<compile_context>
chip_gen: v6e
topology: v6e:2x2x1
jax: 0.10.0
libtpu: 0.0.40
codegen_flags: <defaults>
</compile_context>

<pallas_src>
import functools

import jax
import jax.numpy as jnp
from jax.experimental import pallas as pl
from jax.experimental.pallas import tpu as pltpu

F32 = jnp.float32
BF16 = jnp.bfloat16

_VMEM = pl.BlockSpec(memory_space=pltpu.MemorySpace.VMEM)


def _lstm_step(gates, c_prev):
    """PyTorch-order (i, f, g, o) LSTM cell update from gate pre-activations."""
    H = gates.shape[-1] // 4
    i = jax.nn.sigmoid(gates[:, 0 * H:1 * H])
    f = jax.nn.sigmoid(gates[:, 1 * H:2 * H])
    g = jnp.tanh(gates[:, 2 * H:3 * H])
    o = jax.nn.sigmoid(gates[:, 3 * H:4 * H])
    c_new = f * c_prev + i * g
    h_new = o * jnp.tanh(c_new)
    return h_new, c_new


# ------------------------------------------------------------------ encoder kernel
def _encoder_kernel(emb_ref, wih_w_ref, whh_w_ref, b_w_ref,
                    wih_s_ref, whh_s_ref, b_s_ref, wh_ref, bh_ref,
                    out_ref, feat_ref, sh_ref, sc_ref, *, A, B, Lw):
    """Fused word-level + sentence-level encoder (one launch, static in-kernel unrolls)."""
    N = A * B
    H = sh_ref.shape[-1]

    # ---- word-level LSTM over Lw steps; the A article sentences fold into batch rows.
    # Input projection hoisted out of the recurrence: one (Lw*N, E) @ (E, 4H) weight push.
    xg = jnp.dot(emb_ref[...], wih_w_ref[...], preferred_element_type=jnp.float32)
    h = jnp.zeros((N, H), F32)
    c = jnp.zeros((N, H), F32)
    for t in range(Lw):                               # static unroll, no per-step grid cost
        gates = (xg[t * N:(t + 1) * N]
                 + jnp.dot(h.astype(BF16), whh_w_ref[...],
                           preferred_element_type=jnp.float32)
                 + b_w_ref[...])
        h, c = _lstm_step(gates, c)
    word_hx = h                                       # (A*B, H), rows ordered a-major

    # ---- sentence-level LSTM over the A sentence states (input projection hoisted too)
    sg = jnp.dot(word_hx.astype(BF16), wih_s_ref[...], preferred_element_type=jnp.float32)
    sh = jnp.zeros((B, H), F32)
    sc = jnp.zeros((B, H), F32)
    for a in range(A):
        gates = (sg[a * B:(a + 1) * B]
                 + jnp.dot(sh.astype(BF16), whh_s_ref[...],
                           preferred_element_type=jnp.float32)
                 + b_s_ref[...])
        sh, sc = _lstm_step(gates, sc)
        out_ref[a * B:(a + 1) * B, :] = sh
    sh_ref[...] = sh
    sc_ref[...] = sc

    # ---- attention features W_h(outputs): hoisted out of the recurrence -> 1 matmul
    feat_ref[...] = (jnp.dot(out_ref[...].astype(BF16), wh_ref[...],
                             preferred_element_type=jnp.float32) + bh_ref[...])


def encoder(emb, p_wenc, p_senc, p_sdec, *, A, B, Lw, H):
    N = A * B
    kernel = functools.partial(_encoder_kernel, A=A, B=B, Lw=Lw)
    return pl.pallas_call(
        kernel,
        out_shape=(jax.ShapeDtypeStruct((N, H), F32),   # sentence-encoder outputs (a-major)
                   jax.ShapeDtypeStruct((N, H), F32),   # attention features W_h(outputs)
                   jax.ShapeDtypeStruct((B, H), F32),   # final s_hx
                   jax.ShapeDtypeStruct((B, H), F32)),  # final s_cx
        in_specs=[_VMEM] * 9,
        out_specs=(_VMEM, _VMEM, _VMEM, _VMEM),
    )(emb, p_wenc['w_ih'], p_wenc['w_hh'], p_wenc['b'],
      p_senc['w_ih'], p_senc['w_hh'], p_senc['b'],
      p_sdec['W_h'], p_sdec['b_h'])


# ------------------------------------------------------------------ fused decoder kernel
def _decoder_kernel(emb_ref, lbl_ref, h0_ref, c0_ref, enc_ref, feat_ref, mask_ref,
                    wd_wih_ref, wd_whh_ref, wd_b_ref, wout_ref, bout_ref,
                    sd_wxh_ref, sd_b_ref, ws_ref, bs_ref, v_ref, wc_ref,
                    wm_ref, bm_ref,
                    loss_ref,
                    wh_s, wcell_s, sh_s, scell_s, cov_s,
                    *, L, B, coverage_flag):
    """One grid step = one summary sentence: word decoder + CE, sentence decoder + coverage
    attention + merge.  All recurrent state + coverage + loss stay resident in VMEM."""
    t = pl.program_id(0)

    @pl.when(t == 0)
    def _():
        wh_s[...] = h0_ref[...]          # w_hx, w_cx = (s_hx, s_cx)
        wcell_s[...] = c0_ref[...]
        sh_s[...] = h0_ref[...]
        scell_s[...] = c0_ref[...]
        cov_s[...] = jnp.zeros_like(cov_s)
        loss_ref[...] = jnp.zeros_like(loss_ref)

    # ---------- word decoder: teacher-forced LSTM + vocab CE over the L word steps ----
    # input projection for all L steps in one matmul (one w_ih push per t)
    xg = jnp.dot(emb_ref[0, :, :], wd_wih_ref[...], preferred_element_type=jnp.float32)
    w_h = wh_s[...]
    w_c = wcell_s[...]
    loss = jnp.zeros((1, 1), F32)
    for i in range(L):                                 # static in-kernel unroll
        gates = (xg[i * B:(i + 1) * B]
                 + jnp.dot(w_h.astype(BF16), wd_whh_ref[...],
                           preferred_element_type=jnp.float32)
                 + wd_b_ref[...])
        w_h, w_c = _lstm_step(gates, w_c)
        # cross_entropy(W_out w_h + b_out, label), mean over labels != 0 (ignore_index=0)
        logits = (jnp.dot(w_h.astype(BF16), wout_ref[...],
                          preferred_element_type=jnp.float32) + bout_ref[...])    # (B, V)
        labels = lbl_ref[0, i * B:(i + 1) * B, :]                                 # (B, 1)
        m = jnp.max(logits, axis=-1, keepdims=True)
        lse = m + jnp.log(jnp.sum(jnp.exp(logits - m), axis=-1, keepdims=True))
        col = jax.lax.broadcasted_iota(jnp.int32, logits.shape, 1)
        label_logit = jnp.sum(jnp.where(col == labels, logits, 0.0),
                              axis=-1, keepdims=True)
        valid = (labels != 0).astype(F32)
        per = (lse - label_logit) * valid
        total = jnp.sum(per, axis=0, keepdims=True)                               # (1, 1)
        count = jnp.sum(valid, axis=0, keepdims=True)                             # (1, 1)
        loss = loss + total / jnp.maximum(count, 1.0)
    wcell_s[...] = w_c

    # ---------- sentence decoder LSTM: single fused [w_ih; w_hh] (2H,4H) weight push ---
    s_h_prev = sh_s[...]
    xs = jnp.concatenate([w_h, s_h_prev], axis=-1).astype(BF16)                   # (B, 2H)
    gates = (jnp.dot(xs, sd_wxh_ref[...], preferred_element_type=jnp.float32)
             + sd_b_ref[...])
    s_h, s_c = _lstm_step(gates, scell_s[...])
    scell_s[...] = s_c

    # ---------- coverage attention (lane-dense: S on the lane axis) --------------------
    dec = (jnp.dot(s_h.astype(BF16), ws_ref[...], preferred_element_type=jnp.float32)
           + bs_ref[...])                                                         # (B, H)
    cov = cov_s[...]                                                              # (B, S)
    cov_wc = cov * wc_ref[...]                                                    # (B, S)
    att = jnp.tanh(feat_ref[...] + dec[:, None, :] + cov_wc[:, :, None])          # (B, S, H)
    e = jnp.sum(att * v_ref[...][None, :, :], axis=-1)                            # (B, S)
    mask = mask_ref[...]                                                          # (B, S)
    e = jnp.where(mask > 0, e, jnp.float32(-1e30))
    mx = jnp.max(e, axis=-1, keepdims=True)
    ex = jnp.exp(e - mx) * mask
    denom = jnp.sum(ex, axis=-1, keepdims=True)
    align = ex / jnp.maximum(denom, 1e-12)                                        # (B, S)
    ctx = jnp.sum(align[:, :, None] * enc_ref[...], axis=1)                       # (B, H)

    if coverage_flag:   # static Python flag (trace-time)
        per_b = jnp.sum(jnp.minimum(align, cov), axis=-1, keepdims=True)          # (B, 1)
        loss = loss + jnp.sum(per_b, axis=0, keepdims=True) / float(B)
        cov_s[...] = cov + align

    # ---------- merge: final_dist = tanh(W_m [s_h ; ctx] + b_m) ------------------------
    merged = jnp.concatenate([s_h, ctx], axis=-1).astype(BF16)                    # (B, 2H)
    fd = jnp.tanh(jnp.dot(merged, wm_ref[...], preferred_element_type=jnp.float32)
                  + bm_ref[...])
    sh_s[...] = fd     # s_hx = final_dist
    wh_s[...] = fd     # w_hx = final_dist

    loss_ref[...] += loss


def fused_decoder(dec_emb, dec_lbl, h0, c0, enc_b, feat_b, mask_b, p_wdec, p_sdec, *,
                  coverage_flag):
    T, LB, E = dec_emb.shape
    B, S, H = enc_b.shape
    L = LB // B
    V = p_wdec['W_out'].shape[-1]
    kernel = functools.partial(_decoder_kernel, L=L, B=B, coverage_flag=coverage_flag)

    def c2(shape):    # block resident across the whole T grid (constant index_map)
        return pl.BlockSpec(shape, lambda t: (0, 0))

    def c3(shape):
        return pl.BlockSpec(shape, lambda t: (0, 0, 0))

    return pl.pallas_call(
        kernel,
        out_shape=jax.ShapeDtypeStruct((1, 1), F32),
        grid=(T,),
        in_specs=[
            pl.BlockSpec((1, LB, E), lambda t: (t, 0, 0)),        # dec_emb (per-t block)
            pl.BlockSpec((1, LB, 1), lambda t: (t, 0, 0)),        # dec labels (per-t block)
            c2((B, H)), c2((B, H)),                               # h0, c0
            c3((B, S, H)), c3((B, S, H)),                         # enc outputs, features
            c2((B, S)),                                           # mask
            c2((E, 4 * H)), c2((H, 4 * H)), c2((1, 4 * H)),       # word-decoder LSTM
            c2((H, V)), c2((1, V)),                               # W_out, b_out
            c2((2 * H, 4 * H)), c2((1, 4 * H)),                   # sent-decoder fused LSTM
            c2((H, H)), c2((1, H)),                               # W_s, b_s
            c2((1, H)),                                           # v
            c2((1, 1)),                                           # w_c
            c2((2 * H, H)), c2((1, H)),                           # W_m, b_m
        ],
        out_specs=pl.BlockSpec((1, 1), lambda t: (0, 0)),         # loss, written once
        scratch_shapes=[pltpu.VMEM((B, H), F32)] * 4 + [pltpu.VMEM((B, S), F32)],
        compiler_params=pltpu.CompilerParams(dimension_semantics=("arbitrary",)),
    )(dec_emb, dec_lbl, h0, c0, enc_b, feat_b, mask_b,
      p_wdec['w_ih'], p_wdec['w_hh'], p_wdec['b'], p_wdec['W_out'], p_wdec['b_out'],
      p_sdec['w_xh'], p_sdec['b'], p_sdec['W_s'], p_sdec['b_s'], p_sdec['v'],
      p_sdec['w_c'], p_sdec['W_m'], p_sdec['b_m'])


# ------------------------------------------------------------------ forward
def hierachical_forward(params, articles, summaries, coverage_flag=True):
    A, B, Lw = articles.shape
    T, _, Ls = summaries.shape
    H = params['s_enc']['w_hh'].shape[0]
    L = Ls - 1
    N = A * B

    # ---- encoders: one fused launch (word LSTM over Lw + sentence LSTM over A) --------
    tok = jnp.transpose(articles, (2, 0, 1)).reshape(Lw, N)                 # (Lw, A*B)
    emb = jnp.take(params['enc_embed'], tok, axis=0).reshape(Lw * N, -1)    # bf16
    sent_out, sent_feat, s_h, s_c = encoder(
        emb, params['w_enc'], params['s_enc'], params['s_dec'], A=A, B=B, Lw=Lw, H=H)

    # re-lay the attention operands ONCE so the decoder's softmax is lane-dense over S=A
    enc_b = jnp.transpose(sent_out.reshape(A, B, H), (1, 0, 2))             # (B, A, H)
    feat_b = jnp.transpose(sent_feat.reshape(A, B, H), (1, 0, 2))           # (B, A, H)
    mask_b = (articles[:, :, 0] > 0).astype(F32).T                          # (B, A)

    # ---- decoder: the entire T x (Ls-1) loop is ONE gridded kernel --------------------
    dec_in = jnp.transpose(summaries[:, :, :-1], (0, 2, 1)).reshape(T, L * B)
    dec_emb = jnp.take(params['dec_embed'], dec_in, axis=0)                 # (T, L*B, E) bf16
    dec_lbl = jnp.transpose(summaries[:, :, 1:], (0, 2, 1)).reshape(T, L * B, 1)
    dec_lbl = dec_lbl.astype(jnp.int32)

    loss = fused_decoder(dec_emb, dec_lbl, s_h, s_c, enc_b, feat_b, mask_b,
                         params['w_dec'], params['s_dec'], coverage_flag=coverage_flag)
    return loss[0, 0]


# ------------------------------------------------------------------ params
def init_params(key, V, E, H):
    ks = iter(jax.random.split(key, 32))

    def nrm(shape, dtype=F32):
        return (0.1 * jax.random.normal(next(ks), shape)).astype(dtype)

    def lstm(in_dim):
        # MXU weights stored bf16; biases / element-wise params f32 (v5e-safe elementwise).
        return {'w_ih': nrm((in_dim, 4 * H), BF16),
                'w_hh': nrm((H, 4 * H), BF16),
                'b': nrm((1, 4 * H))}

    return {
        'enc_embed': nrm((V, E), BF16),   # bf16 embeddings: gathered slabs feed MXU directly
        'dec_embed': nrm((V, E), BF16),
        'w_enc': lstm(E),
        's_enc': lstm(H),
        'w_dec': {**lstm(E), 'W_out': nrm((H, V), BF16), 'b_out': nrm((1, V))},
        's_dec': {
            # sentence-decoder LSTM stores a single fused [w_ih; w_hh] weight (one MXU push)
            'w_xh': nrm((2 * H, 4 * H), BF16),
            'b': nrm((1, 4 * H)),
            'W_h': nrm((H, H), BF16), 'b_h': nrm((1, H)),
            'W_s': nrm((H, H), BF16), 'b_s': nrm((1, H)),
            'v': nrm((1, H)),
            'w_c': nrm((1, 1)),
            'W_m': nrm((2 * H, H), BF16), 'b_m': nrm((1, H)),
        },
    }


# ------------------------------------------------------------------ main
if __name__ == "__main__":
    # H and V padded to the 128-lane width so gate slices / logits are lane-aligned.
    V, E, H = 128, 32, 128      # vocab, embedding, hidden
    A, B, Lw = 4, 2, 6          # article sentences, batch, words per article sentence
    T, Ls = 2, 5                # summary sentences, words per summary sentence

    key = jax.random.PRNGKey(0)
    k_art, k_sum, k_par = jax.random.split(key, 3)

    articles = jax.random.randint(k_art, (A, B, Lw), 1, V, dtype=jnp.int32)
    summaries = jax.random.randint(k_sum, (T, B, Ls), 1, V, dtype=jnp.int32)
    summaries = summaries.at[:, 1, -1].set(0)   # a padded target exercises ignore_index=0

    params = init_params(k_par, V, E, H)

    fwd = jax.jit(functools.partial(hierachical_forward, coverage_flag=True))
    loss = fwd(params, articles, summaries)
    jax.block_until_ready(loss)
    assert jnp.isfinite(loss), "loss is not finite"
    print("KERNEL_OK")
</pallas_src>

<mosaic_0001>
module attributes {stable_mosaic.version = 11 : i64} {
  func.func @_encoder_kernel(%arg0: memref<48x32xbf16, #tpu.memory_space<vmem>>, %arg1: memref<32x512xbf16, #tpu.memory_space<vmem>>, %arg2: memref<128x512xbf16, #tpu.memory_space<vmem>>, %arg3: memref<1x512xf32, #tpu.memory_space<vmem>>, %arg4: memref<128x512xbf16, #tpu.memory_space<vmem>>, %arg5: memref<128x512xbf16, #tpu.memory_space<vmem>>, %arg6: memref<1x512xf32, #tpu.memory_space<vmem>>, %arg7: memref<128x128xbf16, #tpu.memory_space<vmem>>, %arg8: memref<1x128xf32, #tpu.memory_space<vmem>>, %arg9: memref<8x128xf32, #tpu.memory_space<vmem>>, %arg10: memref<8x128xf32, #tpu.memory_space<vmem>>, %arg11: memref<2x128xf32, #tpu.memory_space<vmem>>, %arg12: memref<2x128xf32, #tpu.memory_space<vmem>>) attributes {dimension_semantics = [], scalar_prefetch = 0 : i64, scratch_operands = 0 : i64, tpu.core_type = #tpu.core_type<tc>} {
    %c0 = arith.constant 0 : index
    %c0_0 = arith.constant 0 : index
    %0 = vector.load %arg0[%c0, %c0_0] : memref<48x32xbf16, #tpu.memory_space<vmem>>, vector<48x32xbf16>
    %c0_1 = arith.constant 0 : index
    %c0_2 = arith.constant 0 : index
    %1 = vector.load %arg1[%c0_1, %c0_2] : memref<32x512xbf16, #tpu.memory_space<vmem>>, vector<32x512xbf16>
    %cst = arith.constant dense<0.000000e+00> : vector<48x512xf32>
    %2 = tpu.matmul %0, %1, %cst {dimension_numbers = #tpu.dot_dimension_numbers<[1], [0], [0], [1], [0, 0, 1, 1], [], []>} : vector<48x32xbf16>, vector<32x512xbf16>, vector<48x512xf32> -> vector<48x512xf32>
    %cst_3 = arith.constant 0.000000e+00 : f32
    %3 = vector.broadcast %cst_3 : f32 to vector<8x128xf32>
    %cst_4 = arith.constant 0.000000e+00 : f32
    %4 = vector.broadcast %cst_4 : f32 to vector<8x128xf32>
    %5 = vector.extract_strided_slice %2 {offsets = [0, 0], sizes = [8, 512], strides = [1, 1]} : vector<48x512xf32> to vector<8x512xf32>
    %6 = arith.truncf %3 : vector<8x128xf32> to vector<8x128xbf16>
    %c0_5 = arith.constant 0 : index
    %c0_6 = arith.constant 0 : index
    %7 = vector.load %arg2[%c0_5, %c0_6] : memref<128x512xbf16, #tpu.memory_space<vmem>>, vector<128x512xbf16>
    %cst_7 = arith.constant dense<0.000000e+00> : vector<8x512xf32>
    %8 = tpu.matmul %6, %7, %cst_7 {dimension_numbers = #tpu.dot_dimension_numbers<[1], [0], [0], [1], [0, 0, 1, 1], [], []>} : vector<8x128xbf16>, vector<128x512xbf16>, vector<8x512xf32> -> vector<8x512xf32>
    %9 = arith.addf %5, %8 : vector<8x512xf32>
    %c0_8 = arith.constant 0 : index
    %c0_9 = arith.constant 0 : index
    %10 = vector.load %arg3[%c0_8, %c0_9] : memref<1x512xf32, #tpu.memory_space<vmem>>, vector<1x512xf32>
    %11 = vector.broadcast %10 : vector<1x512xf32> to vector<8x512xf32>
    %12 = arith.addf %9, %11 : vector<8x512xf32>
    %13 = vector.extract_strided_slice %12 {offsets = [0, 0], sizes = [8, 128], strides = [1, 1]} : vector<8x512xf32> to vector<8x128xf32>
    %14 = arith.negf %13 : vector<8x128xf32>
    %15 = math.exp %14 : vector<8x128xf32>
    %cst_10 = arith.constant 1.000000e+00 : f32
    %16 = vector.broadcast %cst_10 : f32 to vector<8x128xf32>
    %17 = arith.addf %16, %15 : vector<8x128xf32>
    %18 = arith.divf %16, %17 : vector<8x128xf32>
    %19 = vector.extract_strided_slice %12 {offsets = [0, 128], sizes = [8, 128], strides = [1, 1]} : vector<8x512xf32> to vector<8x128xf32>
    %20 = arith.negf %19 : vector<8x128xf32>
    %21 = math.exp %20 : vector<8x128xf32>
    %cst_11 = arith.constant 1.000000e+00 : f32
    %22 = vector.broadcast %cst_11 : f32 to vector<8x128xf32>
    %23 = arith.addf %22, %21 : vector<8x128xf32>
    %24 = arith.divf %22, %23 : vector<8x128xf32>
    %25 = vector.extract_strided_slice %12 {offsets = [0, 256], sizes = [8, 128], strides = [1, 1]} : vector<8x512xf32> to vector<8x128xf32>
    %26 = math.tanh %25 : vector<8x128xf32>
    %27 = vector.extract_strided_slice %12 {offsets = [0, 384], sizes = [8, 128], strides = [1, 1]} : vector<8x512xf32> to vector<8x128xf32>
    %28 = arith.negf %27 : vector<8x128xf32>
    %29 = math.exp %28 : vector<8x128xf32>
    %cst_12 = arith.constant 1.000000e+00 : f32
    %30 = vector.broadcast %cst_12 : f32 to vector<8x128xf32>
    %31 = arith.addf %30, %29 : vector<8x128xf32>
    %32 = arith.divf %30, %31 : vector<8x128xf32>
    %33 = arith.mulf %24, %4 : vector<8x128xf32>
    %34 = arith.mulf %18, %26 : vector<8x128xf32>
    %35 = arith.addf %33, %34 : vector<8x128xf32>
    %36 = math.tanh %35 : vector<8x128xf32>
    %37 = arith.mulf %32, %36 : vector<8x128xf32>
    %38 = vector.extract_strided_slice %2 {offsets = [8, 0], sizes = [8, 512], strides = [1, 1]} : vector<48x512xf32> to vector<8x512xf32>
    %39 = arith.truncf %37 : vector<8x128xf32> to vector<8x128xbf16>
    %c0_13 = arith.constant 0 : index
    %c0_14 = arith.constant 0 : index
    %40 = vector.load %arg2[%c0_13, %c0_14] : memref<128x512xbf16, #tpu.memory_space<vmem>>, vector<128x512xbf16>
    %cst_15 = arith.constant dense<0.000000e+00> : vector<8x512xf32>
    %41 = tpu.matmul %39, %40, %cst_15 {dimension_numbers = #tpu.dot_dimension_numbers<[1], [0], [0], [1], [0, 0, 1, 1], [], []>} : vector<8x128xbf16>, vector<128x512xbf16>, vector<8x512xf32> -> vector<8x512xf32>
    %42 = arith.addf %38, %41 : vector<8x512xf32>
    %c0_16 = arith.constant 0 : index
    %c0_17 = arith.constant 0 : index
    %43 = vector.load %arg3[%c0_16, %c0_17] : memref<1x512xf32, #tpu.memory_space<vmem>>, vector<1x512xf32>
    %44 = vector.broadcast %43 : vector<1x512xf32> to vector<8x512xf32>
    %45 = arith.addf %42, %44 : vector<8x512xf32>
    %46 = vector.extract_strided_slice %45 {offsets = [0, 0], sizes = [8, 128], strides = [1, 1]} : vector<8x512xf32> to vector<8x128xf32>
    %47 = arith.negf %46 : vector<8x128xf32>
    %48 = math.exp %47 : vector<8x128xf32>
    %cst_18 = arith.constant 1.000000e+00 : f32
    %49 = vector.broadcast %cst_18 : f32 to vector<8x128xf32>
    %50 = arith.addf %49, %48 : vector<8x128xf32>
    %51 = arith.divf %49, %50 : vector<8x128xf32>
    %52 = vector.extract_strided_slice %45 {offsets = [0, 128], sizes = [8, 128], strides = [1, 1]} : vector<8x512xf32> to vector<8x128xf32>
    %53 = arith.negf %52 : vector<8x128xf32>
    %54 = math.exp %53 : vector<8x128xf32>
    %cst_19 = arith.constant 1.000000e+00 : f32
    %55 = vector.broadcast %cst_19 : f32 to vector<8x128xf32>
    %56 = arith.addf %55, %54 : vector<8x128xf32>
    %57 = arith.divf %55, %56 : vector<8x128xf32>
    %58 = vector.extract_strided_slice %45 {offsets = [0, 256], sizes = [8, 128], strides = [1, 1]} : vector<8x512xf32> to vector<8x128xf32>
    %59 = math.tanh %58 : vector<8x128xf32>
    %60 = vector.extract_strided_slice %45 {offsets = [0, 384], sizes = [8, 128], strides = [1, 1]} : vector<8x512xf32> to vector<8x128xf32>
    %61 = arith.negf %60 : vector<8x128xf32>
    %62 = math.exp %61 : vector<8x128xf32>
    %cst_20 = arith.constant 1.000000e+00 : f32
    %63 = vector.broadcast %cst_20 : f32 to vector<8x128xf32>
    %64 = arith.addf %63, %62 : vector<8x128xf32>
    %65 = arith.divf %63, %64 : vector<8x128xf32>
    %66 = arith.mulf %57, %35 : vector<8x128xf32>
    %67 = arith.mulf %51, %59 : vector<8x128xf32>
    %68 = arith.addf %66, %67 : vector<8x128xf32>
    %69 = math.tanh %68 : vector<8x128xf32>
    %70 = arith.mulf %65, %69 : vector<8x128xf32>
    %71 = vector.extract_strided_slice %2 {offsets = [16, 0], sizes = [8, 512], strides = [1, 1]} : vector<48x512xf32> to vector<8x512xf32>
    %72 = arith.truncf %70 : vector<8x128xf32> to vector<8x128xbf16>
    %c0_21 = arith.constant 0 : index
    %c0_22 = arith.constant 0 : index
    %73 = vector.load %arg2[%c0_21, %c0_22] : memref<128x512xbf16, #tpu.memory_space<vmem>>, vector<128x512xbf16>
    %cst_23 = arith.constant dense<0.000000e+00> : vector<8x512xf32>
    %74 = tpu.matmul %72, %73, %cst_23 {dimension_numbers = #tpu.dot_dimension_numbers<[1], [0], [0], [1], [0, 0, 1, 1], [], []>} : vector<8x128xbf16>, vector<128x512xbf16>, vector<8x512xf32> -> vector<8x512xf32>
    %75 = arith.addf %71, %74 : vector<8x512xf32>
    %c0_24 = arith.constant 0 : index
    %c0_25 = arith.constant 0 : index
    %76 = vector.load %arg3[%c0_24, %c0_25] : memref<1x512xf32, #tpu.memory_space<vmem>>, vector<1x512xf32>
    %77 = vector.broadcast %76 : vector<1x512xf32> to vector<8x512xf32>
    %78 = arith.addf %75, %77 : vector<8x512xf32>
    %79 = vector.extract_strided_slice %78 {offsets = [0, 0], sizes = [8, 128], strides = [1, 1]} : vector<8x512xf32> to vector<8x128xf32>
    %80 = arith.negf %79 : vector<8x128xf32>
    %81 = math.exp %80 : vector<8x128xf32>
    %cst_26 = arith.constant 1.000000e+00 : f32
    %82 = vector.broadcast %cst_26 : f32 to vector<8x128xf32>
    %83 = arith.addf %82, %81 : vector<8x128xf32>
    %84 = arith.divf %82, %83 : vector<8x128xf32>
    %85 = vector.extract_strided_slice %78 {offsets = [0, 128], sizes = [8, 128], strides = [1, 1]} : vector<8x512xf32> to vector<8x128xf32>
    %86 = arith.negf %85 : vector<8x128xf32>
    %87 = math.exp %86 : vector<8x128xf32>
    %cst_27 = arith.constant 1.000000e+00 : f32
    %88 = vector.broadcast %cst_27 : f32 to vector<8x128xf32>
    %89 = arith.addf %88, %87 : vector<8x128xf32>
    %90 = arith.divf %88, %89 : vector<8x128xf32>
    %91 = vector.extract_strided_slice %78 {offsets = [0, 256], sizes = [8, 128], strides = [1, 1]} : vector<8x512xf32> to vector<8x128xf32>
    %92 = math.tanh %91 : vector<8x128xf32>
    %93 = vector.extract_strided_slice %78 {offsets = [0, 384], sizes = [8, 128], strides = [1, 1]} : vector<8x512xf32> to vector<8x128xf32>
    %94 = arith.negf %93 : vector<8x128xf32>
    %95 = math.exp %94 : vector<8x128xf32>
    %cst_28 = arith.constant 1.000000e+00 : f32
    %96 = vector.broadcast %cst_28 : f32 to vector<8x128xf32>
    %97 = arith.addf %96, %95 : vector<8x128xf32>
    %98 = arith.divf %96, %97 : vector<8x128xf32>
    %99 = arith.mulf %90, %68 : vector<8x128xf32>
    %100 = arith.mulf %84, %92 : vector<8x128xf32>
    %101 = arith.addf %99, %100 : vector<8x128xf32>
    %102 = math.tanh %101 : vector<8x128xf32>
    %103 = arith.mulf %98, %102 : vector<8x128xf32>
    %104 = vector.extract_strided_slice %2 {offsets = [24, 0], sizes = [8, 512], strides = [1, 1]} : vector<48x512xf32> to vector<8x512xf32>
    %105 = arith.truncf %103 : vector<8x128xf32> to vector<8x128xbf16>
    %c0_29 = arith.constant 0 : index
    %c0_30 = arith.constant 0 : index
    %106 = vector.load %arg2[%c0_29, %c0_30] : memref<128x512xbf16, #tpu.memory_space<vmem>>, vector<128x512xbf16>
    %cst_31 = arith.constant dense<0.000000e+00> : vector<8x512xf32>
    %107 = tpu.matmul %105, %106, %cst_31 {dimension_numbers = #tpu.dot_dimension_numbers<[1], [0], [0], [1], [0, 0, 1, 1], [], []>} : vector<8x128xbf16>, vector<128x512xbf16>, vector<8x512xf32> -> vector<8x512xf32>
    %108 = arith.addf %104, %107 : vector<8x512xf32>
    %c0_32 = arith.constant 0 : index
    %c0_33 = arith.constant 0 : index
    %109 = vector.load %arg3[%c0_32, %c0_33] : memref<1x512xf32, #tpu.memory_space<vmem>>, vector<1x512xf32>
    %110 = vector.broadcast %109 : vector<1x512xf32> to vector<8x512xf32>
    %111 = arith.addf %108, %110 : vector<8x512xf32>
    %112 = vector.extract_strided_slice %111 {offsets = [0, 0], sizes = [8, 128], strides = [1, 1]} : vector<8x512xf32> to vector<8x128xf32>
    %113 = arith.negf %112 : vector<8x128xf32>
    %114 = math.exp %113 : vector<8x128xf32>
    %cst_34 = arith.constant 1.000000e+00 : f32
    %115 = vector.broadcast %cst_34 : f32 to vector<8x128xf32>
    %116 = arith.addf %115, %114 : vector<8x128xf32>
    %117 = arith.divf %115, %116 : vector<8x128xf32>
    %118 = vector.extract_strided_slice %111 {offsets = [0, 128], sizes = [8, 128], strides = [1, 1]} : vector<8x512xf32> to vector<8x128xf32>
    %119 = arith.negf %118 : vector<8x128xf32>
    %120 = math.exp %119 : vector<8x128xf32>
    %cst_35 = arith.constant 1.000000e+00 : f32
    %121 = vector.broadcast %cst_35 : f32 to vector<8x128xf32>
    %122 = arith.addf %121, %120 : vector<8x128xf32>
    %123 = arith.divf %121, %122 : vector<8x128xf32>
    %124 = vector.extract_strided_slice %111 {offsets = [0, 256], sizes = [8, 128], strides = [1, 1]} : vector<8x512xf32> to vector<8x128xf32>
    %125 = math.tanh %124 : vector<8x128xf32>
    %126 = vector.extract_strided_slice %111 {offsets = [0, 384], sizes = [8, 128], strides = [1, 1]} : vector<8x512xf32> to vector<8x128xf32>
    %127 = arith.negf %126 : vector<8x128xf32>
    %128 = math.exp %127 : vector<8x128xf32>
    %cst_36 = arith.constant 1.000000e+00 : f32
    %129 = vector.broadcast %cst_36 : f32 to vector<8x128xf32>
    %130 = arith.addf %129, %128 : vector<8x128xf32>
    %131 = arith.divf %129, %130 : vector<8x128xf32>
    %132 = arith.mulf %123, %101 : vector<8x128xf32>
    %133 = arith.mulf %117, %125 : vector<8x128xf32>
    %134 = arith.addf %132, %133 : vector<8x128xf32>
    %135 = math.tanh %134 : vector<8x128xf32>
    %136 = arith.mulf %131, %135 : vector<8x128xf32>
    %137 = vector.extract_strided_slice %2 {offsets = [32, 0], sizes = [8, 512], strides = [1, 1]} : vector<48x512xf32> to vector<8x512xf32>
    %138 = arith.truncf %136 : vector<8x128xf32> to vector<8x128xbf16>
    %c0_37 = arith.constant 0 : index
    %c0_38 = arith.constant 0 : index
    %139 = vector.load %arg2[%c0_37, %c0_38] : memref<128x512xbf16, #tpu.memory_space<vmem>>, vector<128x512xbf16>
    %cst_39 = arith.constant dense<0.000000e+00> : vector<8x512xf32>
    %140 = tpu.matmul %138, %139, %cst_39 {dimension_numbers = #tpu.dot_dimension_numbers<[1], [0], [0], [1], [0, 0, 1, 1], [], []>} : vector<8x128xbf16>, vector<128x512xbf16>, vector<8x512xf32> -> vector<8x512xf32>
    %141 = arith.addf %137, %140 : vector<8x512xf32>
    %c0_40 = arith.constant 0 : index
    %c0_41 = arith.constant 0 : index
    %142 = vector.load %arg3[%c0_40, %c0_41] : memref<1x512xf32, #tpu.memory_space<vmem>>, vector<1x512xf32>
    %143 = vector.broadcast %142 : vector<1x512xf32> to vector<8x512xf32>
    %144 = arith.addf %141, %143 : vector<8x512xf32>
    %145 = vector.extract_strided_slice %144 {offsets = [0, 0], sizes = [8, 128], strides = [1, 1]} : vector<8x512xf32> to vector<8x128xf32>
    %146 = arith.negf %145 : vector<8x128xf32>
    %147 = math.exp %146 : vector<8x128xf32>
    %cst_42 = arith.constant 1.000000e+00 : f32
    %148 = vector.broadcast %cst_42 : f32 to vector<8x128xf32>
    %149 = arith.addf %148, %147 : vector<8x128xf32>
    %150 = arith.divf %148, %149 : vector<8x128xf32>
    %151 = vector.extract_strided_slice %144 {offsets = [0, 128], sizes = [8, 128], strides = [1, 1]} : vector<8x512xf32> to vector<8x128xf32>
    %152 = arith.negf %151 : vector<8x128xf32>
    %153 = math.exp %152 : vector<8x128xf32>
    %cst_43 = arith.constant 1.000000e+00 : f32
    %154 = vector.broadcast %cst_43 : f32 to vector<8x128xf32>
    %155 = arith.addf %154, %153 : vector<8x128xf32>
    %156 = arith.divf %154, %155 : vector<8x128xf32>
    %157 = vector.extract_strided_slice %144 {offsets = [0, 256], sizes = [8, 128], strides = [1, 1]} : vector<8x512xf32> to vector<8x128xf32>
    %158 = math.tanh %157 : vector<8x128xf32>
    %159 = vector.extract_strided_slice %144 {offsets = [0, 384], sizes = [8, 128], strides = [1, 1]} : vector<8x512xf32> to vector<8x128xf32>
    %160 = arith.negf %159 : vector<8x128xf32>
    %161 = math.exp %160 : vector<8x128xf32>
    %cst_44 = arith.constant 1.000000e+00 : f32
    %162 = vector.broadcast %cst_44 : f32 to vector<8x128xf32>
    %163 = arith.addf %162, %161 : vector<8x128xf32>
    %164 = arith.divf %162, %163 : vector<8x128xf32>
    %165 = arith.mulf %156, %134 : vector<8x128xf32>
    %166 = arith.mulf %150, %158 : vector<8x128xf32>
    %167 = arith.addf %165, %166 : vector<8x128xf32>
    %168 = math.tanh %167 : vector<8x128xf32>
    %169 = arith.mulf %164, %168 : vector<8x128xf32>
    %170 = vector.extract_strided_slice %2 {offsets = [40, 0], sizes = [8, 512], strides = [1, 1]} : vector<48x512xf32> to vector<8x512xf32>
    %171 = arith.truncf %169 : vector<8x128xf32> to vector<8x128xbf16>
    %c0_45 = arith.constant 0 : index
    %c0_46 = arith.constant 0 : index
    %172 = vector.load %arg2[%c0_45, %c0_46] : memref<128x512xbf16, #tpu.memory_space<vmem>>, vector<128x512xbf16>
    %cst_47 = arith.constant dense<0.000000e+00> : vector<8x512xf32>
    %173 = tpu.matmul %171, %172, %cst_47 {dimension_numbers = #tpu.dot_dimension_numbers<[1], [0], [0], [1], [0, 0, 1, 1], [], []>} : vector<8x128xbf16>, vector<128x512xbf16>, vector<8x512xf32> -> vector<8x512xf32>
    %174 = arith.addf %170, %173 : vector<8x512xf32>
    %c0_48 = arith.constant 0 : index
    %c0_49 = arith.constant 0 : index
    %175 = vector.load %arg3[%c0_48, %c0_49] : memref<1x512xf32, #tpu.memory_space<vmem>>, vector<1x512xf32>
    %176 = vector.broadcast %175 : vector<1x512xf32> to vector<8x512xf32>
    %177 = arith.addf %174, %176 : vector<8x512xf32>
    %178 = vector.extract_strided_slice %177 {offsets = [0, 0], sizes = [8, 128], strides = [1, 1]} : vector<8x512xf32> to vector<8x128xf32>
    %179 = arith.negf %178 : vector<8x128xf32>
    %180 = math.exp %179 : vector<8x128xf32>
    %cst_50 = arith.constant 1.000000e+00 : f32
    %181 = vector.broadcast %cst_50 : f32 to vector<8x128xf32>
    %182 = arith.addf %181, %180 : vector<8x128xf32>
    %183 = arith.divf %181, %182 : vector<8x128xf32>
    %184 = vector.extract_strided_slice %177 {offsets = [0, 128], sizes = [8, 128], strides = [1, 1]} : vector<8x512xf32> to vector<8x128xf32>
    %185 = arith.negf %184 : vector<8x128xf32>
    %186 = math.exp %185 : vector<8x128xf32>
    %cst_51 = arith.constant 1.000000e+00 : f32
    %187 = vector.broadcast %cst_51 : f32 to vector<8x128xf32>
    %188 = arith.addf %187, %186 : vector<8x128xf32>
    %189 = arith.divf %187, %188 : vector<8x128xf32>
    %190 = vector.extract_strided_slice %177 {offsets = [0, 256], sizes = [8, 128], strides = [1, 1]} : vector<8x512xf32> to vector<8x128xf32>
    %191 = math.tanh %190 : vector<8x128xf32>
    %192 = vector.extract_strided_slice %177 {offsets = [0, 384], sizes = [8, 128], strides = [1, 1]} : vector<8x512xf32> to vector<8x128xf32>
    %193 = arith.negf %192 : vector<8x128xf32>
    %194 = math.exp %193 : vector<8x128xf32>
    %cst_52 = arith.constant 1.000000e+00 : f32
    %195 = vector.broadcast %cst_52 : f32 to vector<8x128xf32>
    %196 = arith.addf %195, %194 : vector<8x128xf32>
    %197 = arith.divf %195, %196 : vector<8x128xf32>
    %198 = arith.mulf %189, %167 : vector<8x128xf32>
    %199 = arith.mulf %183, %191 : vector<8x128xf32>
    %200 = arith.addf %198, %199 : vector<8x128xf32>
    %201 = math.tanh %200 : vector<8x128xf32>
    %202 = arith.mulf %197, %201 : vector<8x128xf32>
    %203 = arith.truncf %202 : vector<8x128xf32> to vector<8x128xbf16>
    %c0_53 = arith.constant 0 : index
    %c0_54 = arith.constant 0 : index
    %204 = vector.load %arg4[%c0_53, %c0_54] : memref<128x512xbf16, #tpu.memory_space<vmem>>, vector<128x512xbf16>
    %cst_55 = arith.constant dense<0.000000e+00> : vector<8x512xf32>
    %205 = tpu.matmul %203, %204, %cst_55 {dimension_numbers = #tpu.dot_dimension_numbers<[1], [0], [0], [1], [0, 0, 1, 1], [], []>} : vector<8x128xbf16>, vector<128x512xbf16>, vector<8x512xf32> -> vector<8x512xf32>
    %cst_56 = arith.constant 0.000000e+00 : f32
    %206 = vector.broadcast %cst_56 : f32 to vector<2x128xf32>
    %cst_57 = arith.constant 0.000000e+00 : f32
    %207 = vector.broadcast %cst_57 : f32 to vector<2x128xf32>
    %208 = vector.extract_strided_slice %205 {offsets = [0, 0], sizes = [2, 512], strides = [1, 1]} : vector<8x512xf32> to vector<2x512xf32>
    %209 = arith.truncf %206 : vector<2x128xf32> to vector<2x128xbf16>
    %c0_58 = arith.constant 0 : index
    %c0_59 = arith.constant 0 : index
    %210 = vector.load %arg5[%c0_58, %c0_59] : memref<128x512xbf16, #tpu.memory_space<vmem>>, vector<128x512xbf16>
    %cst_60 = arith.constant dense<0.000000e+00> : vector<2x512xf32>
    %211 = tpu.matmul %209, %210, %cst_60 {dimension_numbers = #tpu.dot_dimension_numbers<[1], [0], [0], [1], [0, 0, 1, 1], [], []>} : vector<2x128xbf16>, vector<128x512xbf16>, vector<2x512xf32> -> vector<2x512xf32>
    %212 = arith.addf %208, %211 : vector<2x512xf32>
    %c0_61 = arith.constant 0 : index
    %c0_62 = arith.constant 0 : index
    %213 = vector.load %arg6[%c0_61, %c0_62] : memref<1x512xf32, #tpu.memory_space<vmem>>, vector<1x512xf32>
    %214 = vector.broadcast %213 : vector<1x512xf32> to vector<2x512xf32>
    %215 = arith.addf %212, %214 : vector<2x512xf32>
    %216 = vector.extract_strided_slice %215 {offsets = [0, 0], sizes = [2, 128], strides = [1, 1]} : vector<2x512xf32> to vector<2x128xf32>
    %217 = arith.negf %216 : vector<2x128xf32>
    %218 = math.exp %217 : vector<2x128xf32>
    %cst_63 = arith.constant 1.000000e+00 : f32
    %219 = vector.broadcast %cst_63 : f32 to vector<2x128xf32>
    %220 = arith.addf %219, %218 : vector<2x128xf32>
    %221 = arith.divf %219, %220 : vector<2x128xf32>
    %222 = vector.extract_strided_slice %215 {offsets = [0, 128], sizes = [2, 128], strides = [1, 1]} : vector<2x512xf32> to vector<2x128xf32>
    %223 = arith.negf %222 : vector<2x128xf32>
    %224 = math.exp %223 : vector<2x128xf32>
    %cst_64 = arith.constant 1.000000e+00 : f32
    %225 = vector.broadcast %cst_64 : f32 to vector<2x128xf32>
    %226 = arith.addf %225, %224 : vector<2x128xf32>
    %227 = arith.divf %225, %226 : vector<2x128xf32>
    %228 = vector.extract_strided_slice %215 {offsets = [0, 256], sizes = [2, 128], strides = [1, 1]} : vector<2x512xf32> to vector<2x128xf32>
    %229 = math.tanh %228 : vector<2x128xf32>
    %230 = vector.extract_strided_slice %215 {offsets = [0, 384], sizes = [2, 128], strides = [1, 1]} : vector<2x512xf32> to vector<2x128xf32>
    %231 = arith.negf %230 : vector<2x128xf32>
    %232 = math.exp %231 : vector<2x128xf32>
    %cst_65 = arith.constant 1.000000e+00 : f32
    %233 = vector.broadcast %cst_65 : f32 to vector<2x128xf32>
    %234 = arith.addf %233, %232 : vector<2x128xf32>
    %235 = arith.divf %233, %234 : vector<2x128xf32>
    %236 = arith.mulf %227, %207 : vector<2x128xf32>
    %237 = arith.mulf %221, %229 : vector<2x128xf32>
    %238 = arith.addf %236, %237 : vector<2x128xf32>
    %239 = math.tanh %238 : vector<2x128xf32>
    %240 = arith.mulf %235, %239 : vector<2x128xf32>
    %c0_66 = arith.constant 0 : index
    %c0_67 = arith.constant 0 : index
    %241 = vector.load %arg9[%c0_66, %c0_67] : memref<8x128xf32, #tpu.memory_space<vmem>>, vector<2x128xf32>
    tpu.vector_store %arg9[%c0_66, %c0_67], %240 {strides = array<i32>} : memref<8x128xf32, #tpu.memory_space<vmem>>, vector<2x128xf32>,
    %242 = vector.extract_strided_slice %205 {offsets = [2, 0], sizes = [2, 512], strides = [1, 1]} : vector<8x512xf32> to vector<2x512xf32>
    %243 = arith.truncf %240 : vector<2x128xf32> to vector<2x128xbf16>
    %c0_68 = arith.constant 0 : index
    %c0_69 = arith.constant 0 : index
    %244 = vector.load %arg5[%c0_68, %c0_69] : memref<128x512xbf16, #tpu.memory_space<vmem>>, vector<128x512xbf16>
    %cst_70 = arith.constant dense<0.000000e+00> : vector<2x512xf32>
    %245 = tpu.matmul %243, %244, %cst_70 {dimension_numbers = #tpu.dot_dimension_numbers<[1], [0], [0], [1], [0, 0, 1, 1], [], []>} : vector<2x128xbf16>, vector<128x512xbf16>, vector<2x512xf32> -> vector<2x512xf32>
    %246 = arith.addf %242, %245 : vector<2x512xf32>
    %c0_71 = arith.constant 0 : index
    %c0_72 = arith.constant 0 : index
    %247 = vector.load %arg6[%c0_71, %c0_72] : memref<1x512xf32, #tpu.memory_space<vmem>>, vector<1x512xf32>
    %248 = vector.broadcast %247 : vector<1x512xf32> to vector<2x512xf32>
    %249 = arith.addf %246, %248 : vector<2x512xf32>
    %250 = vector.extract_strided_slice %249 {offsets = [0, 0], sizes = [2, 128], strides = [1, 1]} : vector<2x512xf32> to vector<2x128xf32>
    %251 = arith.negf %250 : vector<2x128xf32>
    %252 = math.exp %251 : vector<2x128xf32>
    %cst_73 = arith.constant 1.000000e+00 : f32
    %253 = vector.broadcast %cst_73 : f32 to vector<2x128xf32>
    %254 = arith.addf %253, %252 : vector<2x128xf32>
    %255 = arith.divf %253, %254 : vector<2x128xf32>
    %256 = vector.extract_strided_slice %249 {offsets = [0, 128], sizes = [2, 128], strides = [1, 1]} : vector<2x512xf32> to vector<2x128xf32>
    %257 = arith.negf %256 : vector<2x128xf32>
    %258 = math.exp %257 : vector<2x128xf32>
    %cst_74 = arith.constant 1.000000e+00 : f32
    %259 = vector.broadcast %cst_74 : f32 to vector<2x128xf32>
    %260 = arith.addf %259, %258 : vector<2x128xf32>
    %261 = arith.divf %259, %260 : vector<2x128xf32>
    %262 = vector.extract_strided_slice %249 {offsets = [0, 256], sizes = [2, 128], strides = [1, 1]} : vector<2x512xf32> to vector<2x128xf32>
    %263 = math.tanh %262 : vector<2x128xf32>
    %264 = vector.extract_strided_slice %249 {offsets = [0, 384], sizes = [2, 128], strides = [1, 1]} : vector<2x512xf32> to vector<2x128xf32>
    %265 = arith.negf %264 : vector<2x128xf32>
    %266 = math.exp %265 : vector<2x128xf32>
    %cst_75 = arith.constant 1.000000e+00 : f32
    %267 = vector.broadcast %cst_75 : f32 to vector<2x128xf32>
    %268 = arith.addf %267, %266 : vector<2x128xf32>
    %269 = arith.divf %267, %268 : vector<2x128xf32>
    %270 = arith.mulf %261, %238 : vector<2x128xf32>
    %271 = arith.mulf %255, %263 : vector<2x128xf32>
    %272 = arith.addf %270, %271 : vector<2x128xf32>
    %273 = math.tanh %272 : vector<2x128xf32>
    %274 = arith.mulf %269, %273 : vector<2x128xf32>
    %c2 = arith.constant 2 : index
    %c0_76 = arith.constant 0 : index
    %275 = vector.load %arg9[%c2, %c0_76] : memref<8x128xf32, #tpu.memory_space<vmem>>, vector<2x128xf32>
    tpu.vector_store %arg9[%c2, %c0_76], %274 {strides = array<i32>} : memref<8x128xf32, #tpu.memory_space<vmem>>, vector<2x128xf32>,
    %276 = vector.extract_strided_slice %205 {offsets = [4, 0], sizes = [2, 512], strides = [1, 1]} : vector<8x512xf32> to vector<2x512xf32>
    %277 = arith.truncf %274 : vector<2x128xf32> to vector<2x128xbf16>
    %c0_77 = arith.constant 0 : index
    %c0_78 = arith.constant 0 : index
    %278 = vector.load %arg5[%c0_77, %c0_78] : memref<128x512xbf16, #tpu.memory_space<vmem>>, vector<128x512xbf16>
    %cst_79 = arith.constant dense<0.000000e+00> : vector<2x512xf32>
    %279 = tpu.matmul %277, %278, %cst_79 {dimension_numbers = #tpu.dot_dimension_numbers<[1], [0], [0], [1], [0, 0, 1, 1], [], []>} : vector<2x128xbf16>, vector<128x512xbf16>, vector<2x512xf32> -> vector<2x512xf32>
    %280 = arith.addf %276, %279 : vector<2x512xf32>
    %c0_80 = arith.constant 0 : index
    %c0_81 = arith.constant 0 : index
    %281 = vector.load %arg6[%c0_80, %c0_81] : memref<1x512xf32, #tpu.memory_space<vmem>>, vector<1x512xf32>
    %282 = vector.broadcast %281 : vector<1x512xf32> to vector<2x512xf32>
    %283 = arith.addf %280, %282 : vector<2x512xf32>
    %284 = vector.extract_strided_slice %283 {offsets = [0, 0], sizes = [2, 128], strides = [1, 1]} : vector<2x512xf32> to vector<2x128xf32>
    %285 = arith.negf %284 : vector<2x128xf32>
    %286 = math.exp %285 : vector<2x128xf32>
    %cst_82 = arith.constant 1.000000e+00 : f32
    %287 = vector.broadcast %cst_82 : f32 to vector<2x128xf32>
    %288 = arith.addf %287, %286 : vector<2x128xf32>
    %289 = arith.divf %287, %288 : vector<2x128xf32>
    %290 = vector.extract_strided_slice %283 {offsets = [0, 128], sizes = [2, 128], strides = [1, 1]} : vector<2x512xf32> to vector<2x128xf32>
    %291 = arith.negf %290 : vector<2x128xf32>
    %292 = math.exp %291 : vector<2x128xf32>
    %cst_83 = arith.constant 1.000000e+00 : f32
    %293 = vector.broadcast %cst_83 : f32 to vector<2x128xf32>
    %294 = arith.addf %293, %292 : vector<2x128xf32>
    %295 = arith.divf %293, %294 : vector<2x128xf32>
    %296 = vector.extract_strided_slice %283 {offsets = [0, 256], sizes = [2, 128], strides = [1, 1]} : vector<2x512xf32> to vector<2x128xf32>
    %297 = math.tanh %296 : vector<2x128xf32>
    %298 = vector.extract_strided_slice %283 {offsets = [0, 384], sizes = [2, 128], strides = [1, 1]} : vector<2x512xf32> to vector<2x128xf32>
    %299 = arith.negf %298 : vector<2x128xf32>
    %300 = math.exp %299 : vector<2x128xf32>
    %cst_84 = arith.constant 1.000000e+00 : f32
    %301 = vector.broadcast %cst_84 : f32 to vector<2x128xf32>
    %302 = arith.addf %301, %300 : vector<2x128xf32>
    %303 = arith.divf %301, %302 : vector<2x128xf32>
    %304 = arith.mulf %295, %272 : vector<2x128xf32>
    %305 = arith.mulf %289, %297 : vector<2x128xf32>
    %306 = arith.addf %304, %305 : vector<2x128xf32>
    %307 = math.tanh %306 : vector<2x128xf32>
    %308 = arith.mulf %303, %307 : vector<2x128xf32>
    %c4 = arith.constant 4 : index
    %c0_85 = arith.constant 0 : index
    %309 = vector.load %arg9[%c4, %c0_85] : memref<8x128xf32, #tpu.memory_space<vmem>>, vector<2x128xf32>
    tpu.vector_store %arg9[%c4, %c0_85], %308 {strides = array<i32>} : memref<8x128xf32, #tpu.memory_space<vmem>>, vector<2x128xf32>,
    %310 = vector.extract_strided_slice %205 {offsets = [6, 0], sizes = [2, 512], strides = [1, 1]} : vector<8x512xf32> to vector<2x512xf32>
    %311 = arith.truncf %308 : vector<2x128xf32> to vector<2x128xbf16>
    %c0_86 = arith.constant 0 : index
    %c0_87 = arith.constant 0 : index
    %312 = vector.load %arg5[%c0_86, %c0_87] : memref<128x512xbf16, #tpu.memory_space<vmem>>, vector<128x512xbf16>
    %cst_88 = arith.constant dense<0.000000e+00> : vector<2x512xf32>
    %313 = tpu.matmul %311, %312, %cst_88 {dimension_numbers = #tpu.dot_dimension_numbers<[1], [0], [0], [1], [0, 0, 1, 1], [], []>} : vector<2x128xbf16>, vector<128x512xbf16>, vector<2x512xf32> -> vector<2x512xf32>
    %314 = arith.addf %310, %313 : vector<2x512xf32>
    %c0_89 = arith.constant 0 : index
    %c0_90 = arith.constant 0 : index
    %315 = vector.load %arg6[%c0_89, %c0_90] : memref<1x512xf32, #tpu.memory_space<vmem>>, vector<1x512xf32>
    %316 = vector.broadcast %315 : vector<1x512xf32> to vector<2x512xf32>
    %317 = arith.addf %314, %316 : vector<2x512xf32>
    %318 = vector.extract_strided_slice %317 {offsets = [0, 0], sizes = [2, 128], strides = [1, 1]} : vector<2x512xf32> to vector<2x128xf32>
    %319 = arith.negf %318 : vector<2x128xf32>
    %320 = math.exp %319 : vector<2x128xf32>
    %cst_91 = arith.constant 1.000000e+00 : f32
    %321 = vector.broadcast %cst_91 : f32 to vector<2x128xf32>
    %322 = arith.addf %321, %320 : vector<2x128xf32>
    %323 = arith.divf %321, %322 : vector<2x128xf32>
    %324 = vector.extract_strided_slice %317 {offsets = [0, 128], sizes = [2, 128], strides = [1, 1]} : vector<2x512xf32> to vector<2x128xf32>
    %325 = arith.negf %324 : vector<2x128xf32>
    %326 = math.exp %325 : vector<2x128xf32>
    %cst_92 = arith.constant 1.000000e+00 : f32
    %327 = vector.broadcast %cst_92 : f32 to vector<2x128xf32>
    %328 = arith.addf %327, %326 : vector<2x128xf32>
    %329 = arith.divf %327, %328 : vector<2x128xf32>
    %330 = vector.extract_strided_slice %317 {offsets = [0, 256], sizes = [2, 128], strides = [1, 1]} : vector<2x512xf32> to vector<2x128xf32>
    %331 = math.tanh %330 : vector<2x128xf32>
    %332 = vector.extract_strided_slice %317 {offsets = [0, 384], sizes = [2, 128], strides = [1, 1]} : vector<2x512xf32> to vector<2x128xf32>
    %333 = arith.negf %332 : vector<2x128xf32>
    %334 = math.exp %333 : vector<2x128xf32>
    %cst_93 = arith.constant 1.000000e+00 : f32
    %335 = vector.broadcast %cst_93 : f32 to vector<2x128xf32>
    %336 = arith.addf %335, %334 : vector<2x128xf32>
    %337 = arith.divf %335, %336 : vector<2x128xf32>
    %338 = arith.mulf %329, %306 : vector<2x128xf32>
    %339 = arith.mulf %323, %331 : vector<2x128xf32>
    %340 = arith.addf %338, %339 : vector<2x128xf32>
    %341 = math.tanh %340 : vector<2x128xf32>
    %342 = arith.mulf %337, %341 : vector<2x128xf32>
    %c6 = arith.constant 6 : index
    %c0_94 = arith.constant 0 : index
    %343 = vector.load %arg9[%c6, %c0_94] : memref<8x128xf32, #tpu.memory_space<vmem>>, vector<2x128xf32>
    tpu.vector_store %arg9[%c6, %c0_94], %342 {strides = array<i32>} : memref<8x128xf32, #tpu.memory_space<vmem>>, vector<2x128xf32>,
    %c0_95 = arith.constant 0 : index
    %c0_96 = arith.constant 0 : index
    %344 = vector.load %arg11[%c0_95, %c0_96] : memref<2x128xf32, #tpu.memory_space<vmem>>, vector<2x128xf32>
    tpu.vector_store %arg11[%c0_95, %c0_96], %342 {strides = array<i32>} : memref<2x128xf32, #tpu.memory_space<vmem>>, vector<2x128xf32>,
    %c0_97 = arith.constant 0 : index
    %c0_98 = arith.constant 0 : index
    %345 = vector.load %arg12[%c0_97, %c0_98] : memref<2x128xf32, #tpu.memory_space<vmem>>, vector<2x128xf32>
    tpu.vector_store %arg12[%c0_97, %c0_98], %340 {strides = array<i32>} : memref<2x128xf32, #tpu.memory_space<vmem>>, vector<2x128xf32>,
    %c0_99 = arith.constant 0 : index
    %c0_100 = arith.constant 0 : index
    %346 = vector.load %arg9[%c0_99, %c0_100] : memref<8x128xf32, #tpu.memory_space<vmem>>, vector<8x128xf32>
    %347 = arith.truncf %346 : vector<8x128xf32> to vector<8x128xbf16>
    %c0_101 = arith.constant 0 : index
    %c0_102 = arith.constant 0 : index
    %348 = vector.load %arg7[%c0_101, %c0_102] : memref<128x128xbf16, #tpu.memory_space<vmem>>, vector<128x128xbf16>
    %cst_103 = arith.constant dense<0.000000e+00> : vector<8x128xf32>
    %349 = tpu.matmul %347, %348, %cst_103 {dimension_numbers = #tpu.dot_dimension_numbers<[1], [0], [0], [1], [0, 0, 1, 1], [], []>} : vector<8x128xbf16>, vector<128x128xbf16>, vector<8x128xf32> -> vector<8x128xf32>
    %c0_104 = arith.constant 0 : index
    %c0_105 = arith.constant 0 : index
    %350 = vector.load %arg8[%c0_104, %c0_105] : memref<1x128xf32, #tpu.memory_space<vmem>>, vector<1x128xf32>
    %351 = vector.broadcast %350 : vector<1x128xf32> to vector<8x128xf32>
    %352 = arith.addf %349, %351 : vector<8x128xf32>
    %c0_106 = arith.constant 0 : index
    %c0_107 = arith.constant 0 : index
    %353 = vector.load %arg10[%c0_106, %c0_107] : memref<8x128xf32, #tpu.memory_space<vmem>>, vector<8x128xf32>
    tpu.vector_store %arg10[%c0_106, %c0_107], %352 {strides = array<i32>} : memref<8x128xf32, #tpu.memory_space<vmem>>, vector<8x128xf32>,
    return
  }
}

module attributes {stable_mosaic.version = 11 : i64} {
  func.func @_decoder_kernel(%arg0: i32, %arg1: memref<1x8x32xbf16, #tpu.memory_space<vmem>>, %arg2: memref<1x8x1xi32, #tpu.memory_space<vmem>>, %arg3: memref<2x128xf32, #tpu.memory_space<vmem>>, %arg4: memref<2x128xf32, #tpu.memory_space<vmem>>, %arg5: memref<2x4x128xf32, #tpu.memory_space<vmem>>, %arg6: memref<2x4x128xf32, #tpu.memory_space<vmem>>, %arg7: memref<2x4xf32, #tpu.memory_space<vmem>>, %arg8: memref<32x512xbf16, #tpu.memory_space<vmem>>, %arg9: memref<128x512xbf16, #tpu.memory_space<vmem>>, %arg10: memref<1x512xf32, #tpu.memory_space<vmem>>, %arg11: memref<128x128xbf16, #tpu.memory_space<vmem>>, %arg12: memref<1x128xf32, #tpu.memory_space<vmem>>, %arg13: memref<256x512xbf16, #tpu.memory_space<vmem>>, %arg14: memref<1x512xf32, #tpu.memory_space<vmem>>, %arg15: memref<128x128xbf16, #tpu.memory_space<vmem>>, %arg16: memref<1x128xf32, #tpu.memory_space<vmem>>, %arg17: memref<1x128xf32, #tpu.memory_space<vmem>>, %arg18: memref<1x1xf32, #tpu.memory_space<vmem>>, %arg19: memref<256x128xbf16, #tpu.memory_space<vmem>>, %arg20: memref<1x128xf32, #tpu.memory_space<vmem>>, %arg21: memref<1x1xf32, #tpu.memory_space<vmem>>, %arg22: memref<2x128xf32, #tpu.memory_space<vmem>>, %arg23: memref<2x128xf32, #tpu.memory_space<vmem>>, %arg24: memref<2x128xf32, #tpu.memory_space<vmem>>, %arg25: memref<2x128xf32, #tpu.memory_space<vmem>>, %arg26: memref<2x4xf32, #tpu.memory_space<vmem>>) attributes {dimension_semantics = [#tpu.dimension_semantics<arbitrary>], iteration_bounds = array<i64: 2>, scalar_prefetch = 0 : i64, scratch_operands = 5 : i64, tpu.core_type = #tpu.core_type<tc>, window_params = [{transform_indices = @transform_0, window_bounds = array<i64: 1, 8, 32>}, {transform_indices = @transform_1, window_bounds = array<i64: 1, 8, 1>}, {pipeline_mode = #tpu.pipeline_mode<synchronous>, transform_indices = @transform_2, window_bounds = array<i64: 2, 128>}, {pipeline_mode = #tpu.pipeline_mode<synchronous>, transform_indices = @transform_3, window_bounds = array<i64: 2, 128>}, {pipeline_mode = #tpu.pipeline_mode<synchronous>, transform_indices = @transform_4, window_bounds = array<i64: 2, 4, 128>}, {pipeline_mode = #tpu.pipeline_mode<synchronous>, transform_indices = @transform_5, window_bounds = array<i64: 2, 4, 128>}, {pipeline_mode = #tpu.pipeline_mode<synchronous>, transform_indices = @transform_6, window_bounds = array<i64: 2, 4>}, {pipeline_mode = #tpu.pipeline_mode<synchronous>, transform_indices = @transform_7, window_bounds = array<i64: 32, 512>}, {pipeline_mode = #tpu.pipeline_mode<synchronous>, transform_indices = @transform_8, window_bounds = array<i64: 128, 512>}, {pipeline_mode = #tpu.pipeline_mode<synchronous>, transform_indices = @transform_9, window_bounds = array<i64: 1, 512>}, {pipeline_mode = #tpu.pipeline_mode<synchronous>, transform_indices = @transform_10, window_bounds = array<i64: 128, 128>}, {pipeline_mode = #tpu.pipeline_mode<synchronous>, transform_indices = @transform_11, window_bounds = array<i64: 1, 128>}, {pipeline_mode = #tpu.pipeline_mode<synchronous>, transform_indices = @transform_12, window_bounds = array<i64: 256, 512>}, {pipeline_mode = #tpu.pipeline_mode<synchronous>, transform_indices = @transform_13, window_bounds = array<i64: 1, 512>}, {pipeline_mode = #tpu.pipeline_mode<synchronous>, transform_indices = @transform_14, window_bounds = array<i64: 128, 128>}, {pipeline_mode = #tpu.pipeline_mode<synchronous>, transform_indices = @transform_15, window_bounds = array<i64: 1, 128>}, {pipeline_mode = #tpu.pipeline_mode<synchronous>, transform_indices = @transform_16, window_bounds = array<i64: 1, 128>}, {pipeline_mode = #tpu.pipeline_mode<synchronous>, transform_indices = @transform_17, window_bounds = array<i64: 1, 1>}, {pipeline_mode = #tpu.pipeline_mode<synchronous>, transform_indices = @transform_18, window_bounds = array<i64: 256, 128>}, {pipeline_mode = #tpu.pipeline_mode<synchronous>, transform_indices = @transform_19, window_bounds = array<i64: 1, 128>}, {pipeline_mode = #tpu.pipeline_mode<synchronous>, transform_indices = @transform_20, window_bounds = array<i64: 1, 1>}]} {
    %c0_i32 = arith.constant 0 : i32
    %0 = arith.cmpi eq, %arg0, %c0_i32 : i32
    %1 = arith.extui %0 : i1 to i32
    %c0_i32_0 = arith.constant 0 : i32
    %2 = arith.cmpi ne, %1, %c0_i32_0 : i32
    scf.if %2 {
      %c0_163 = arith.constant 0 : index
      %c0_164 = arith.constant 0 : index
      %398 = vector.load %arg3[%c0_163, %c0_164] : memref<2x128xf32, #tpu.memory_space<vmem>>, vector<2x128xf32>
      %c0_165 = arith.constant 0 : index
      %c0_166 = arith.constant 0 : index
      %399 = vector.load %arg22[%c0_165, %c0_166] : memref<2x128xf32, #tpu.memory_space<vmem>>, vector<2x128xf32>
      tpu.vector_store %arg22[%c0_165, %c0_166], %398 {strides = array<i32>} : memref<2x128xf32, #tpu.memory_space<vmem>>, vector<2x128xf32>,
      %c0_167 = arith.constant 0 : index
      %c0_168 = arith.constant 0 : index
      %400 = vector.load %arg4[%c0_167, %c0_168] : memref<2x128xf32, #tpu.memory_space<vmem>>, vector<2x128xf32>
      %c0_169 = arith.constant 0 : index
      %c0_170 = arith.constant 0 : index
      %401 = vector.load %arg23[%c0_169, %c0_170] : memref<2x128xf32, #tpu.memory_space<vmem>>, vector<2x128xf32>
      tpu.vector_store %arg23[%c0_169, %c0_170], %400 {strides = array<i32>} : memref<2x128xf32, #tpu.memory_space<vmem>>, vector<2x128xf32>,
      %c0_171 = arith.constant 0 : index
      %c0_172 = arith.constant 0 : index
      %402 = vector.load %arg3[%c0_171, %c0_172] : memref<2x128xf32, #tpu.memory_space<vmem>>, vector<2x128xf32>
      %c0_173 = arith.constant 0 : index
      %c0_174 = arith.constant 0 : index
      %403 = vector.load %arg24[%c0_173, %c0_174] : memref<2x128xf32, #tpu.memory_space<vmem>>, vector<2x128xf32>
      tpu.vector_store %arg24[%c0_173, %c0_174], %402 {strides = array<i32>} : memref<2x128xf32, #tpu.memory_space<vmem>>, vector<2x128xf32>,
      %c0_175 = arith.constant 0 : index
      %c0_176 = arith.constant 0 : index
      %404 = vector.load %arg4[%c0_175, %c0_176] : memref<2x128xf32, #tpu.memory_space<vmem>>, vector<2x128xf32>
      %c0_177 = arith.constant 0 : index
      %c0_178 = arith.constant 0 : index
      %405 = vector.load %arg25[%c0_177, %c0_178] : memref<2x128xf32, #tpu.memory_space<vmem>>, vector<2x128xf32>
      tpu.vector_store %arg25[%c0_177, %c0_178], %404 {strides = array<i32>} : memref<2x128xf32, #tpu.memory_space<vmem>>, vector<2x128xf32>,
      %cst_179 = arith.constant 0.000000e+00 : f32
      %406 = vector.broadcast %cst_179 : f32 to vector<2x4xf32>
      %c0_180 = arith.constant 0 : index
      %c0_181 = arith.constant 0 : index
      %407 = vector.load %arg26[%c0_180, %c0_181] : memref<2x4xf32, #tpu.memory_space<vmem>>, vector<2x4xf32>
      tpu.vector_store %arg26[%c0_180, %c0_181], %406 {strides = array<i32>} : memref<2x4xf32, #tpu.memory_space<vmem>>, vector<2x4xf32>,
      %cst_182 = arith.constant 0.000000e+00 : f32
      %408 = vector.broadcast %cst_182 : f32 to vector<1x1xf32>
      %c0_183 = arith.constant 0 : index
      %c0_184 = arith.constant 0 : index
      %409 = vector.load %arg21[%c0_183, %c0_184] : memref<1x1xf32, #tpu.memory_space<vmem>>, vector<1x1xf32>
      tpu.vector_store %arg21[%c0_183, %c0_184], %408 {strides = array<i32>} : memref<1x1xf32, #tpu.memory_space<vmem>>, vector<1x1xf32>,
    } else {
    }
    %c0 = arith.constant 0 : index
    %c0_1 = arith.constant 0 : index
    %c0_2 = arith.constant 0 : index
    %3 = vector.load %arg1[%c0, %c0_1, %c0_2] : memref<1x8x32xbf16, #tpu.memory_space<vmem>>, vector<1x8x32xbf16>
    %4 = vector.shape_cast %3 : vector<1x8x32xbf16> to vector<8x32xbf16>
    %c0_3 = arith.constant 0 : index
    %c0_4 = arith.constant 0 : index
    %5 = vector.load %arg8[%c0_3, %c0_4] : memref<32x512xbf16, #tpu.memory_space<vmem>>, vector<32x512xbf16>
    %cst = arith.constant dense<0.000000e+00> : vector<8x512xf32>
    %6 = tpu.matmul %4, %5, %cst {dimension_numbers = #tpu.dot_dimension_numbers<[1], [0], [0], [1], [0, 0, 1, 1], [], []>} : vector<8x32xbf16>, vector<32x512xbf16>, vector<8x512xf32> -> vector<8x512xf32>
    %c0_5 = arith.constant 0 : index
    %c0_6 = arith.constant 0 : index
    %7 = vector.load %arg22[%c0_5, %c0_6] : memref<2x128xf32, #tpu.memory_space<vmem>>, vector<2x128xf32>
    %c0_7 = arith.constant 0 : index
    %c0_8 = arith.constant 0 : index
    %8 = vector.load %arg23[%c0_7, %c0_8] : memref<2x128xf32, #tpu.memory_space<vmem>>, vector<2x128xf32>
    %cst_9 = arith.constant 0.000000e+00 : f32
    %9 = vector.broadcast %cst_9 : f32 to vector<1x1xf32>
    %10 = vector.extract_strided_slice %6 {offsets = [0, 0], sizes = [2, 512], strides = [1, 1]} : vector<8x512xf32> to vector<2x512xf32>
    %11 = arith.truncf %7 : vector<2x128xf32> to vector<2x128xbf16>
    %c0_10 = arith.constant 0 : index
    %c0_11 = arith.constant 0 : index
    %12 = vector.load %arg9[%c0_10, %c0_11] : memref<128x512xbf16, #tpu.memory_space<vmem>>, vector<128x512xbf16>
    %cst_12 = arith.constant dense<0.000000e+00> : vector<2x512xf32>
    %13 = tpu.matmul %11, %12, %cst_12 {dimension_numbers = #tpu.dot_dimension_numbers<[1], [0], [0], [1], [0, 0, 1, 1], [], []>} : vector<2x128xbf16>, vector<128x512xbf16>, vector<2x512xf32> -> vector<2x512xf32>
    %14 = arith.addf %10, %13 : vector<2x512xf32>
    %c0_13 = arith.constant 0 : index
    %c0_14 = arith.constant 0 : index
    %15 = vector.load %arg10[%c0_13, %c0_14] : memref<1x512xf32, #tpu.memory_space<vmem>>, vector<1x512xf32>
    %16 = vector.broadcast %15 : vector<1x512xf32> to vector<2x512xf32>
    %17 = arith.addf %14, %16 : vector<2x512xf32>
    %18 = vector.extract_strided_slice %17 {offsets = [0, 0], sizes = [2, 128], strides = [1, 1]} : vector<2x512xf32> to vector<2x128xf32>
    %19 = arith.negf %18 : vector<2x128xf32>
    %20 = math.exp %19 : vector<2x128xf32>
    %cst_15 = arith.constant 1.000000e+00 : f32
    %21 = vector.broadcast %cst_15 : f32 to vector<2x128xf32>
    %22 = arith.addf %21, %20 : vector<2x128xf32>
    %23 = arith.divf %21, %22 : vector<2x128xf32>
    %24 = vector.extract_strided_slice %17 {offsets = [0, 128], sizes = [2, 128], strides = [1, 1]} : vector<2x512xf32> to vector<2x128xf32>
    %25 = arith.negf %24 : vector<2x128xf32>
    %26 = math.exp %25 : vector<2x128xf32>
    %cst_16 = arith.constant 1.000000e+00 : f32
    %27 = vector.broadcast %cst_16 : f32 to vector<2x128xf32>
    %28 = arith.addf %27, %26 : vector<2x128xf32>
    %29 = arith.divf %27, %28 : vector<2x128xf32>
    %30 = vector.extract_strided_slice %17 {offsets = [0, 256], sizes = [2, 128], strides = [1, 1]} : vector<2x512xf32> to vector<2x128xf32>
    %31 = math.tanh %30 : vector<2x128xf32>
    %32 = vector.extract_strided_slice %17 {offsets = [0, 384], sizes = [2, 128], strides = [1, 1]} : vector<2x512xf32> to vector<2x128xf32>
    %33 = arith.negf %32 : vector<2x128xf32>
    %34 = math.exp %33 : vector<2x128xf32>
    %cst_17 = arith.constant 1.000000e+00 : f32
    %35 = vector.broadcast %cst_17 : f32 to vector<2x128xf32>
    %36 = arith.addf %35, %34 : vector<2x128xf32>
    %37 = arith.divf %35, %36 : vector<2x128xf32>
    %38 = arith.mulf %29, %8 : vector<2x128xf32>
    %39 = arith.mulf %23, %31 : vector<2x128xf32>
    %40 = arith.addf %38, %39 : vector<2x128xf32>
    %41 = math.tanh %40 : vector<2x128xf32>
    %42 = arith.mulf %37, %41 : vector<2x128xf32>
    %43 = arith.truncf %42 : vector<2x128xf32> to vector<2x128xbf16>
    %c0_18 = arith.constant 0 : index
    %c0_19 = arith.constant 0 : index
    %44 = vector.load %arg11[%c0_18, %c0_19] : memref<128x128xbf16, #tpu.memory_space<vmem>>, vector<128x128xbf16>
    %cst_20 = arith.constant dense<0.000000e+00> : vector<2x128xf32>
    %45 = tpu.matmul %43, %44, %cst_20 {dimension_numbers = #tpu.dot_dimension_numbers<[1], [0], [0], [1], [0, 0, 1, 1], [], []>} : vector<2x128xbf16>, vector<128x128xbf16>, vector<2x128xf32> -> vector<2x128xf32>
    %c0_21 = arith.constant 0 : index
    %c0_22 = arith.constant 0 : index
    %46 = vector.load %arg12[%c0_21, %c0_22] : memref<1x128xf32, #tpu.memory_space<vmem>>, vector<1x128xf32>
    %47 = vector.broadcast %46 : vector<1x128xf32> to vector<2x128xf32>
    %48 = arith.addf %45, %47 : vector<2x128xf32>
    %c0_23 = arith.constant 0 : index
    %c0_24 = arith.constant 0 : index
    %c0_25 = arith.constant 0 : index
    %49 = vector.load %arg2[%c0_23, %c0_24, %c0_25] : memref<1x8x1xi32, #tpu.memory_space<vmem>>, vector<1x2x1xi32>
    %50 = vector.shape_cast %49 : vector<1x2x1xi32> to vector<2x1xi32>
    %cst_26 = arith.constant dense<0xFF800000> : vector<2xf32>
    %51 = vector.multi_reduction <maximumf>, %48, %cst_26 [1] : vector<2x128xf32> to vector<2xf32>
    %52 = vector.shape_cast %51 : vector<2xf32> to vector<2x1xf32>
    %53 = vector.broadcast %52 : vector<2x1xf32> to vector<2x128xf32>
    %54 = arith.subf %48, %53 : vector<2x128xf32>
    %55 = math.exp %54 : vector<2x128xf32>
    %cst_27 = arith.constant dense<0.000000e+00> : vector<2xf32>
    %56 = vector.multi_reduction <add>, %55, %cst_27 [1] : vector<2x128xf32> to vector<2xf32>
    %57 = vector.shape_cast %56 : vector<2xf32> to vector<2x1xf32>
    %58 = math.log %57 : vector<2x1xf32>
    %59 = arith.addf %52, %58 : vector<2x1xf32>
    %60 = tpu.iota {dimensions = array<i32: 1>} : vector<2x128xi32>
    %61 = vector.broadcast %50 : vector<2x1xi32> to vector<2x128xi32>
    %62 = arith.cmpi eq, %60, %61 : vector<2x128xi32>
    %cst_28 = arith.constant 0.000000e+00 : f32
    %63 = vector.broadcast %cst_28 : f32 to vector<2x128xf32>
    %64 = arith.select %62, %48, %63 : vector<2x128xi1>, vector<2x128xf32>
    %cst_29 = arith.constant dense<0.000000e+00> : vector<2xf32>
    %65 = vector.multi_reduction <add>, %64, %cst_29 [1] : vector<2x128xf32> to vector<2xf32>
    %66 = vector.shape_cast %65 : vector<2xf32> to vector<2x1xf32>
    %c0_i32_30 = arith.constant 0 : i32
    %67 = vector.broadcast %c0_i32_30 : i32 to vector<2x1xi32>
    %68 = arith.cmpi ne, %50, %67 : vector<2x1xi32>
    %69 = arith.extui %68 : vector<2x1xi1> to vector<2x1xi32>
    %70 = arith.sitofp %69 : vector<2x1xi32> to vector<2x1xf32>
    %71 = arith.subf %59, %66 : vector<2x1xf32>
    %72 = arith.mulf %71, %70 : vector<2x1xf32>
    %cst_31 = arith.constant dense<0.000000e+00> : vector<1xf32>
    %73 = vector.multi_reduction <add>, %72, %cst_31 [0] : vector<2x1xf32> to vector<1xf32>
    %74 = vector.shape_cast %73 : vector<1xf32> to vector<1x1xf32>
    %cst_32 = arith.constant dense<0.000000e+00> : vector<1xf32>
    %75 = vector.multi_reduction <add>, %70, %cst_32 [0] : vector<2x1xf32> to vector<1xf32>
    %76 = vector.shape_cast %75 : vector<1xf32> to vector<1x1xf32>
    %cst_33 = arith.constant 1.000000e+00 : f32
    %77 = vector.broadcast %cst_33 : f32 to vector<1x1xf32>
    %78 = arith.maximumf %76, %77 : vector<1x1xf32>
    %79 = arith.divf %74, %78 : vector<1x1xf32>
    %80 = arith.addf %9, %79 : vector<1x1xf32>
    %81 = vector.extract_strided_slice %6 {offsets = [2, 0], sizes = [2, 512], strides = [1, 1]} : vector<8x512xf32> to vector<2x512xf32>
    %82 = arith.truncf %42 : vector<2x128xf32> to vector<2x128xbf16>
    %c0_34 = arith.constant 0 : index
    %c0_35 = arith.constant 0 : index
    %83 = vector.load %arg9[%c0_34, %c0_35] : memref<128x512xbf16, #tpu.memory_space<vmem>>, vector<128x512xbf16>
    %cst_36 = arith.constant dense<0.000000e+00> : vector<2x512xf32>
    %84 = tpu.matmul %82, %83, %cst_36 {dimension_numbers = #tpu.dot_dimension_numbers<[1], [0], [0], [1], [0, 0, 1, 1], [], []>} : vector<2x128xbf16>, vector<128x512xbf16>, vector<2x512xf32> -> vector<2x512xf32>
    %85 = arith.addf %81, %84 : vector<2x512xf32>
    %c0_37 = arith.constant 0 : index
    %c0_38 = arith.constant 0 : index
    %86 = vector.load %arg10[%c0_37, %c0_38] : memref<1x512xf32, #tpu.memory_space<vmem>>, vector<1x512xf32>
    %87 = vector.broadcast %86 : vector<1x512xf32> to vector<2x512xf32>
    %88 = arith.addf %85, %87 : vector<2x512xf32>
    %89 = vector.extract_strided_slice %88 {offsets = [0, 0], sizes = [2, 128], strides = [1, 1]} : vector<2x512xf32> to vector<2x128xf32>
    %90 = arith.negf %89 : vector<2x128xf32>
    %91 = math.exp %90 : vector<2x128xf32>
    %cst_39 = arith.constant 1.000000e+00 : f32
    %92 = vector.broadcast %cst_39 : f32 to vector<2x128xf32>
    %93 = arith.addf %92, %91 : vector<2x128xf32>
    %94 = arith.divf %92, %93 : vector<2x128xf32>
    %95 = vector.extract_strided_slice %88 {offsets = [0, 128], sizes = [2, 128], strides = [1, 1]} : vector<2x512xf32> to vector<2x128xf32>
    %96 = arith.negf %95 : vector<2x128xf32>
    %97 = math.exp %96 : vector<2x128xf32>
    %cst_40 = arith.constant 1.000000e+00 : f32
    %98 = vector.broadcast %cst_40 : f32 to vector<2x128xf32>
    %99 = arith.addf %98, %97 : vector<2x128xf32>
    %100 = arith.divf %98, %99 : vector<2x128xf32>
    %101 = vector.extract_strided_slice %88 {offsets = [0, 256], sizes = [2, 128], strides = [1, 1]} : vector<2x512xf32> to vector<2x128xf32>
    %102 = math.tanh %101 : vector<2x128xf32>
    %103 = vector.extract_strided_slice %88 {offsets = [0, 384], sizes = [2, 128], strides = [1, 1]} : vector<2x512xf32> to vector<2x128xf32>
    %104 = arith.negf %103 : vector<2x128xf32>
    %105 = math.exp %104 : vector<2x128xf32>
    %cst_41 = arith.constant 1.000000e+00 : f32
    %106 = vector.broadcast %cst_41 : f32 to vector<2x128xf32>
    %107 = arith.addf %106, %105 : vector<2x128xf32>
    %108 = arith.divf %106, %107 : vector<2x128xf32>
    %109 = arith.mulf %100, %40 : vector<2x128xf32>
    %110 = arith.mulf %94, %102 : vector<2x128xf32>
    %111 = arith.addf %109, %110 : vector<2x128xf32>
    %112 = math.tanh %111 : vector<2x128xf32>
    %113 = arith.mulf %108, %112 : vector<2x128xf32>
    %114 = arith.truncf %113 : vector<2x128xf32> to vector<2x128xbf16>
    %c0_42 = arith.constant 0 : index
    %c0_43 = arith.constant 0 : index
    %115 = vector.load %arg11[%c0_42, %c0_43] : memref<128x128xbf16, #tpu.memory_space<vmem>>, vector<128x128xbf16>
    %cst_44 = arith.constant dense<0.000000e+00> : vector<2x128xf32>
    %116 = tpu.matmul %114, %115, %cst_44 {dimension_numbers = #tpu.dot_dimension_numbers<[1], [0], [0], [1], [0, 0, 1, 1], [], []>} : vector<2x128xbf16>, vector<128x128xbf16>, vector<2x128xf32> -> vector<2x128xf32>
    %c0_45 = arith.constant 0 : index
    %c0_46 = arith.constant 0 : index
    %117 = vector.load %arg12[%c0_45, %c0_46] : memref<1x128xf32, #tpu.memory_space<vmem>>, vector<1x128xf32>
    %118 = vector.broadcast %117 : vector<1x128xf32> to vector<2x128xf32>
    %119 = arith.addf %116, %118 : vector<2x128xf32>
    %c0_47 = arith.constant 0 : index
    %c2 = arith.constant 2 : index
    %c0_48 = arith.constant 0 : index
    %120 = vector.load %arg2[%c0_47, %c2, %c0_48] : memref<1x8x1xi32, #tpu.memory_space<vmem>>, vector<1x2x1xi32>
    %121 = vector.shape_cast %120 : vector<1x2x1xi32> to vector<2x1xi32>
    %cst_49 = arith.constant dense<0xFF800000> : vector<2xf32>
    %122 = vector.multi_reduction <maximumf>, %119, %cst_49 [1] : vector<2x128xf32> to vector<2xf32>
    %123 = vector.shape_cast %122 : vector<2xf32> to vector<2x1xf32>
    %124 = vector.broadcast %123 : vector<2x1xf32> to vector<2x128xf32>
    %125 = arith.subf %119, %124 : vector<2x128xf32>
    %126 = math.exp %125 : vector<2x128xf32>
    %cst_50 = arith.constant dense<0.000000e+00> : vector<2xf32>
    %127 = vector.multi_reduction <add>, %126, %cst_50 [1] : vector<2x128xf32> to vector<2xf32>
    %128 = vector.shape_cast %127 : vector<2xf32> to vector<2x1xf32>
    %129 = math.log %128 : vector<2x1xf32>
    %130 = arith.addf %123, %129 : vector<2x1xf32>
    %131 = tpu.iota {dimensions = array<i32: 1>} : vector<2x128xi32>
    %132 = vector.broadcast %121 : vector<2x1xi32> to vector<2x128xi32>
    %133 = arith.cmpi eq, %131, %132 : vector<2x128xi32>
    %cst_51 = arith.constant 0.000000e+00 : f32
    %134 = vector.broadcast %cst_51 : f32 to vector<2x128xf32>
    %135 = arith.select %133, %119, %134 : vector<2x128xi1>, vector<2x128xf32>
    %cst_52 = arith.constant dense<0.000000e+00> : vector<2xf32>
    %136 = vector.multi_reduction <add>, %135, %cst_52 [1] : vector<2x128xf32> to vector<2xf32>
    %137 = vector.shape_cast %136 : vector<2xf32> to vector<2x1xf32>
    %c0_i32_53 = arith.constant 0 : i32
    %138 = vector.broadcast %c0_i32_53 : i32 to vector<2x1xi32>
    %139 = arith.cmpi ne, %121, %138 : vector<2x1xi32>
    %140 = arith.extui %139 : vector<2x1xi1> to vector<2x1xi32>
    %141 = arith.sitofp %140 : vector<2x1xi32> to vector<2x1xf32>
    %142 = arith.subf %130, %137 : vector<2x1xf32>
    %143 = arith.mulf %142, %141 : vector<2x1xf32>
    %cst_54 = arith.constant dense<0.000000e+00> : vector<1xf32>
    %144 = vector.multi_reduction <add>, %143, %cst_54 [0] : vector<2x1xf32> to vector<1xf32>
    %145 = vector.shape_cast %144 : vector<1xf32> to vector<1x1xf32>
    %cst_55 = arith.constant dense<0.000000e+00> : vector<1xf32>
    %146 = vector.multi_reduction <add>, %141, %cst_55 [0] : vector<2x1xf32> to vector<1xf32>
    %147 = vector.shape_cast %146 : vector<1xf32> to vector<1x1xf32>
    %cst_56 = arith.constant 1.000000e+00 : f32
    %148 = vector.broadcast %cst_56 : f32 to vector<1x1xf32>
    %149 = arith.maximumf %147, %148 : vector<1x1xf32>
    %150 = arith.divf %145, %149 : vector<1x1xf32>
    %151 = arith.addf %80, %150 : vector<1x1xf32>
    %152 = vector.extract_strided_slice %6 {offsets = [4, 0], sizes = [2, 512], strides = [1, 1]} : vector<8x512xf32> to vector<2x512xf32>
    %153 = arith.truncf %113 : vector<2x128xf32> to vector<2x128xbf16>
    %c0_57 = arith.constant 0 : index
    %c0_58 = arith.constant 0 : index
    %154 = vector.load %arg9[%c0_57, %c0_58] : memref<128x512xbf16, #tpu.memory_space<vmem>>, vector<128x512xbf16>
    %cst_59 = arith.constant dense<0.000000e+00> : vector<2x512xf32>
    %155 = tpu.matmul %153, %154, %cst_59 {dimension_numbers = #tpu.dot_dimension_numbers<[1], [0], [0], [1], [0, 0, 1, 1], [], []>} : vector<2x128xbf16>, vector<128x512xbf16>, vector<2x512xf32> -> vector<2x512xf32>
    %156 = arith.addf %152, %155 : vector<2x512xf32>
    %c0_60 = arith.constant 0 : index
    %c0_61 = arith.constant 0 : index
    %157 = vector.load %arg10[%c0_60, %c0_61] : memref<1x512xf32, #tpu.memory_space<vmem>>, vector<1x512xf32>
    %158 = vector.broadcast %157 : vector<1x512xf32> to vector<2x512xf32>
    %159 = arith.addf %156, %158 : vector<2x512xf32>
    %160 = vector.extract_strided_slice %159 {offsets = [0, 0], sizes = [2, 128], strides = [1, 1]} : vector<2x512xf32> to vector<2x128xf32>
    %161 = arith.negf %160 : vector<2x128xf32>
    %162 = math.exp %161 : vector<2x128xf32>
    %cst_62 = arith.constant 1.000000e+00 : f32
    %163 = vector.broadcast %cst_62 : f32 to vector<2x128xf32>
    %164 = arith.addf %163, %162 : vector<2x128xf32>
    %165 = arith.divf %163, %164 : vector<2x128xf32>
    %166 = vector.extract_strided_slice %159 {offsets = [0, 128], sizes = [2, 128], strides = [1, 1]} : vector<2x512xf32> to vector<2x128xf32>
    %167 = arith.negf %166 : vector<2x128xf32>
    %168 = math.exp %167 : vector<2x128xf32>
    %cst_63 = arith.constant 1.000000e+00 : f32
    %169 = vector.broadcast %cst_63 : f32 to vector<2x128xf32>
    %170 = arith.addf %169, %168 : vector<2x128xf32>
    %171 = arith.divf %169, %170 : vector<2x128xf32>
    %172 = vector.extract_strided_slice %159 {offsets = [0, 256], sizes = [2, 128], strides = [1, 1]} : vector<2x512xf32> to vector<2x128xf32>
    %173 = math.tanh %172 : vector<2x128xf32>
    %174 = vector.extract_strided_slice %159 {offsets = [0, 384], sizes = [2, 128], strides = [1, 1]} : vector<2x512xf32> to vector<2x128xf32>
    %175 = arith.negf %174 : vector<2x128xf32>
    %176 = math.exp %175 : vector<2x128xf32>
    %cst_64 = arith.constant 1.000000e+00 : f32
    %177 = vector.broadcast %cst_64 : f32 to vector<2x128xf32>
    %178 = arith.addf %177, %176 : vector<2x128xf32>
    %179 = arith.divf %177, %178 : vector<2x128xf32>
    %180 = arith.mulf %171, %111 : vector<2x128xf32>
    %181 = arith.mulf %165, %173 : vector<2x128xf32>
    %182 = arith.addf %180, %181 : vector<2x128xf32>
    %183 = math.tanh %182 : vector<2x128xf32>
    %184 = arith.mulf %179, %183 : vector<2x128xf32>
    %185 = arith.truncf %184 : vector<2x128xf32> to vector<2x128xbf16>
    %c0_65 = arith.constant 0 : index
    %c0_66 = arith.constant 0 : index
    %186 = vector.load %arg11[%c0_65, %c0_66] : memref<128x128xbf16, #tpu.memory_space<vmem>>, vector<128x128xbf16>
    %cst_67 = arith.constant dense<0.000000e+00> : vector<2x128xf32>
    %187 = tpu.matmul %185, %186, %cst_67 {dimension_numbers = #tpu.dot_dimension_numbers<[1], [0], [0], [1], [0, 0, 1, 1], [], []>} : vector<2x128xbf16>, vector<128x128xbf16>, vector<2x128xf32> -> vector<2x128xf32>
    %c0_68 = arith.constant 0 : index
    %c0_69 = arith.constant 0 : index
    %188 = vector.load %arg12[%c0_68, %c0_69] : memref<1x128xf32, #tpu.memory_space<vmem>>, vector<1x128xf32>
    %189 = vector.broadcast %188 : vector<1x128xf32> to vector<2x128xf32>
    %190 = arith.addf %187, %189 : vector<2x128xf32>
    %c0_70 = arith.constant 0 : index
    %c4 = arith.constant 4 : index
    %c0_71 = arith.constant 0 : index
    %191 = vector.load %arg2[%c0_70, %c4, %c0_71] : memref<1x8x1xi32, #tpu.memory_space<vmem>>, vector<1x2x1xi32>
    %192 = vector.shape_cast %191 : vector<1x2x1xi32> to vector<2x1xi32>
    %cst_72 = arith.constant dense<0xFF800000> : vector<2xf32>
    %193 = vector.multi_reduction <maximumf>, %190, %cst_72 [1] : vector<2x128xf32> to vector<2xf32>
    %194 = vector.shape_cast %193 : vector<2xf32> to vector<2x1xf32>
    %195 = vector.broadcast %194 : vector<2x1xf32> to vector<2x128xf32>
    %196 = arith.subf %190, %195 : vector<2x128xf32>
    %197 = math.exp %196 : vector<2x128xf32>
    %cst_73 = arith.constant dense<0.000000e+00> : vector<2xf32>
    %198 = vector.multi_reduction <add>, %197, %cst_73 [1] : vector<2x128xf32> to vector<2xf32>
    %199 = vector.shape_cast %198 : vector<2xf32> to vector<2x1xf32>
    %200 = math.log %199 : vector<2x1xf32>
    %201 = arith.addf %194, %200 : vector<2x1xf32>
    %202 = tpu.iota {dimensions = array<i32: 1>} : vector<2x128xi32>
    %203 = vector.broadcast %192 : vector<2x1xi32> to vector<2x128xi32>
    %204 = arith.cmpi eq, %202, %203 : vector<2x128xi32>
    %cst_74 = arith.constant 0.000000e+00 : f32
    %205 = vector.broadcast %cst_74 : f32 to vector<2x128xf32>
    %206 = arith.select %204, %190, %205 : vector<2x128xi1>, vector<2x128xf32>
    %cst_75 = arith.constant dense<0.000000e+00> : vector<2xf32>
    %207 = vector.multi_reduction <add>, %206, %cst_75 [1] : vector<2x128xf32> to vector<2xf32>
    %208 = vector.shape_cast %207 : vector<2xf32> to vector<2x1xf32>
    %c0_i32_76 = arith.constant 0 : i32
    %209 = vector.broadcast %c0_i32_76 : i32 to vector<2x1xi32>
    %210 = arith.cmpi ne, %192, %209 : vector<2x1xi32>
    %211 = arith.extui %210 : vector<2x1xi1> to vector<2x1xi32>
    %212 = arith.sitofp %211 : vector<2x1xi32> to vector<2x1xf32>
    %213 = arith.subf %201, %208 : vector<2x1xf32>
    %214 = arith.mulf %213, %212 : vector<2x1xf32>
    %cst_77 = arith.constant dense<0.000000e+00> : vector<1xf32>
    %215 = vector.multi_reduction <add>, %214, %cst_77 [0] : vector<2x1xf32> to vector<1xf32>
    %216 = vector.shape_cast %215 : vector<1xf32> to vector<1x1xf32>
    %cst_78 = arith.constant dense<0.000000e+00> : vector<1xf32>
    %217 = vector.multi_reduction <add>, %212, %cst_78 [0] : vector<2x1xf32> to vector<1xf32>
    %218 = vector.shape_cast %217 : vector<1xf32> to vector<1x1xf32>
    %cst_79 = arith.constant 1.000000e+00 : f32
    %219 = vector.broadcast %cst_79 : f32 to vector<1x1xf32>
    %220 = arith.maximumf %218, %219 : vector<1x1xf32>
    %221 = arith.divf %216, %220 : vector<1x1xf32>
    %222 = arith.addf %151, %221 : vector<1x1xf32>
    %223 = vector.extract_strided_slice %6 {offsets = [6, 0], sizes = [2, 512], strides = [1, 1]} : vector<8x512xf32> to vector<2x512xf32>
    %224 = arith.truncf %184 : vector<2x128xf32> to vector<2x128xbf16>
    %c0_80 = arith.constant 0 : index
    %c0_81 = arith.constant 0 : index
    %225 = vector.load %arg9[%c0_80, %c0_81] : memref<128x512xbf16, #tpu.memory_space<vmem>>, vector<128x512xbf16>
    %cst_82 = arith.constant dense<0.000000e+00> : vector<2x512xf32>
    %226 = tpu.matmul %224, %225, %cst_82 {dimension_numbers = #tpu.dot_dimension_numbers<[1], [0], [0], [1], [0, 0, 1, 1], [], []>} : vector<2x128xbf16>, vector<128x512xbf16>, vector<2x512xf32> -> vector<2x512xf32>
    %227 = arith.addf %223, %226 : vector<2x512xf32>
    %c0_83 = arith.constant 0 : index
    %c0_84 = arith.constant 0 : index
    %228 = vector.load %arg10[%c0_83, %c0_84] : memref<1x512xf32, #tpu.memory_space<vmem>>, vector<1x512xf32>
    %229 = vector.broadcast %228 : vector<1x512xf32> to vector<2x512xf32>
    %230 = arith.addf %227, %229 : vector<2x512xf32>
    %231 = vector.extract_strided_slice %230 {offsets = [0, 0], sizes = [2, 128], strides = [1, 1]} : vector<2x512xf32> to vector<2x128xf32>
    %232 = arith.negf %231 : vector<2x128xf32>
    %233 = math.exp %232 : vector<2x128xf32>
    %cst_85 = arith.constant 1.000000e+00 : f32
    %234 = vector.broadcast %cst_85 : f32 to vector<2x128xf32>
    %235 = arith.addf %234, %233 : vector<2x128xf32>
    %236 = arith.divf %234, %235 : vector<2x128xf32>
    %237 = vector.extract_strided_slice %230 {offsets = [0, 128], sizes = [2, 128], strides = [1, 1]} : vector<2x512xf32> to vector<2x128xf32>
    %238 = arith.negf %237 : vector<2x128xf32>
    %239 = math.exp %238 : vector<2x128xf32>
    %cst_86 = arith.constant 1.000000e+00 : f32
    %240 = vector.broadcast %cst_86 : f32 to vector<2x128xf32>
    %241 = arith.addf %240, %239 : vector<2x128xf32>
    %242 = arith.divf %240, %241 : vector<2x128xf32>
    %243 = vector.extract_strided_slice %230 {offsets = [0, 256], sizes = [2, 128], strides = [1, 1]} : vector<2x512xf32> to vector<2x128xf32>
    %244 = math.tanh %243 : vector<2x128xf32>
    %245 = vector.extract_strided_slice %230 {offsets = [0, 384], sizes = [2, 128], strides = [1, 1]} : vector<2x512xf32> to vector<2x128xf32>
    %246 = arith.negf %245 : vector<2x128xf32>
    %247 = math.exp %246 : vector<2x128xf32>
    %cst_87 = arith.constant 1.000000e+00 : f32
    %248 = vector.broadcast %cst_87 : f32 to vector<2x128xf32>
    %249 = arith.addf %248, %247 : vector<2x128xf32>
    %250 = arith.divf %248, %249 : vector<2x128xf32>
    %251 = arith.mulf %242, %182 : vector<2x128xf32>
    %252 = arith.mulf %236, %244 : vector<2x128xf32>
    %253 = arith.addf %251, %252 : vector<2x128xf32>
    %254 = math.tanh %253 : vector<2x128xf32>
    %255 = arith.mulf %250, %254 : vector<2x128xf32>
    %256 = arith.truncf %255 : vector<2x128xf32> to vector<2x128xbf16>
    %c0_88 = arith.constant 0 : index
    %c0_89 = arith.constant 0 : index
    %257 = vector.load %arg11[%c0_88, %c0_89] : memref<128x128xbf16, #tpu.memory_space<vmem>>, vector<128x128xbf16>
    %cst_90 = arith.constant dense<0.000000e+00> : vector<2x128xf32>
    %258 = tpu.matmul %256, %257, %cst_90 {dimension_numbers = #tpu.dot_dimension_numbers<[1], [0], [0], [1], [0, 0, 1, 1], [], []>} : vector<2x128xbf16>, vector<128x128xbf16>, vector<2x128xf32> -> vector<2x128xf32>
    %c0_91 = arith.constant 0 : index
    %c0_92 = arith.constant 0 : index
    %259 = vector.load %arg12[%c0_91, %c0_92] : memref<1x128xf32, #tpu.memory_space<vmem>>, vector<1x128xf32>
    %260 = vector.broadcast %259 : vector<1x128xf32> to vector<2x128xf32>
    %261 = arith.addf %258, %260 : vector<2x128xf32>
    %c0_93 = arith.constant 0 : index
    %c6 = arith.constant 6 : index
    %c0_94 = arith.constant 0 : index
    %262 = vector.load %arg2[%c0_93, %c6, %c0_94] : memref<1x8x1xi32, #tpu.memory_space<vmem>>, vector<1x2x1xi32>
    %263 = vector.shape_cast %262 : vector<1x2x1xi32> to vector<2x1xi32>
    %cst_95 = arith.constant dense<0xFF800000> : vector<2xf32>
    %264 = vector.multi_reduction <maximumf>, %261, %cst_95 [1] : vector<2x128xf32> to vector<2xf32>
    %265 = vector.shape_cast %264 : vector<2xf32> to vector<2x1xf32>
    %266 = vector.broadcast %265 : vector<2x1xf32> to vector<2x128xf32>
    %267 = arith.subf %261, %266 : vector<2x128xf32>
    %268 = math.exp %267 : vector<2x128xf32>
    %cst_96 = arith.constant dense<0.000000e+00> : vector<2xf32>
    %269 = vector.multi_reduction <add>, %268, %cst_96 [1] : vector<2x128xf32> to vector<2xf32>
    %270 = vector.shape_cast %269 : vector<2xf32> to vector<2x1xf32>
    %271 = math.log %270 : vector<2x1xf32>
    %272 = arith.addf %265, %271 : vector<2x1xf32>
    %273 = tpu.iota {dimensions = array<i32: 1>} : vector<2x128xi32>
    %274 = vector.broadcast %263 : vector<2x1xi32> to vector<2x128xi32>
    %275 = arith.cmpi eq, %273, %274 : vector<2x128xi32>
    %cst_97 = arith.constant 0.000000e+00 : f32
    %276 = vector.broadcast %cst_97 : f32 to vector<2x128xf32>
    %277 = arith.select %275, %261, %276 : vector<2x128xi1>, vector<2x128xf32>
    %cst_98 = arith.constant dense<0.000000e+00> : vector<2xf32>
    %278 = vector.multi_reduction <add>, %277, %cst_98 [1] : vector<2x128xf32> to vector<2xf32>
    %279 = vector.shape_cast %278 : vector<2xf32> to vector<2x1xf32>
    %c0_i32_99 = arith.constant 0 : i32
    %280 = vector.broadcast %c0_i32_99 : i32 to vector<2x1xi32>
    %281 = arith.cmpi ne, %263, %280 : vector<2x1xi32>
    %282 = arith.extui %281 : vector<2x1xi1> to vector<2x1xi32>
    %283 = arith.sitofp %282 : vector<2x1xi32> to vector<2x1xf32>
    %284 = arith.subf %272, %279 : vector<2x1xf32>
    %285 = arith.mulf %284, %283 : vector<2x1xf32>
    %cst_100 = arith.constant dense<0.000000e+00> : vector<1xf32>
    %286 = vector.multi_reduction <add>, %285, %cst_100 [0] : vector<2x1xf32> to vector<1xf32>
    %287 = vector.shape_cast %286 : vector<1xf32> to vector<1x1xf32>
    %cst_101 = arith.constant dense<0.000000e+00> : vector<1xf32>
    %288 = vector.multi_reduction <add>, %283, %cst_101 [0] : vector<2x1xf32> to vector<1xf32>
    %289 = vector.shape_cast %288 : vector<1xf32> to vector<1x1xf32>
    %cst_102 = arith.constant 1.000000e+00 : f32
    %290 = vector.broadcast %cst_102 : f32 to vector<1x1xf32>
    %291 = arith.maximumf %289, %290 : vector<1x1xf32>
    %292 = arith.divf %287, %291 : vector<1x1xf32>
    %293 = arith.addf %222, %292 : vector<1x1xf32>
    %c0_103 = arith.constant 0 : index
    %c0_104 = arith.constant 0 : index
    %294 = vector.load %arg23[%c0_103, %c0_104] : memref<2x128xf32, #tpu.memory_space<vmem>>, vector<2x128xf32>
    tpu.vector_store %arg23[%c0_103, %c0_104], %253 {strides = array<i32>} : memref<2x128xf32, #tpu.memory_space<vmem>>, vector<2x128xf32>,
    %c0_105 = arith.constant 0 : index
    %c0_106 = arith.constant 0 : index
    %295 = vector.load %arg24[%c0_105, %c0_106] : memref<2x128xf32, #tpu.memory_space<vmem>>, vector<2x128xf32>
    %296 = tpu.concatenate %255, %295 in 1 : vector<2x128xf32>, vector<2x128xf32> -> vector<2x256xf32>
    %297 = arith.truncf %296 : vector<2x256xf32> to vector<2x256xbf16>
    %c0_107 = arith.constant 0 : index
    %c0_108 = arith.constant 0 : index
    %298 = vector.load %arg13[%c0_107, %c0_108] : memref<256x512xbf16, #tpu.memory_space<vmem>>, vector<256x512xbf16>
    %cst_109 = arith.constant dense<0.000000e+00> : vector<2x512xf32>
    %299 = tpu.matmul %297, %298, %cst_109 {dimension_numbers = #tpu.dot_dimension_numbers<[1], [0], [0], [1], [0, 0, 1, 1], [], []>} : vector<2x256xbf16>, vector<256x512xbf16>, vector<2x512xf32> -> vector<2x512xf32>
    %c0_110 = arith.constant 0 : index
    %c0_111 = arith.constant 0 : index
    %300 = vector.load %arg14[%c0_110, %c0_111] : memref<1x512xf32, #tpu.memory_space<vmem>>, vector<1x512xf32>
    %301 = vector.broadcast %300 : vector<1x512xf32> to vector<2x512xf32>
    %302 = arith.addf %299, %301 : vector<2x512xf32>
    %c0_112 = arith.constant 0 : index
    %c0_113 = arith.constant 0 : index
    %303 = vector.load %arg25[%c0_112, %c0_113] : memref<2x128xf32, #tpu.memory_space<vmem>>, vector<2x128xf32>
    %304 = vector.extract_strided_slice %302 {offsets = [0, 0], sizes = [2, 128], strides = [1, 1]} : vector<2x512xf32> to vector<2x128xf32>
    %305 = arith.negf %304 : vector<2x128xf32>
    %306 = math.exp %305 : vector<2x128xf32>
    %cst_114 = arith.constant 1.000000e+00 : f32
    %307 = vector.broadcast %cst_114 : f32 to vector<2x128xf32>
    %308 = arith.addf %307, %306 : vector<2x128xf32>
    %309 = arith.divf %307, %308 : vector<2x128xf32>
    %310 = vector.extract_strided_slice %302 {offsets = [0, 128], sizes = [2, 128], strides = [1, 1]} : vector<2x512xf32> to vector<2x128xf32>
    %311 = arith.negf %310 : vector<2x128xf32>
    %312 = math.exp %311 : vector<2x128xf32>
    %cst_115 = arith.constant 1.000000e+00 : f32
    %313 = vector.broadcast %cst_115 : f32 to vector<2x128xf32>
    %314 = arith.addf %313, %312 : vector<2x128xf32>
    %315 = arith.divf %313, %314 : vector<2x128xf32>
    %316 = vector.extract_strided_slice %302 {offsets = [0, 256], sizes = [2, 128], strides = [1, 1]} : vector<2x512xf32> to vector<2x128xf32>
    %317 = math.tanh %316 : vector<2x128xf32>
    %318 = vector.extract_strided_slice %302 {offsets = [0, 384], sizes = [2, 128], strides = [1, 1]} : vector<2x512xf32> to vector<2x128xf32>
    %319 = arith.negf %318 : vector<2x128xf32>
    %320 = math.exp %319 : vector<2x128xf32>
    %cst_116 = arith.constant 1.000000e+00 : f32
    %321 = vector.broadcast %cst_116 : f32 to vector<2x128xf32>
    %322 = arith.addf %321, %320 : vector<2x128xf32>
    %323 = arith.divf %321, %322 : vector<2x128xf32>
    %324 = arith.mulf %315, %303 : vector<2x128xf32>
    %325 = arith.mulf %309, %317 : vector<2x128xf32>
    %326 = arith.addf %324, %325 : vector<2x128xf32>
    %327 = math.tanh %326 : vector<2x128xf32>
    %328 = arith.mulf %323, %327 : vector<2x128xf32>
    %c0_117 = arith.constant 0 : index
    %c0_118 = arith.constant 0 : index
    %329 = vector.load %arg25[%c0_117, %c0_118] : memref<2x128xf32, #tpu.memory_space<vmem>>, vector<2x128xf32>
    tpu.vector_store %arg25[%c0_117, %c0_118], %326 {strides = array<i32>} : memref<2x128xf32, #tpu.memory_space<vmem>>, vector<2x128xf32>,
    %330 = arith.truncf %328 : vector<2x128xf32> to vector<2x128xbf16>
    %c0_119 = arith.constant 0 : index
    %c0_120 = arith.constant 0 : index
    %331 = vector.load %arg15[%c0_119, %c0_120] : memref<128x128xbf16, #tpu.memory_space<vmem>>, vector<128x128xbf16>
    %cst_121 = arith.constant dense<0.000000e+00> : vector<2x128xf32>
    %332 = tpu.matmul %330, %331, %cst_121 {dimension_numbers = #tpu.dot_dimension_numbers<[1], [0], [0], [1], [0, 0, 1, 1], [], []>} : vector<2x128xbf16>, vector<128x128xbf16>, vector<2x128xf32> -> vector<2x128xf32>
    %c0_122 = arith.constant 0 : index
    %c0_123 = arith.constant 0 : index
    %333 = vector.load %arg16[%c0_122, %c0_123] : memref<1x128xf32, #tpu.memory_space<vmem>>, vector<1x128xf32>
    %334 = vector.broadcast %333 : vector<1x128xf32> to vector<2x128xf32>
    %335 = arith.addf %332, %334 : vector<2x128xf32>
    %c0_124 = arith.constant 0 : index
    %c0_125 = arith.constant 0 : index
    %336 = vector.load %arg26[%c0_124, %c0_125] : memref<2x4xf32, #tpu.memory_space<vmem>>, vector<2x4xf32>
    %c0_126 = arith.constant 0 : index
    %c0_127 = arith.constant 0 : index
    %337 = vector.load %arg18[%c0_126, %c0_127] : memref<1x1xf32, #tpu.memory_space<vmem>>, vector<1x1xf32>
    %338 = vector.broadcast %337 : vector<1x1xf32> to vector<2x4xf32>
    %339 = arith.mulf %336, %338 : vector<2x4xf32>
    %c0_128 = arith.constant 0 : index
    %c0_129 = arith.constant 0 : index
    %c0_130 = arith.constant 0 : index
    %340 = vector.load %arg6[%c0_128, %c0_129, %c0_130] : memref<2x4x128xf32, #tpu.memory_space<vmem>>, vector<2x4x128xf32>
    %341 = vector.shape_cast %335 : vector<2x128xf32> to vector<2x1x128xf32>
    %342 = vector.broadcast %341 : vector<2x1x128xf32> to vector<2x4x128xf32>
    %343 = arith.addf %340, %342 : vector<2x4x128xf32>
    %344 = vector.shape_cast %339 : vector<2x4xf32> to vector<2x4x1xf32>
    %345 = vector.broadcast %344 : vector<2x4x1xf32> to vector<2x4x128xf32>
    %346 = arith.addf %343, %345 : vector<2x4x128xf32>
    %347 = math.tanh %346 : vector<2x4x128xf32>
    %c0_131 = arith.constant 0 : index
    %c0_132 = arith.constant 0 : index
    %348 = vector.load %arg17[%c0_131, %c0_132] : memref<1x128xf32, #tpu.memory_space<vmem>>, vector<1x128xf32>
    %349 = vector.shape_cast %348 : vector<1x128xf32> to vector<1x1x128xf32>
    %350 = vector.broadcast %349 : vector<1x1x128xf32> to vector<2x4x128xf32>
    %351 = arith.mulf %347, %350 : vector<2x4x128xf32>
    %cst_133 = arith.constant dense<0.000000e+00> : vector<2x4xf32>
    %352 = vector.multi_reduction <add>, %351, %cst_133 [2] : vector<2x4x128xf32> to vector<2x4xf32>
    %c0_134 = arith.constant 0 : index
    %c0_135 = arith.constant 0 : index
    %353 = vector.load %arg7[%c0_134, %c0_135] : memref<2x4xf32, #tpu.memory_space<vmem>>, vector<2x4xf32>
    %cst_136 = arith.constant 0.000000e+00 : f32
    %354 = vector.broadcast %cst_136 : f32 to vector<2x4xf32>
    %355 = arith.cmpf ogt, %353, %354 : vector<2x4xf32>
    %cst_137 = arith.constant -1.000000e+30 : f32
    %356 = vector.broadcast %cst_137 : f32 to vector<2x4xf32>
    %357 = arith.select %355, %352, %356 : vector<2x4xi1>, vector<2x4xf32>
    %cst_138 = arith.constant dense<0xFF800000> : vector<2xf32>
    %358 = vector.multi_reduction <maximumf>, %357, %cst_138 [1] : vector<2x4xf32> to vector<2xf32>
    %359 = vector.shape_cast %358 : vector<2xf32> to vector<2x1xf32>
    %360 = vector.broadcast %359 : vector<2x1xf32> to vector<2x4xf32>
    %361 = arith.subf %357, %360 : vector<2x4xf32>
    %362 = math.exp %361 : vector<2x4xf32>
    %363 = arith.mulf %362, %353 : vector<2x4xf32>
    %cst_139 = arith.constant dense<0.000000e+00> : vector<2xf32>
    %364 = vector.multi_reduction <add>, %363, %cst_139 [1] : vector<2x4xf32> to vector<2xf32>
    %365 = vector.shape_cast %364 : vector<2xf32> to vector<2x1xf32>
    %cst_140 = arith.constant 9.99999996E-13 : f32
    %366 = vector.broadcast %cst_140 : f32 to vector<2x1xf32>
    %367 = arith.maximumf %365, %366 : vector<2x1xf32>
    %368 = vector.broadcast %367 : vector<2x1xf32> to vector<2x4xf32>
    %369 = arith.divf %363, %368 : vector<2x4xf32>
    %370 = vector.shape_cast %369 : vector<2x4xf32> to vector<2x4x1xf32>
    %c0_141 = arith.constant 0 : index
    %c0_142 = arith.constant 0 : index
    %c0_143 = arith.constant 0 : index
    %371 = vector.load %arg5[%c0_141, %c0_142, %c0_143] : memref<2x4x128xf32, #tpu.memory_space<vmem>>, vector<2x4x128xf32>
    %372 = vector.broadcast %370 : vector<2x4x1xf32> to vector<2x4x128xf32>
    %373 = arith.mulf %372, %371 : vector<2x4x128xf32>
    %cst_144 = arith.constant dense<0.000000e+00> : vector<2x128xf32>
    %374 = vector.multi_reduction <add>, %373, %cst_144 [1] : vector<2x4x128xf32> to vector<2x128xf32>
    %375 = arith.minimumf %369, %336 : vector<2x4xf32>
    %cst_145 = arith.constant dense<0.000000e+00> : vector<2xf32>
    %376 = vector.multi_reduction <add>, %375, %cst_145 [1] : vector<2x4xf32> to vector<2xf32>
    %377 = vector.shape_cast %376 : vector<2xf32> to vector<2x1xf32>
    %cst_146 = arith.constant dense<0.000000e+00> : vector<1xf32>
    %378 = vector.multi_reduction <add>, %377, %cst_146 [0] : vector<2x1xf32> to vector<1xf32>
    %379 = vector.shape_cast %378 : vector<1xf32> to vector<1x1xf32>
    %cst_147 = arith.constant 2.000000e+00 : f32
    %380 = vector.broadcast %cst_147 : f32 to vector<1x1xf32>
    %381 = arith.divf %379, %380 : vector<1x1xf32>
    %382 = arith.addf %293, %381 : vector<1x1xf32>
    %383 = arith.addf %336, %369 : vector<2x4xf32>
    %c0_148 = arith.constant 0 : index
    %c0_149 = arith.constant 0 : index
    %384 = vector.load %arg26[%c0_148, %c0_149] : memref<2x4xf32, #tpu.memory_space<vmem>>, vector<2x4xf32>
    tpu.vector_store %arg26[%c0_148, %c0_149], %383 {strides = array<i32>} : memref<2x4xf32, #tpu.memory_space<vmem>>, vector<2x4xf32>,
    %385 = tpu.concatenate %328, %374 in 1 : vector<2x128xf32>, vector<2x128xf32> -> vector<2x256xf32>
    %386 = arith.truncf %385 : vector<2x256xf32> to vector<2x256xbf16>
    %c0_150 = arith.constant 0 : index
    %c0_151 = arith.constant 0 : index
    %387 = vector.load %arg19[%c0_150, %c0_151] : memref<256x128xbf16, #tpu.memory_space<vmem>>, vector<256x128xbf16>
    %cst_152 = arith.constant dense<0.000000e+00> : vector<2x128xf32>
    %388 = tpu.matmul %386, %387, %cst_152 {dimension_numbers = #tpu.dot_dimension_numbers<[1], [0], [0], [1], [0, 0, 1, 1], [], []>} : vector<2x256xbf16>, vector<256x128xbf16>, vector<2x128xf32> -> vector<2x128xf32>
    %c0_153 = arith.constant 0 : index
    %c0_154 = arith.constant 0 : index
    %389 = vector.load %arg20[%c0_153, %c0_154] : memref<1x128xf32, #tpu.memory_space<vmem>>, vector<1x128xf32>
    %390 = vector.broadcast %389 : vector<1x128xf32> to vector<2x128xf32>
    %391 = arith.addf %388, %390 : vector<2x128xf32>
    %392 = math.tanh %391 : vector<2x128xf32>
    %c0_155 = arith.constant 0 : index
    %c0_156 = arith.constant 0 : index
    %393 = vector.load %arg24[%c0_155, %c0_156] : memref<2x128xf32, #tpu.memory_space<vmem>>, vector<2x128xf32>
    tpu.vector_store %arg24[%c0_155, %c0_156], %392 {strides = array<i32>} : memref<2x128xf32, #tpu.memory_space<vmem>>, vector<2x128xf32>,
    %c0_157 = arith.constant 0 : index
    %c0_158 = arith.constant 0 : index
    %394 = vector.load %arg22[%c0_157, %c0_158] : memref<2x128xf32, #tpu.memory_space<vmem>>, vector<2x128xf32>
    tpu.vector_store %arg22[%c0_157, %c0_158], %392 {strides = array<i32>} : memref<2x128xf32, #tpu.memory_space<vmem>>, vector<2x128xf32>,
    %c0_159 = arith.constant 0 : index
    %c0_160 = arith.constant 0 : index
    %395 = vector.load %arg21[%c0_159, %c0_160] : memref<1x1xf32, #tpu.memory_space<vmem>>, vector<1x1xf32>
    %396 = arith.addf %395, %382 : vector<1x1xf32>
    %c0_161 = arith.constant 0 : index
    %c0_162 = arith.constant 0 : index
    %397 = vector.load %arg21[%c0_161, %c0_162] : memref<1x1xf32, #tpu.memory_space<vmem>>, vector<1x1xf32>
    tpu.vector_store %arg21[%c0_161, %c0_162], %396 {strides = array<i32>} : memref<1x1xf32, #tpu.memory_space<vmem>>, vector<1x1xf32>,
    return
  }
  func.func @transform_0(%arg0: i32) -> (i32, i32, i32) {
    %c0_i32 = arith.constant 0 : i32
    %c0_i32_0 = arith.constant 0 : i32
    %c0_i32_1 = arith.constant 0 : i32
    return %arg0, %c0_i32, %c0_i32_0 : i32, i32, i32
  }
  func.func @transform_1(%arg0: i32) -> (i32, i32, i32) {
    %c0_i32 = arith.constant 0 : i32
    %c0_i32_0 = arith.constant 0 : i32
    %c0_i32_1 = arith.constant 0 : i32
    return %arg0, %c0_i32, %c0_i32_0 : i32, i32, i32
  }
  func.func @transform_2(%arg0: i32) -> (i32, i32) {
    %c0_i32 = arith.constant 0 : i32
    %c0_i32_0 = arith.constant 0 : i32
    %c0_i32_1 = arith.constant 0 : i32
    return %c0_i32, %c0_i32_0 : i32, i32
  }
  func.func @transform_3(%arg0: i32) -> (i32, i32) {
    %c0_i32 = arith.constant 0 : i32
    %c0_i32_0 = arith.constant 0 : i32
    %c0_i32_1 = arith.constant 0 : i32
    return %c0_i32, %c0_i32_0 : i32, i32
  }
  func.func @transform_4(%arg0: i32) -> (i32, i32, i32) {
    %c0_i32 = arith.constant 0 : i32
    %c0_i32_0 = arith.constant 0 : i32
    %c0_i32_1 = arith.constant 0 : i32
    %c0_i32_2 = arith.constant 0 : i32
    return %c0_i32, %c0_i32_0, %c0_i32_1 : i32, i32, i32
  }
  func.func @transform_5(%arg0: i32) -> (i32, i32, i32) {
    %c0_i32 = arith.constant 0 : i32
    %c0_i32_0 = arith.constant 0 : i32
    %c0_i32_1 = arith.constant 0 : i32
    %c0_i32_2 = arith.constant 0 : i32
    return %c0_i32, %c0_i32_0, %c0_i32_1 : i32, i32, i32
  }
  func.func @transform_6(%arg0: i32) -> (i32, i32) {
    %c0_i32 = arith.constant 0 : i32
    %c0_i32_0 = arith.constant 0 : i32
    %c0_i32_1 = arith.constant 0 : i32
    return %c0_i32, %c0_i32_0 : i32, i32
  }
  func.func @transform_7(%arg0: i32) -> (i32, i32) {
    %c0_i32 = arith.constant 0 : i32
    %c0_i32_0 = arith.constant 0 : i32
    %c0_i32_1 = arith.constant 0 : i32
    return %c0_i32, %c0_i32_0 : i32, i32
  }
  func.func @transform_8(%arg0: i32) -> (i32, i32) {
    %c0_i32 = arith.constant 0 : i32
    %c0_i32_0 = arith.constant 0 : i32
    %c0_i32_1 = arith.constant 0 : i32
    return %c0_i32, %c0_i32_0 : i32, i32
  }
  func.func @transform_9(%arg0: i32) -> (i32, i32) {
    %c0_i32 = arith.constant 0 : i32
    %c0_i32_0 = arith.constant 0 : i32
    %c0_i32_1 = arith.constant 0 : i32
    return %c0_i32, %c0_i32_0 : i32, i32
  }
  func.func @transform_10(%arg0: i32) -> (i32, i32) {
    %c0_i32 = arith.constant 0 : i32
    %c0_i32_0 = arith.constant 0 : i32
    %c0_i32_1 = arith.constant 0 : i32
    return %c0_i32, %c0_i32_0 : i32, i32
  }
  func.func @transform_11(%arg0: i32) -> (i32, i32) {
    %c0_i32 = arith.constant 0 : i32
    %c0_i32_0 = arith.constant 0 : i32
    %c0_i32_1 = arith.constant 0 : i32
    return %c0_i32, %c0_i32_0 : i32, i32
  }
  func.func @transform_12(%arg0: i32) -> (i32, i32) {
    %c0_i32 = arith.constant 0 : i32
    %c0_i32_0 = arith.constant 0 : i32
    %c0_i32_1 = arith.constant 0 : i32
    return %c0_i32, %c0_i32_0 : i32, i32
  }
  func.func @transform_13(%arg0: i32) -> (i32, i32) {
    %c0_i32 = arith.constant 0 : i32
    %c0_i32_0 = arith.constant 0 : i32
    %c0_i32_1 = arith.constant 0 : i32
    return %c0_i32, %c0_i32_0 : i32, i32
  }
  func.func @transform_14(%arg0: i32) -> (i32, i32) {
    %c0_i32 = arith.constant 0 : i32
    %c0_i32_0 = arith.constant 0 : i32
    %c0_i32_1 = arith.constant 0 : i32
    return %c0_i32, %c0_i32_0 : i32, i32
  }
  func.func @transform_15(%arg0: i32) -> (i32, i32) {
    %c0_i32 = arith.constant 0 : i32
    %c0_i32_0 = arith.constant 0 : i32
    %c0_i32_1 = arith.constant 0 : i32
    return %c0_i32, %c0_i32_0 : i32, i32
  }
  func.func @transform_16(%arg0: i32) -> (i32, i32) {
    %c0_i32 = arith.constant 0 : i32
    %c0_i32_0 = arith.constant 0 : i32
    %c0_i32_1 = arith.constant 0 : i32
    return %c0_i32, %c0_i32_0 : i32, i32
  }
  func.func @transform_17(%arg0: i32) -> (i32, i32) {
    %c0_i32 = arith.constant 0 : i32
    %c0_i32_0 = arith.constant 0 : i32
    %c0_i32_1 = arith.constant 0 : i32
    return %c0_i32, %c0_i32_0 : i32, i32
  }
  func.func @transform_18(%arg0: i32) -> (i32, i32) {
    %c0_i32 = arith.constant 0 : i32
    %c0_i32_0 = arith.constant 0 : i32
    %c0_i32_1 = arith.constant 0 : i32
    return %c0_i32, %c0_i32_0 : i32, i32
  }
  func.func @transform_19(%arg0: i32) -> (i32, i32) {
    %c0_i32 = arith.constant 0 : i32
    %c0_i32_0 = arith.constant 0 : i32
    %c0_i32_1 = arith.constant 0 : i32
    return %c0_i32, %c0_i32_0 : i32, i32
  }
  func.func @transform_20(%arg0: i32) -> (i32, i32) {
    %c0_i32 = arith.constant 0 : i32
    %c0_i32_0 = arith.constant 0 : i32
    %c0_i32_1 = arith.constant 0 : i32
    return %c0_i32, %c0_i32_0 : i32, i32
  }
}

</mosaic_0001>

<llo_original>
// kernel: hierachical_forward.3
$region0: #{hierachical_forward.3}
  #allocation0 [shape = 'u32[]', space=smem, size = 0x4, offset = 0x4, fixed_abs, tag = 'smem constant byte address 0x4 - core index']
  #allocation1 [shape = 'u32[144,128]{1,0:T(1,128)}', space=vmem, size = 0x12000, scoped, tag = 'internal scratch']
  #allocation2 [shape = 'f32[2,128]{1,0:T(2,128)}', space=vmem, size = 0x400, scoped, tag = 'scratch operand']
  #allocation3 [shape = 'f32[2,128]{1,0:T(2,128)}', space=vmem, size = 0x400, scoped, tag = 'scratch operand']
  #allocation4 [shape = 'f32[2,128]{1,0:T(2,128)}', space=vmem, size = 0x400, scoped, tag = 'scratch operand']
  #allocation5 [shape = 'f32[2,128]{1,0:T(2,128)}', space=vmem, size = 0x400, scoped, tag = 'scratch operand']
  #allocation6 [shape = 'f32[2,4]{1,0:T(2,128)}', space=vmem, size = 0x400, scoped, tag = 'scratch operand']
  #allocation7 [shape = 'f32[1,1]{1,0:T(1,128)S(1)}', space=vmem, size = 0x200, scoped, tag = 'scoped memory for hierachical_forward.3']
  %s0 = inlined_call_operand.vmem [shape: bf16[2,8,32], index: 0, kind: input, shape index: {}]
  %s1 = inlined_call_operand.vmem [shape: s32[2,8,1], index: 1, kind: input, shape index: {}]
  %s2 = inlined_call_operand.vmem [shape: f32[2,128], index: 2, kind: input, shape index: {}]
  %s3 = inlined_call_operand.vmem [shape: f32[2,128], index: 3, kind: input, shape index: {}]
  %s4 = inlined_call_operand.vmem [shape: f32[2,4,128], index: 4, kind: input, shape index: {}]
  %s5 = inlined_call_operand.vmem [shape: f32[2,4,128], index: 5, kind: input, shape index: {}]
  %s6 = inlined_call_operand.vmem [shape: f32[2,4], index: 6, kind: input, shape index: {}]
  %s7 = inlined_call_operand.vmem [shape: bf16[32,512], index: 7, kind: input, shape index: {}]
  %s8 = inlined_call_operand.vmem [shape: bf16[128,512], index: 8, kind: input, shape index: {}]
  %s9 = inlined_call_operand.vmem [shape: f32[1,512], index: 9, kind: input, shape index: {}]
  %s10 = inlined_call_operand.vmem [shape: bf16[128,128], index: 10, kind: input, shape index: {}]
  %s11 = inlined_call_operand.vmem [shape: f32[1,128], index: 11, kind: input, shape index: {}]
  %s12 = inlined_call_operand.vmem [shape: bf16[256,512], index: 12, kind: input, shape index: {}]
  %s13 = inlined_call_operand.vmem [shape: f32[1,512], index: 13, kind: input, shape index: {}]
  %s14 = inlined_call_operand.vmem [shape: bf16[128,128], index: 14, kind: input, shape index: {}]
  %s15 = inlined_call_operand.vmem [shape: f32[1,128], index: 15, kind: input, shape index: {}]
  %s16 = inlined_call_operand.vmem [shape: f32[1,128], index: 16, kind: input, shape index: {}]
  %s17 = inlined_call_operand.<no memory space> [shape: f32[1,1], index: 17, kind: input, shape index: {}]
  %s18 = inlined_call_operand.vmem [shape: bf16[256,128], index: 18, kind: input, shape index: {}]
  %s19 = inlined_call_operand.vmem [shape: f32[1,128], index: 19, kind: input, shape index: {}]
  %s20 = inlined_call_operand.hbm [shape: f32[1,1], index: 20, kind: output, shape index: {}]
  %s21 = sld [smem:[#allocation0]]
  $region117: #{hierachical_forward.3} parent=0
    _
  %s23 = ssub.s32 1, %s21
  %s24 = scalar_select 0, %s23, %s21
  %v25 = vstv %s17
  %26 = vst [vmem:[#allocation7] sm:$0x1] %v25
  $region1: #{hierachical_forward.3} parent=0
    #allocation8 [shape = 'u8[512]{0}', space=vmem, size = 0x400, scoped, tag = 'output window, operand 0, single buffered']
    #allocation9 [shape = 's32[2]{0}', space=sflag, size = 0x8, scoped, tag = 'scoped memory for hierachical_forward.3']
    %27 = vsyncpa [#allocation9], 0
    loop: start=0, step=1, limit=4
    $region2: #{hierachical_forward.3} parent=1 // loop_pre_header
      _
    $region3: #{hierachical_forward.3} parent=1 // loop_header
      %s29 = sphi 0, %s33
      %p30 = scmp.ge.s32.totalorder %s29, 4
      %s39 = sphi 0, %s41
      %s42 = sphi 0, %s39
      %s43 = sphi 0, %s42
      %s59 = sphi 0, %s43
      %s65 = sphi 0, %s67
      %s68 = sphi 0, %s65
      %s69 = sphi 0, %s68
      %s85 = sphi 0, %s69
      %s89 = sphi 0, %s89
      %s91 = sphi 0, %s89
      %s92 = sphi 0, %s91
      %s106 = sphi 0, %s92
      %s110 = sphi 0, %s110
      %s112 = sphi 0, %s110
      %s113 = sphi 0, %s112
      %s127 = sphi 0, %s113
      %s131 = sphi 0, %s131
      %s133 = sphi 0, %s131
      %s134 = sphi 0, %s133
      %s148 = sphi 0, %s134
      %s152 = sphi 0, %s152
      %s154 = sphi 0, %s152
      %s155 = sphi 0, %s154
      %s169 = sphi 0, %s155
      %s173 = sphi 0, %s173
      %s175 = sphi 0, %s173
      %s176 = sphi 0, %s175
      %s190 = sphi 0, %s176
      %s194 = sphi 0, %s194
      %s196 = sphi 0, %s194
      %s197 = sphi 0, %s196
      %s211 = sphi 0, %s197
      %s215 = sphi 0, %s215
      %s217 = sphi 0, %s215
      %s218 = sphi 0, %s217
      %s232 = sphi 0, %s218
      %s236 = sphi 0, %s236
      %s238 = sphi 0, %s236
      %s239 = sphi 0, %s238
      %s253 = sphi 0, %s239
      %s257 = sphi 0, %s257
      %s259 = sphi 0, %s257
      %s260 = sphi 0, %s259
      %s274 = sphi 0, %s260
      %s278 = sphi 0, %s278
      %s280 = sphi 0, %s278
      %s281 = sphi 0, %s280
      %s295 = sphi 0, %s281
      %s299 = sphi 0, %s299
      %s301 = sphi 0, %s299
      %s302 = sphi 0, %s301
      %s316 = sphi 0, %s302
      %s320 = sphi 0, %s320
      %s322 = sphi 0, %s320
      %s323 = sphi 0, %s322
      %s337 = sphi 0, %s323
      %s341 = sphi 0, %s341
      %s343 = sphi 0, %s341
      %s344 = sphi 0, %s343
      %s358 = sphi 0, %s344
      %s362 = sphi 0, %s362
      %s364 = sphi 0, %s362
      %s365 = sphi 0, %s364
      %s379 = sphi 0, %s365
      %s383 = sphi 0, %s383
      %s385 = sphi 0, %s383
      %s386 = sphi 0, %s385
      %s400 = sphi 0, %s386
      %s404 = sphi 0, %s404
      %s406 = sphi 0, %s404
      %s407 = sphi 0, %s406
      %s421 = sphi 0, %s407
      %s425 = sphi 0, %s425
      %s427 = sphi 0, %s425
      %s428 = sphi 0, %s427
      %s442 = sphi 0, %s428
      %s446 = sphi 0, %s446
      %s448 = sphi 0, %s446
      %s449 = sphi 0, %s448
      %s463 = sphi 0, %s449
      %s467 = sphi 0, %s467
      %s469 = sphi 0, %s467
      %s470 = sphi 0, %s469
      %s484 = sphi 0, %s470
    $region4: #{hierachical_forward.3} parent=1 // loop_header_branch
      %32 = sbr.rel (%p30) target = $region8
    $region5: #{hierachical_forward.3} parent=1 // loop_body
      %s34 = ssub.s32 %s29, 1
      %s35 = ssub.s32 %s29, 2
      %s36 = sadd.s32 %s29, 1
      %s37 = ssub.s32 %s29, %s36
      %p38 = scmp.eq.s32.totalorder %s37, 0
      %s40 = sadd.s32 %s39, 1
      %s41 = scalar_select %p38, %s39, %s40
      %p44 = pneg %p38
      %p45 = scmp.eq.s32.totalorder %s29, 1
      %p46 = por %p44, %p45
      %p47 = scmp.ne.s32.totalorder %s39, %s42
      %p48 = scmp.eq.s32.totalorder %s29, 0
      %p49 = por %p47, %p48
      %p50 = scmp.ne.s32.totalorder %s39, %s42
      %p51 = scmp.eq.s32.totalorder %s34, 1
      %p52 = por %p50, %p51
      %p53 = scmp.ne.s32.totalorder %s42, %s43
      %p54 = scmp.eq.s32.totalorder %s34, 0
      %p55 = por %p53, %p54
      %p56 = scmp.ne.s32.totalorder %s42, %s43
      %p57 = scmp.eq.s32.totalorder %s35, 1
      %p58 = por %p56, %p57
      %p60 = scmp.ne.s32.totalorder %s43, %s59
      %p61 = scmp.eq.s32.totalorder %s35, 0
      %p62 = por %p60, %p61
      %s63 = ssub.s32 %s29, %s36
      %p64 = scmp.eq.s32.totalorder %s63, 0
      %s66 = sadd.s32 %s65, 1
      %s67 = scalar_select %p64, %s65, %s66
      %p70 = pneg %p64
      %p71 = scmp.eq.s32.totalorder %s29, 1
      %p72 = por %p70, %p71
      %p73 = scmp.ne.s32.totalorder %s65, %s68
      %p74 = scmp.eq.s32.totalorder %s29, 0
      %p75 = por %p73, %p74
      %p76 = scmp.ne.s32.totalorder %s65, %s68
      %p77 = scmp.eq.s32.totalorder %s34, 1
      %p78 = por %p76, %p77
      %p79 = scmp.ne.s32.totalorder %s68, %s69
      %p80 = scmp.eq.s32.totalorder %s34, 0
      %p81 = por %p79, %p80
      %p82 = scmp.ne.s32.totalorder %s68, %s69
      %p83 = scmp.eq.s32.totalorder %s35, 1
      %p84 = por %p82, %p83
      %p86 = scmp.ne.s32.totalorder %s69, %s85
      %p87 = scmp.eq.s32.totalorder %s35, 0
      %p88 = por %p86, %p87
      %s90 = sadd.s32 %s89, 1
      %p93 = scmp.eq.s32.totalorder %s29, 1
      %p94 = scmp.ne.s32.totalorder %s89, %s91
      %p95 = scmp.eq.s32.totalorder %s29, 0
      %p96 = por %p94, %p95
      %p97 = scmp.ne.s32.totalorder %s89, %s91
      %p98 = scmp.eq.s32.totalorder %s34, 1
      %p99 = por %p97, %p98
      %p100 = scmp.ne.s32.totalorder %s91, %s92
      %p101 = scmp.eq.s32.totalorder %s34, 0
      %p102 = por %p100, %p101
      %p103 = scmp.ne.s32.totalorder %s91, %s92
      %p104 = scmp.eq.s32.totalorder %s35, 1
      %p105 = por %p103, %p104
      %p107 = scmp.ne.s32.totalorder %s92, %s106
      %p108 = scmp.eq.s32.totalorder %s35, 0
      %p109 = por %p107, %p108
      %s111 = sadd.s32 %s110, 1
      %p114 = scmp.eq.s32.totalorder %s29, 1
      %p115 = scmp.ne.s32.totalorder %s110, %s112
      %p116 = scmp.eq.s32.totalorder %s29, 0
      %p117 = por %p115, %p116
      %p118 = scmp.ne.s32.totalorder %s110, %s112
      %p119 = scmp.eq.s32.totalorder %s34, 1
      %p120 = por %p118, %p119
      %p121 = scmp.ne.s32.totalorder %s112, %s113
      %p122 = scmp.eq.s32.totalorder %s34, 0
      %p123 = por %p121, %p122
      %p124 = scmp.ne.s32.totalorder %s112, %s113
      %p125 = scmp.eq.s32.totalorder %s35, 1
      %p126 = por %p124, %p125
      %p128 = scmp.ne.s32.totalorder %s113, %s127
      %p129 = scmp.eq.s32.totalorder %s35, 0
      %p130 = por %p128, %p129
      %s132 = sadd.s32 %s131, 1
      %p135 = scmp.eq.s32.totalorder %s29, 1
      %p136 = scmp.ne.s32.totalorder %s131, %s133
      %p137 = scmp.eq.s32.totalorder %s29, 0
      %p138 = por %p136, %p137
      %p139 = scmp.ne.s32.totalorder %s131, %s133
      %p140 = scmp.eq.s32.totalorder %s34, 1
      %p141 = por %p139, %p140
      %p142 = scmp.ne.s32.totalorder %s133, %s134
      %p143 = scmp.eq.s32.totalorder %s34, 0
      %p144 = por %p142, %p143
      %p145 = scmp.ne.s32.totalorder %s133, %s134
      %p146 = scmp.eq.s32.totalorder %s35, 1
      %p147 = por %p145, %p146
      %p149 = scmp.ne.s32.totalorder %s134, %s148
      %p150 = scmp.eq.s32.totalorder %s35, 0
      %p151 = por %p149, %p150
      %s153 = sadd.s32 %s152, 1
      %p156 = scmp.eq.s32.totalorder %s29, 1
      %p157 = scmp.ne.s32.totalorder %s152, %s154
      %p158 = scmp.eq.s32.totalorder %s29, 0
      %p159 = por %p157, %p158
      %p160 = scmp.ne.s32.totalorder %s152, %s154
      %p161 = scmp.eq.s32.totalorder %s34, 1
      %p162 = por %p160, %p161
      %p163 = scmp.ne.s32.totalorder %s154, %s155
      %p164 = scmp.eq.s32.totalorder %s34, 0
      %p165 = por %p163, %p164
      %p166 = scmp.ne.s32.totalorder %s154, %s155
      %p167 = scmp.eq.s32.totalorder %s35, 1
      %p168 = por %p166, %p167
      %p170 = scmp.ne.s32.totalorder %s155, %s169
      %p171 = scmp.eq.s32.totalorder %s35, 0
      %p172 = por %p170, %p171
      %s174 = sadd.s32 %s173, 1
      %p177 = scmp.eq.s32.totalorder %s29, 1
      %p178 = scmp.ne.s32.totalorder %s173, %s175
      %p179 = scmp.eq.s32.totalorder %s29, 0
      %p180 = por %p178, %p179
      %p181 = scmp.ne.s32.totalorder %s173, %s175
      %p182 = scmp.eq.s32.totalorder %s34, 1
      %p183 = por %p181, %p182
      %p184 = scmp.ne.s32.totalorder %s175, %s176
      %p185 = scmp.eq.s32.totalorder %s34, 0
      %p186 = por %p184, %p185
      %p187 = scmp.ne.s32.totalorder %s175, %s176
      %p188 = scmp.eq.s32.totalorder %s35, 1
      %p189 = por %p187, %p188
      %p191 = scmp.ne.s32.totalorder %s176, %s190
      %p192 = scmp.eq.s32.totalorder %s35, 0
      %p193 = por %p191, %p192
      %s195 = sadd.s32 %s194, 1
      %p198 = scmp.eq.s32.totalorder %s29, 1
      %p199 = scmp.ne.s32.totalorder %s194, %s196
      %p200 = scmp.eq.s32.totalorder %s29, 0
      %p201 = por %p199, %p200
      %p202 = scmp.ne.s32.totalorder %s194, %s196
      %p203 = scmp.eq.s32.totalorder %s34, 1
      %p204 = por %p202, %p203
      %p205 = scmp.ne.s32.totalorder %s196, %s197
      %p206 = scmp.eq.s32.totalorder %s34, 0
      %p207 = por %p205, %p206
      %p208 = scmp.ne.s32.totalorder %s196, %s197
      %p209 = scmp.eq.s32.totalorder %s35, 1
      %p210 = por %p208, %p209
      %p212 = scmp.ne.s32.totalorder %s197, %s211
      %p213 = scmp.eq.s32.totalorder %s35, 0
      %p214 = por %p212, %p213
      %s216 = sadd.s32 %s215, 1
      %p219 = scmp.eq.s32.totalorder %s29, 1
      %p220 = scmp.ne.s32.totalorder %s215, %s217
      %p221 = scmp.eq.s32.totalorder %s29, 0
      %p222 = por %p220, %p221
      %p223 = scmp.ne.s32.totalorder %s215, %s217
      %p224 = scmp.eq.s32.totalorder %s34, 1
      %p225 = por %p223, %p224
      %p226 = scmp.ne.s32.totalorder %s217, %s218
      %p227 = scmp.eq.s32.totalorder %s34, 0
      %p228 = por %p226, %p227
      %p229 = scmp.ne.s32.totalorder %s217, %s218
      %p230 = scmp.eq.s32.totalorder %s35, 1
      %p231 = por %p229, %p230
      %p233 = scmp.ne.s32.totalorder %s218, %s232
      %p234 = scmp.eq.s32.totalorder %s35, 0
      %p235 = por %p233, %p234
      %s237 = sadd.s32 %s236, 1
      %p240 = scmp.eq.s32.totalorder %s29, 1
      %p241 = scmp.ne.s32.totalorder %s236, %s238
      %p242 = scmp.eq.s32.totalorder %s29, 0
      %p243 = por %p241, %p242
      %p244 = scmp.ne.s32.totalorder %s236, %s238
      %p245 = scmp.eq.s32.totalorder %s34, 1
      %p246 = por %p244, %p245
      %p247 = scmp.ne.s32.totalorder %s238, %s239
      %p248 = scmp.eq.s32.totalorder %s34, 0
      %p249 = por %p247, %p248
      %p250 = scmp.ne.s32.totalorder %s238, %s239
      %p251 = scmp.eq.s32.totalorder %s35, 1
      %p252 = por %p250, %p251
      %p254 = scmp.ne.s32.totalorder %s239, %s253
      %p255 = scmp.eq.s32.totalorder %s35, 0
      %p256 = por %p254, %p255
      %s258 = sadd.s32 %s257, 1
      %p261 = scmp.eq.s32.totalorder %s29, 1
      %p262 = scmp.ne.s32.totalorder %s257, %s259
      %p263 = scmp.eq.s32.totalorder %s29, 0
      %p264 = por %p262, %p263
      %p265 = scmp.ne.s32.totalorder %s257, %s259
      %p266 = scmp.eq.s32.totalorder %s34, 1
      %p267 = por %p265, %p266
      %p268 = scmp.ne.s32.totalorder %s259, %s260
      %p269 = scmp.eq.s32.totalorder %s34, 0
      %p270 = por %p268, %p269
      %p271 = scmp.ne.s32.totalorder %s259, %s260
      %p272 = scmp.eq.s32.totalorder %s35, 1
      %p273 = por %p271, %p272
      %p275 = scmp.ne.s32.totalorder %s260, %s274
      %p276 = scmp.eq.s32.totalorder %s35, 0
      %p277 = por %p275, %p276
      %s279 = sadd.s32 %s278, 1
      %p282 = scmp.eq.s32.totalorder %s29, 1
      %p283 = scmp.ne.s32.totalorder %s278, %s280
      %p284 = scmp.eq.s32.totalorder %s29, 0
      %p285 = por %p283, %p284
      %p286 = scmp.ne.s32.totalorder %s278, %s280
      %p287 = scmp.eq.s32.totalorder %s34, 1
      %p288 = por %p286, %p287
      %p289 = scmp.ne.s32.totalorder %s280, %s281
      %p290 = scmp.eq.s32.totalorder %s34, 0
      %p291 = por %p289, %p290
      %p292 = scmp.ne.s32.totalorder %s280, %s281
      %p293 = scmp.eq.s32.totalorder %s35, 1
      %p294 = por %p292, %p293
      %p296 = scmp.ne.s32.totalorder %s281, %s295
      %p297 = scmp.eq.s32.totalorder %s35, 0
      %p298 = por %p296, %p297
      %s300 = sadd.s32 %s299, 1
      %p303 = scmp.eq.s32.totalorder %s29, 1
      %p304 = scmp.ne.s32.totalorder %s299, %s301
      %p305 = scmp.eq.s32.totalorder %s29, 0
      %p306 = por %p304, %p305
      %p307 = scmp.ne.s32.totalorder %s299, %s301
      %p308 = scmp.eq.s32.totalorder %s34, 1
      %p309 = por %p307, %p308
      %p310 = scmp.ne.s32.totalorder %s301, %s302
      %p311 = scmp.eq.s32.totalorder %s34, 0
      %p312 = por %p310, %p311
      %p313 = scmp.ne.s32.totalorder %s301, %s302
      %p314 = scmp.eq.s32.totalorder %s35, 1
      %p315 = por %p313, %p314
      %p317 = scmp.ne.s32.totalorder %s302, %s316
      %p318 = scmp.eq.s32.totalorder %s35, 0
      %p319 = por %p317, %p318
      %s321 = sadd.s32 %s320, 1
      %p324 = scmp.eq.s32.totalorder %s29, 1
      %p325 = scmp.ne.s32.totalorder %s320, %s322
      %p326 = scmp.eq.s32.totalorder %s29, 0
      %p327 = por %p325, %p326
      %p328 = scmp.ne.s32.totalorder %s320, %s322
      %p329 = scmp.eq.s32.totalorder %s34, 1
      %p330 = por %p328, %p329
      %p331 = scmp.ne.s32.totalorder %s322, %s323
      %p332 = scmp.eq.s32.totalorder %s34, 0
      %p333 = por %p331, %p332
      %p334 = scmp.ne.s32.totalorder %s322, %s323
      %p335 = scmp.eq.s32.totalorder %s35, 1
      %p336 = por %p334, %p335
      %p338 = scmp.ne.s32.totalorder %s323, %s337
      %p339 = scmp.eq.s32.totalorder %s35, 0
      %p340 = por %p338, %p339
      %s342 = sadd.s32 %s341, 1
      %p345 = scmp.eq.s32.totalorder %s29, 1
      %p346 = scmp.ne.s32.totalorder %s341, %s343
      %p347 = scmp.eq.s32.totalorder %s29, 0
      %p348 = por %p346, %p347
      %p349 = scmp.ne.s32.totalorder %s341, %s343
      %p350 = scmp.eq.s32.totalorder %s34, 1
      %p351 = por %p349, %p350
      %p352 = scmp.ne.s32.totalorder %s343, %s344
      %p353 = scmp.eq.s32.totalorder %s34, 0
      %p354 = por %p352, %p353
      %p355 = scmp.ne.s32.totalorder %s343, %s344
      %p356 = scmp.eq.s32.totalorder %s35, 1
      %p357 = por %p355, %p356
      %p359 = scmp.ne.s32.totalorder %s344, %s358
      %p360 = scmp.eq.s32.totalorder %s35, 0
      %p361 = por %p359, %p360
      %s363 = sadd.s32 %s362, 1
      %p366 = scmp.eq.s32.totalorder %s29, 1
      %p367 = scmp.ne.s32.totalorder %s362, %s364
      %p368 = scmp.eq.s32.totalorder %s29, 0
      %p369 = por %p367, %p368
      %p370 = scmp.ne.s32.totalorder %s362, %s364
      %p371 = scmp.eq.s32.totalorder %s34, 1
      %p372 = por %p370, %p371
      %p373 = scmp.ne.s32.totalorder %s364, %s365
      %p374 = scmp.eq.s32.totalorder %s34, 0
      %p375 = por %p373, %p374
      %p376 = scmp.ne.s32.totalorder %s364, %s365
      %p377 = scmp.eq.s32.totalorder %s35, 1
      %p378 = por %p376, %p377
      %p380 = scmp.ne.s32.totalorder %s365, %s379
      %p381 = scmp.eq.s32.totalorder %s35, 0
      %p382 = por %p380, %p381
      %s384 = sadd.s32 %s383, 1
      %p387 = scmp.eq.s32.totalorder %s29, 1
      %p388 = scmp.ne.s32.totalorder %s383, %s385
      %p389 = scmp.eq.s32.totalorder %s29, 0
      %p390 = por %p388, %p389
      %p391 = scmp.ne.s32.totalorder %s383, %s385
      %p392 = scmp.eq.s32.totalorder %s34, 1
      %p393 = por %p391, %p392
      %p394 = scmp.ne.s32.totalorder %s385, %s386
      %p395 = scmp.eq.s32.totalorder %s34, 0
      %p396 = por %p394, %p395
      %p397 = scmp.ne.s32.totalorder %s385, %s386
      %p398 = scmp.eq.s32.totalorder %s35, 1
      %p399 = por %p397, %p398
      %p401 = scmp.ne.s32.totalorder %s386, %s400
      %p402 = scmp.eq.s32.totalorder %s35, 0
      %p403 = por %p401, %p402
      %s405 = sadd.s32 %s404, 1
      %p408 = scmp.eq.s32.totalorder %s29, 1
      %p409 = scmp.ne.s32.totalorder %s404, %s406
      %p410 = scmp.eq.s32.totalorder %s29, 0
      %p411 = por %p409, %p410
      %p412 = scmp.ne.s32.totalorder %s404, %s406
      %p413 = scmp.eq.s32.totalorder %s34, 1
      %p414 = por %p412, %p413
      %p415 = scmp.ne.s32.totalorder %s406, %s407
      %p416 = scmp.eq.s32.totalorder %s34, 0
      %p417 = por %p415, %p416
      %p418 = scmp.ne.s32.totalorder %s406, %s407
      %p419 = scmp.eq.s32.totalorder %s35, 1
      %p420 = por %p418, %p419
      %p422 = scmp.ne.s32.totalorder %s407, %s421
      %p423 = scmp.eq.s32.totalorder %s35, 0
      %p424 = por %p422, %p423
      %s426 = sadd.s32 %s425, 1
      %p429 = scmp.eq.s32.totalorder %s29, 1
      %p430 = scmp.ne.s32.totalorder %s425, %s427
      %p431 = scmp.eq.s32.totalorder %s29, 0
      %p432 = por %p430, %p431
      %p433 = scmp.ne.s32.totalorder %s425, %s427
      %p434 = scmp.eq.s32.totalorder %s34, 1
      %p435 = por %p433, %p434
      %p436 = scmp.ne.s32.totalorder %s427, %s428
      %p437 = scmp.eq.s32.totalorder %s34, 0
      %p438 = por %p436, %p437
      %p439 = scmp.ne.s32.totalorder %s427, %s428
      %p440 = scmp.eq.s32.totalorder %s35, 1
      %p441 = por %p439, %p440
      %p443 = scmp.ne.s32.totalorder %s428, %s442
      %p444 = scmp.eq.s32.totalorder %s35, 0
      %p445 = por %p443, %p444
      %s447 = sadd.s32 %s446, 1
      %p450 = scmp.eq.s32.totalorder %s29, 1
      %p451 = scmp.ne.s32.totalorder %s446, %s448
      %p452 = scmp.eq.s32.totalorder %s29, 0
      %p453 = por %p451, %p452
      %p454 = scmp.ne.s32.totalorder %s446, %s448
      %p455 = scmp.eq.s32.totalorder %s34, 1
      %p456 = por %p454, %p455
      %p457 = scmp.ne.s32.totalorder %s448, %s449
      %p458 = scmp.eq.s32.totalorder %s34, 0
      %p459 = por %p457, %p458
      %p460 = scmp.ne.s32.totalorder %s448, %s449
      %p461 = scmp.eq.s32.totalorder %s35, 1
      %p462 = por %p460, %p461
      %p464 = scmp.ne.s32.totalorder %s449, %s463
      %p465 = scmp.eq.s32.totalorder %s35, 0
      %p466 = por %p464, %p465
      %s468 = sadd.s32 %s467, 1
      %p471 = scmp.eq.s32.totalorder %s29, 1
      %p472 = scmp.ne.s32.totalorder %s467, %s469
      %p473 = scmp.eq.s32.totalorder %s29, 0
      %p474 = por %p472, %p473
      %p475 = scmp.ne.s32.totalorder %s467, %s469
      %p476 = scmp.eq.s32.totalorder %s34, 1
      %p477 = por %p475, %p476
      %p478 = scmp.ne.s32.totalorder %s469, %s470
      %p479 = scmp.eq.s32.totalorder %s34, 0
      %p480 = por %p478, %p479
      %p481 = scmp.ne.s32.totalorder %s469, %s470
      %p482 = scmp.eq.s32.totalorder %s35, 1
      %p483 = por %p481, %p482
      %p485 = scmp.ne.s32.totalorder %s470, %s484
      %p486 = scmp.eq.s32.totalorder %s35, 0
      %p487 = por %p485, %p486
      %p488 = scmp.le.s32.totalorder 1, %s29
      %p489 = scmp.lt.s32.totalorder %s29, 3
      %p490 = pnand %p488, %p489
      %p491 = pneg %p490
      // Predicated region
      $region9: #{hierachical_forward.3} parent=5 // pred_check
        _
      $region10: #{hierachical_forward.3} parent=5 // pred_check_branch
        %493 = sbr.rel (%p490) target = $region12
      $region11: #{hierachical_forward.3} parent=5 // pred_region
        %s494 = ssub.s32 %s29, 1
        // Predicated region
        $region13: #{hierachical_forward.3} parent=11 // pred_check
          %p495 = pneg %p102
        $region14: #{hierachical_forward.3} parent=11 // pred_check_branch
          %497 = sbr.rel (%p495) target = $region16
        $region15: #{hierachical_forward.3} parent=11 // pred_region
          _
        $region16: #{hierachical_forward.3} parent=11 // pred_fallthru
          _
        // Predicated region
        $region17: #{hierachical_forward.3} parent=11 // pred_check
          %p498 = pneg %p123
        $region18: #{hierachical_forward.3} parent=11 // pred_check_branch
          %500 = sbr.rel (%p498) target = $region20
        $region19: #{hierachical_forward.3} parent=11 // pred_region
          _
        $region20: #{hierachical_forward.3} parent=11 // pred_fallthru
          _
        // Predicated region
        $region21: #{hierachical_forward.3} parent=11 // pred_check
          %p501 = pneg %p144
        $region22: #{hierachical_forward.3} parent=11 // pred_check_branch
          %503 = sbr.rel (%p501) target = $region24
        $region23: #{hierachical_forward.3} parent=11 // pred_region
          _
        $region24: #{hierachical_forward.3} parent=11 // pred_fallthru
          _
        // Predicated region
        $region25: #{hierachical_forward.3} parent=11 // pred_check
          %p504 = pneg %p165
        $region26: #{hierachical_forward.3} parent=11 // pred_check_branch
          %506 = sbr.rel (%p504) target = $region28
        $region27: #{hierachical_forward.3} parent=11 // pred_region
          _
        $region28: #{hierachical_forward.3} parent=11 // pred_fallthru
          _
        // Predicated region
        $region29: #{hierachical_forward.3} parent=11 // pred_check
          %p507 = pneg %p186
        $region30: #{hierachical_forward.3} parent=11 // pred_check_branch
          %509 = sbr.rel (%p507) target = $region32
        $region31: #{hierachical_forward.3} parent=11 // pred_region
          _
        $region32: #{hierachical_forward.3} parent=11 // pred_fallthru
          _
        // Predicated region
        $region33: #{hierachical_forward.3} parent=11 // pred_check
          %p510 = pneg %p207
        $region34: #{hierachical_forward.3} parent=11 // pred_check_branch
          %512 = sbr.rel (%p510) target = $region36
        $region35: #{hierachical_forward.3} parent=11 // pred_region
          _
        $region36: #{hierachical_forward.3} parent=11 // pred_fallthru
          _
        // Predicated region
        $region37: #{hierachical_forward.3} parent=11 // pred_check
          %p513 = pneg %p228
        $region38: #{hierachical_forward.3} parent=11 // pred_check_branch
          %515 = sbr.rel (%p513) target = $region40
        $region39: #{hierachical_forward.3} parent=11 // pred_region
          _
        $region40: #{hierachical_forward.3} parent=11 // pred_fallthru
          _
        // Predicated region
        $region41: #{hierachical_forward.3} parent=11 // pred_check
          %p516 = pneg %p249
        $region42: #{hierachical_forward.3} parent=11 // pred_check_branch
          %518 = sbr.rel (%p516) target = $region44
        $region43: #{hierachical_forward.3} parent=11 // pred_region
          _
        $region44: #{hierachical_forward.3} parent=11 // pred_fallthru
          _
        // Predicated region
        $region45: #{hierachical_forward.3} parent=11 // pred_check
          %p519 = pneg %p270
        $region46: #{hierachical_forward.3} parent=11 // pred_check_branch
          %521 = sbr.rel (%p519) target = $region48
        $region47: #{hierachical_forward.3} parent=11 // pred_region
          _
        $region48: #{hierachical_forward.3} parent=11 // pred_fallthru
          _
        // Predicated region
        $region49: #{hierachical_forward.3} parent=11 // pred_check
          %p522 = pneg %p291
        $region50: #{hierachical_forward.3} parent=11 // pred_check_branch
          %524 = sbr.rel (%p522) target = $region52
        $region51: #{hierachical_forward.3} parent=11 // pred_region
          _
        $region52: #{hierachical_forward.3} parent=11 // pred_fallthru
          _
        // Predicated region
        $region53: #{hierachical_forward.3} parent=11 // pred_check
          %p525 = pneg %p312
        $region54: #{hierachical_forward.3} parent=11 // pred_check_branch
          %527 = sbr.rel (%p525) target = $region56
        $region55: #{hierachical_forward.3} parent=11 // pred_region
          _
        $region56: #{hierachical_forward.3} parent=11 // pred_fallthru
          _
        // Predicated region
        $region57: #{hierachical_forward.3} parent=11 // pred_check
          %p528 = pneg %p333
        $region58: #{hierachical_forward.3} parent=11 // pred_check_branch
          %530 = sbr.rel (%p528) target = $region60
        $region59: #{hierachical_forward.3} parent=11 // pred_region
          _
        $region60: #{hierachical_forward.3} parent=11 // pred_fallthru
          _
        // Predicated region
        $region61: #{hierachical_forward.3} parent=11 // pred_check
          %p531 = pneg %p354
        $region62: #{hierachical_forward.3} parent=11 // pred_check_branch
          %533 = sbr.rel (%p531) target = $region64
        $region63: #{hierachical_forward.3} parent=11 // pred_region
          _
        $region64: #{hierachical_forward.3} parent=11 // pred_fallthru
          _
        // Predicated region
        $region65: #{hierachical_forward.3} parent=11 // pred_check
          %p534 = pneg %p375
        $region66: #{hierachical_forward.3} parent=11 // pred_check_branch
          %536 = sbr.rel (%p534) target = $region68
        $region67: #{hierachical_forward.3} parent=11 // pred_region
          _
        $region68: #{hierachical_forward.3} parent=11 // pred_fallthru
          _
        // Predicated region
        $region69: #{hierachical_forward.3} parent=11 // pred_check
          %p537 = pneg %p396
        $region70: #{hierachical_forward.3} parent=11 // pred_check_branch
          %539 = sbr.rel (%p537) target = $region72
        $region71: #{hierachical_forward.3} parent=11 // pred_region
          _
        $region72: #{hierachical_forward.3} parent=11 // pred_fallthru
          _
        // Predicated region
        $region73: #{hierachical_forward.3} parent=11 // pred_check
          %p540 = pneg %p417
        $region74: #{hierachical_forward.3} parent=11 // pred_check_branch
          %542 = sbr.rel (%p540) target = $region76
        $region75: #{hierachical_forward.3} parent=11 // pred_region
          _
        $region76: #{hierachical_forward.3} parent=11 // pred_fallthru
          _
        // Predicated region
        $region77: #{hierachical_forward.3} parent=11 // pred_check
          %p543 = pneg %p438
        $region78: #{hierachical_forward.3} parent=11 // pred_check_branch
          %545 = sbr.rel (%p543) target = $region80
        $region79: #{hierachical_forward.3} parent=11 // pred_region
          _
        $region80: #{hierachical_forward.3} parent=11 // pred_fallthru
          _
        // Predicated region
        $region81: #{hierachical_forward.3} parent=11 // pred_check
          %p546 = pneg %p459
        $region82: #{hierachical_forward.3} parent=11 // pred_check_branch
          %548 = sbr.rel (%p546) target = $region84
        $region83: #{hierachical_forward.3} parent=11 // pred_region
          _
        $region84: #{hierachical_forward.3} parent=11 // pred_fallthru
          _
      $region12: #{hierachical_forward.3} parent=5 // pred_fallthru
        _
      %p549 = scmp.lt.s32.totalorder %s29, 2
      // Predicated region
      $region85: #{hierachical_forward.3} parent=5 // pred_check
        %p550 = pneg %p549
      $region86: #{hierachical_forward.3} parent=5 // pred_check_branch
        %552 = sbr.rel (%p550) target = $region88
      $region87: #{hierachical_forward.3} parent=5 // pred_region
        // Predicated region
        $region89: #{hierachical_forward.3} parent=87 // pred_check
          %p553 = pneg %p49
        $region90: #{hierachical_forward.3} parent=87 // pred_check_branch
          %555 = sbr.rel (%p553) target = $region92
        $region91: #{hierachical_forward.3} parent=87 // pred_region
          %p556 = scmp.lt.s32.totalorder %s29, 1
          %s557 = scalar_select %p556, %s29, 1
          %s558 = smul.addr %s557, 4
          %s559 = scalar_lea.vmem %s0, %s558
        $region92: #{hierachical_forward.3} parent=87 // pred_fallthru
          _
        // Predicated region
        $region93: #{hierachical_forward.3} parent=87 // pred_check
          %p560 = pneg %p75
        $region94: #{hierachical_forward.3} parent=87 // pred_check_branch
          %562 = sbr.rel (%p560) target = $region96
        $region95: #{hierachical_forward.3} parent=87 // pred_region
          %p563 = scmp.lt.s32.totalorder %s29, 1
          %s564 = scalar_select %p563, %s29, 1
          %s565 = smul.addr %s564, 8
          %s566 = scalar_lea.vmem %s1, %s565
        $region96: #{hierachical_forward.3} parent=87 // pred_fallthru
          _
      $region88: #{hierachical_forward.3} parent=5 // pred_fallthru
        _
      %p567 = scmp.le.s32.totalorder 1, %s29
      %p568 = scmp.lt.s32.totalorder %s29, 3
      %p569 = pnand %p567, %p568
      %p570 = pneg %p569
      // Predicated region
      $region97: #{hierachical_forward.3} parent=5 // pred_check
        _
      $region98: #{hierachical_forward.3} parent=5 // pred_check_branch
        %572 = sbr.rel (%p569) target = $region100
      $region99: #{hierachical_forward.3} parent=5 // pred_region
        %s573 = ssub.s32 %s29, 1
        %p574 = scmp.lt.s32.totalorder %s34, 1
        %s575 = scalar_select %p574, %s34, 1
        %s576 = smul.addr %s575, 4
        %s577 = scalar_lea.vmem %s0, %s576
        %p578 = pneg %p55
        %p579 = pneg %p52
        %p580 = scmp.lt.s32.totalorder %s34, 1
        %s581 = scalar_select %p580, %s34, 1
        %s582 = smul.addr %s581, 8
        %s583 = scalar_lea.vmem %s1, %s582
        %p584 = pneg %p81
        %p585 = pneg %p78
        %p586 = pneg %p102
        %p587 = pneg %p99
        %p588 = pneg %p123
        %p589 = pneg %p120
        %p590 = pneg %p144
        %p591 = pneg %p141
        %p592 = pneg %p165
        %p593 = pneg %p162
        %p594 = pneg %p186
        %p595 = pneg %p183
        %p596 = pneg %p207
        %p597 = pneg %p204
        %p598 = pneg %p228
        %p599 = pneg %p225
        %p600 = pneg %p249
        %p601 = pneg %p246
        %p602 = pneg %p270
        %p603 = pneg %p267
        %p604 = pneg %p291
        %p605 = pneg %p288
        %p606 = pneg %p312
        %p607 = pneg %p309
        %p608 = pneg %p333
        %p609 = pneg %p330
        %p610 = pneg %p354
        %p611 = pneg %p351
        %p612 = pneg %p375
        %p613 = pneg %p372
        %p614 = pneg %p396
        %p615 = pneg %p393
        %p616 = pneg %p417
        %p617 = pneg %p414
        %p618 = pneg %p438
        %p619 = pneg %p435
        %p620 = pneg %p459
        %p621 = pneg %p456
        %p622 = pneg %p480
        %p623 = pneg %p477
        %p624 = scmp.lt.s32.totalorder %s34, 1
        %s625 = scalar_select %p624, %s34, 1
        %s626 = smul.addr %s625, 4
        %s627 = scalar_lea.vmem %s0, %s626
        %p628 = scmp.lt.s32.totalorder %s34, 1
        %s629 = scalar_select %p628, %s34, 1
        %s630 = smul.addr %s629, 8
        %s631 = scalar_lea.vmem %s1, %s630
        %p633 = scmp.eq.s32.totalorder %s34, 0
        // Predicated region
        $region101: #{hierachical_forward.3} parent=99 // pred_check
          %p634 = pneg %p633
        $region102: #{hierachical_forward.3} parent=99 // pred_check_branch
          %636 = sbr.rel (%p634) target = $region104
        $region103: #{hierachical_forward.3} parent=99 // pred_region
          %v637 = vld [vmem:[%s2] sm:$0x3]
          %638 = vst [vmem:[#allocation2] sm:$0x3] %v637
          %v639 = vld [vmem:[%s3] sm:$0x3]
          %640 = vst [vmem:[#allocation3] sm:$0x3] %v639
          %v641 = vld [vmem:[%s2] sm:$0x3]
          %642 = vst [vmem:[#allocation4] sm:$0x3] %v641
          %v643 = vld [vmem:[%s3] sm:$0x3]
          %644 = vst [vmem:[#allocation5] sm:$0x3] %v643
          %vm645 = vcmask 25600
          %646 = vst.msk [vmem:[#allocation6] sm:$0x3] %vm645, 0.0
          %vm647 = vcmask 0
          %648 = vst.msk [vmem:[#allocation8] sm:$0x1] %vm647, 0.0
        $region104: #{hierachical_forward.3} parent=99 // pred_fallthru
          _
        %v649 = vld [vmem:[%s627] sm:$0xf]
        %v650 = vld [vmem:[%s7] sm:$0xff]
        %v651 = vld [vmem:[%s7 + $0x8] sm:$0xff]
        %v652 = vld [vmem:[%s7 + $0x10] sm:$0xff]
        %v653 = vld [vmem:[%s7 + $0x18] sm:$0xff]
        %v654 = vld [vmem:[%s7 + $0x20] sm:$0xff]
        %v655 = vld [vmem:[%s7 + $0x28] sm:$0xff]
        %v656 = vld [vmem:[%s7 + $0x30] sm:$0xff]
        %v657 = vld [vmem:[%s7 + $0x38] sm:$0xff]
        %v666 = vunpack.c.l.b16 %v650
        %v667 = vunpack.c.h.b16 %v650
        %v668 = vunpack.c.l.b16 %v651
        %v669 = vunpack.c.h.b16 %v651
        %v670 = vunpack.c.l.b16 %v652
        %v671 = vunpack.c.h.b16 %v652
        %v672 = vunpack.c.l.b16 %v653
        %v673 = vunpack.c.h.b16 %v653
        %v674 = vunpack.c.l.b16 %v654
        %v675 = vunpack.c.h.b16 %v654
        %v676 = vunpack.c.l.b16 %v655
        %v677 = vunpack.c.h.b16 %v655
        %v678 = vunpack.c.l.b16 %v656
        %v679 = vunpack.c.h.b16 %v656
        %v680 = vunpack.c.l.b16 %v657
        %v681 = vunpack.c.h.b16 %v657
        %v682 = vpack.c.b16 %v670, %v666
        %v683 = vpack.c.b16 %v671, %v667
        %v684 = vpack.c.b16 %v672, %v668
        %v685 = vpack.c.b16 %v673, %v669
        %v686 = vpack.c.b16 %v678, %v674
        %v687 = vpack.c.b16 %v679, %v675
        %v688 = vpack.c.b16 %v680, %v676
        %v689 = vpack.c.b16 %v681, %v677
        %vm698 = vcmask 261120
        %v700 = vsel %vm698, %v649, 0
        %702 = vmatprep.subr.bf16.mxu0 0
        %703 = vmatpush1.bf16.msra.mxu0 0
        %704 = vmatprep.subr.bf16.mxu0 0
        %705 = vmatpush1.bf16.msra.mxu0 0
        %706 = vmatprep.subr.bf16.mxu0 0
        %707 = vmatpush1.bf16.msra.mxu0 0
        %708 = vmatprep.subr.bf16.mxu0 0
        %709 = vmatpush1.bf16.msra.mxu0 0
        %710 = vmatprep.subr.bf16.mxu0 0
        %711 = vmatpush1.bf16.msra.mxu0 0
        %712 = vmatprep.subr.bf16.mxu0 0
        %713 = vmatpush1.bf16.msra.mxu0 0
        %714 = vmatprep.subr.bf16.mxu0 %v687
        %715 = vmatpush1.bf16.msra.mxu0 %v686
        %716 = vmatprep.subr.bf16.mxu0 %v683
        %717 = vmatpush1.bf16.msra.mxu0 %v682
        %718 = vmatprep.subr.bf16.mxu0 0
        %719 = vmatpush2.bf16.msra.mxu0 0
        %720 = vmatprep.subr.bf16.mxu0 0
        %721 = vmatpush2.bf16.msra.mxu0 0
        %722 = vmatprep.subr.bf16.mxu0 0
        %723 = vmatpush2.bf16.msra.mxu0 0
        %724 = vmatprep.subr.bf16.mxu0 0
        %725 = vmatpush2.bf16.msra.mxu0 0
        %726 = vmatprep.subr.bf16.mxu0 0
        %727 = vmatpush2.bf16.msra.mxu0 0
        %728 = vmatprep.subr.bf16.mxu0 0
        %729 = vmatpush2.bf16.msra.mxu0 0
        %730 = vmatprep.subr.bf16.mxu0 0
        %731 = vmatpush2.bf16.msra.mxu0 0
        %732 = vmatprep.subr.bf16.mxu0 0
        %733 = vmatpush2.bf16.msra.mxu0 0
        %734 = vmatprep.mubr.bf16.mxu0 0
        %735 = vmatmul.mubr.bf16.gmra.mxu0 %v700
        %v736 = vpop.f32.mrf.mxu0
        %v737 = vadd.f32 0.0, %v736
        %v738 = vpop.f32.mrf.mxu0
        %v739 = vadd.f32 0.0, %v738
        %v740 = vpop.f32.mrf.mxu0
        %v741 = vpop.f32.mrf.mxu0
        %742 = vdwg.mxu0
        %743 = vmatprep.subr.bf16.mxu0 0
        %744 = vmatpush1.bf16.msra.mxu0 0
        %745 = vmatprep.subr.bf16.mxu0 0
        %746 = vmatpush1.bf16.msra.mxu0 0
        %747 = vmatprep.subr.bf16.mxu0 0
        %748 = vmatpush1.bf16.msra.mxu0 0
        %749 = vmatprep.subr.bf16.mxu0 0
        %750 = vmatpush1.bf16.msra.mxu0 0
        %751 = vmatprep.subr.bf16.mxu0 0
        %752 = vmatpush1.bf16.msra.mxu0 0
        %753 = vmatprep.subr.bf16.mxu0 0
        %754 = vmatpush1.bf16.msra.mxu0 0
        %755 = vmatprep.subr.bf16.mxu0 %v689
        %756 = vmatpush1.bf16.msra.mxu0 %v688
        %757 = vmatprep.subr.bf16.mxu0 %v685
        %758 = vmatpush1.bf16.msra.mxu0 %v684
        %759 = vmatprep.subr.bf16.mxu0 0
        %760 = vmatpush2.bf16.msra.mxu0 0
        %761 = vmatprep.subr.bf16.mxu0 0
        %762 = vmatpush2.bf16.msra.mxu0 0
        %763 = vmatprep.subr.bf16.mxu0 0
        %764 = vmatpush2.bf16.msra.mxu0 0
        %765 = vmatprep.subr.bf16.mxu0 0
        %766 = vmatpush2.bf16.msra.mxu0 0
        %767 = vmatprep.subr.bf16.mxu0 0
        %768 = vmatpush2.bf16.msra.mxu0 0
        %769 = vmatprep.subr.bf16.mxu0 0
        %770 = vmatpush2.bf16.msra.mxu0 0
        %771 = vmatprep.subr.bf16.mxu0 0
        %772 = vmatpush2.bf16.msra.mxu0 0
        %773 = vmatprep.subr.bf16.mxu0 0
        %774 = vmatpush2.bf16.msra.mxu0 0
        %775 = vmatprep.mubr.bf16.mxu0 0
        %776 = vmatmul.mubr.bf16.gmra.mxu0 %v700
        %v777 = vpop.f32.mrf.mxu0
        %v778 = vadd.f32 0.0, %v777
        %v779 = vpop.f32.mrf.mxu0
        %v780 = vadd.f32 0.0, %v779
        %v781 = vpop.f32.mrf.mxu0
        %v782 = vpop.f32.mrf.mxu0
        %783 = vdwg.mxu0
        %v784 = vld [vmem:[#allocation2] sm:$0x3]
        %v785 = vld [vmem:[#allocation3] sm:$0x3]
        %v786 = vpack.c.bf16 %v784, %v784
        %v787 = vld [vmem:[%s8] sm:$0xff]
        %v788 = vld [vmem:[%s8 + $0x8] sm:$0xff]
        %v789 = vld [vmem:[%s8 + $0x10] sm:$0xff]
        %v790 = vld [vmem:[%s8 + $0x18] sm:$0xff]
        %v791 = vld [vmem:[%s8 + $0x20] sm:$0xff]
        %v792 = vld [vmem:[%s8 + $0x28] sm:$0xff]
        %v793 = vld [vmem:[%s8 + $0x30] sm:$0xff]
        %v794 = vld [vmem:[%s8 + $0x38] sm:$0xff]
        %v795 = vld [vmem:[%s8 + $0x40] sm:$0xff]
        %v796 = vld [vmem:[%s8 + $0x48] sm:$0xff]
        %v797 = vld [vmem:[%s8 + $0x50] sm:$0xff]
        %v798 = vld [vmem:[%s8 + $0x58] sm:$0xff]
        %v799 = vld [vmem:[%s8 + $0x60] sm:$0xff]
        %v800 = vld [vmem:[%s8 + $0x68] sm:$0xff]
        %v801 = vld [vmem:[%s8 + $0x70] sm:$0xff]
        %v802 = vld [vmem:[%s8 + $0x78] sm:$0xff]
        %v803 = vld [vmem:[%s8 + $0x80] sm:$0xff]
        %v804 = vld [vmem:[%s8 + $0x88] sm:$0xff]
        %v805 = vld [vmem:[%s8 + $0x90] sm:$0xff]
        %v806 = vld [vmem:[%s8 + $0x98] sm:$0xff]
        %v807 = vld [vmem:[%s8 + $0xa0] sm:$0xff]
        %v808 = vld [vmem:[%s8 + $0xa8] sm:$0xff]
        %v809 = vld [vmem:[%s8 + $0xb0] sm:$0xff]
        %v810 = vld [vmem:[%s8 + $0xb8] sm:$0xff]
        %v811 = vld [vmem:[%s8 + $0xc0] sm:$0xff]
        %v812 = vld [vmem:[%s8 + $0xc8] sm:$0xff]
        %v813 = vld [vmem:[%s8 + $0xd0] sm:$0xff]
        %v814 = vld [vmem:[%s8 + $0xd8] sm:$0xff]
        %v815 = vld [vmem:[%s8 + $0xe0] sm:$0xff]
        %v816 = vld [vmem:[%s8 + $0xe8] sm:$0xff]
        %v817 = vld [vmem:[%s8 + $0xf0] sm:$0xff]
        %v818 = vld [vmem:[%s8 + $0xf8] sm:$0xff]
        %v851 = vunpack.c.l.b16 %v787
        %v852 = vunpack.c.h.b16 %v787
        %v853 = vunpack.c.l.b16 %v788
        %v854 = vunpack.c.h.b16 %v788
        %v855 = vunpack.c.l.b16 %v789
        %v856 = vunpack.c.h.b16 %v789
        %v857 = vunpack.c.l.b16 %v790
        %v858 = vunpack.c.h.b16 %v790
        %v859 = vunpack.c.l.b16 %v791
        %v860 = vunpack.c.h.b16 %v791
        %v861 = vunpack.c.l.b16 %v792
        %v862 = vunpack.c.h.b16 %v792
        %v863 = vunpack.c.l.b16 %v793
        %v864 = vunpack.c.h.b16 %v793
        %v865 = vunpack.c.l.b16 %v794
        %v866 = vunpack.c.h.b16 %v794
        %v867 = vunpack.c.l.b16 %v795
        %v868 = vunpack.c.h.b16 %v795
        %v869 = vunpack.c.l.b16 %v796
        %v870 = vunpack.c.h.b16 %v796
        %v871 = vunpack.c.l.b16 %v797
        %v872 = vunpack.c.h.b16 %v797
        %v873 = vunpack.c.l.b16 %v798
        %v874 = vunpack.c.h.b16 %v798
        %v875 = vunpack.c.l.b16 %v799
        %v876 = vunpack.c.h.b16 %v799
        %v877 = vunpack.c.l.b16 %v800
        %v878 = vunpack.c.h.b16 %v800
        %v879 = vunpack.c.l.b16 %v801
        %v880 = vunpack.c.h.b16 %v801
        %v881 = vunpack.c.l.b16 %v802
        %v882 = vunpack.c.h.b16 %v802
        %v883 = vunpack.c.l.b16 %v803
        %v884 = vunpack.c.h.b16 %v803
        %v885 = vunpack.c.l.b16 %v804
        %v886 = vunpack.c.h.b16 %v804
        %v887 = vunpack.c.l.b16 %v805
        %v888 = vunpack.c.h.b16 %v805
        %v889 = vunpack.c.l.b16 %v806
        %v890 = vunpack.c.h.b16 %v806
        %v891 = vunpack.c.l.b16 %v807
        %v892 = vunpack.c.h.b16 %v807
        %v893 = vunpack.c.l.b16 %v808
        %v894 = vunpack.c.h.b16 %v808
        %v895 = vunpack.c.l.b16 %v809
        %v896 = vunpack.c.h.b16 %v809
        %v897 = vunpack.c.l.b16 %v810
        %v898 = vunpack.c.h.b16 %v810
        %v899 = vunpack.c.l.b16 %v811
        %v900 = vunpack.c.h.b16 %v811
        %v901 = vunpack.c.l.b16 %v812
        %v902 = vunpack.c.h.b16 %v812
        %v903 = vunpack.c.l.b16 %v813
        %v904 = vunpack.c.h.b16 %v813
        %v905 = vunpack.c.l.b16 %v814
        %v906 = vunpack.c.h.b16 %v814
        %v907 = vunpack.c.l.b16 %v815
        %v908 = vunpack.c.h.b16 %v815
        %v909 = vunpack.c.l.b16 %v816
        %v910 = vunpack.c.h.b16 %v816
        %v911 = vunpack.c.l.b16 %v817
        %v912 = vunpack.c.h.b16 %v817
        %v913 = vunpack.c.l.b16 %v818
        %v914 = vunpack.c.h.b16 %v818
        %v915 = vpack.c.b16 %v855, %v851
        %v916 = vpack.c.b16 %v856, %v852
        %v917 = vpack.c.b16 %v857, %v853
        %v918 = vpack.c.b16 %v858, %v854
        %v919 = vpack.c.b16 %v863, %v859
        %v920 = vpack.c.b16 %v864, %v860
        %v921 = vpack.c.b16 %v865, %v861
        %v922 = vpack.c.b16 %v866, %v862
        %v923 = vpack.c.b16 %v871, %v867
        %v924 = vpack.c.b16 %v872, %v868
        %v925 = vpack.c.b16 %v873, %v869
        %v926 = vpack.c.b16 %v874, %v870
        %v927 = vpack.c.b16 %v879, %v875
        %v928 = vpack.c.b16 %v880, %v876
        %v929 = vpack.c.b16 %v881, %v877
        %v930 = vpack.c.b16 %v882, %v878
        %v931 = vpack.c.b16 %v887, %v883
        %v932 = vpack.c.b16 %v888, %v884
        %v933 = vpack.c.b16 %v889, %v885
        %v934 = vpack.c.b16 %v890, %v886
        %v935 = vpack.c.b16 %v895, %v891
        %v936 = vpack.c.b16 %v896, %v892
        %v937 = vpack.c.b16 %v897, %v893
        %v938 = vpack.c.b16 %v898, %v894
        %v939 = vpack.c.b16 %v903, %v899
        %v940 = vpack.c.b16 %v904, %v900
        %v941 = vpack.c.b16 %v905, %v901
        %v942 = vpack.c.b16 %v906, %v902
        %v943 = vpack.c.b16 %v911, %v907
        %v944 = vpack.c.b16 %v912, %v908
        %v945 = vpack.c.b16 %v913, %v909
        %v946 = vpack.c.b16 %v914, %v910
        %979 = vmatprep.subr.bf16.mxu0 %v944
        %980 = vmatpush1.bf16.msra.mxu0 %v943
        %981 = vmatprep.subr.bf16.mxu0 %v940
        %982 = vmatpush1.bf16.msra.mxu0 %v939
        %983 = vmatprep.subr.bf16.mxu0 %v936
        %984 = vmatpush1.bf16.msra.mxu0 %v935
        %985 = vmatprep.subr.bf16.mxu0 %v932
        %986 = vmatpush1.bf16.msra.mxu0 %v931
        %987 = vmatprep.subr.bf16.mxu0 %v928
        %988 = vmatpush1.bf16.msra.mxu0 %v927
        %989 = vmatprep.subr.bf16.mxu0 %v924
        %990 = vmatpush1.bf16.msra.mxu0 %v923
        %991 = vmatprep.subr.bf16.mxu0 %v920
        %992 = vmatpush1.bf16.msra.mxu0 %v919
        %993 = vmatprep.subr.bf16.mxu0 %v916
        %994 = vmatpush1.bf16.msra.mxu0 %v915
        %995 = vmatprep.subr.bf16.mxu0 0
        %996 = vmatpush2.bf16.msra.mxu0 0
        %997 = vmatprep.subr.bf16.mxu0 0
        %998 = vmatpush2.bf16.msra.mxu0 0
        %999 = vmatprep.subr.bf16.mxu0 0
        %1000 = vmatpush2.bf16.msra.mxu0 0
        %1001 = vmatprep.subr.bf16.mxu0 0
        %1002 = vmatpush2.bf16.msra.mxu0 0
        %1003 = vmatprep.subr.bf16.mxu0 0
        %1004 = vmatpush2.bf16.msra.mxu0 0
        %1005 = vmatprep.subr.bf16.mxu0 0
        %1006 = vmatpush2.bf16.msra.mxu0 0
        %1007 = vmatprep.subr.bf16.mxu0 0
        %1008 = vmatpush2.bf16.msra.mxu0 0
        %1009 = vmatprep.subr.bf16.mxu0 0
        %1010 = vmatpush2.bf16.msra.mxu0 0
        %1011 = vmatprep.mubr.bf16.mxu0 0
        %1012 = vmatmul.mubr.bf16.gmra.mxu0 %v786
        %v1013 = vpop.f32.mrf.mxu0
        %v1014 = vadd.f32 0.0, %v1013
        %v1015 = vpop.f32.mrf.mxu0
        %v1016 = vadd.f32 0.0, %v1015
        %v1017 = vpop.f32.mrf.mxu0
        %v1018 = vpop.f32.mrf.mxu0
        %1019 = vdwg.mxu0
        %1020 = vmatprep.subr.bf16.mxu0 %v946
        %1021 = vmatpush1.bf16.msra.mxu0 %v945
        %1022 = vmatprep.subr.bf16.mxu0 %v942
        %1023 = vmatpush1.bf16.msra.mxu0 %v941
        %1024 = vmatprep.subr.bf16.mxu0 %v938
        %1025 = vmatpush1.bf16.msra.mxu0 %v937
        %1026 = vmatprep.subr.bf16.mxu0 %v934
        %1027 = vmatpush1.bf16.msra.mxu0 %v933
        %1028 = vmatprep.subr.bf16.mxu0 %v930
        %1029 = vmatpush1.bf16.msra.mxu0 %v929
        %1030 = vmatprep.subr.bf16.mxu0 %v926
        %1031 = vmatpush1.bf16.msra.mxu0 %v925
        %1032 = vmatprep.subr.bf16.mxu0 %v922
        %1033 = vmatpush1.bf16.msra.mxu0 %v921
        %1034 = vmatprep.subr.bf16.mxu0 %v918
        %1035 = vmatpush1.bf16.msra.mxu0 %v917
        %1036 = vmatprep.subr.bf16.mxu0 0
        %1037 = vmatpush2.bf16.msra.mxu0 0
        %1038 = vmatprep.subr.bf16.mxu0 0
        %1039 = vmatpush2.bf16.msra.mxu0 0
        %1040 = vmatprep.subr.bf16.mxu0 0
        %1041 = vmatpush2.bf16.msra.mxu0 0
        %1042 = vmatprep.subr.bf16.mxu0 0
        %1043 = vmatpush2.bf16.msra.mxu0 0
        %1044 = vmatprep.subr.bf16.mxu0 0
        %1045 = vmatpush2.bf16.msra.mxu0 0
        %1046 = vmatprep.subr.bf16.mxu0 0
        %1047 = vmatpush2.bf16.msra.mxu0 0
        %1048 = vmatprep.subr.bf16.mxu0 0
        %1049 = vmatpush2.bf16.msra.mxu0 0
        %1050 = vmatprep.subr.bf16.mxu0 0
        %1051 = vmatpush2.bf16.msra.mxu0 0
        %1052 = vmatprep.mubr.bf16.mxu0 0
        %1053 = vmatmul.mubr.bf16.gmra.mxu0 %v786
        %v1054 = vpop.f32.mrf.mxu0
        %v1055 = vadd.f32 0.0, %v1054
        %v1056 = vpop.f32.mrf.mxu0
        %v1057 = vadd.f32 0.0, %v1056
        %v1058 = vpop.f32.mrf.mxu0
        %v1059 = vpop.f32.mrf.mxu0
        %1060 = vdwg.mxu0
        %v1061 = vadd.f32 %v737, %v1014
        %v1062 = vadd.f32 %v739, %v1016
        %v1063 = vadd.f32 %v778, %v1055
        %v1064 = vadd.f32 %v780, %v1057
        %v1065 = vld [vmem:[%s9] sm:$0xf]
        %v1067 = vlaneseq
        %v1068 = vshrl.u32 %v1067, 7
        %v1069 = vsub.s32 0, %v1068
        %v1070 = vrot.slane %v1065, %v1069
        %v1071 = vlaneseq
        %v1072 = vshrl.u32 %v1071, 7
        %v1073 = vsub.s32 1, %v1072
        %v1074 = vrot.slane %v1065, %v1073
        %v1075 = vlaneseq
        %v1076 = vshrl.u32 %v1075, 7
        %v1077 = vsub.s32 2, %v1076
        %v1078 = vrot.slane %v1065, %v1077
        %v1079 = vlaneseq
        %v1080 = vshrl.u32 %v1079, 7
        %v1081 = vsub.s32 3, %v1080
        %v1082 = vrot.slane %v1065, %v1081
        %v1087 = vadd.f32 %v1061, %v1070
        %v1088 = vadd.f32 %v1062, %v1074
        %v1089 = vadd.f32 %v1063, %v1078
        %v1090 = vadd.f32 %v1064, %v1082
        %v1091 = vxor.u32 %v1087, 2147483648
        %v1092 = vmul.f32 %v1091, 1.442695
        %v1093 = vpow.pop %v1092
        %v1094 = vadd.f32 %v1093, 1.0
        %v1095 = vrcp.pop %v1094
        %v1096 = vmul.f32 1.0, %v1095
        %v1097 = vxor.u32 %v1088, 2147483648
        %v1098 = vmul.f32 %v1097, 1.442695
        %v1099 = vpow.pop %v1098
        %v1100 = vadd.f32 %v1099, 1.0
        %v1101 = vrcp.pop %v1100
        %v1102 = vmul.f32 1.0, %v1101
        %v1103 = vtanh.pop %v1089
        %v1104 = vxor.u32 %v1090, 2147483648
        %v1105 = vmul.f32 %v1104, 1.442695
        %v1106 = vpow.pop %v1105
        %v1107 = vadd.f32 %v1106, 1.0
        %v1108 = vrcp.pop %v1107
        %v1109 = vmul.f32 1.0, %v1108
        %v1110 = vmul.f32 %v1102, %v785
        %v1111 = vmul.f32 %v1096, %v1103
        %v1112 = vadd.f32 %v1110, %v1111
        %v1113 = vtanh.pop %v1112
        %v1114 = vmul.f32 %v1109, %v1113
        %v1115 = vpack.c.bf16 %v1114, %v1114
        %v1116 = vld [vmem:[%s10] sm:$0xf]
        %v1117 = vld [vmem:[%s10 + $0x4] sm:$0xf]
        %v1118 = vld [vmem:[%s10 + $0x8] sm:$0xf]
        %v1119 = vld [vmem:[%s10 + $0xc] sm:$0xf]
        %v1120 = vld [vmem:[%s10 + $0x10] sm:$0xf]
        %v1121 = vld [vmem:[%s10 + $0x14] sm:$0xf]
        %v1122 = vld [vmem:[%s10 + $0x18] sm:$0xf]
        %v1123 = vld [vmem:[%s10 + $0x1c] sm:$0xf]
        %v1124 = vld [vmem:[%s10 + $0x20] sm:$0xf]
        %v1125 = vld [vmem:[%s10 + $0x24] sm:$0xf]
        %v1126 = vld [vmem:[%s10 + $0x28] sm:$0xf]
        %v1127 = vld [vmem:[%s10 + $0x2c] sm:$0xf]
        %v1128 = vld [vmem:[%s10 + $0x30] sm:$0xf]
        %v1129 = vld [vmem:[%s10 + $0x34] sm:$0xf]
        %v1130 = vld [vmem:[%s10 + $0x38] sm:$0xf]
        %v1131 = vld [vmem:[%s10 + $0x3c] sm:$0xf]
        %v1132 = vld [vmem:[%s11] sm:$0x1]
        %v1134 = vlaneseq
        %v1135 = vshrl.u32 %v1134, 7
        %v1136 = vsub.s32 0, %v1135
        %v1137 = vrot.slane %v1132, %v1136
        %v1155 = vunpack.c.l.b16 %v1116
        %v1156 = vunpack.c.l.b16 %v1117
        %v1157 = vunpack.c.l.b16 %v1118
        %v1158 = vunpack.c.l.b16 %v1119
        %v1159 = vunpack.c.l.b16 %v1120
        %v1160 = vunpack.c.l.b16 %v1121
        %v1161 = vunpack.c.l.b16 %v1122
        %v1162 = vunpack.c.l.b16 %v1123
        %v1163 = vunpack.c.l.b16 %v1124
        %v1164 = vunpack.c.l.b16 %v1125
        %v1165 = vunpack.c.l.b16 %v1126
        %v1166 = vunpack.c.l.b16 %v1127
        %v1167 = vunpack.c.l.b16 %v1128
        %v1168 = vunpack.c.l.b16 %v1129
        %v1169 = vunpack.c.l.b16 %v1130
        %v1170 = vunpack.c.l.b16 %v1131
        %v1171 = vpack.c.b16 %v1156, %v1155
        %v1172 = vpack.c.b16 %v1158, %v1157
        %v1173 = vpack.c.b16 %v1160, %v1159
        %v1174 = vpack.c.b16 %v1162, %v1161
        %v1175 = vpack.c.b16 %v1164, %v1163
        %v1176 = vpack.c.b16 %v1166, %v1165
        %v1177 = vpack.c.b16 %v1168, %v1167
        %v1178 = vpack.c.b16 %v1170, %v1169
        %1187 = vmatprep.subr.bf16.mxu0 0
        %1188 = vmatpush1.bf16.msra.mxu0 %v1178
        %1189 = vmatprep.subr.bf16.mxu0 0
        %1190 = vmatpush1.bf16.msra.mxu0 %v1177
        %1191 = vmatprep.subr.bf16.mxu0 0
        %1192 = vmatpush1.bf16.msra.mxu0 %v1176
        %1193 = vmatprep.subr.bf16.mxu0 0
        %1194 = vmatpush1.bf16.msra.mxu0 %v1175
        %1195 = vmatprep.subr.bf16.mxu0 0
        %1196 = vmatpush1.bf16.msra.mxu0 %v1174
        %1197 = vmatprep.subr.bf16.mxu0 0
        %1198 = vmatpush1.bf16.msra.mxu0 %v1173
        %1199 = vmatprep.subr.bf16.mxu0 0
        %1200 = vmatpush1.bf16.msra.mxu0 %v1172
        %1201 = vmatprep.subr.bf16.mxu0 0
        %1202 = vmatpush1.bf16.msra.mxu0 %v1171
        %1203 = vmatprep.subr.bf16.mxu0 0
        %1204 = vmatpush2.bf16.msra.mxu0 0
        %1205 = vmatprep.subr.bf16.mxu0 0
        %1206 = vmatpush2.bf16.msra.mxu0 0
        %1207 = vmatprep.subr.bf16.mxu0 0
        %1208 = vmatpush2.bf16.msra.mxu0 0
        %1209 = vmatprep.subr.bf16.mxu0 0
        %1210 = vmatpush2.bf16.msra.mxu0 0
        %1211 = vmatprep.subr.bf16.mxu0 0
        %1212 = vmatpush2.bf16.msra.mxu0 0
        %1213 = vmatprep.subr.bf16.mxu0 0
        %1214 = vmatpush2.bf16.msra.mxu0 0
        %1215 = vmatprep.subr.bf16.mxu0 0
        %1216 = vmatpush2.bf16.msra.mxu0 0
        %1217 = vmatprep.subr.bf16.mxu0 0
        %1218 = vmatpush2.bf16.msra.mxu0 0
        %1219 = vmatprep.mubr.bf16.mxu0 0
        %1220 = vmatmul.mubr.bf16.gmra.mxu0 %v1115
        %v1221 = vpop.f32.mrf.mxu0
        %v1222 = vadd.f32 %v1137, %v1221
        %v1223 = vpop.f32.mrf.mxu0
        %v1224 = vpop.f32.mrf.mxu0
        %v1225 = vpop.f32.mrf.mxu0
        %1226 = vdwg.mxu0
        %v1227 = vld [vmem:[%s631] sm:$0x3]
        %vm1228 = vcmask 1041408
        %v1229 = vsel %vm1228, %v1222, -inf
        %1230 = vmax.xlane.f32.xlu0 %v1229
        %v1231 = vpop.xlane.xlu0 %1230
        %v1232 = vsub.f32 %v1222, %v1231
        %v1233 = vmul.f32 %v1232, 1.442695
        %v1234 = vpow.pop %v1233
        %v1235 = vsel %vm1228, %v1234, 0.0
        %1236 = vadd.xlane.f32.xlu0 %v1235
        %v1237 = vpop.xlane.xlu0 %1236
        %v1238 = vlog2.pop %v1237
        %v1239 = vmul.f32 %v1238, 0.6931472
        %v1240 = vadd.f32 %v1231, %v1239
        %v1241 = vlaneseq
        %v1242 = vand.u32 %v1241, 127
        %1243 = vset.pattern.permute.xlu0 0
        %1244 = vperm.xlu0 %1243, %v1227
        %v1245 = vpop.permute.xlu0 %1244
        %vm1246 = vcmp.eq.s32.totalorder %v1242, %v1245
        %v1247 = vsel %vm1246, %v1222, 0.0
        %v1248 = vsel %vm1228, %v1247, 0.0
        %1249 = vadd.xlane.f32.xlu0 %v1248
        %v1250 = vpop.xlane.xlu0 %1249
        %vm1251 = vcmp.ne.s32.totalorder %v1227, 0
        %v1252 = vsel %vm1251, 1, 0
        %v1253 = vcvt.s32.f32 %v1252
        %v1254 = vsub.f32 %v1240, %v1250
        %v1255 = vmul.f32 %v1254, %v1253
        %vm1256 = vcmask 1024
        %v1257 = vsel %vm1256, %v1255, 0.0
        %v1258 = vrot.slane %v1257, 4
        %v1259 = vadd.f32 %v1257, %v1258
        %v1260 = vrot.slane %v1259, 2
        %v1261 = vadd.f32 %v1259, %v1260
        %v1262 = vrot.slane %v1261, 1
        %v1263 = vadd.f32 %v1261, %v1262
        %v1264 = vsel %vm1256, %v1253, 0.0
        %v1265 = vrot.slane %v1264, 4
        %v1266 = vadd.f32 %v1264, %v1265
        %v1267 = vrot.slane %v1266, 2
        %v1268 = vadd.f32 %v1266, %v1267
        %v1269 = vrot.slane %v1268, 1
        %v1270 = vadd.f32 %v1268, %v1269
        %v1271 = vmax.f32 %v1270, 1.0
        %v1272 = vrcp.pop %v1271
        %v1273 = vmul.f32 %v1263, %v1272
        %v1274 = vadd.f32 %v1273, 0.0
        %1275 = vmatprep.subr.bf16.mxu0 %v944
        %1276 = vmatpush1.bf16.msra.mxu0 %v943
        %1277 = vmatprep.subr.bf16.mxu0 %v940
        %1278 = vmatpush1.bf16.msra.mxu0 %v939
        %1279 = vmatprep.subr.bf16.mxu0 %v936
        %1280 = vmatpush1.bf16.msra.mxu0 %v935
        %1281 = vmatprep.subr.bf16.mxu0 %v932
        %1282 = vmatpush1.bf16.msra.mxu0 %v931
        %1283 = vmatprep.subr.bf16.mxu0 %v928
        %1284 = vmatpush1.bf16.msra.mxu0 %v927
        %1285 = vmatprep.subr.bf16.mxu0 %v924
        %1286 = vmatpush1.bf16.msra.mxu0 %v923
        %1287 = vmatprep.subr.bf16.mxu0 %v920
        %1288 = vmatpush1.bf16.msra.mxu0 %v919
        %1289 = vmatprep.subr.bf16.mxu0 %v916
        %1290 = vmatpush1.bf16.msra.mxu0 %v915
        %1291 = vmatprep.subr.bf16.mxu0 0
        %1292 = vmatpush2.bf16.msra.mxu0 0
        %1293 = vmatprep.subr.bf16.mxu0 0
        %1294 = vmatpush2.bf16.msra.mxu0 0
        %1295 = vmatprep.subr.bf16.mxu0 0
        %1296 = vmatpush2.bf16.msra.mxu0 0
        %1297 = vmatprep.subr.bf16.mxu0 0
        %1298 = vmatpush2.bf16.msra.mxu0 0
        %1299 = vmatprep.subr.bf16.mxu0 0
        %1300 = vmatpush2.bf16.msra.mxu0 0
        %1301 = vmatprep.subr.bf16.mxu0 0
        %1302 = vmatpush2.bf16.msra.mxu0 0
        %1303 = vmatprep.subr.bf16.mxu0 0
        %1304 = vmatpush2.bf16.msra.mxu0 0
        %1305 = vmatprep.subr.bf16.mxu0 0
        %1306 = vmatpush2.bf16.msra.mxu0 0
        %1307 = vmatprep.mubr.bf16.mxu0 0
        %1308 = vmatmul.mubr.bf16.gmra.mxu0 %v1115
        %v1309 = vpop.f32.mrf.mxu0
        %v1310 = vadd.f32 0.0, %v1309
        %v1311 = vpop.f32.mrf.mxu0
        %v1312 = vadd.f32 0.0, %v1311
        %v1313 = vpop.f32.mrf.mxu0
        %v1314 = vpop.f32.mrf.mxu0
        %1315 = vdwg.mxu0
        %1316 = vmatprep.subr.bf16.mxu0 %v946
        %1317 = vmatpush1.bf16.msra.mxu0 %v945
        %1318 = vmatprep.subr.bf16.mxu0 %v942
        %1319 = vmatpush1.bf16.msra.mxu0 %v941
        %1320 = vmatprep.subr.bf16.mxu0 %v938
        %1321 = vmatpush1.bf16.msra.mxu0 %v937
        %1322 = vmatprep.subr.bf16.mxu0 %v934
        %1323 = vmatpush1.bf16.msra.mxu0 %v933
        %1324 = vmatprep.subr.bf16.mxu0 %v930
        %1325 = vmatpush1.bf16.msra.mxu0 %v929
        %1326 = vmatprep.subr.bf16.mxu0 %v926
        %1327 = vmatpush1.bf16.msra.mxu0 %v925
        %1328 = vmatprep.subr.bf16.mxu0 %v922
        %1329 = vmatpush1.bf16.msra.mxu0 %v921
        %1330 = vmatprep.subr.bf16.mxu0 %v918
        %1331 = vmatpush1.bf16.msra.mxu0 %v917
        %1332 = vmatprep.subr.bf16.mxu0 0
        %1333 = vmatpush2.bf16.msra.mxu0 0
        %1334 = vmatprep.subr.bf16.mxu0 0
        %1335 = vmatpush2.bf16.msra.mxu0 0
        %1336 = vmatprep.subr.bf16.mxu0 0
        %1337 = vmatpush2.bf16.msra.mxu0 0
        %1338 = vmatprep.subr.bf16.mxu0 0
        %1339 = vmatpush2.bf16.msra.mxu0 0
        %1340 = vmatprep.subr.bf16.mxu0 0
        %1341 = vmatpush2.bf16.msra.mxu0 0
        %1342 = vmatprep.subr.bf16.mxu0 0
        %1343 = vmatpush2.bf16.msra.mxu0 0
        %1344 = vmatprep.subr.bf16.mxu0 0
        %1345 = vmatpush2.bf16.msra.mxu0 0
        %1346 = vmatprep.subr.bf16.mxu0 0
        %1347 = vmatpush2.bf16.msra.mxu0 0
        %1348 = vmatprep.mubr.bf16.mxu0 0
        %1349 = vmatmul.mubr.bf16.gmra.mxu0 %v1115
        %v1350 = vpop.f32.mrf.mxu0
        %v1351 = vadd.f32 0.0, %v1350
        %v1352 = vpop.f32.mrf.mxu0
        %v1353 = vadd.f32 0.0, %v1352
        %v1354 = vpop.f32.mrf.mxu0
        %v1355 = vpop.f32.mrf.mxu0
        %1356 = vdwg.mxu0
        %v1361 = vrot.slane %v1310, 6
        %v1362 = vrot.slane %v1312, 6
        %v1363 = vrot.slane %v1351, 6
        %v1364 = vrot.slane %v1353, 6
        %v1369 = vadd.f32 %v737, %v1361
        %v1370 = vadd.f32 %v739, %v1362
        %v1371 = vadd.f32 %v778, %v1363
        %v1372 = vadd.f32 %v780, %v1364
        %v1373 = vadd.f32 %v1369, %v1070
        %v1374 = vadd.f32 %v1370, %v1074
        %v1375 = vadd.f32 %v1371, %v1078
        %v1376 = vadd.f32 %v1372, %v1082
        %v1377 = vxor.u32 %v1373, 2147483648
        %v1378 = vmul.f32 %v1377, 1.442695
        %v1379 = vpow.pop %v1378
        %v1380 = vadd.f32 %v1379, 1.0
        %v1381 = vrcp.pop %v1380
        %v1382 = vmul.f32 1.0, %v1381
        %v1383 = vxor.u32 %v1374, 2147483648
        %v1384 = vmul.f32 %v1383, 1.442695
        %v1385 = vpow.pop %v1384
        %v1386 = vadd.f32 %v1385, 1.0
        %v1387 = vrcp.pop %v1386
        %v1388 = vmul.f32 1.0, %v1387
        %v1389 = vtanh.pop %v1375
        %v1390 = vxor.u32 %v1376, 2147483648
        %v1391 = vmul.f32 %v1390, 1.442695
        %v1392 = vpow.pop %v1391
        %v1393 = vadd.f32 %v1392, 1.0
        %v1394 = vrcp.pop %v1393
        %v1395 = vmul.f32 1.0, %v1394
        %v1397 = vrot.slane %v1112, 6
        %v1399 = vmul.f32 %v1388, %v1397
        %v1400 = vmul.f32 %v1382, %v1389
        %v1401 = vadd.f32 %v1399, %v1400
        %v1402 = vtanh.pop %v1401
        %v1403 = vmul.f32 %v1395, %v1402
        %v1404 = vpack.c.bf16 %v1403, %v1403
        %v1406 = vrot.slane %v1404, 1
        %1408 = vmatprep.subr.bf16.mxu0 0
        %1409 = vmatpush1.bf16.msra.mxu0 %v1178
        %1410 = vmatprep.subr.bf16.mxu0 0
        %1411 = vmatpush1.bf16.msra.mxu0 %v1177
        %1412 = vmatprep.subr.bf16.mxu0 0
        %1413 = vmatpush1.bf16.msra.mxu0 %v1176
        %1414 = vmatprep.subr.bf16.mxu0 0
        %1415 = vmatpush1.bf16.msra.mxu0 %v1175
        %1416 = vmatprep.subr.bf16.mxu0 0
        %1417 = vmatpush1.bf16.msra.mxu0 %v1174
        %1418 = vmatprep.subr.bf16.mxu0 0
        %1419 = vmatpush1.bf16.msra.mxu0 %v1173
        %1420 = vmatprep.subr.bf16.mxu0 0
        %1421 = vmatpush1.bf16.msra.mxu0 %v1172
        %1422 = vmatprep.subr.bf16.mxu0 0
        %1423 = vmatpush1.bf16.msra.mxu0 %v1171
        %1424 = vmatprep.subr.bf16.mxu0 0
        %1425 = vmatpush2.bf16.msra.mxu0 0
        %1426 = vmatprep.subr.bf16.mxu0 0
        %1427 = vmatpush2.bf16.msra.mxu0 0
        %1428 = vmatprep.subr.bf16.mxu0 0
        %1429 = vmatpush2.bf16.msra.mxu0 0
        %1430 = vmatprep.subr.bf16.mxu0 0
        %1431 = vmatpush2.bf16.msra.mxu0 0
        %1432 = vmatprep.subr.bf16.mxu0 0
        %1433 = vmatpush2.bf16.msra.mxu0 0
        %1434 = vmatprep.subr.bf16.mxu0 0
        %1435 = vmatpush2.bf16.msra.mxu0 0
        %1436 = vmatprep.subr.bf16.mxu0 0
        %1437 = vmatpush2.bf16.msra.mxu0 0
        %1438 = vmatprep.subr.bf16.mxu0 0
        %1439 = vmatpush2.bf16.msra.mxu0 0
        %1440 = vmatprep.mubr.bf16.mxu0 0
        %1441 = vmatmul.mubr.bf16.gmra.mxu0 %v1406
        %v1442 = vpop.f32.mrf.mxu0
        %v1443 = vadd.f32 %v1137, %v1442
        %v1444 = vpop.f32.mrf.mxu0
        %v1445 = vpop.f32.mrf.mxu0
        %v1446 = vpop.f32.mrf.mxu0
        %1447 = vdwg.mxu0
        %v1448 = vld [vmem:[%s631 + $0x2] sm:$0x3]
        %v1449 = vsel %vm1228, %v1443, -inf
        %1450 = vmax.xlane.f32.xlu0 %v1449
        %v1451 = vpop.xlane.xlu0 %1450
        %v1452 = vsub.f32 %v1443, %v1451
        %v1453 = vmul.f32 %v1452, 1.442695
        %v1454 = vpow.pop %v1453
        %v1455 = vsel %vm1228, %v1454, 0.0
        %1456 = vadd.xlane.f32.xlu0 %v1455
        %v1457 = vpop.xlane.xlu0 %1456
        %v1458 = vlog2.pop %v1457
        %v1459 = vmul.f32 %v1458, 0.6931472
        %v1460 = vadd.f32 %v1451, %v1459
        %1461 = vset.pattern.permute.xlu0 0
        %1462 = vperm.xlu0 %1461, %v1448
        %v1463 = vpop.permute.xlu0 %1462
        %vm1464 = vcmp.eq.s32.totalorder %v1242, %v1463
        %v1465 = vsel %vm1464, %v1443, 0.0
        %v1466 = vsel %vm1228, %v1465, 0.0
        %1467 = vadd.xlane.f32.xlu0 %v1466
        %v1468 = vpop.xlane.xlu0 %1467
        %vm1469 = vcmp.ne.s32.totalorder %v1448, 0
        %v1470 = vsel %vm1469, 1, 0
        %v1471 = vcvt.s32.f32 %v1470
        %v1472 = vsub.f32 %v1460, %v1468
        %v1473 = vmul.f32 %v1472, %v1471
        %v1474 = vsel %vm1256, %v1473, 0.0
        %v1475 = vrot.slane %v1474, 4
        %v1476 = vadd.f32 %v1474, %v1475
        %v1477 = vrot.slane %v1476, 2
        %v1478 = vadd.f32 %v1476, %v1477
        %v1479 = vrot.slane %v1478, 1
        %v1480 = vadd.f32 %v1478, %v1479
        %v1481 = vsel %vm1256, %v1471, 0.0
        %v1482 = vrot.slane %v1481, 4
        %v1483 = vadd.f32 %v1481, %v1482
        %v1484 = vrot.slane %v1483, 2
        %v1485 = vadd.f32 %v1483, %v1484
        %v1486 = vrot.slane %v1485, 1
        %v1487 = vadd.f32 %v1485, %v1486
        %v1488 = vmax.f32 %v1487, 1.0
        %v1489 = vrcp.pop %v1488
        %v1490 = vmul.f32 %v1480, %v1489
        %v1491 = vadd.f32 %v1274, %v1490
        %1492 = vmatprep.subr.bf16.mxu0 %v944
        %1493 = vmatpush1.bf16.msra.mxu0 %v943
        %1494 = vmatprep.subr.bf16.mxu0 %v940
        %1495 = vmatpush1.bf16.msra.mxu0 %v939
        %1496 = vmatprep.subr.bf16.mxu0 %v936
        %1497 = vmatpush1.bf16.msra.mxu0 %v935
        %1498 = vmatprep.subr.bf16.mxu0 %v932
        %1499 = vmatpush1.bf16.msra.mxu0 %v931
        %1500 = vmatprep.subr.bf16.mxu0 %v928
        %1501 = vmatpush1.bf16.msra.mxu0 %v927
        %1502 = vmatprep.subr.bf16.mxu0 %v924
        %1503 = vmatpush1.bf16.msra.mxu0 %v923
        %1504 = vmatprep.subr.bf16.mxu0 %v920
        %1505 = vmatpush1.bf16.msra.mxu0 %v919
        %1506 = vmatprep.subr.bf16.mxu0 %v916
        %1507 = vmatpush1.bf16.msra.mxu0 %v915
        %1508 = vmatprep.subr.bf16.mxu0 0
        %1509 = vmatpush2.bf16.msra.mxu0 0
        %1510 = vmatprep.subr.bf16.mxu0 0
        %1511 = vmatpush2.bf16.msra.mxu0 0
        %1512 = vmatprep.subr.bf16.mxu0 0
        %1513 = vmatpush2.bf16.msra.mxu0 0
        %1514 = vmatprep.subr.bf16.mxu0 0
        %1515 = vmatpush2.bf16.msra.mxu0 0
        %1516 = vmatprep.subr.bf16.mxu0 0
        %1517 = vmatpush2.bf16.msra.mxu0 0
        %1518 = vmatprep.subr.bf16.mxu0 0
        %1519 = vmatpush2.bf16.msra.mxu0 0
        %1520 = vmatprep.subr.bf16.mxu0 0
        %1521 = vmatpush2.bf16.msra.mxu0 0
        %1522 = vmatprep.subr.bf16.mxu0 0
        %1523 = vmatpush2.bf16.msra.mxu0 0
        %1524 = vmatprep.mubr.bf16.mxu0 0
        %1525 = vmatmul.mubr.bf16.gmra.mxu0 %v1406
        %v1526 = vpop.f32.mrf.mxu0
        %v1527 = vadd.f32 0.0, %v1526
        %v1528 = vpop.f32.mrf.mxu0
        %v1529 = vadd.f32 0.0, %v1528
        %v1530 = vpop.f32.mrf.mxu0
        %v1531 = vpop.f32.mrf.mxu0
        %1532 = vdwg.mxu0
        %1533 = vmatprep.subr.bf16.mxu0 %v946
        %1534 = vmatpush1.bf16.msra.mxu0 %v945
        %1535 = vmatprep.subr.bf16.mxu0 %v942
        %1536 = vmatpush1.bf16.msra.mxu0 %v941
        %1537 = vmatprep.subr.bf16.mxu0 %v938
        %1538 = vmatpush1.bf16.msra.mxu0 %v937
        %1539 = vmatprep.subr.bf16.mxu0 %v934
        %1540 = vmatpush1.bf16.msra.mxu0 %v933
        %1541 = vmatprep.subr.bf16.mxu0 %v930
        %1542 = vmatpush1.bf16.msra.mxu0 %v929
        %1543 = vmatprep.subr.bf16.mxu0 %v926
        %1544 = vmatpush1.bf16.msra.mxu0 %v925
        %1545 = vmatprep.subr.bf16.mxu0 %v922
        %1546 = vmatpush1.bf16.msra.mxu0 %v921
        %1547 = vmatprep.subr.bf16.mxu0 %v918
        %1548 = vmatpush1.bf16.msra.mxu0 %v917
        %1549 = vmatprep.subr.bf16.mxu0 0
        %1550 = vmatpush2.bf16.msra.mxu0 0
        %1551 = vmatprep.subr.bf16.mxu0 0
        %1552 = vmatpush2.bf16.msra.mxu0 0
        %1553 = vmatprep.subr.bf16.mxu0 0
        %1554 = vmatpush2.bf16.msra.mxu0 0
        %1555 = vmatprep.subr.bf16.mxu0 0
        %1556 = vmatpush2.bf16.msra.mxu0 0
        %1557 = vmatprep.subr.bf16.mxu0 0
        %1558 = vmatpush2.bf16.msra.mxu0 0
        %1559 = vmatprep.subr.bf16.mxu0 0
        %1560 = vmatpush2.bf16.msra.mxu0 0
        %1561 = vmatprep.subr.bf16.mxu0 0
        %1562 = vmatpush2.bf16.msra.mxu0 0
        %1563 = vmatprep.subr.bf16.mxu0 0
        %1564 = vmatpush2.bf16.msra.mxu0 0
        %1565 = vmatprep.mubr.bf16.mxu0 0
        %1566 = vmatmul.mubr.bf16.gmra.mxu0 %v1406
        %v1567 = vpop.f32.mrf.mxu0
        %v1568 = vadd.f32 0.0, %v1567
        %v1569 = vpop.f32.mrf.mxu0
        %v1570 = vadd.f32 0.0, %v1569
        %v1571 = vpop.f32.mrf.mxu0
        %v1572 = vpop.f32.mrf.mxu0
        %1573 = vdwg.mxu0
        %v1578 = vrot.slane %v1527, 4
        %v1579 = vrot.slane %v1529, 4
        %v1580 = vrot.slane %v1568, 4
        %v1581 = vrot.slane %v1570, 4
        %v1586 = vadd.f32 %v737, %v1578
        %v1587 = vadd.f32 %v739, %v1579
        %v1588 = vadd.f32 %v778, %v1580
        %v1589 = vadd.f32 %v780, %v1581
        %v1590 = vadd.f32 %v1586, %v1070
        %v1591 = vadd.f32 %v1587, %v1074
        %v1592 = vadd.f32 %v1588, %v1078
        %v1593 = vadd.f32 %v1589, %v1082
        %v1594 = vxor.u32 %v1590, 2147483648
        %v1595 = vmul.f32 %v1594, 1.442695
        %v1596 = vpow.pop %v1595
        %v1597 = vadd.f32 %v1596, 1.0
        %v1598 = vrcp.pop %v1597
        %v1599 = vmul.f32 1.0, %v1598
        %v1600 = vxor.u32 %v1591, 2147483648
        %v1601 = vmul.f32 %v1600, 1.442695
        %v1602 = vpow.pop %v1601
        %v1603 = vadd.f32 %v1602, 1.0
        %v1604 = vrcp.pop %v1603
        %v1605 = vmul.f32 1.0, %v1604
        %v1606 = vtanh.pop %v1592
        %v1607 = vxor.u32 %v1593, 2147483648
        %v1608 = vmul.f32 %v1607, 1.442695
        %v1609 = vpow.pop %v1608
        %v1610 = vadd.f32 %v1609, 1.0
        %v1611 = vrcp.pop %v1610
        %v1612 = vmul.f32 1.0, %v1611
        %v1614 = vrot.slane %v1401, 6
        %v1616 = vmul.f32 %v1605, %v1614
        %v1617 = vmul.f32 %v1599, %v1606
        %v1618 = vadd.f32 %v1616, %v1617
        %v1619 = vtanh.pop %v1618
        %v1620 = vmul.f32 %v1612, %v1619
        %v1621 = vpack.c.bf16 %v1620, %v1620
        %v1623 = vrot.slane %v1621, 2
        %1625 = vmatprep.subr.bf16.mxu0 0
        %1626 = vmatpush1.bf16.msra.mxu0 %v1178
        %1627 = vmatprep.subr.bf16.mxu0 0
        %1628 = vmatpush1.bf16.msra.mxu0 %v1177
        %1629 = vmatprep.subr.bf16.mxu0 0
        %1630 = vmatpush1.bf16.msra.mxu0 %v1176
        %1631 = vmatprep.subr.bf16.mxu0 0
        %1632 = vmatpush1.bf16.msra.mxu0 %v1175
        %1633 = vmatprep.subr.bf16.mxu0 0
        %1634 = vmatpush1.bf16.msra.mxu0 %v1174
        %1635 = vmatprep.subr.bf16.mxu0 0
        %1636 = vmatpush1.bf16.msra.mxu0 %v1173
        %1637 = vmatprep.subr.bf16.mxu0 0
        %1638 = vmatpush1.bf16.msra.mxu0 %v1172
        %1639 = vmatprep.subr.bf16.mxu0 0
        %1640 = vmatpush1.bf16.msra.mxu0 %v1171
        %1641 = vmatprep.subr.bf16.mxu0 0
        %1642 = vmatpush2.bf16.msra.mxu0 0
        %1643 = vmatprep.subr.bf16.mxu0 0
        %1644 = vmatpush2.bf16.msra.mxu0 0
        %1645 = vmatprep.subr.bf16.mxu0 0
        %1646 = vmatpush2.bf16.msra.mxu0 0
        %1647 = vmatprep.subr.bf16.mxu0 0
        %1648 = vmatpush2.bf16.msra.mxu0 0
        %1649 = vmatprep.subr.bf16.mxu0 0
        %1650 = vmatpush2.bf16.msra.mxu0 0
        %1651 = vmatprep.subr.bf16.mxu0 0
        %1652 = vmatpush2.bf16.msra.mxu0 0
        %1653 = vmatprep.subr.bf16.mxu0 0
        %1654 = vmatpush2.bf16.msra.mxu0 0
        %1655 = vmatprep.subr.bf16.mxu0 0
        %1656 = vmatpush2.bf16.msra.mxu0 0
        %1657 = vmatprep.mubr.bf16.mxu0 0
        %1658 = vmatmul.mubr.bf16.gmra.mxu0 %v1623
        %v1659 = vpop.f32.mrf.mxu0
        %v1660 = vadd.f32 %v1137, %v1659
        %v1661 = vpop.f32.mrf.mxu0
        %v1662 = vpop.f32.mrf.mxu0
        %v1663 = vpop.f32.mrf.mxu0
        %1664 = vdwg.mxu0
        %v1665 = vld [vmem:[%s631 + $0x4] sm:$0x3]
        %v1666 = vsel %vm1228, %v1660, -inf
        %1667 = vmax.xlane.f32.xlu0 %v1666
        %v1668 = vpop.xlane.xlu0 %1667
        %v1669 = vsub.f32 %v1660, %v1668
        %v1670 = vmul.f32 %v1669, 1.442695
        %v1671 = vpow.pop %v1670
        %v1672 = vsel %vm1228, %v1671, 0.0
        %1673 = vadd.xlane.f32.xlu0 %v1672
        %v1674 = vpop.xlane.xlu0 %1673
        %v1675 = vlog2.pop %v1674
        %v1676 = vmul.f32 %v1675, 0.6931472
        %v1677 = vadd.f32 %v1668, %v1676
        %1678 = vset.pattern.permute.xlu0 0
        %1679 = vperm.xlu0 %1678, %v1665
        %v1680 = vpop.permute.xlu0 %1679
        %vm1681 = vcmp.eq.s32.totalorder %v1242, %v1680
        %v1682 = vsel %vm1681, %v1660, 0.0
        %v1683 = vsel %vm1228, %v1682, 0.0
        %1684 = vadd.xlane.f32.xlu0 %v1683
        %v1685 = vpop.xlane.xlu0 %1684
        %vm1686 = vcmp.ne.s32.totalorder %v1665, 0
        %v1687 = vsel %vm1686, 1, 0
        %v1688 = vcvt.s32.f32 %v1687
        %v1689 = vsub.f32 %v1677, %v1685
        %v1690 = vmul.f32 %v1689, %v1688
        %v1691 = vsel %vm1256, %v1690, 0.0
        %v1692 = vrot.slane %v1691, 4
        %v1693 = vadd.f32 %v1691, %v1692
        %v1694 = vrot.slane %v1693, 2
        %v1695 = vadd.f32 %v1693, %v1694
        %v1696 = vrot.slane %v1695, 1
        %v1697 = vadd.f32 %v1695, %v1696
        %v1698 = vsel %vm1256, %v1688, 0.0
        %v1699 = vrot.slane %v1698, 4
        %v1700 = vadd.f32 %v1698, %v1699
        %v1701 = vrot.slane %v1700, 2
        %v1702 = vadd.f32 %v1700, %v1701
        %v1703 = vrot.slane %v1702, 1
        %v1704 = vadd.f32 %v1702, %v1703
        %v1705 = vmax.f32 %v1704, 1.0
        %v1706 = vrcp.pop %v1705
        %v1707 = vmul.f32 %v1697, %v1706
        %v1708 = vadd.f32 %v1491, %v1707
        %1709 = vmatprep.subr.bf16.mxu0 %v944
        %1710 = vmatpush1.bf16.msra.mxu0 %v943
        %1711 = vmatprep.subr.bf16.mxu0 %v940
        %1712 = vmatpush1.bf16.msra.mxu0 %v939
        %1713 = vmatprep.subr.bf16.mxu0 %v936
        %1714 = vmatpush1.bf16.msra.mxu0 %v935
        %1715 = vmatprep.subr.bf16.mxu0 %v932
        %1716 = vmatpush1.bf16.msra.mxu0 %v931
        %1717 = vmatprep.subr.bf16.mxu0 %v928
        %1718 = vmatpush1.bf16.msra.mxu0 %v927
        %1719 = vmatprep.subr.bf16.mxu0 %v924
        %1720 = vmatpush1.bf16.msra.mxu0 %v923
        %1721 = vmatprep.subr.bf16.mxu0 %v920
        %1722 = vmatpush1.bf16.msra.mxu0 %v919
        %1723 = vmatprep.subr.bf16.mxu0 %v916
        %1724 = vmatpush1.bf16.msra.mxu0 %v915
        %1725 = vmatprep.subr.bf16.mxu0 0
        %1726 = vmatpush2.bf16.msra.mxu0 0
        %1727 = vmatprep.subr.bf16.mxu0 0
        %1728 = vmatpush2.bf16.msra.mxu0 0
        %1729 = vmatprep.subr.bf16.mxu0 0
        %1730 = vmatpush2.bf16.msra.mxu0 0
        %1731 = vmatprep.subr.bf16.mxu0 0
        %1732 = vmatpush2.bf16.msra.mxu0 0
        %1733 = vmatprep.subr.bf16.mxu0 0
        %1734 = vmatpush2.bf16.msra.mxu0 0
        %1735 = vmatprep.subr.bf16.mxu0 0
        %1736 = vmatpush2.bf16.msra.mxu0 0
        %1737 = vmatprep.subr.bf16.mxu0 0
        %1738 = vmatpush2.bf16.msra.mxu0 0
        %1739 = vmatprep.subr.bf16.mxu0 0
        %1740 = vmatpush2.bf16.msra.mxu0 0
        %1741 = vmatprep.mubr.bf16.mxu0 0
        %1742 = vmatmul.mubr.bf16.gmra.mxu0 %v1623
        %v1743 = vpop.f32.mrf.mxu0
        %v1744 = vadd.f32 0.0, %v1743
        %v1745 = vpop.f32.mrf.mxu0
        %v1746 = vadd.f32 0.0, %v1745
        %v1747 = vpop.f32.mrf.mxu0
        %v1748 = vpop.f32.mrf.mxu0
        %1749 = vdwg.mxu0
        %1750 = vmatprep.subr.bf16.mxu0 %v946
        %1751 = vmatpush1.bf16.msra.mxu0 %v945
        %1752 = vmatprep.subr.bf16.mxu0 %v942
        %1753 = vmatpush1.bf16.msra.mxu0 %v941
        %1754 = vmatprep.subr.bf16.mxu0 %v938
        %1755 = vmatpush1.bf16.msra.mxu0 %v937
        %1756 = vmatprep.subr.bf16.mxu0 %v934
        %1757 = vmatpush1.bf16.msra.mxu0 %v933
        %1758 = vmatprep.subr.bf16.mxu0 %v930
        %1759 = vmatpush1.bf16.msra.mxu0 %v929
        %1760 = vmatprep.subr.bf16.mxu0 %v926
        %1761 = vmatpush1.bf16.msra.mxu0 %v925
        %1762 = vmatprep.subr.bf16.mxu0 %v922
        %1763 = vmatpush1.bf16.msra.mxu0 %v921
        %1764 = vmatprep.subr.bf16.mxu0 %v918
        %1765 = vmatpush1.bf16.msra.mxu0 %v917
        %1766 = vmatprep.subr.bf16.mxu0 0
        %1767 = vmatpush2.bf16.msra.mxu0 0
        %1768 = vmatprep.subr.bf16.mxu0 0
        %1769 = vmatpush2.bf16.msra.mxu0 0
        %1770 = vmatprep.subr.bf16.mxu0 0
        %1771 = vmatpush2.bf16.msra.mxu0 0
        %1772 = vmatprep.subr.bf16.mxu0 0
        %1773 = vmatpush2.bf16.msra.mxu0 0
        %1774 = vmatprep.subr.bf16.mxu0 0
        %1775 = vmatpush2.bf16.msra.mxu0 0
        %1776 = vmatprep.subr.bf16.mxu0 0
        %1777 = vmatpush2.bf16.msra.mxu0 0
        %1778 = vmatprep.subr.bf16.mxu0 0
        %1779 = vmatpush2.bf16.msra.mxu0 0
        %1780 = vmatprep.subr.bf16.mxu0 0
        %1781 = vmatpush2.bf16.msra.mxu0 0
        %1782 = vmatprep.mubr.bf16.mxu0 0
        %1783 = vmatmul.mubr.bf16.gmra.mxu0 %v1623
        %v1784 = vpop.f32.mrf.mxu0
        %v1785 = vadd.f32 0.0, %v1784
        %v1786 = vpop.f32.mrf.mxu0
        %v1787 = vadd.f32 0.0, %v1786
        %v1788 = vpop.f32.mrf.mxu0
        %v1789 = vpop.f32.mrf.mxu0
        %1790 = vdwg.mxu0
        %v1795 = vrot.slane %v1744, 2
        %v1796 = vrot.slane %v1746, 2
        %v1797 = vrot.slane %v1785, 2
        %v1798 = vrot.slane %v1787, 2
        %v1803 = vadd.f32 %v737, %v1795
        %v1804 = vadd.f32 %v739, %v1796
        %v1805 = vadd.f32 %v778, %v1797
        %v1806 = vadd.f32 %v780, %v1798
        %v1807 = vadd.f32 %v1803, %v1070
        %v1808 = vadd.f32 %v1804, %v1074
        %v1809 = vadd.f32 %v1805, %v1078
        %v1810 = vadd.f32 %v1806, %v1082
        %v1811 = vxor.u32 %v1807, 2147483648
        %v1812 = vmul.f32 %v1811, 1.442695
        %v1813 = vpow.pop %v1812
        %v1814 = vadd.f32 %v1813, 1.0
        %v1815 = vrcp.pop %v1814
        %v1816 = vmul.f32 1.0, %v1815
        %v1817 = vxor.u32 %v1808, 2147483648
        %v1818 = vmul.f32 %v1817, 1.442695
        %v1819 = vpow.pop %v1818
        %v1820 = vadd.f32 %v1819, 1.0
        %v1821 = vrcp.pop %v1820
        %v1822 = vmul.f32 1.0, %v1821
        %v1823 = vtanh.pop %v1809
        %v1824 = vxor.u32 %v1810, 2147483648
        %v1825 = vmul.f32 %v1824, 1.442695
        %v1826 = vpow.pop %v1825
        %v1827 = vadd.f32 %v1826, 1.0
        %v1828 = vrcp.pop %v1827
        %v1829 = vmul.f32 1.0, %v1828
        %v1831 = vrot.slane %v1618, 6
        %v1833 = vmul.f32 %v1822, %v1831
        %v1834 = vmul.f32 %v1816, %v1823
        %v1835 = vadd.f32 %v1833, %v1834
        %v1836 = vtanh.pop %v1835
        %v1837 = vmul.f32 %v1829, %v1836
        %v1838 = vpack.c.bf16 %v1837, %v1837
        %v1840 = vrot.slane %v1838, 3
        %1842 = vmatprep.subr.bf16.mxu0 0
        %1843 = vmatpush1.bf16.msra.mxu0 %v1178
        %1844 = vmatprep.subr.bf16.mxu0 0
        %1845 = vmatpush1.bf16.msra.mxu0 %v1177
        %1846 = vmatprep.subr.bf16.mxu0 0
        %1847 = vmatpush1.bf16.msra.mxu0 %v1176
        %1848 = vmatprep.subr.bf16.mxu0 0
        %1849 = vmatpush1.bf16.msra.mxu0 %v1175
        %1850 = vmatprep.subr.bf16.mxu0 0
        %1851 = vmatpush1.bf16.msra.mxu0 %v1174
        %1852 = vmatprep.subr.bf16.mxu0 0
        %1853 = vmatpush1.bf16.msra.mxu0 %v1173
        %1854 = vmatprep.subr.bf16.mxu0 0
        %1855 = vmatpush1.bf16.msra.mxu0 %v1172
        %1856 = vmatprep.subr.bf16.mxu0 0
        %1857 = vmatpush1.bf16.msra.mxu0 %v1171
        %1858 = vmatprep.subr.bf16.mxu0 0
        %1859 = vmatpush2.bf16.msra.mxu0 0
        %1860 = vmatprep.subr.bf16.mxu0 0
        %1861 = vmatpush2.bf16.msra.mxu0 0
        %1862 = vmatprep.subr.bf16.mxu0 0
        %1863 = vmatpush2.bf16.msra.mxu0 0
        %1864 = vmatprep.subr.bf16.mxu0 0
        %1865 = vmatpush2.bf16.msra.mxu0 0
        %1866 = vmatprep.subr.bf16.mxu0 0
        %1867 = vmatpush2.bf16.msra.mxu0 0
        %1868 = vmatprep.subr.bf16.mxu0 0
        %1869 = vmatpush2.bf16.msra.mxu0 0
        %1870 = vmatprep.subr.bf16.mxu0 0
        %1871 = vmatpush2.bf16.msra.mxu0 0
        %1872 = vmatprep.subr.bf16.mxu0 0
        %1873 = vmatpush2.bf16.msra.mxu0 0
        %1874 = vmatprep.mubr.bf16.mxu0 0
        %1875 = vmatmul.mubr.bf16.gmra.mxu0 %v1840
        %v1876 = vpop.f32.mrf.mxu0
        %v1877 = vadd.f32 %v1137, %v1876
        %v1878 = vpop.f32.mrf.mxu0
        %v1879 = vpop.f32.mrf.mxu0
        %v1880 = vpop.f32.mrf.mxu0
        %1881 = vdwg.mxu0
        %v1882 = vld [vmem:[%s631 + $0x6] sm:$0x3]
        %v1883 = vsel %vm1228, %v1877, -inf
        %1884 = vmax.xlane.f32.xlu0 %v1883
        %v1885 = vpop.xlane.xlu0 %1884
        %v1886 = vsub.f32 %v1877, %v1885
        %v1887 = vmul.f32 %v1886, 1.442695
        %v1888 = vpow.pop %v1887
        %v1889 = vsel %vm1228, %v1888, 0.0
        %1890 = vadd.xlane.f32.xlu0 %v1889
        %v1891 = vpop.xlane.xlu0 %1890
        %v1892 = vlog2.pop %v1891
        %v1893 = vmul.f32 %v1892, 0.6931472
        %v1894 = vadd.f32 %v1885, %v1893
        %1895 = vset.pattern.permute.xlu0 0
        %1896 = vperm.xlu0 %1895, %v1882
        %v1897 = vpop.permute.xlu0 %1896
        %vm1898 = vcmp.eq.s32.totalorder %v1242, %v1897
        %v1899 = vsel %vm1898, %v1877, 0.0
        %v1900 = vsel %vm1228, %v1899, 0.0
        %1901 = vadd.xlane.f32.xlu0 %v1900
        %v1902 = vpop.xlane.xlu0 %1901
        %vm1903 = vcmp.ne.s32.totalorder %v1882, 0
        %v1904 = vsel %vm1903, 1, 0
        %v1905 = vcvt.s32.f32 %v1904
        %v1906 = vsub.f32 %v1894, %v1902
        %v1907 = vmul.f32 %v1906, %v1905
        %v1908 = vsel %vm1256, %v1907, 0.0
        %v1909 = vrot.slane %v1908, 4
        %v1910 = vadd.f32 %v1908, %v1909
        %v1911 = vrot.slane %v1910, 2
        %v1912 = vadd.f32 %v1910, %v1911
        %v1913 = vrot.slane %v1912, 1
        %v1914 = vadd.f32 %v1912, %v1913
        %v1915 = vsel %vm1256, %v1905, 0.0
        %v1916 = vrot.slane %v1915, 4
        %v1917 = vadd.f32 %v1915, %v1916
        %v1918 = vrot.slane %v1917, 2
        %v1919 = vadd.f32 %v1917, %v1918
        %v1920 = vrot.slane %v1919, 1
        %v1921 = vadd.f32 %v1919, %v1920
        %v1922 = vmax.f32 %v1921, 1.0
        %v1923 = vrcp.pop %v1922
        %v1924 = vmul.f32 %v1914, %v1923
        %v1925 = vadd.f32 %v1708, %v1924
        %1926 = vst [vmem:[#allocation3 - $0x6] sm:$0xc0] %v1835
        %v1927 = vld [vmem:[#allocation4] sm:$0x3]
        %v1929 = vrot.slane %v1927, 2
        %v1931 = vpack.c.bf16 %v1929, %v1929
        %v1932 = vld [vmem:[%s12] sm:$0xff]
        %v1933 = vld [vmem:[%s12 + $0x8] sm:$0xff]
        %v1934 = vld [vmem:[%s12 + $0x10] sm:$0xff]
        %v1935 = vld [vmem:[%s12 + $0x18] sm:$0xff]
        %v1936 = vld [vmem:[%s12 + $0x20] sm:$0xff]
        %v1937 = vld [vmem:[%s12 + $0x28] sm:$0xff]
        %v1938 = vld [vmem:[%s12 + $0x30] sm:$0xff]
        %v1939 = vld [vmem:[%s12 + $0x38] sm:$0xff]
        %v1940 = vld [vmem:[%s12 + $0x40] sm:$0xff]
        %v1941 = vld [vmem:[%s12 + $0x48] sm:$0xff]
        %v1942 = vld [vmem:[%s12 + $0x50] sm:$0xff]
        %v1943 = vld [vmem:[%s12 + $0x58] sm:$0xff]
        %v1944 = vld [vmem:[%s12 + $0x60] sm:$0xff]
        %v1945 = vld [vmem:[%s12 + $0x68] sm:$0xff]
        %v1946 = vld [vmem:[%s12 + $0x70] sm:$0xff]
        %v1947 = vld [vmem:[%s12 + $0x78] sm:$0xff]
        %v1948 = vld [vmem:[%s12 + $0x80] sm:$0xff]
        %v1949 = vld [vmem:[%s12 + $0x88] sm:$0xff]
        %v1950 = vld [vmem:[%s12 + $0x90] sm:$0xff]
        %v1951 = vld [vmem:[%s12 + $0x98] sm:$0xff]
        %v1952 = vld [vmem:[%s12 + $0xa0] sm:$0xff]
        %v1953 = vld [vmem:[%s12 + $0xa8] sm:$0xff]
        %v1954 = vld [vmem:[%s12 + $0xb0] sm:$0xff]
        %v1955 = vld [vmem:[%s12 + $0xb8] sm:$0xff]
        %v1956 = vld [vmem:[%s12 + $0xc0] sm:$0xff]
        %v1957 = vld [vmem:[%s12 + $0xc8] sm:$0xff]
        %v1958 = vld [vmem:[%s12 + $0xd0] sm:$0xff]
        %v1959 = vld [vmem:[%s12 + $0xd8] sm:$0xff]
        %v1960 = vld [vmem:[%s12 + $0xe0] sm:$0xff]
        %v1961 = vld [vmem:[%s12 + $0xe8] sm:$0xff]
        %v1962 = vld [vmem:[%s12 + $0xf0] sm:$0xff]
        %v1963 = vld [vmem:[%s12 + $0xf8] sm:$0xff]
        %v1964 = vld [vmem:[%s12 + $0x100] sm:$0xff]
        %v1965 = vld [vmem:[%s12 + $0x108] sm:$0xff]
        %v1966 = vld [vmem:[%s12 + $0x110] sm:$0xff]
        %v1967 = vld [vmem:[%s12 + $0x118] sm:$0xff]
        %v1968 = vld [vmem:[%s12 + $0x120] sm:$0xff]
        %v1969 = vld [vmem:[%s12 + $0x128] sm:$0xff]
        %v1970 = vld [vmem:[%s12 + $0x130] sm:$0xff]
        %v1971 = vld [vmem:[%s12 + $0x138] sm:$0xff]
        %v1972 = vld [vmem:[%s12 + $0x140] sm:$0xff]
        %v1973 = vld [vmem:[%s12 + $0x148] sm:$0xff]
        %v1974 = vld [vmem:[%s12 + $0x150] sm:$0xff]
        %v1975 = vld [vmem:[%s12 + $0x158] sm:$0xff]
        %v1976 = vld [vmem:[%s12 + $0x160] sm:$0xff]
        %v1977 = vld [vmem:[%s12 + $0x168] sm:$0xff]
        %v1978 = vld [vmem:[%s12 + $0x170] sm:$0xff]
        %v1979 = vld [vmem:[%s12 + $0x178] sm:$0xff]
        %v1980 = vld [vmem:[%s12 + $0x180] sm:$0xff]
        %v1981 = vld [vmem:[%s12 + $0x188] sm:$0xff]
        %v1982 = vld [vmem:[%s12 + $0x190] sm:$0xff]
        %v1983 = vld [vmem:[%s12 + $0x198] sm:$0xff]
        %v1984 = vld [vmem:[%s12 + $0x1a0] sm:$0xff]
        %v1985 = vld [vmem:[%s12 + $0x1a8] sm:$0xff]
        %v1986 = vld [vmem:[%s12 + $0x1b0] sm:$0xff]
        %v1987 = vld [vmem:[%s12 + $0x1b8] sm:$0xff]
        %v1988 = vld [vmem:[%s12 + $0x1c0] sm:$0xff]
        %v1989 = vld [vmem:[%s12 + $0x1c8] sm:$0xff]
        %v1990 = vld [vmem:[%s12 + $0x1d0] sm:$0xff]
        %v1991 = vld [vmem:[%s12 + $0x1d8] sm:$0xff]
        %v1992 = vld [vmem:[%s12 + $0x1e0] sm:$0xff]
        %v1993 = vld [vmem:[%s12 + $0x1e8] sm:$0xff]
        %v1994 = vld [vmem:[%s12 + $0x1f0] sm:$0xff]
        %v1995 = vld [vmem:[%s12 + $0x1f8] sm:$0xff]
        %v1996 = vld [vmem:[%s13] sm:$0xf]
        %v1998 = vlaneseq
        %v1999 = vshrl.u32 %v1998, 7
        %v2000 = vsub.s32 0, %v1999
        %v2001 = vrot.slane %v1996, %v2000
        %v2002 = vlaneseq
        %v2003 = vshrl.u32 %v2002, 7
        %v2004 = vsub.s32 1, %v2003
        %v2005 = vrot.slane %v1996, %v2004
        %v2006 = vlaneseq
        %v2007 = vshrl.u32 %v2006, 7
        %v2008 = vsub.s32 2, %v2007
        %v2009 = vrot.slane %v1996, %v2008
        %v2010 = vlaneseq
        %v2011 = vshrl.u32 %v2010, 7
        %v2012 = vsub.s32 3, %v2011
        %v2013 = vrot.slane %v1996, %v2012
        %v2019 = vrot.slane %v1931, 3
        %v2085 = vunpack.c.l.b16 %v1932
        %v2086 = vunpack.c.h.b16 %v1932
        %v2087 = vunpack.c.l.b16 %v1933
        %v2088 = vunpack.c.h.b16 %v1933
        %v2089 = vunpack.c.l.b16 %v1934
        %v2090 = vunpack.c.h.b16 %v1934
        %v2091 = vunpack.c.l.b16 %v1935
        %v2092 = vunpack.c.h.b16 %v1935
        %v2093 = vunpack.c.l.b16 %v1936
        %v2094 = vunpack.c.h.b16 %v1936
        %v2095 = vunpack.c.l.b16 %v1937
        %v2096 = vunpack.c.h.b16 %v1937
        %v2097 = vunpack.c.l.b16 %v1938
        %v2098 = vunpack.c.h.b16 %v1938
        %v2099 = vunpack.c.l.b16 %v1939
        %v2100 = vunpack.c.h.b16 %v1939
        %v2101 = vunpack.c.l.b16 %v1940
        %v2102 = vunpack.c.h.b16 %v1940
        %v2103 = vunpack.c.l.b16 %v1941
        %v2104 = vunpack.c.h.b16 %v1941
        %v2105 = vunpack.c.l.b16 %v1942
        %v2106 = vunpack.c.h.b16 %v1942
        %v2107 = vunpack.c.l.b16 %v1943
        %v2108 = vunpack.c.h.b16 %v1943
        %v2109 = vunpack.c.l.b16 %v1944
        %v2110 = vunpack.c.h.b16 %v1944
        %v2111 = vunpack.c.l.b16 %v1945
        %v2112 = vunpack.c.h.b16 %v1945
        %v2113 = vunpack.c.l.b16 %v1946
        %v2114 = vunpack.c.h.b16 %v1946
        %v2115 = vunpack.c.l.b16 %v1947
        %v2116 = vunpack.c.h.b16 %v1947
        %v2117 = vunpack.c.l.b16 %v1948
        %v2118 = vunpack.c.h.b16 %v1948
        %v2119 = vunpack.c.l.b16 %v1949
        %v2120 = vunpack.c.h.b16 %v1949
        %v2121 = vunpack.c.l.b16 %v1950
        %v2122 = vunpack.c.h.b16 %v1950
        %v2123 = vunpack.c.l.b16 %v1951
        %v2124 = vunpack.c.h.b16 %v1951
        %v2125 = vunpack.c.l.b16 %v1952
        %v2126 = vunpack.c.h.b16 %v1952
        %v2127 = vunpack.c.l.b16 %v1953
        %v2128 = vunpack.c.h.b16 %v1953
        %v2129 = vunpack.c.l.b16 %v1954
        %v2130 = vunpack.c.h.b16 %v1954
        %v2131 = vunpack.c.l.b16 %v1955
        %v2132 = vunpack.c.h.b16 %v1955
        %v2133 = vunpack.c.l.b16 %v1956
        %v2134 = vunpack.c.h.b16 %v1956
        %v2135 = vunpack.c.l.b16 %v1957
        %v2136 = vunpack.c.h.b16 %v1957
        %v2137 = vunpack.c.l.b16 %v1958
        %v2138 = vunpack.c.h.b16 %v1958
        %v2139 = vunpack.c.l.b16 %v1959
        %v2140 = vunpack.c.h.b16 %v1959
        %v2141 = vunpack.c.l.b16 %v1960
        %v2142 = vunpack.c.h.b16 %v1960
        %v2143 = vunpack.c.l.b16 %v1961
        %v2144 = vunpack.c.h.b16 %v1961
        %v2145 = vunpack.c.l.b16 %v1962
        %v2146 = vunpack.c.h.b16 %v1962
        %v2147 = vunpack.c.l.b16 %v1963
        %v2148 = vunpack.c.h.b16 %v1963
        %v2149 = vunpack.c.l.b16 %v1964
        %v2150 = vunpack.c.h.b16 %v1964
        %v2151 = vunpack.c.l.b16 %v1965
        %v2152 = vunpack.c.h.b16 %v1965
        %v2153 = vunpack.c.l.b16 %v1966
        %v2154 = vunpack.c.h.b16 %v1966
        %v2155 = vunpack.c.l.b16 %v1967
        %v2156 = vunpack.c.h.b16 %v1967
        %v2157 = vunpack.c.l.b16 %v1968
        %v2158 = vunpack.c.h.b16 %v1968
        %v2159 = vunpack.c.l.b16 %v1969
        %v2160 = vunpack.c.h.b16 %v1969
        %v2161 = vunpack.c.l.b16 %v1970
        %v2162 = vunpack.c.h.b16 %v1970
        %v2163 = vunpack.c.l.b16 %v1971
        %v2164 = vunpack.c.h.b16 %v1971
        %v2165 = vunpack.c.l.b16 %v1972
        %v2166 = vunpack.c.h.b16 %v1972
        %v2167 = vunpack.c.l.b16 %v1973
        %v2168 = vunpack.c.h.b16 %v1973
        %v2169 = vunpack.c.l.b16 %v1974
        %v2170 = vunpack.c.h.b16 %v1974
        %v2171 = vunpack.c.l.b16 %v1975
        %v2172 = vunpack.c.h.b16 %v1975
        %v2173 = vunpack.c.l.b16 %v1976
        %v2174 = vunpack.c.h.b16 %v1976
        %v2175 = vunpack.c.l.b16 %v1977
        %v2176 = vunpack.c.h.b16 %v1977
        %v2177 = vunpack.c.l.b16 %v1978
        %v2178 = vunpack.c.h.b16 %v1978
        %v2179 = vunpack.c.l.b16 %v1979
        %v2180 = vunpack.c.h.b16 %v1979
        %v2181 = vunpack.c.l.b16 %v1980
        %v2182 = vunpack.c.h.b16 %v1980
        %v2183 = vunpack.c.l.b16 %v1981
        %v2184 = vunpack.c.h.b16 %v1981
        %v2185 = vunpack.c.l.b16 %v1982
        %v2186 = vunpack.c.h.b16 %v1982
        %v2187 = vunpack.c.l.b16 %v1983
        %v2188 = vunpack.c.h.b16 %v1983
        %v2189 = vunpack.c.l.b16 %v1984
        %v2190 = vunpack.c.h.b16 %v1984
        %v2191 = vunpack.c.l.b16 %v1985
        %v2192 = vunpack.c.h.b16 %v1985
        %v2193 = vunpack.c.l.b16 %v1986
        %v2194 = vunpack.c.h.b16 %v1986
        %v2195 = vunpack.c.l.b16 %v1987
        %v2196 = vunpack.c.h.b16 %v1987
        %v2197 = vunpack.c.l.b16 %v1988
        %v2198 = vunpack.c.h.b16 %v1988
        %v2199 = vunpack.c.l.b16 %v1989
        %v2200 = vunpack.c.h.b16 %v1989
        %v2201 = vunpack.c.l.b16 %v1990
        %v2202 = vunpack.c.h.b16 %v1990
        %v2203 = vunpack.c.l.b16 %v1991
        %v2204 = vunpack.c.h.b16 %v1991
        %v2205 = vunpack.c.l.b16 %v1992
        %v2206 = vunpack.c.h.b16 %v1992
        %v2207 = vunpack.c.l.b16 %v1993
        %v2208 = vunpack.c.h.b16 %v1993
        %v2209 = vunpack.c.l.b16 %v1994
        %v2210 = vunpack.c.h.b16 %v1994
        %v2211 = vunpack.c.l.b16 %v1995
        %v2212 = vunpack.c.h.b16 %v1995
        %v2213 = vpack.c.b16 %v2089, %v2085
        %v2214 = vpack.c.b16 %v2090, %v2086
        %v2215 = vpack.c.b16 %v2091, %v2087
        %v2216 = vpack.c.b16 %v2092, %v2088
        %v2217 = vpack.c.b16 %v2097, %v2093
        %v2218 = vpack.c.b16 %v2098, %v2094
        %v2219 = vpack.c.b16 %v2099, %v2095
        %v2220 = vpack.c.b16 %v2100, %v2096
        %v2221 = vpack.c.b16 %v2105, %v2101
        %v2222 = vpack.c.b16 %v2106, %v2102
        %v2223 = vpack.c.b16 %v2107, %v2103
        %v2224 = vpack.c.b16 %v2108, %v2104
        %v2225 = vpack.c.b16 %v2113, %v2109
        %v2226 = vpack.c.b16 %v2114, %v2110
        %v2227 = vpack.c.b16 %v2115, %v2111
        %v2228 = vpack.c.b16 %v2116, %v2112
        %v2229 = vpack.c.b16 %v2121, %v2117
        %v2230 = vpack.c.b16 %v2122, %v2118
        %v2231 = vpack.c.b16 %v2123, %v2119
        %v2232 = vpack.c.b16 %v2124, %v2120
        %v2233 = vpack.c.b16 %v2129, %v2125
        %v2234 = vpack.c.b16 %v2130, %v2126
        %v2235 = vpack.c.b16 %v2131, %v2127
        %v2236 = vpack.c.b16 %v2132, %v2128
        %v2237 = vpack.c.b16 %v2137, %v2133
        %v2238 = vpack.c.b16 %v2138, %v2134
        %v2239 = vpack.c.b16 %v2139, %v2135
        %v2240 = vpack.c.b16 %v2140, %v2136
        %v2241 = vpack.c.b16 %v2145, %v2141
        %v2242 = vpack.c.b16 %v2146, %v2142
        %v2243 = vpack.c.b16 %v2147, %v2143
        %v2244 = vpack.c.b16 %v2148, %v2144
        %v2245 = vpack.c.b16 %v2153, %v2149
        %v2246 = vpack.c.b16 %v2154, %v2150
        %v2247 = vpack.c.b16 %v2155, %v2151
        %v2248 = vpack.c.b16 %v2156, %v2152
        %v2249 = vpack.c.b16 %v2161, %v2157
        %v2250 = vpack.c.b16 %v2162, %v2158
        %v2251 = vpack.c.b16 %v2163, %v2159
        %v2252 = vpack.c.b16 %v2164, %v2160
        %v2253 = vpack.c.b16 %v2169, %v2165
        %v2254 = vpack.c.b16 %v2170, %v2166
        %v2255 = vpack.c.b16 %v2171, %v2167
        %v2256 = vpack.c.b16 %v2172, %v2168
        %v2257 = vpack.c.b16 %v2177, %v2173
        %v2258 = vpack.c.b16 %v2178, %v2174
        %v2259 = vpack.c.b16 %v2179, %v2175
        %v2260 = vpack.c.b16 %v2180, %v2176
        %v2261 = vpack.c.b16 %v2185, %v2181
        %v2262 = vpack.c.b16 %v2186, %v2182
        %v2263 = vpack.c.b16 %v2187, %v2183
        %v2264 = vpack.c.b16 %v2188, %v2184
        %v2265 = vpack.c.b16 %v2193, %v2189
        %v2266 = vpack.c.b16 %v2194, %v2190
        %v2267 = vpack.c.b16 %v2195, %v2191
        %v2268 = vpack.c.b16 %v2196, %v2192
        %v2269 = vpack.c.b16 %v2201, %v2197
        %v2270 = vpack.c.b16 %v2202, %v2198
        %v2271 = vpack.c.b16 %v2203, %v2199
        %v2272 = vpack.c.b16 %v2204, %v2200
        %v2273 = vpack.c.b16 %v2209, %v2205
        %v2274 = vpack.c.b16 %v2210, %v2206
        %v2275 = vpack.c.b16 %v2211, %v2207
        %v2276 = vpack.c.b16 %v2212, %v2208
        %2341 = vmatprep.subr.bf16.mxu0 %v2242
        %2342 = vmatpush1.bf16.msra.mxu0 %v2241
        %2343 = vmatprep.subr.bf16.mxu0 %v2238
        %2344 = vmatpush1.bf16.msra.mxu0 %v2237
        %2345 = vmatprep.subr.bf16.mxu0 %v2234
        %2346 = vmatpush1.bf16.msra.mxu0 %v2233
        %2347 = vmatprep.subr.bf16.mxu0 %v2230
        %2348 = vmatpush1.bf16.msra.mxu0 %v2229
        %2349 = vmatprep.subr.bf16.mxu0 %v2226
        %2350 = vmatpush1.bf16.msra.mxu0 %v2225
        %2351 = vmatprep.subr.bf16.mxu0 %v2222
        %2352 = vmatpush1.bf16.msra.mxu0 %v2221
        %2353 = vmatprep.subr.bf16.mxu0 %v2218
        %2354 = vmatpush1.bf16.msra.mxu0 %v2217
        %2355 = vmatprep.subr.bf16.mxu0 %v2214
        %2356 = vmatpush1.bf16.msra.mxu0 %v2213
        %2357 = vmatprep.subr.bf16.mxu0 %v2274
        %2358 = vmatpush2.bf16.msra.mxu0 %v2273
        %2359 = vmatprep.subr.bf16.mxu0 %v2270
        %2360 = vmatpush2.bf16.msra.mxu0 %v2269
        %2361 = vmatprep.subr.bf16.mxu0 %v2266
        %2362 = vmatpush2.bf16.msra.mxu0 %v2265
        %2363 = vmatprep.subr.bf16.mxu0 %v2262
        %2364 = vmatpush2.bf16.msra.mxu0 %v2261
        %2365 = vmatprep.subr.bf16.mxu0 %v2258
        %2366 = vmatpush2.bf16.msra.mxu0 %v2257
        %2367 = vmatprep.subr.bf16.mxu0 %v2254
        %2368 = vmatpush2.bf16.msra.mxu0 %v2253
        %2369 = vmatprep.subr.bf16.mxu0 %v2250
        %2370 = vmatpush2.bf16.msra.mxu0 %v2249
        %2371 = vmatprep.subr.bf16.mxu0 %v2246
        %2372 = vmatpush2.bf16.msra.mxu0 %v2245
        %2373 = vmatprep.mubr.bf16.mxu0 %v2019
        %2374 = vmatmul.mubr.bf16.gmra.mxu0 %v1840
        %v2375 = vpop.f32.mrf.mxu0
        %v2376 = vadd.f32 %v2001, %v2375
        %v2377 = vpop.f32.mrf.mxu0
        %v2378 = vadd.f32 %v2005, %v2377
        %v2379 = vpop.f32.mrf.mxu0
        %v2380 = vpop.f32.mrf.mxu0
        %2381 = vdwg.mxu0
        %2382 = vmatprep.subr.bf16.mxu0 %v2244
        %2383 = vmatpush1.bf16.msra.mxu0 %v2243
        %2384 = vmatprep.subr.bf16.mxu0 %v2240
        %2385 = vmatpush1.bf16.msra.mxu0 %v2239
        %2386 = vmatprep.subr.bf16.mxu0 %v2236
        %2387 = vmatpush1.bf16.msra.mxu0 %v2235
        %2388 = vmatprep.subr.bf16.mxu0 %v2232
        %2389 = vmatpush1.bf16.msra.mxu0 %v2231
        %2390 = vmatprep.subr.bf16.mxu0 %v2228
        %2391 = vmatpush1.bf16.msra.mxu0 %v2227
        %2392 = vmatprep.subr.bf16.mxu0 %v2224
        %2393 = vmatpush1.bf16.msra.mxu0 %v2223
        %2394 = vmatprep.subr.bf16.mxu0 %v2220
        %2395 = vmatpush1.bf16.msra.mxu0 %v2219
        %2396 = vmatprep.subr.bf16.mxu0 %v2216
        %2397 = vmatpush1.bf16.msra.mxu0 %v2215
        %2398 = vmatprep.subr.bf16.mxu0 %v2276
        %2399 = vmatpush2.bf16.msra.mxu0 %v2275
        %2400 = vmatprep.subr.bf16.mxu0 %v2272
        %2401 = vmatpush2.bf16.msra.mxu0 %v2271
        %2402 = vmatprep.subr.bf16.mxu0 %v2268
        %2403 = vmatpush2.bf16.msra.mxu0 %v2267
        %2404 = vmatprep.subr.bf16.mxu0 %v2264
        %2405 = vmatpush2.bf16.msra.mxu0 %v2263
        %2406 = vmatprep.subr.bf16.mxu0 %v2260
        %2407 = vmatpush2.bf16.msra.mxu0 %v2259
        %2408 = vmatprep.subr.bf16.mxu0 %v2256
        %2409 = vmatpush2.bf16.msra.mxu0 %v2255
        %2410 = vmatprep.subr.bf16.mxu0 %v2252
        %2411 = vmatpush2.bf16.msra.mxu0 %v2251
        %2412 = vmatprep.subr.bf16.mxu0 %v2248
        %2413 = vmatpush2.bf16.msra.mxu0 %v2247
        %2414 = vmatprep.mubr.bf16.mxu0 %v2019
        %2415 = vmatmul.mubr.bf16.gmra.mxu0 %v1840
        %v2416 = vpop.f32.mrf.mxu0
        %v2417 = vadd.f32 %v2009, %v2416
        %v2418 = vpop.f32.mrf.mxu0
        %v2419 = vadd.f32 %v2013, %v2418
        %v2420 = vpop.f32.mrf.mxu0
        %v2421 = vpop.f32.mrf.mxu0
        %2422 = vdwg.mxu0
        %v2423 = vld [vmem:[#allocation5] sm:$0x3]
        %v2424 = vxor.u32 %v2376, 2147483648
        %v2425 = vmul.f32 %v2424, 1.442695
        %v2426 = vpow.pop %v2425
        %v2427 = vadd.f32 %v2426, 1.0
        %v2428 = vrcp.pop %v2427
        %v2429 = vmul.f32 1.0, %v2428
        %v2430 = vxor.u32 %v2378, 2147483648
        %v2431 = vmul.f32 %v2430, 1.442695
        %v2432 = vpow.pop %v2431
        %v2433 = vadd.f32 %v2432, 1.0
        %v2434 = vrcp.pop %v2433
        %v2435 = vmul.f32 1.0, %v2434
        %v2436 = vtanh.pop %v2417
        %v2437 = vxor.u32 %v2419, 2147483648
        %v2438 = vmul.f32 %v2437, 1.442695
        %v2439 = vpow.pop %v2438
        %v2440 = vadd.f32 %v2439, 1.0
        %v2441 = vrcp.pop %v2440
        %v2442 = vmul.f32 1.0, %v2441
        %v2443 = vmul.f32 %v2435, %v2423
        %v2444 = vmul.f32 %v2429, %v2436
        %v2445 = vadd.f32 %v2443, %v2444
        %v2446 = vtanh.pop %v2445
        %v2447 = vmul.f32 %v2442, %v2446
        %2448 = vst [vmem:[#allocation5] sm:$0x3] %v2445
        %v2449 = vpack.c.bf16 %v2447, %v2447
        %v2450 = vld [vmem:[%s14] sm:$0xf]
        %v2451 = vld [vmem:[%s14 + $0x4] sm:$0xf]
        %v2452 = vld [vmem:[%s14 + $0x8] sm:$0xf]
        %v2453 = vld [vmem:[%s14 + $0xc] sm:$0xf]
        %v2454 = vld [vmem:[%s14 + $0x10] sm:$0xf]
        %v2455 = vld [vmem:[%s14 + $0x14] sm:$0xf]
        %v2456 = vld [vmem:[%s14 + $0x18] sm:$0xf]
        %v2457 = vld [vmem:[%s14 + $0x1c] sm:$0xf]
        %v2458 = vld [vmem:[%s14 + $0x20] sm:$0xf]
        %v2459 = vld [vmem:[%s14 + $0x24] sm:$0xf]
        %v2460 = vld [vmem:[%s14 + $0x28] sm:$0xf]
        %v2461 = vld [vmem:[%s14 + $0x2c] sm:$0xf]
        %v2462 = vld [vmem:[%s14 + $0x30] sm:$0xf]
        %v2463 = vld [vmem:[%s14 + $0x34] sm:$0xf]
        %v2464 = vld [vmem:[%s14 + $0x38] sm:$0xf]
        %v2465 = vld [vmem:[%s14 + $0x3c] sm:$0xf]
        %v2466 = vld [vmem:[%s15] sm:$0x1]
        %v2468 = vlaneseq
        %v2469 = vshrl.u32 %v2468, 7
        %v2470 = vsub.s32 0, %v2469
        %v2471 = vrot.slane %v2466, %v2470
        %v2489 = vunpack.c.l.b16 %v2450
        %v2490 = vunpack.c.l.b16 %v2451
        %v2491 = vunpack.c.l.b16 %v2452
        %v2492 = vunpack.c.l.b16 %v2453
        %v2493 = vunpack.c.l.b16 %v2454
        %v2494 = vunpack.c.l.b16 %v2455
        %v2495 = vunpack.c.l.b16 %v2456
        %v2496 = vunpack.c.l.b16 %v2457
        %v2497 = vunpack.c.l.b16 %v2458
        %v2498 = vunpack.c.l.b16 %v2459
        %v2499 = vunpack.c.l.b16 %v2460
        %v2500 = vunpack.c.l.b16 %v2461
        %v2501 = vunpack.c.l.b16 %v2462
        %v2502 = vunpack.c.l.b16 %v2463
        %v2503 = vunpack.c.l.b16 %v2464
        %v2504 = vunpack.c.l.b16 %v2465
        %v2505 = vpack.c.b16 %v2490, %v2489
        %v2506 = vpack.c.b16 %v2492, %v2491
        %v2507 = vpack.c.b16 %v2494, %v2493
        %v2508 = vpack.c.b16 %v2496, %v2495
        %v2509 = vpack.c.b16 %v2498, %v2497
        %v2510 = vpack.c.b16 %v2500, %v2499
        %v2511 = vpack.c.b16 %v2502, %v2501
        %v2512 = vpack.c.b16 %v2504, %v2503
        %2521 = vmatprep.subr.bf16.mxu0 0
        %2522 = vmatpush1.bf16.msra.mxu0 %v2512
        %2523 = vmatprep.subr.bf16.mxu0 0
        %2524 = vmatpush1.bf16.msra.mxu0 %v2511
        %2525 = vmatprep.subr.bf16.mxu0 0
        %2526 = vmatpush1.bf16.msra.mxu0 %v2510
        %2527 = vmatprep.subr.bf16.mxu0 0
        %2528 = vmatpush1.bf16.msra.mxu0 %v2509
        %2529 = vmatprep.subr.bf16.mxu0 0
        %2530 = vmatpush1.bf16.msra.mxu0 %v2508
        %2531 = vmatprep.subr.bf16.mxu0 0
        %2532 = vmatpush1.bf16.msra.mxu0 %v2507
        %2533 = vmatprep.subr.bf16.mxu0 0
        %2534 = vmatpush1.bf16.msra.mxu0 %v2506
        %2535 = vmatprep.subr.bf16.mxu0 0
        %2536 = vmatpush1.bf16.msra.mxu0 %v2505
        %2537 = vmatprep.subr.bf16.mxu0 0
        %2538 = vmatpush2.bf16.msra.mxu0 0
        %2539 = vmatprep.subr.bf16.mxu0 0
        %2540 = vmatpush2.bf16.msra.mxu0 0
        %2541 = vmatprep.subr.bf16.mxu0 0
        %2542 = vmatpush2.bf16.msra.mxu0 0
        %2543 = vmatprep.subr.bf16.mxu0 0
        %2544 = vmatpush2.bf16.msra.mxu0 0
        %2545 = vmatprep.subr.bf16.mxu0 0
        %2546 = vmatpush2.bf16.msra.mxu0 0
        %2547 = vmatprep.subr.bf16.mxu0 0
        %2548 = vmatpush2.bf16.msra.mxu0 0
        %2549 = vmatprep.subr.bf16.mxu0 0
        %2550 = vmatpush2.bf16.msra.mxu0 0
        %2551 = vmatprep.subr.bf16.mxu0 0
        %2552 = vmatpush2.bf16.msra.mxu0 0
        %2553 = vmatprep.mubr.bf16.mxu0 0
        %2554 = vmatmul.mubr.bf16.gmra.mxu0 %v2449
        %v2555 = vpop.f32.mrf.mxu0
        %v2556 = vadd.f32 %v2471, %v2555
        %v2557 = vpop.f32.mrf.mxu0
        %v2558 = vpop.f32.mrf.mxu0
        %v2559 = vpop.f32.mrf.mxu0
        %2560 = vdwg.mxu0
        %v2561 = vld [vmem:[#allocation6] sm:$0x3]
        %v2562 = vld [vmem:[#allocation7] sm:$0x1]
        %v2564 = vlaneseq
        %v2565 = vshrl.u32 %v2564, 7
        %v2566 = vsub.s32 0, %v2565
        %v2567 = vrot.slane %v2562, %v2566
        %2568 = vset.pattern.permute.xlu0 0
        %2569 = vperm.xlu0 %2568, %v2567
        %v2570 = vpop.permute.xlu0 %2569
        %v2572 = vmul.f32 %v2561, %v2570
        %v2573 = vld [vmem:[%s5] sm:$0xf]
        %v2574 = vld [vmem:[%s5 + $0x4] sm:$0xf]
        %v2577 = vunpack.c.l.s4 1966171168
        %v2578 = vunpack.c.0.s8 %v2577
        %v2579 = vlaneseq
        %v2580 = vshrl.u32 %v2579, 7
        %v2581 = vsub.s32 %v2578, %v2580
        %v2582 = vrot.slane %v2556, %v2581
        %v2583 = vcombine.high %v2582, %v2582
        %v2585 = vunpack.c.l.s4 1966171168
        %v2586 = vunpack.c.0.s8 %v2585
        %v2587 = vlaneseq
        %v2588 = vshrl.u32 %v2587, 7
        %v2589 = vsub.s32 %v2586, %v2588
        %v2590 = vrot.slane %v2582, %v2589
        %v2592 = vunpack.c.l.s4 1966171168
        %v2593 = vunpack.c.0.s8 %v2592
        %v2594 = vlaneseq
        %v2595 = vshrl.u32 %v2594, 7
        %v2596 = vsub.s32 %v2593, %v2595
        %v2597 = vrot.slane %v2583, %v2596
        %v2598 = vlaneseq
        %v2599 = vshrl.u32 %v2598, 7
        %v2600 = vsub.s32 0, %v2599
        %v2601 = vrot.slane %v2590, %v2600
        %v2602 = vlaneseq
        %v2603 = vshrl.u32 %v2602, 7
        %v2604 = vsub.s32 0, %v2603
        %v2605 = vrot.slane %v2597, %v2604
        %v2608 = vadd.f32 %v2573, %v2601
        %v2609 = vadd.f32 %v2574, %v2605
        %v2610 = vlaneseq
        %v2611 = vshrl.u32 %v2610, 7
        %v2612 = vsub.s32 0, %v2611
        %v2613 = vrot.slane %v2572, %v2612
        %2615 = vbcast.lane.b32.xlu0 %v2613, 256
        %v2616 = vpop.permute.xlu0 %2615
        %v2617 = vlaneseq
        %v2618 = vshrl.u32 %v2617, 7
        %v2619 = vsub.s32 1, %v2618
        %v2620 = vrot.slane %v2572, %v2619
        %2622 = vbcast.lane.b32.xlu0 %v2620, 256
        %v2623 = vpop.permute.xlu0 %2622
        %v2624 = vadd.f32 %v2608, %v2616
        %v2625 = vadd.f32 %v2609, %v2623
        %v2626 = vtanh.pop %v2624
        %v2627 = vtanh.pop %v2625
        %v2628 = vld [vmem:[%s16] sm:$0x1]
        %v2630 = vlaneseq
        %v2631 = vshrl.u32 %v2630, 7
        %v2632 = vsub.s32 0, %v2631
        %v2633 = vrot.slane %v2628, %v2632
        %v2635 = vmul.f32 %v2626, %v2633
        %v2636 = vmul.f32 %v2627, %v2633
        %vm2637 = vcmask 1043456
        %v2638 = vsel %vm2637, %v2635, 0.0
        %2639 = vadd.xlane.f32.xlu0 %v2638
        %v2640 = vpop.xlane.xlu0 %2639
        %v2641 = vsel %vm2637, %v2636, 0.0
        %2642 = vadd.xlane.f32.xlu0 %v2641
        %v2643 = vpop.xlane.xlu0 %2642
        %v2644 = vld [vmem:[%s6] sm:$0x3]
        %vm2645 = vcmp.gt.f32.partialorder %v2644, 0.0
        %v2648 = vlaneseq
        %v2649 = vshrl.u32 %v2648, 7
        %v2650 = vsub.s32 %v1242, %v2649
        %v2651 = vrot.slane %v2640, %v2650
        %v2652 = vlaneseq
        %v2653 = vshrl.u32 %v2652, 7
        %v2654 = vsub.s32 %v1242, %v2653
        %v2655 = vrot.slane %v2643, %v2654
        %vm2656 = vcmask 1041409
        %v2657 = vsel %vm2656, %v2655, %v2651
        %v2659 = vsel %vm2645, %v2657, -1e+30
        %vm2660 = vcmask 25600
        %v2661 = vsel %vm2660, %v2659, -inf
        %2662 = vmax.xlane.f32.xlu0 %v2661
        %v2663 = vpop.xlane.xlu0 %2662
        %v2664 = vsub.f32 %v2659, %v2663
        %v2665 = vmul.f32 %v2664, 1.442695
        %v2666 = vpow.pop %v2665
        %v2667 = vmul.f32 %v2666, %v2644
        %v2668 = vsel %vm2660, %v2667, 0.0
        %2669 = vadd.xlane.f32.xlu0 %v2668
        %v2670 = vpop.xlane.xlu0 %2669
        %v2671 = vmax.f32 %v2670, 1e-12
        %v2672 = vrcp.pop %v2671
        %v2673 = vmul.f32 %v2667, %v2672
        %v2674 = vlaneseq
        %v2675 = vshrl.u32 %v2674, 7
        %v2676 = vsub.s32 0, %v2675
        %v2677 = vrot.slane %v2673, %v2676
        %2679 = vbcast.lane.b32.xlu0 %v2677, 256
        %v2680 = vpop.permute.xlu0 %2679
        %v2681 = vlaneseq
        %v2682 = vshrl.u32 %v2681, 7
        %v2683 = vsub.s32 1, %v2682
        %v2684 = vrot.slane %v2673, %v2683
        %2686 = vbcast.lane.b32.xlu0 %v2684, 256
        %v2687 = vpop.permute.xlu0 %2686
        %v2688 = vld [vmem:[%s4] sm:$0xf]
        %v2689 = vld [vmem:[%s4 + $0x4] sm:$0xf]
        %v2690 = vmul.f32 %v2680, %v2688
        %v2691 = vmul.f32 %v2687, %v2689
        %v2692 = vsel %vm2637, %v2690, 0.0
        %v2693 = vrot.slane %v2692, 4
        %v2694 = vadd.f32 %v2692, %v2693
        %v2695 = vrot.slane %v2694, 2
        %v2696 = vadd.f32 %v2694, %v2695
        %v2697 = vrot.slane %v2696, 1
        %v2698 = vadd.f32 %v2696, %v2697
        %v2699 = vsel %vm2637, %v2691, 0.0
        %v2700 = vrot.slane %v2699, 4
        %v2701 = vadd.f32 %v2699, %v2700
        %v2702 = vrot.slane %v2701, 2
        %v2703 = vadd.f32 %v2701, %v2702
        %v2704 = vrot.slane %v2703, 1
        %v2705 = vadd.f32 %v2703, %v2704
        %v2706 = vmin.f32 %v2673, %v2561
        %v2707 = vsel %vm2660, %v2706, 0.0
        %2708 = vadd.xlane.f32.xlu0 %v2707
        %v2709 = vpop.xlane.xlu0 %2708
        %v2710 = vsel %vm1228, %v2709, 0.0
        %v2711 = vrot.slane %v2710, 4
        %v2712 = vadd.f32 %v2710, %v2711
        %v2713 = vrot.slane %v2712, 2
        %v2714 = vadd.f32 %v2712, %v2713
        %v2715 = vrot.slane %v2714, 1
        %v2716 = vadd.f32 %v2714, %v2715
        %v2717 = vrcp.pop 2.0
        %v2718 = vmul.f32 %v2716, %v2717
        %v2719 = vadd.f32 %v1925, %v2718
        %v2720 = vadd.f32 %v2561, %v2673
        %2721 = vst.msk [vmem:[#allocation6] sm:$0x3] %vm2660, %v2720
        %v2724 = vsel %vm2656, %v2705, %v2698
        %v2726 = vpack.c.bf16 %v2724, %v2724
        %v2727 = vld [vmem:[%s18] sm:$0xf]
        %v2728 = vld [vmem:[%s18 + $0x4] sm:$0xf]
        %v2729 = vld [vmem:[%s18 + $0x8] sm:$0xf]
        %v2730 = vld [vmem:[%s18 + $0xc] sm:$0xf]
        %v2731 = vld [vmem:[%s18 + $0x10] sm:$0xf]
        %v2732 = vld [vmem:[%s18 + $0x14] sm:$0xf]
        %v2733 = vld [vmem:[%s18 + $0x18] sm:$0xf]
        %v2734 = vld [vmem:[%s18 + $0x1c] sm:$0xf]
        %v2735 = vld [vmem:[%s18 + $0x20] sm:$0xf]
        %v2736 = vld [vmem:[%s18 + $0x24] sm:$0xf]
        %v2737 = vld [vmem:[%s18 + $0x28] sm:$0xf]
        %v2738 = vld [vmem:[%s18 + $0x2c] sm:$0xf]
        %v2739 = vld [vmem:[%s18 + $0x30] sm:$0xf]
        %v2740 = vld [vmem:[%s18 + $0x34] sm:$0xf]
        %v2741 = vld [vmem:[%s18 + $0x38] sm:$0xf]
        %v2742 = vld [vmem:[%s18 + $0x3c] sm:$0xf]
        %v2743 = vld [vmem:[%s18 + $0x40] sm:$0xf]
        %v2744 = vld [vmem:[%s18 + $0x44] sm:$0xf]
        %v2745 = vld [vmem:[%s18 + $0x48] sm:$0xf]
        %v2746 = vld [vmem:[%s18 + $0x4c] sm:$0xf]
        %v2747 = vld [vmem:[%s18 + $0x50] sm:$0xf]
        %v2748 = vld [vmem:[%s18 + $0x54] sm:$0xf]
        %v2749 = vld [vmem:[%s18 + $0x58] sm:$0xf]
        %v2750 = vld [vmem:[%s18 + $0x5c] sm:$0xf]
        %v2751 = vld [vmem:[%s18 + $0x60] sm:$0xf]
        %v2752 = vld [vmem:[%s18 + $0x64] sm:$0xf]
        %v2753 = vld [vmem:[%s18 + $0x68] sm:$0xf]
        %v2754 = vld [vmem:[%s18 + $0x6c] sm:$0xf]
        %v2755 = vld [vmem:[%s18 + $0x70] sm:$0xf]
        %v2756 = vld [vmem:[%s18 + $0x74] sm:$0xf]
        %v2757 = vld [vmem:[%s18 + $0x78] sm:$0xf]
        %v2758 = vld [vmem:[%s18 + $0x7c] sm:$0xf]
        %v2759 = vld [vmem:[%s19] sm:$0x1]
        %v2761 = vlaneseq
        %v2762 = vshrl.u32 %v2761, 7
        %v2763 = vsub.s32 0, %v2762
        %v2764 = vrot.slane %v2759, %v2763
        %v2798 = vunpack.c.l.b16 %v2727
        %v2799 = vunpack.c.l.b16 %v2728
        %v2800 = vunpack.c.l.b16 %v2729
        %v2801 = vunpack.c.l.b16 %v2730
        %v2802 = vunpack.c.l.b16 %v2731
        %v2803 = vunpack.c.l.b16 %v2732
        %v2804 = vunpack.c.l.b16 %v2733
        %v2805 = vunpack.c.l.b16 %v2734
        %v2806 = vunpack.c.l.b16 %v2735
        %v2807 = vunpack.c.l.b16 %v2736
        %v2808 = vunpack.c.l.b16 %v2737
        %v2809 = vunpack.c.l.b16 %v2738
        %v2810 = vunpack.c.l.b16 %v2739
        %v2811 = vunpack.c.l.b16 %v2740
        %v2812 = vunpack.c.l.b16 %v2741
        %v2813 = vunpack.c.l.b16 %v2742
        %v2814 = vunpack.c.l.b16 %v2743
        %v2815 = vunpack.c.l.b16 %v2744
        %v2816 = vunpack.c.l.b16 %v2745
        %v2817 = vunpack.c.l.b16 %v2746
        %v2818 = vunpack.c.l.b16 %v2747
        %v2819 = vunpack.c.l.b16 %v2748
        %v2820 = vunpack.c.l.b16 %v2749
        %v2821 = vunpack.c.l.b16 %v2750
        %v2822 = vunpack.c.l.b16 %v2751
        %v2823 = vunpack.c.l.b16 %v2752
        %v2824 = vunpack.c.l.b16 %v2753
        %v2825 = vunpack.c.l.b16 %v2754
        %v2826 = vunpack.c.l.b16 %v2755
        %v2827 = vunpack.c.l.b16 %v2756
        %v2828 = vunpack.c.l.b16 %v2757
        %v2829 = vunpack.c.l.b16 %v2758
        %v2830 = vpack.c.b16 %v2799, %v2798
        %v2831 = vpack.c.b16 %v2801, %v2800
        %v2832 = vpack.c.b16 %v2803, %v2802
        %v2833 = vpack.c.b16 %v2805, %v2804
        %v2834 = vpack.c.b16 %v2807, %v2806
        %v2835 = vpack.c.b16 %v2809, %v2808
        %v2836 = vpack.c.b16 %v2811, %v2810
        %v2837 = vpack.c.b16 %v2813, %v2812
        %v2838 = vpack.c.b16 %v2815, %v2814
        %v2839 = vpack.c.b16 %v2817, %v2816
        %v2840 = vpack.c.b16 %v2819, %v2818
        %v2841 = vpack.c.b16 %v2821, %v2820
        %v2842 = vpack.c.b16 %v2823, %v2822
        %v2843 = vpack.c.b16 %v2825, %v2824
        %v2844 = vpack.c.b16 %v2827, %v2826
        %v2845 = vpack.c.b16 %v2829, %v2828
        %2862 = vmatprep.subr.bf16.mxu0 0
        %2863 = vmatpush1.bf16.msra.mxu0 %v2837
        %2864 = vmatprep.subr.bf16.mxu0 0
        %2865 = vmatpush1.bf16.msra.mxu0 %v2836
        %2866 = vmatprep.subr.bf16.mxu0 0
        %2867 = vmatpush1.bf16.msra.mxu0 %v2835
        %2868 = vmatprep.subr.bf16.mxu0 0
        %2869 = vmatpush1.bf16.msra.mxu0 %v2834
        %2870 = vmatprep.subr.bf16.mxu0 0
        %2871 = vmatpush1.bf16.msra.mxu0 %v2833
        %2872 = vmatprep.subr.bf16.mxu0 0
        %2873 = vmatpush1.bf16.msra.mxu0 %v2832
        %2874 = vmatprep.subr.bf16.mxu0 0
        %2875 = vmatpush1.bf16.msra.mxu0 %v2831
        %2876 = vmatprep.subr.bf16.mxu0 0
        %2877 = vmatpush1.bf16.msra.mxu0 %v2830
        %2878 = vmatprep.subr.bf16.mxu0 0
        %2879 = vmatpush2.bf16.msra.mxu0 %v2845
        %2880 = vmatprep.subr.bf16.mxu0 0
        %2881 = vmatpush2.bf16.msra.mxu0 %v2844
        %2882 = vmatprep.subr.bf16.mxu0 0
        %2883 = vmatpush2.bf16.msra.mxu0 %v2843
        %2884 = vmatprep.subr.bf16.mxu0 0
        %2885 = vmatpush2.bf16.msra.mxu0 %v2842
        %2886 = vmatprep.subr.bf16.mxu0 0
        %2887 = vmatpush2.bf16.msra.mxu0 %v2841
        %2888 = vmatprep.subr.bf16.mxu0 0
        %2889 = vmatpush2.bf16.msra.mxu0 %v2840
        %2890 = vmatprep.subr.bf16.mxu0 0
        %2891 = vmatpush2.bf16.msra.mxu0 %v2839
        %2892 = vmatprep.subr.bf16.mxu0 0
        %2893 = vmatpush2.bf16.msra.mxu0 %v2838
        %2894 = vmatprep.mubr.bf16.mxu0 %v2726
        %2895 = vmatmul.mubr.bf16.gmra.mxu0 %v2449
        %v2896 = vpop.f32.mrf.mxu0
        %v2897 = vadd.f32 %v2764, %v2896
        %v2898 = vpop.f32.mrf.mxu0
        %v2899 = vpop.f32.mrf.mxu0
        %v2900 = vpop.f32.mrf.mxu0
        %2901 = vdwg.mxu0
        %v2902 = vtanh.pop %v2897
        %2903 = vst [vmem:[#allocation4] sm:$0x3] %v2902
        %2904 = vst [vmem:[#allocation2] sm:$0x3] %v2902
        %v2905 = vld [vmem:[#allocation8] sm:$0x1]
        %v2906 = vadd.f32 %v2905, %v2719
        %vm2907 = vcmask 0
        %2908 = vst.msk [vmem:[#allocation8] sm:$0x1] %vm2907, %v2906
        // Predicated region
        $region105: #{hierachical_forward.3} parent=99 // pred_check
          %p2909 = pneg %p477
        $region106: #{hierachical_forward.3} parent=99 // pred_check_branch
          %2911 = sbr.rel (%p2909) target = $region108
        $region107: #{hierachical_forward.3} parent=99 // pred_region
          %s2913 = ssub.s32 16, 16
          %2914 = vsyncadd [#allocation9], %s2913
          %s2916 = sshll.u32 [#allocation8], 4
          %s2917 = int_to_ptr.vmem [resolvable:$true] %s2916
          %2919 = dma.vmem_to_hbm [thread:$0]  %s2917, 16, %s20, [#allocation9]
        $region108: #{hierachical_forward.3} parent=99 // pred_fallthru
          _
        // Predicated region
        $region109: #{hierachical_forward.3} parent=99 // pred_check
          %p2920 = pneg %p477
        $region110: #{hierachical_forward.3} parent=99 // pred_check_branch
          %2922 = sbr.rel (%p2920) target = $region112
        $region111: #{hierachical_forward.3} parent=99 // pred_region
          %2923 = dma.done [#allocation9], 16
        $region112: #{hierachical_forward.3} parent=99 // pred_fallthru
          _
      $region100: #{hierachical_forward.3} parent=5 // pred_fallthru
        _
      %p2924 = scmp.le.s32.totalorder 2, %s29
      // Predicated region
      $region113: #{hierachical_forward.3} parent=5 // pred_check
        %p2925 = pneg %p2924
      $region114: #{hierachical_forward.3} parent=5 // pred_check_branch
        %2927 = sbr.rel (%p2925) target = $region116
      $region115: #{hierachical_forward.3} parent=5 // pred_region
        %s2928 = ssub.s32 %s29, 2
      $region116: #{hierachical_forward.3} parent=5 // pred_fallthru
        _
    $region6: #{hierachical_forward.3} parent=1 // loop_footer
      %s33 = sadd.s32 1, %s29
    $region7: #{hierachical_forward.3} parent=1 // loop_footer_branch
      %28 = sbr.rel target = $region3
    $region8: #{hierachical_forward.3} parent=1 // loop_exit
      _
    %2929 = vsyncpa [#allocation9], 1
    %s2930 = scalar_lea.sflag [#allocation9], 1
    %2931 = vsyncpa %s2930, 1

// kernel: hierachical_forward.2
$region0: #{hierachical_forward.2}
  #allocation0 [shape = 'u32[]', space=smem, size = 0x4, offset = 0x4, fixed_abs, tag = 'smem constant byte address 0x4 - core index']
  #allocation1 [shape = 'u32[144,128]{1,0:T(1,128)}', space=vmem, size = 0x12000, scoped, tag = 'internal scratch']
  %s0 = inlined_call_operand.vmem [shape: bf16[48,32], index: 0, kind: input, shape index: {}]
  %s1 = inlined_call_operand.vmem [shape: bf16[32,512], index: 1, kind: input, shape index: {}]
  %s2 = inlined_call_operand.vmem [shape: bf16[128,512], index: 2, kind: input, shape index: {}]
  %s3 = inlined_call_operand.vmem [shape: f32[1,512], index: 3, kind: input, shape index: {}]
  %s4 = inlined_call_operand.hbm [shape: bf16[128,512], index: 4, kind: input, shape index: {}]
  %s5 = inlined_call_operand.hbm [shape: bf16[128,512], index: 5, kind: input, shape index: {}]
  %s6 = inlined_call_operand.vmem [shape: f32[1,512], index: 6, kind: input, shape index: {}]
  %s7 = inlined_call_operand.vmem [shape: bf16[128,128], index: 7, kind: input, shape index: {}]
  %s8 = inlined_call_operand.vmem [shape: f32[1,128], index: 8, kind: input, shape index: {}]
  %s9 = inlined_call_operand.vmem [shape: f32[8,128], index: 9, kind: output, shape index: {0}]
  %s10 = inlined_call_operand.vmem [shape: f32[8,128], index: 10, kind: output, shape index: {1}]
  %s11 = inlined_call_operand.vmem [shape: f32[2,128], index: 11, kind: output, shape index: {2}]
  %s12 = inlined_call_operand.vmem [shape: f32[2,128], index: 12, kind: output, shape index: {3}]
  %13 = xla_tuple %s9, %s10, %s11, %s12
  %s14 = sld [smem:[#allocation0]]
  $region78: #{hierachical_forward.2} parent=0
    _
  %s16 = ssub.s32 1, %s14
  %s17 = scalar_select 0, %s16, %s14
  $region1: #{hierachical_forward.2} parent=0
    #allocation2 [shape = 'u8[131072]{0}', space=vmem, size = 0x20000, scoped, tag = 'input window, operand 4, single buffered']
    #allocation3 [shape = 's32[1]{0}', space=sflag, size = 0x4, scoped, tag = 'scoped memory for hierachical_forward.2']
    #allocation4 [shape = 'u8[131072]{0}', space=vmem, size = 0x20000, scoped, tag = 'input window, operand 5, single buffered']
    #allocation5 [shape = 's32[1]{0}', space=sflag, size = 0x4, scoped, tag = 'scoped memory for hierachical_forward.2']
    %18 = vsyncpa [#allocation3], 0
    %19 = vsyncpa [#allocation5], 0
    // Predicated region
    $region2: #{hierachical_forward.2} parent=1 // pred_check
      _
    $region3: #{hierachical_forward.2} parent=1 // pred_check_branch
      %21 = sbr.rel (0) target = $region5
    $region4: #{hierachical_forward.2} parent=1 // pred_region
      _
    $region5: #{hierachical_forward.2} parent=1 // pred_fallthru
      _
    // Predicated region
    $region6: #{hierachical_forward.2} parent=1 // pred_check
      _
    $region7: #{hierachical_forward.2} parent=1 // pred_check_branch
      %23 = sbr.rel (0) target = $region9
    $region8: #{hierachical_forward.2} parent=1 // pred_region
      _
    $region9: #{hierachical_forward.2} parent=1 // pred_fallthru
      _
    // Predicated region
    $region10: #{hierachical_forward.2} parent=1 // pred_check
      _
    $region11: #{hierachical_forward.2} parent=1 // pred_check_branch
      %25 = sbr.rel (0) target = $region13
    $region12: #{hierachical_forward.2} parent=1 // pred_region
      _
    $region13: #{hierachical_forward.2} parent=1 // pred_fallthru
      _
    // Predicated region
    $region14: #{hierachical_forward.2} parent=1 // pred_check
      _
    $region15: #{hierachical_forward.2} parent=1 // pred_check_branch
      %27 = sbr.rel (0) target = $region17
    $region16: #{hierachical_forward.2} parent=1 // pred_region
      _
    $region17: #{hierachical_forward.2} parent=1 // pred_fallthru
      _
    // Predicated region
    $region18: #{hierachical_forward.2} parent=1 // pred_check
      _
    $region19: #{hierachical_forward.2} parent=1 // pred_check_branch
      %29 = sbr.rel (0) target = $region21
    $region20: #{hierachical_forward.2} parent=1 // pred_region
      %s31 = ssub.s32 4096, 4096
      %32 = vsyncadd [#allocation3], %s31
      %s33 = sshll.u32 [#allocation2], 4
      %s34 = int_to_ptr.vmem [resolvable:$true] %s33
      %39 = dma.hbm_to_vmem [thread:$0]  %s4, 4096, %s34, [#allocation3], 256, 256, 16
    $region21: #{hierachical_forward.2} parent=1 // pred_fallthru
      _
    // Predicated region
    $region22: #{hierachical_forward.2} parent=1 // pred_check
      _
    $region23: #{hierachical_forward.2} parent=1 // pred_check_branch
      %41 = sbr.rel (0) target = $region25
    $region24: #{hierachical_forward.2} parent=1 // pred_region
      %s43 = ssub.s32 4096, 4096
      %44 = vsyncadd [#allocation5], %s43
      %s45 = sshll.u32 [#allocation4], 4
      %s46 = int_to_ptr.vmem [resolvable:$true] %s45
      %51 = dma.hbm_to_vmem [thread:$0]  %s5, 4096, %s46, [#allocation5], 256, 256, 16
    $region25: #{hierachical_forward.2} parent=1 // pred_fallthru
      _
    // Predicated region
    $region26: #{hierachical_forward.2} parent=1 // pred_check
      _
    $region27: #{hierachical_forward.2} parent=1 // pred_check_branch
      %53 = sbr.rel (0) target = $region29
    $region28: #{hierachical_forward.2} parent=1 // pred_region
      _
    $region29: #{hierachical_forward.2} parent=1 // pred_fallthru
      _
    // Predicated region
    $region30: #{hierachical_forward.2} parent=1 // pred_check
      _
    $region31: #{hierachical_forward.2} parent=1 // pred_check_branch
      %55 = sbr.rel (0) target = $region33
    $region32: #{hierachical_forward.2} parent=1 // pred_region
      _
    $region33: #{hierachical_forward.2} parent=1 // pred_fallthru
      _
    // Predicated region
    $region34: #{hierachical_forward.2} parent=1 // pred_check
      _
    $region35: #{hierachical_forward.2} parent=1 // pred_check_branch
      %57 = sbr.rel (0) target = $region37
    $region36: #{hierachical_forward.2} parent=1 // pred_region
      _
    $region37: #{hierachical_forward.2} parent=1 // pred_fallthru
      _
    // Predicated region
    $region38: #{hierachical_forward.2} parent=1 // pred_check
      _
    $region39: #{hierachical_forward.2} parent=1 // pred_check_branch
      %59 = sbr.rel (0) target = $region41
    $region40: #{hierachical_forward.2} parent=1 // pred_region
      %60 = dma.done [#allocation3], 4096
    $region41: #{hierachical_forward.2} parent=1 // pred_fallthru
      _
    // Predicated region
    $region42: #{hierachical_forward.2} parent=1 // pred_check
      _
    $region43: #{hierachical_forward.2} parent=1 // pred_check_branch
      %62 = sbr.rel (0) target = $region45
    $region44: #{hierachical_forward.2} parent=1 // pred_region
      %63 = dma.done [#allocation5], 4096
    $region45: #{hierachical_forward.2} parent=1 // pred_fallthru
      _
    %v65 = vld [vmem:[%s0] sm:$0xf]
    %v66 = vld [vmem:[%s0 + $0x4] sm:$0xf]
    %v67 = vld [vmem:[%s0 + $0x8] sm:$0xf]
    %v68 = vld [vmem:[%s0 + $0xc] sm:$0xf]
    %v69 = vld [vmem:[%s0 + $0x10] sm:$0xf]
    %v70 = vld [vmem:[%s0 + $0x14] sm:$0xf]
    %v71 = vld [vmem:[%s1] sm:$0xff]
    %v72 = vld [vmem:[%s1 + $0x8] sm:$0xff]
    %v73 = vld [vmem:[%s1 + $0x10] sm:$0xff]
    %v74 = vld [vmem:[%s1 + $0x18] sm:$0xff]
    %v75 = vld [vmem:[%s1 + $0x20] sm:$0xff]
    %v76 = vld [vmem:[%s1 + $0x28] sm:$0xff]
    %v77 = vld [vmem:[%s1 + $0x30] sm:$0xff]
    %v78 = vld [vmem:[%s1 + $0x38] sm:$0xff]
    %v85 = vunpack.c.l.b16 %v65
    %v86 = vunpack.c.l.b16 %v66
    %v87 = vunpack.c.l.b16 %v67
    %v88 = vunpack.c.l.b16 %v68
    %v89 = vunpack.c.l.b16 %v69
    %v90 = vunpack.c.l.b16 %v70
    %v91 = vpack.c.b16 %v86, %v85
    %v92 = vpack.c.b16 %v88, %v87
    %v93 = vpack.c.b16 %v90, %v89
    %v102 = vunpack.c.l.b16 %v71
    %v103 = vunpack.c.h.b16 %v71
    %v104 = vunpack.c.l.b16 %v72
    %v105 = vunpack.c.h.b16 %v72
    %v106 = vunpack.c.l.b16 %v73
    %v107 = vunpack.c.h.b16 %v73
    %v108 = vunpack.c.l.b16 %v74
    %v109 = vunpack.c.h.b16 %v74
    %v110 = vunpack.c.l.b16 %v75
    %v111 = vunpack.c.h.b16 %v75
    %v112 = vunpack.c.l.b16 %v76
    %v113 = vunpack.c.h.b16 %v76
    %v114 = vunpack.c.l.b16 %v77
    %v115 = vunpack.c.h.b16 %v77
    %v116 = vunpack.c.l.b16 %v78
    %v117 = vunpack.c.h.b16 %v78
    %v118 = vpack.c.b16 %v106, %v102
    %v119 = vpack.c.b16 %v107, %v103
    %v120 = vpack.c.b16 %v108, %v104
    %v121 = vpack.c.b16 %v109, %v105
    %v122 = vpack.c.b16 %v114, %v110
    %v123 = vpack.c.b16 %v115, %v111
    %v124 = vpack.c.b16 %v116, %v112
    %v125 = vpack.c.b16 %v117, %v113
    %vm134 = vcmask 261120
    %v136 = vsel %vm134, %v91, 0
    %v139 = vsel %vm134, %v92, 0
    %v142 = vsel %vm134, %v93, 0
    %144 = vmatprep.subr.bf16.mxu0 0
    %145 = vmatpush1.bf16.msra.mxu0 0
    %146 = vmatprep.subr.bf16.mxu0 0
    %147 = vmatpush1.bf16.msra.mxu0 0
    %148 = vmatprep.subr.bf16.mxu0 0
    %149 = vmatpush1.bf16.msra.mxu0 0
    %150 = vmatprep.subr.bf16.mxu0 0
    %151 = vmatpush1.bf16.msra.mxu0 0
    %152 = vmatprep.subr.bf16.mxu0 0
    %153 = vmatpush1.bf16.msra.mxu0 0
    %154 = vmatprep.subr.bf16.mxu0 0
    %155 = vmatpush1.bf16.msra.mxu0 0
    %156 = vmatprep.subr.bf16.mxu0 %v123
    %157 = vmatpush1.bf16.msra.mxu0 %v122
    %158 = vmatprep.subr.bf16.mxu0 %v119
    %159 = vmatpush1.bf16.msra.mxu0 %v118
    %160 = vmatprep.subr.bf16.mxu0 0
    %161 = vmatpush2.bf16.msra.mxu0 0
    %162 = vmatprep.subr.bf16.mxu0 0
    %163 = vmatpush2.bf16.msra.mxu0 0
    %164 = vmatprep.subr.bf16.mxu0 0
    %165 = vmatpush2.bf16.msra.mxu0 0
    %166 = vmatprep.subr.bf16.mxu0 0
    %167 = vmatpush2.bf16.msra.mxu0 0
    %168 = vmatprep.subr.bf16.mxu0 0
    %169 = vmatpush2.bf16.msra.mxu0 0
    %170 = vmatprep.subr.bf16.mxu0 0
    %171 = vmatpush2.bf16.msra.mxu0 0
    %172 = vmatprep.subr.bf16.mxu0 0
    %173 = vmatpush2.bf16.msra.mxu0 0
    %174 = vmatprep.subr.bf16.mxu0 0
    %175 = vmatpush2.bf16.msra.mxu0 0
    %176 = vmatprep.mubr.bf16.mxu0 0
    %177 = vmatmul.mubr.bf16.gmra.mxu0 %v136
    %v178 = vpop.f32.mrf.mxu0
    %v179 = vadd.f32 0.0, %v178
    %v180 = vpop.f32.mrf.mxu0
    %v181 = vadd.f32 0.0, %v180
    %v182 = vpop.f32.mrf.mxu0
    %v183 = vadd.f32 0.0, %v182
    %v184 = vpop.f32.mrf.mxu0
    %v185 = vadd.f32 0.0, %v184
    %186 = vmatprep.mubr.bf16.mxu0 0
    %187 = vmatmul.mubr.bf16.gmra.mxu0 %v139
    %v188 = vpop.f32.mrf.mxu0
    %v189 = vadd.f32 0.0, %v188
    %v190 = vpop.f32.mrf.mxu0
    %v191 = vadd.f32 0.0, %v190
    %v192 = vpop.f32.mrf.mxu0
    %v193 = vadd.f32 0.0, %v192
    %v194 = vpop.f32.mrf.mxu0
    %v195 = vadd.f32 0.0, %v194
    %196 = vmatprep.mubr.bf16.mxu0 0
    %197 = vmatmul.mubr.bf16.gmra.mxu0 %v142
    %v198 = vpop.f32.mrf.mxu0
    %v199 = vadd.f32 0.0, %v198
    %v200 = vpop.f32.mrf.mxu0
    %v201 = vadd.f32 0.0, %v200
    %v202 = vpop.f32.mrf.mxu0
    %v203 = vadd.f32 0.0, %v202
    %v204 = vpop.f32.mrf.mxu0
    %v205 = vadd.f32 0.0, %v204
    %206 = vdwg.mxu0
    %207 = vmatprep.subr.bf16.mxu0 0
    %208 = vmatpush1.bf16.msra.mxu0 0
    %209 = vmatprep.subr.bf16.mxu0 0
    %210 = vmatpush1.bf16.msra.mxu0 0
    %211 = vmatprep.subr.bf16.mxu0 0
    %212 = vmatpush1.bf16.msra.mxu0 0
    %213 = vmatprep.subr.bf16.mxu0 0
    %214 = vmatpush1.bf16.msra.mxu0 0
    %215 = vmatprep.subr.bf16.mxu0 0
    %216 = vmatpush1.bf16.msra.mxu0 0
    %217 = vmatprep.subr.bf16.mxu0 0
    %218 = vmatpush1.bf16.msra.mxu0 0
    %219 = vmatprep.subr.bf16.mxu0 %v125
    %220 = vmatpush1.bf16.msra.mxu0 %v124
    %221 = vmatprep.subr.bf16.mxu0 %v121
    %222 = vmatpush1.bf16.msra.mxu0 %v120
    %223 = vmatprep.subr.bf16.mxu0 0
    %224 = vmatpush2.bf16.msra.mxu0 0
    %225 = vmatprep.subr.bf16.mxu0 0
    %226 = vmatpush2.bf16.msra.mxu0 0
    %227 = vmatprep.subr.bf16.mxu0 0
    %228 = vmatpush2.bf16.msra.mxu0 0
    %229 = vmatprep.subr.bf16.mxu0 0
    %230 = vmatpush2.bf16.msra.mxu0 0
    %231 = vmatprep.subr.bf16.mxu0 0
    %232 = vmatpush2.bf16.msra.mxu0 0
    %233 = vmatprep.subr.bf16.mxu0 0
    %234 = vmatpush2.bf16.msra.mxu0 0
    %235 = vmatprep.subr.bf16.mxu0 0
    %236 = vmatpush2.bf16.msra.mxu0 0
    %237 = vmatprep.subr.bf16.mxu0 0
    %238 = vmatpush2.bf16.msra.mxu0 0
    %239 = vmatprep.mubr.bf16.mxu0 0
    %240 = vmatmul.mubr.bf16.gmra.mxu0 %v136
    %v241 = vpop.f32.mrf.mxu0
    %v242 = vadd.f32 0.0, %v241
    %v243 = vpop.f32.mrf.mxu0
    %v244 = vadd.f32 0.0, %v243
    %v245 = vpop.f32.mrf.mxu0
    %v246 = vadd.f32 0.0, %v245
    %v247 = vpop.f32.mrf.mxu0
    %v248 = vadd.f32 0.0, %v247
    %249 = vmatprep.mubr.bf16.mxu0 0
    %250 = vmatmul.mubr.bf16.gmra.mxu0 %v139
    %v251 = vpop.f32.mrf.mxu0
    %v252 = vadd.f32 0.0, %v251
    %v253 = vpop.f32.mrf.mxu0
    %v254 = vadd.f32 0.0, %v253
    %v255 = vpop.f32.mrf.mxu0
    %v256 = vadd.f32 0.0, %v255
    %v257 = vpop.f32.mrf.mxu0
    %v258 = vadd.f32 0.0, %v257
    %259 = vmatprep.mubr.bf16.mxu0 0
    %260 = vmatmul.mubr.bf16.gmra.mxu0 %v142
    %v261 = vpop.f32.mrf.mxu0
    %v262 = vadd.f32 0.0, %v261
    %v263 = vpop.f32.mrf.mxu0
    %v264 = vadd.f32 0.0, %v263
    %v265 = vpop.f32.mrf.mxu0
    %v266 = vadd.f32 0.0, %v265
    %v267 = vpop.f32.mrf.mxu0
    %v268 = vadd.f32 0.0, %v267
    %269 = vdwg.mxu0
    %v270 = vld [vmem:[%s2] sm:$0xff]
    %v271 = vld [vmem:[%s2 + $0x8] sm:$0xff]
    %v272 = vld [vmem:[%s2 + $0x10] sm:$0xff]
    %v273 = vld [vmem:[%s2 + $0x18] sm:$0xff]
    %v274 = vld [vmem:[%s2 + $0x20] sm:$0xff]
    %v275 = vld [vmem:[%s2 + $0x28] sm:$0xff]
    %v276 = vld [vmem:[%s2 + $0x30] sm:$0xff]
    %v277 = vld [vmem:[%s2 + $0x38] sm:$0xff]
    %v278 = vld [vmem:[%s2 + $0x40] sm:$0xff]
    %v279 = vld [vmem:[%s2 + $0x48] sm:$0xff]
    %v280 = vld [vmem:[%s2 + $0x50] sm:$0xff]
    %v281 = vld [vmem:[%s2 + $0x58] sm:$0xff]
    %v282 = vld [vmem:[%s2 + $0x60] sm:$0xff]
    %v283 = vld [vmem:[%s2 + $0x68] sm:$0xff]
    %v284 = vld [vmem:[%s2 + $0x70] sm:$0xff]
    %v285 = vld [vmem:[%s2 + $0x78] sm:$0xff]
    %v286 = vld [vmem:[%s2 + $0x80] sm:$0xff]
    %v287 = vld [vmem:[%s2 + $0x88] sm:$0xff]
    %v288 = vld [vmem:[%s2 + $0x90] sm:$0xff]
    %v289 = vld [vmem:[%s2 + $0x98] sm:$0xff]
    %v290 = vld [vmem:[%s2 + $0xa0] sm:$0xff]
    %v291 = vld [vmem:[%s2 + $0xa8] sm:$0xff]
    %v292 = vld [vmem:[%s2 + $0xb0] sm:$0xff]
    %v293 = vld [vmem:[%s2 + $0xb8] sm:$0xff]
    %v294 = vld [vmem:[%s2 + $0xc0] sm:$0xff]
    %v295 = vld [vmem:[%s2 + $0xc8] sm:$0xff]
    %v296 = vld [vmem:[%s2 + $0xd0] sm:$0xff]
    %v297 = vld [vmem:[%s2 + $0xd8] sm:$0xff]
    %v298 = vld [vmem:[%s2 + $0xe0] sm:$0xff]
    %v299 = vld [vmem:[%s2 + $0xe8] sm:$0xff]
    %v300 = vld [vmem:[%s2 + $0xf0] sm:$0xff]
    %v301 = vld [vmem:[%s2 + $0xf8] sm:$0xff]
    %v334 = vunpack.c.l.b16 %v270
    %v335 = vunpack.c.h.b16 %v270
    %v336 = vunpack.c.l.b16 %v271
    %v337 = vunpack.c.h.b16 %v271
    %v338 = vunpack.c.l.b16 %v272
    %v339 = vunpack.c.h.b16 %v272
    %v340 = vunpack.c.l.b16 %v273
    %v341 = vunpack.c.h.b16 %v273
    %v342 = vunpack.c.l.b16 %v274
    %v343 = vunpack.c.h.b16 %v274
    %v344 = vunpack.c.l.b16 %v275
    %v345 = vunpack.c.h.b16 %v275
    %v346 = vunpack.c.l.b16 %v276
    %v347 = vunpack.c.h.b16 %v276
    %v348 = vunpack.c.l.b16 %v277
    %v349 = vunpack.c.h.b16 %v277
    %v350 = vunpack.c.l.b16 %v278
    %v351 = vunpack.c.h.b16 %v278
    %v352 = vunpack.c.l.b16 %v279
    %v353 = vunpack.c.h.b16 %v279
    %v354 = vunpack.c.l.b16 %v280
    %v355 = vunpack.c.h.b16 %v280
    %v356 = vunpack.c.l.b16 %v281
    %v357 = vunpack.c.h.b16 %v281
    %v358 = vunpack.c.l.b16 %v282
    %v359 = vunpack.c.h.b16 %v282
    %v360 = vunpack.c.l.b16 %v283
    %v361 = vunpack.c.h.b16 %v283
    %v362 = vunpack.c.l.b16 %v284
    %v363 = vunpack.c.h.b16 %v284
    %v364 = vunpack.c.l.b16 %v285
    %v365 = vunpack.c.h.b16 %v285
    %v366 = vunpack.c.l.b16 %v286
    %v367 = vunpack.c.h.b16 %v286
    %v368 = vunpack.c.l.b16 %v287
    %v369 = vunpack.c.h.b16 %v287
    %v370 = vunpack.c.l.b16 %v288
    %v371 = vunpack.c.h.b16 %v288
    %v372 = vunpack.c.l.b16 %v289
    %v373 = vunpack.c.h.b16 %v289
    %v374 = vunpack.c.l.b16 %v290
    %v375 = vunpack.c.h.b16 %v290
    %v376 = vunpack.c.l.b16 %v291
    %v377 = vunpack.c.h.b16 %v291
    %v378 = vunpack.c.l.b16 %v292
    %v379 = vunpack.c.h.b16 %v292
    %v380 = vunpack.c.l.b16 %v293
    %v381 = vunpack.c.h.b16 %v293
    %v382 = vunpack.c.l.b16 %v294
    %v383 = vunpack.c.h.b16 %v294
    %v384 = vunpack.c.l.b16 %v295
    %v385 = vunpack.c.h.b16 %v295
    %v386 = vunpack.c.l.b16 %v296
    %v387 = vunpack.c.h.b16 %v296
    %v388 = vunpack.c.l.b16 %v297
    %v389 = vunpack.c.h.b16 %v297
    %v390 = vunpack.c.l.b16 %v298
    %v391 = vunpack.c.h.b16 %v298
    %v392 = vunpack.c.l.b16 %v299
    %v393 = vunpack.c.h.b16 %v299
    %v394 = vunpack.c.l.b16 %v300
    %v395 = vunpack.c.h.b16 %v300
    %v396 = vunpack.c.l.b16 %v301
    %v397 = vunpack.c.h.b16 %v301
    %v398 = vpack.c.b16 %v338, %v334
    %v399 = vpack.c.b16 %v339, %v335
    %v400 = vpack.c.b16 %v340, %v336
    %v401 = vpack.c.b16 %v341, %v337
    %v402 = vpack.c.b16 %v346, %v342
    %v403 = vpack.c.b16 %v347, %v343
    %v404 = vpack.c.b16 %v348, %v344
    %v405 = vpack.c.b16 %v349, %v345
    %v406 = vpack.c.b16 %v354, %v350
    %v407 = vpack.c.b16 %v355, %v351
    %v408 = vpack.c.b16 %v356, %v352
    %v409 = vpack.c.b16 %v357, %v353
    %v410 = vpack.c.b16 %v362, %v358
    %v411 = vpack.c.b16 %v363, %v359
    %v412 = vpack.c.b16 %v364, %v360
    %v413 = vpack.c.b16 %v365, %v361
    %v414 = vpack.c.b16 %v370, %v366
    %v415 = vpack.c.b16 %v371, %v367
    %v416 = vpack.c.b16 %v372, %v368
    %v417 = vpack.c.b16 %v373, %v369
    %v418 = vpack.c.b16 %v378, %v374
    %v419 = vpack.c.b16 %v379, %v375
    %v420 = vpack.c.b16 %v380, %v376
    %v421 = vpack.c.b16 %v381, %v377
    %v422 = vpack.c.b16 %v386, %v382
    %v423 = vpack.c.b16 %v387, %v383
    %v424 = vpack.c.b16 %v388, %v384
    %v425 = vpack.c.b16 %v389, %v385
    %v426 = vpack.c.b16 %v394, %v390
    %v427 = vpack.c.b16 %v395, %v391
    %v428 = vpack.c.b16 %v396, %v392
    %v429 = vpack.c.b16 %v397, %v393
    %462 = vmatprep.subr.bf16.mxu0 %v427
    %463 = vmatpush1.bf16.msra.mxu0 %v426
    %464 = vmatprep.subr.bf16.mxu0 %v423
    %465 = vmatpush1.bf16.msra.mxu0 %v422
    %466 = vmatprep.subr.bf16.mxu0 %v419
    %467 = vmatpush1.bf16.msra.mxu0 %v418
    %468 = vmatprep.subr.bf16.mxu0 %v415
    %469 = vmatpush1.bf16.msra.mxu0 %v414
    %470 = vmatprep.subr.bf16.mxu0 %v411
    %471 = vmatpush1.bf16.msra.mxu0 %v410
    %472 = vmatprep.subr.bf16.mxu0 %v407
    %473 = vmatpush1.bf16.msra.mxu0 %v406
    %474 = vmatprep.subr.bf16.mxu0 %v403
    %475 = vmatpush1.bf16.msra.mxu0 %v402
    %476 = vmatprep.subr.bf16.mxu0 %v399
    %477 = vmatpush1.bf16.msra.mxu0 %v398
    %478 = vmatprep.subr.bf16.mxu0 0
    %479 = vmatpush2.bf16.msra.mxu0 0
    %480 = vmatprep.subr.bf16.mxu0 0
    %481 = vmatpush2.bf16.msra.mxu0 0
    %482 = vmatprep.subr.bf16.mxu0 0
    %483 = vmatpush2.bf16.msra.mxu0 0
    %484 = vmatprep.subr.bf16.mxu0 0
    %485 = vmatpush2.bf16.msra.mxu0 0
    %486 = vmatprep.subr.bf16.mxu0 0
    %487 = vmatpush2.bf16.msra.mxu0 0
    %488 = vmatprep.subr.bf16.mxu0 0
    %489 = vmatpush2.bf16.msra.mxu0 0
    %490 = vmatprep.subr.bf16.mxu0 0
    %491 = vmatpush2.bf16.msra.mxu0 0
    %492 = vmatprep.subr.bf16.mxu0 0
    %493 = vmatpush2.bf16.msra.mxu0 0
    %494 = vmatprep.mubr.bf16.mxu0 0
    %495 = vmatmul.mubr.bf16.gmra.mxu0 0
    %v496 = vpop.f32.mrf.mxu0
    %v497 = vadd.f32 0.0, %v496
    %v498 = vpop.f32.mrf.mxu0
    %v499 = vadd.f32 0.0, %v498
    %v500 = vpop.f32.mrf.mxu0
    %v501 = vpop.f32.mrf.mxu0
    %502 = vdwg.mxu0
    %503 = vmatprep.subr.bf16.mxu0 %v429
    %504 = vmatpush1.bf16.msra.mxu0 %v428
    %505 = vmatprep.subr.bf16.mxu0 %v425
    %506 = vmatpush1.bf16.msra.mxu0 %v424
    %507 = vmatprep.subr.bf16.mxu0 %v421
    %508 = vmatpush1.bf16.msra.mxu0 %v420
    %509 = vmatprep.subr.bf16.mxu0 %v417
    %510 = vmatpush1.bf16.msra.mxu0 %v416
    %511 = vmatprep.subr.bf16.mxu0 %v413
    %512 = vmatpush1.bf16.msra.mxu0 %v412
    %513 = vmatprep.subr.bf16.mxu0 %v409
    %514 = vmatpush1.bf16.msra.mxu0 %v408
    %515 = vmatprep.subr.bf16.mxu0 %v405
    %516 = vmatpush1.bf16.msra.mxu0 %v404
    %517 = vmatprep.subr.bf16.mxu0 %v401
    %518 = vmatpush1.bf16.msra.mxu0 %v400
    %519 = vmatprep.subr.bf16.mxu0 0
    %520 = vmatpush2.bf16.msra.mxu0 0
    %521 = vmatprep.subr.bf16.mxu0 0
    %522 = vmatpush2.bf16.msra.mxu0 0
    %523 = vmatprep.subr.bf16.mxu0 0
    %524 = vmatpush2.bf16.msra.mxu0 0
    %525 = vmatprep.subr.bf16.mxu0 0
    %526 = vmatpush2.bf16.msra.mxu0 0
    %527 = vmatprep.subr.bf16.mxu0 0
    %528 = vmatpush2.bf16.msra.mxu0 0
    %529 = vmatprep.subr.bf16.mxu0 0
    %530 = vmatpush2.bf16.msra.mxu0 0
    %531 = vmatprep.subr.bf16.mxu0 0
    %532 = vmatpush2.bf16.msra.mxu0 0
    %533 = vmatprep.subr.bf16.mxu0 0
    %534 = vmatpush2.bf16.msra.mxu0 0
    %535 = vmatprep.mubr.bf16.mxu0 0
    %536 = vmatmul.mubr.bf16.gmra.mxu0 0
    %v537 = vpop.f32.mrf.mxu0
    %v538 = vadd.f32 0.0, %v537
    %v539 = vpop.f32.mrf.mxu0
    %v540 = vadd.f32 0.0, %v539
    %v541 = vpop.f32.mrf.mxu0
    %v542 = vpop.f32.mrf.mxu0
    %543 = vdwg.mxu0
    %v544 = vadd.f32 %v179, %v497
    %v545 = vadd.f32 %v181, %v499
    %v546 = vadd.f32 %v242, %v538
    %v547 = vadd.f32 %v244, %v540
    %v548 = vld [vmem:[%s3] sm:$0xf]
    %v550 = vlaneseq
    %v551 = vshrl.u32 %v550, 7
    %v552 = vsub.s32 0, %v551
    %v553 = vrot.slane %v548, %v552
    %v554 = vlaneseq
    %v555 = vshrl.u32 %v554, 7
    %v556 = vsub.s32 1, %v555
    %v557 = vrot.slane %v548, %v556
    %v558 = vlaneseq
    %v559 = vshrl.u32 %v558, 7
    %v560 = vsub.s32 2, %v559
    %v561 = vrot.slane %v548, %v560
    %v562 = vlaneseq
    %v563 = vshrl.u32 %v562, 7
    %v564 = vsub.s32 3, %v563
    %v565 = vrot.slane %v548, %v564
    %v570 = vadd.f32 %v544, %v553
    %v571 = vadd.f32 %v545, %v557
    %v572 = vadd.f32 %v546, %v561
    %v573 = vadd.f32 %v547, %v565
    %v574 = vxor.u32 %v570, 2147483648
    %v575 = vmul.f32 %v574, 1.442695
    %v576 = vpow.pop %v575
    %v577 = vadd.f32 %v576, 1.0
    %v578 = vrcp.pop %v577
    %v579 = vmul.f32 1.0, %v578
    %v580 = vxor.u32 %v571, 2147483648
    %v581 = vmul.f32 %v580, 1.442695
    %v582 = vpow.pop %v581
    %v583 = vadd.f32 %v582, 1.0
    %v584 = vrcp.pop %v583
    %v585 = vmul.f32 1.0, %v584
    %v586 = vtanh.pop %v572
    %v587 = vxor.u32 %v573, 2147483648
    %v588 = vmul.f32 %v587, 1.442695
    %v589 = vpow.pop %v588
    %v590 = vadd.f32 %v589, 1.0
    %v591 = vrcp.pop %v590
    %v592 = vmul.f32 1.0, %v591
    %v593 = vmul.f32 %v585, 0.0
    %v594 = vmul.f32 %v579, %v586
    %v595 = vadd.f32 %v593, %v594
    %v596 = vtanh.pop %v595
    %v597 = vmul.f32 %v592, %v596
    %v598 = vpack.c.bf16 %v597, %v597
    %599 = vmatprep.subr.bf16.mxu0 %v427
    %600 = vmatpush1.bf16.msra.mxu0 %v426
    %601 = vmatprep.subr.bf16.mxu0 %v423
    %602 = vmatpush1.bf16.msra.mxu0 %v422
    %603 = vmatprep.subr.bf16.mxu0 %v419
    %604 = vmatpush1.bf16.msra.mxu0 %v418
    %605 = vmatprep.subr.bf16.mxu0 %v415
    %606 = vmatpush1.bf16.msra.mxu0 %v414
    %607 = vmatprep.subr.bf16.mxu0 %v411
    %608 = vmatpush1.bf16.msra.mxu0 %v410
    %609 = vmatprep.subr.bf16.mxu0 %v407
    %610 = vmatpush1.bf16.msra.mxu0 %v406
    %611 = vmatprep.subr.bf16.mxu0 %v403
    %612 = vmatpush1.bf16.msra.mxu0 %v402
    %613 = vmatprep.subr.bf16.mxu0 %v399
    %614 = vmatpush1.bf16.msra.mxu0 %v398
    %615 = vmatprep.subr.bf16.mxu0 0
    %616 = vmatpush2.bf16.msra.mxu0 0
    %617 = vmatprep.subr.bf16.mxu0 0
    %618 = vmatpush2.bf16.msra.mxu0 0
    %619 = vmatprep.subr.bf16.mxu0 0
    %620 = vmatpush2.bf16.msra.mxu0 0
    %621 = vmatprep.subr.bf16.mxu0 0
    %622 = vmatpush2.bf16.msra.mxu0 0
    %623 = vmatprep.subr.bf16.mxu0 0
    %624 = vmatpush2.bf16.msra.mxu0 0
    %625 = vmatprep.subr.bf16.mxu0 0
    %626 = vmatpush2.bf16.msra.mxu0 0
    %627 = vmatprep.subr.bf16.mxu0 0
    %628 = vmatpush2.bf16.msra.mxu0 0
    %629 = vmatprep.subr.bf16.mxu0 0
    %630 = vmatpush2.bf16.msra.mxu0 0
    %631 = vmatprep.mubr.bf16.mxu0 0
    %632 = vmatmul.mubr.bf16.gmra.mxu0 %v598
    %v633 = vpop.f32.mrf.mxu0
    %v634 = vadd.f32 0.0, %v633
    %v635 = vpop.f32.mrf.mxu0
    %v636 = vadd.f32 0.0, %v635
    %v637 = vpop.f32.mrf.mxu0
    %v638 = vpop.f32.mrf.mxu0
    %639 = vdwg.mxu0
    %640 = vmatprep.subr.bf16.mxu0 %v429
    %641 = vmatpush1.bf16.msra.mxu0 %v428
    %642 = vmatprep.subr.bf16.mxu0 %v425
    %643 = vmatpush1.bf16.msra.mxu0 %v424
    %644 = vmatprep.subr.bf16.mxu0 %v421
    %645 = vmatpush1.bf16.msra.mxu0 %v420
    %646 = vmatprep.subr.bf16.mxu0 %v417
    %647 = vmatpush1.bf16.msra.mxu0 %v416
    %648 = vmatprep.subr.bf16.mxu0 %v413
    %649 = vmatpush1.bf16.msra.mxu0 %v412
    %650 = vmatprep.subr.bf16.mxu0 %v409
    %651 = vmatpush1.bf16.msra.mxu0 %v408
    %652 = vmatprep.subr.bf16.mxu0 %v405
    %653 = vmatpush1.bf16.msra.mxu0 %v404
    %654 = vmatprep.subr.bf16.mxu0 %v401
    %655 = vmatpush1.bf16.msra.mxu0 %v400
    %656 = vmatprep.subr.bf16.mxu0 0
    %657 = vmatpush2.bf16.msra.mxu0 0
    %658 = vmatprep.subr.bf16.mxu0 0
    %659 = vmatpush2.bf16.msra.mxu0 0
    %660 = vmatprep.subr.bf16.mxu0 0
    %661 = vmatpush2.bf16.msra.mxu0 0
    %662 = vmatprep.subr.bf16.mxu0 0
    %663 = vmatpush2.bf16.msra.mxu0 0
    %664 = vmatprep.subr.bf16.mxu0 0
    %665 = vmatpush2.bf16.msra.mxu0 0
    %666 = vmatprep.subr.bf16.mxu0 0
    %667 = vmatpush2.bf16.msra.mxu0 0
    %668 = vmatprep.subr.bf16.mxu0 0
    %669 = vmatpush2.bf16.msra.mxu0 0
    %670 = vmatprep.subr.bf16.mxu0 0
    %671 = vmatpush2.bf16.msra.mxu0 0
    %672 = vmatprep.mubr.bf16.mxu0 0
    %673 = vmatmul.mubr.bf16.gmra.mxu0 %v598
    %v674 = vpop.f32.mrf.mxu0
    %v675 = vadd.f32 0.0, %v674
    %v676 = vpop.f32.mrf.mxu0
    %v677 = vadd.f32 0.0, %v676
    %v678 = vpop.f32.mrf.mxu0
    %v679 = vpop.f32.mrf.mxu0
    %680 = vdwg.mxu0
    %v681 = vadd.f32 %v183, %v634
    %v682 = vadd.f32 %v185, %v636
    %v683 = vadd.f32 %v246, %v675
    %v684 = vadd.f32 %v248, %v677
    %v685 = vadd.f32 %v681, %v553
    %v686 = vadd.f32 %v682, %v557
    %v687 = vadd.f32 %v683, %v561
    %v688 = vadd.f32 %v684, %v565
    %v689 = vxor.u32 %v685, 2147483648
    %v690 = vmul.f32 %v689, 1.442695
    %v691 = vpow.pop %v690
    %v692 = vadd.f32 %v691, 1.0
    %v693 = vrcp.pop %v692
    %v694 = vmul.f32 1.0, %v693
    %v695 = vxor.u32 %v686, 2147483648
    %v696 = vmul.f32 %v695, 1.442695
    %v697 = vpow.pop %v696
    %v698 = vadd.f32 %v697, 1.0
    %v699 = vrcp.pop %v698
    %v700 = vmul.f32 1.0, %v699
    %v701 = vtanh.pop %v687
    %v702 = vxor.u32 %v688, 2147483648
    %v703 = vmul.f32 %v702, 1.442695
    %v704 = vpow.pop %v703
    %v705 = vadd.f32 %v704, 1.0
    %v706 = vrcp.pop %v705
    %v707 = vmul.f32 1.0, %v706
    %v708 = vmul.f32 %v700, %v595
    %v709 = vmul.f32 %v694, %v701
    %v710 = vadd.f32 %v708, %v709
    %v711 = vtanh.pop %v710
    %v712 = vmul.f32 %v707, %v711
    %v713 = vpack.c.bf16 %v712, %v712
    %714 = vmatprep.subr.bf16.mxu0 %v427
    %715 = vmatpush1.bf16.msra.mxu0 %v426
    %716 = vmatprep.subr.bf16.mxu0 %v423
    %717 = vmatpush1.bf16.msra.mxu0 %v422
    %718 = vmatprep.subr.bf16.mxu0 %v419
    %719 = vmatpush1.bf16.msra.mxu0 %v418
    %720 = vmatprep.subr.bf16.mxu0 %v415
    %721 = vmatpush1.bf16.msra.mxu0 %v414
    %722 = vmatprep.subr.bf16.mxu0 %v411
    %723 = vmatpush1.bf16.msra.mxu0 %v410
    %724 = vmatprep.subr.bf16.mxu0 %v407
    %725 = vmatpush1.bf16.msra.mxu0 %v406
    %726 = vmatprep.subr.bf16.mxu0 %v403
    %727 = vmatpush1.bf16.msra.mxu0 %v402
    %728 = vmatprep.subr.bf16.mxu0 %v399
    %729 = vmatpush1.bf16.msra.mxu0 %v398
    %730 = vmatprep.subr.bf16.mxu0 0
    %731 = vmatpush2.bf16.msra.mxu0 0
    %732 = vmatprep.subr.bf16.mxu0 0
    %733 = vmatpush2.bf16.msra.mxu0 0
    %734 = vmatprep.subr.bf16.mxu0 0
    %735 = vmatpush2.bf16.msra.mxu0 0
    %736 = vmatprep.subr.bf16.mxu0 0
    %737 = vmatpush2.bf16.msra.mxu0 0
    %738 = vmatprep.subr.bf16.mxu0 0
    %739 = vmatpush2.bf16.msra.mxu0 0
    %740 = vmatprep.subr.bf16.mxu0 0
    %741 = vmatpush2.bf16.msra.mxu0 0
    %742 = vmatprep.subr.bf16.mxu0 0
    %743 = vmatpush2.bf16.msra.mxu0 0
    %744 = vmatprep.subr.bf16.mxu0 0
    %745 = vmatpush2.bf16.msra.mxu0 0
    %746 = vmatprep.mubr.bf16.mxu0 0
    %747 = vmatmul.mubr.bf16.gmra.mxu0 %v713
    %v748 = vpop.f32.mrf.mxu0
    %v749 = vadd.f32 0.0, %v748
    %v750 = vpop.f32.mrf.mxu0
    %v751 = vadd.f32 0.0, %v750
    %v752 = vpop.f32.mrf.mxu0
    %v753 = vpop.f32.mrf.mxu0
    %754 = vdwg.mxu0
    %755 = vmatprep.subr.bf16.mxu0 %v429
    %756 = vmatpush1.bf16.msra.mxu0 %v428
    %757 = vmatprep.subr.bf16.mxu0 %v425
    %758 = vmatpush1.bf16.msra.mxu0 %v424
    %759 = vmatprep.subr.bf16.mxu0 %v421
    %760 = vmatpush1.bf16.msra.mxu0 %v420
    %761 = vmatprep.subr.bf16.mxu0 %v417
    %762 = vmatpush1.bf16.msra.mxu0 %v416
    %763 = vmatprep.subr.bf16.mxu0 %v413
    %764 = vmatpush1.bf16.msra.mxu0 %v412
    %765 = vmatprep.subr.bf16.mxu0 %v409
    %766 = vmatpush1.bf16.msra.mxu0 %v408
    %767 = vmatprep.subr.bf16.mxu0 %v405
    %768 = vmatpush1.bf16.msra.mxu0 %v404
    %769 = vmatprep.subr.bf16.mxu0 %v401
    %770 = vmatpush1.bf16.msra.mxu0 %v400
    %771 = vmatprep.subr.bf16.mxu0 0
    %772 = vmatpush2.bf16.msra.mxu0 0
    %773 = vmatprep.subr.bf16.mxu0 0
    %774 = vmatpush2.bf16.msra.mxu0 0
    %775 = vmatprep.subr.bf16.mxu0 0
    %776 = vmatpush2.bf16.msra.mxu0 0
    %777 = vmatprep.subr.bf16.mxu0 0
    %778 = vmatpush2.bf16.msra.mxu0 0
    %779 = vmatprep.subr.bf16.mxu0 0
    %780 = vmatpush2.bf16.msra.mxu0 0
    %781 = vmatprep.subr.bf16.mxu0 0
    %782 = vmatpush2.bf16.msra.mxu0 0
    %783 = vmatprep.subr.bf16.mxu0 0
    %784 = vmatpush2.bf16.msra.mxu0 0
    %785 = vmatprep.subr.bf16.mxu0 0
    %786 = vmatpush2.bf16.msra.mxu0 0
    %787 = vmatprep.mubr.bf16.mxu0 0
    %788 = vmatmul.mubr.bf16.gmra.mxu0 %v713
    %v789 = vpop.f32.mrf.mxu0
    %v790 = vadd.f32 0.0, %v789
    %v791 = vpop.f32.mrf.mxu0
    %v792 = vadd.f32 0.0, %v791
    %v793 = vpop.f32.mrf.mxu0
    %v794 = vpop.f32.mrf.mxu0
    %795 = vdwg.mxu0
    %v796 = vadd.f32 %v189, %v749
    %v797 = vadd.f32 %v191, %v751
    %v798 = vadd.f32 %v252, %v790
    %v799 = vadd.f32 %v254, %v792
    %v800 = vadd.f32 %v796, %v553
    %v801 = vadd.f32 %v797, %v557
    %v802 = vadd.f32 %v798, %v561
    %v803 = vadd.f32 %v799, %v565
    %v804 = vxor.u32 %v800, 2147483648
    %v805 = vmul.f32 %v804, 1.442695
    %v806 = vpow.pop %v805
    %v807 = vadd.f32 %v806, 1.0
    %v808 = vrcp.pop %v807
    %v809 = vmul.f32 1.0, %v808
    %v810 = vxor.u32 %v801, 2147483648
    %v811 = vmul.f32 %v810, 1.442695
    %v812 = vpow.pop %v811
    %v813 = vadd.f32 %v812, 1.0
    %v814 = vrcp.pop %v813
    %v815 = vmul.f32 1.0, %v814
    %v816 = vtanh.pop %v802
    %v817 = vxor.u32 %v803, 2147483648
    %v818 = vmul.f32 %v817, 1.442695
    %v819 = vpow.pop %v818
    %v820 = vadd.f32 %v819, 1.0
    %v821 = vrcp.pop %v820
    %v822 = vmul.f32 1.0, %v821
    %v823 = vmul.f32 %v815, %v710
    %v824 = vmul.f32 %v809, %v816
    %v825 = vadd.f32 %v823, %v824
    %v826 = vtanh.pop %v825
    %v827 = vmul.f32 %v822, %v826
    %v828 = vpack.c.bf16 %v827, %v827
    %829 = vmatprep.subr.bf16.mxu0 %v427
    %830 = vmatpush1.bf16.msra.mxu0 %v426
    %831 = vmatprep.subr.bf16.mxu0 %v423
    %832 = vmatpush1.bf16.msra.mxu0 %v422
    %833 = vmatprep.subr.bf16.mxu0 %v419
    %834 = vmatpush1.bf16.msra.mxu0 %v418
    %835 = vmatprep.subr.bf16.mxu0 %v415
    %836 = vmatpush1.bf16.msra.mxu0 %v414
    %837 = vmatprep.subr.bf16.mxu0 %v411
    %838 = vmatpush1.bf16.msra.mxu0 %v410
    %839 = vmatprep.subr.bf16.mxu0 %v407
    %840 = vmatpush1.bf16.msra.mxu0 %v406
    %841 = vmatprep.subr.bf16.mxu0 %v403
    %842 = vmatpush1.bf16.msra.mxu0 %v402
    %843 = vmatprep.subr.bf16.mxu0 %v399
    %844 = vmatpush1.bf16.msra.mxu0 %v398
    %845 = vmatprep.subr.bf16.mxu0 0
    %846 = vmatpush2.bf16.msra.mxu0 0
    %847 = vmatprep.subr.bf16.mxu0 0
    %848 = vmatpush2.bf16.msra.mxu0 0
    %849 = vmatprep.subr.bf16.mxu0 0
    %850 = vmatpush2.bf16.msra.mxu0 0
    %851 = vmatprep.subr.bf16.mxu0 0
    %852 = vmatpush2.bf16.msra.mxu0 0
    %853 = vmatprep.subr.bf16.mxu0 0
    %854 = vmatpush2.bf16.msra.mxu0 0
    %855 = vmatprep.subr.bf16.mxu0 0
    %856 = vmatpush2.bf16.msra.mxu0 0
    %857 = vmatprep.subr.bf16.mxu0 0
    %858 = vmatpush2.bf16.msra.mxu0 0
    %859 = vmatprep.subr.bf16.mxu0 0
    %860 = vmatpush2.bf16.msra.mxu0 0
    %861 = vmatprep.mubr.bf16.mxu0 0
    %862 = vmatmul.mubr.bf16.gmra.mxu0 %v828
    %v863 = vpop.f32.mrf.mxu0
    %v864 = vadd.f32 0.0, %v863
    %v865 = vpop.f32.mrf.mxu0
    %v866 = vadd.f32 0.0, %v865
    %v867 = vpop.f32.mrf.mxu0
    %v868 = vpop.f32.mrf.mxu0
    %869 = vdwg.mxu0
    %870 = vmatprep.subr.bf16.mxu0 %v429
    %871 = vmatpush1.bf16.msra.mxu0 %v428
    %872 = vmatprep.subr.bf16.mxu0 %v425
    %873 = vmatpush1.bf16.msra.mxu0 %v424
    %874 = vmatprep.subr.bf16.mxu0 %v421
    %875 = vmatpush1.bf16.msra.mxu0 %v420
    %876 = vmatprep.subr.bf16.mxu0 %v417
    %877 = vmatpush1.bf16.msra.mxu0 %v416
    %878 = vmatprep.subr.bf16.mxu0 %v413
    %879 = vmatpush1.bf16.msra.mxu0 %v412
    %880 = vmatprep.subr.bf16.mxu0 %v409
    %881 = vmatpush1.bf16.msra.mxu0 %v408
    %882 = vmatprep.subr.bf16.mxu0 %v405
    %883 = vmatpush1.bf16.msra.mxu0 %v404
    %884 = vmatprep.subr.bf16.mxu0 %v401
    %885 = vmatpush1.bf16.msra.mxu0 %v400
    %886 = vmatprep.subr.bf16.mxu0 0
    %887 = vmatpush2.bf16.msra.mxu0 0
    %888 = vmatprep.subr.bf16.mxu0 0
    %889 = vmatpush2.bf16.msra.mxu0 0
    %890 = vmatprep.subr.bf16.mxu0 0
    %891 = vmatpush2.bf16.msra.mxu0 0
    %892 = vmatprep.subr.bf16.mxu0 0
    %893 = vmatpush2.bf16.msra.mxu0 0
    %894 = vmatprep.subr.bf16.mxu0 0
    %895 = vmatpush2.bf16.msra.mxu0 0
    %896 = vmatprep.subr.bf16.mxu0 0
    %897 = vmatpush2.bf16.msra.mxu0 0
    %898 = vmatprep.subr.bf16.mxu0 0
    %899 = vmatpush2.bf16.msra.mxu0 0
    %900 = vmatprep.subr.bf16.mxu0 0
    %901 = vmatpush2.bf16.msra.mxu0 0
    %902 = vmatprep.mubr.bf16.mxu0 0
    %903 = vmatmul.mubr.bf16.gmra.mxu0 %v828
    %v904 = vpop.f32.mrf.mxu0
    %v905 = vadd.f32 0.0, %v904
    %v906 = vpop.f32.mrf.mxu0
    %v907 = vadd.f32 0.0, %v906
    %v908 = vpop.f32.mrf.mxu0
    %v909 = vpop.f32.mrf.mxu0
    %910 = vdwg.mxu0
    %v911 = vadd.f32 %v193, %v864
    %v912 = vadd.f32 %v195, %v866
    %v913 = vadd.f32 %v256, %v905
    %v914 = vadd.f32 %v258, %v907
    %v915 = vadd.f32 %v911, %v553
    %v916 = vadd.f32 %v912, %v557
    %v917 = vadd.f32 %v913, %v561
    %v918 = vadd.f32 %v914, %v565
    %v919 = vxor.u32 %v915, 2147483648
    %v920 = vmul.f32 %v919, 1.442695
    %v921 = vpow.pop %v920
    %v922 = vadd.f32 %v921, 1.0
    %v923 = vrcp.pop %v922
    %v924 = vmul.f32 1.0, %v923
    %v925 = vxor.u32 %v916, 2147483648
    %v926 = vmul.f32 %v925, 1.442695
    %v927 = vpow.pop %v926
    %v928 = vadd.f32 %v927, 1.0
    %v929 = vrcp.pop %v928
    %v930 = vmul.f32 1.0, %v929
    %v931 = vtanh.pop %v917
    %v932 = vxor.u32 %v918, 2147483648
    %v933 = vmul.f32 %v932, 1.442695
    %v934 = vpow.pop %v933
    %v935 = vadd.f32 %v934, 1.0
    %v936 = vrcp.pop %v935
    %v937 = vmul.f32 1.0, %v936
    %v938 = vmul.f32 %v930, %v825
    %v939 = vmul.f32 %v924, %v931
    %v940 = vadd.f32 %v938, %v939
    %v941 = vtanh.pop %v940
    %v942 = vmul.f32 %v937, %v941
    %v943 = vpack.c.bf16 %v942, %v942
    %944 = vmatprep.subr.bf16.mxu0 %v427
    %945 = vmatpush1.bf16.msra.mxu0 %v426
    %946 = vmatprep.subr.bf16.mxu0 %v423
    %947 = vmatpush1.bf16.msra.mxu0 %v422
    %948 = vmatprep.subr.bf16.mxu0 %v419
    %949 = vmatpush1.bf16.msra.mxu0 %v418
    %950 = vmatprep.subr.bf16.mxu0 %v415
    %951 = vmatpush1.bf16.msra.mxu0 %v414
    %952 = vmatprep.subr.bf16.mxu0 %v411
    %953 = vmatpush1.bf16.msra.mxu0 %v410
    %954 = vmatprep.subr.bf16.mxu0 %v407
    %955 = vmatpush1.bf16.msra.mxu0 %v406
    %956 = vmatprep.subr.bf16.mxu0 %v403
    %957 = vmatpush1.bf16.msra.mxu0 %v402
    %958 = vmatprep.subr.bf16.mxu0 %v399
    %959 = vmatpush1.bf16.msra.mxu0 %v398
    %960 = vmatprep.subr.bf16.mxu0 0
    %961 = vmatpush2.bf16.msra.mxu0 0
    %962 = vmatprep.subr.bf16.mxu0 0
    %963 = vmatpush2.bf16.msra.mxu0 0
    %964 = vmatprep.subr.bf16.mxu0 0
    %965 = vmatpush2.bf16.msra.mxu0 0
    %966 = vmatprep.subr.bf16.mxu0 0
    %967 = vmatpush2.bf16.msra.mxu0 0
    %968 = vmatprep.subr.bf16.mxu0 0
    %969 = vmatpush2.bf16.msra.mxu0 0
    %970 = vmatprep.subr.bf16.mxu0 0
    %971 = vmatpush2.bf16.msra.mxu0 0
    %972 = vmatprep.subr.bf16.mxu0 0
    %973 = vmatpush2.bf16.msra.mxu0 0
    %974 = vmatprep.subr.bf16.mxu0 0
    %975 = vmatpush2.bf16.msra.mxu0 0
    %976 = vmatprep.mubr.bf16.mxu0 0
    %977 = vmatmul.mubr.bf16.gmra.mxu0 %v943
    %v978 = vpop.f32.mrf.mxu0
    %v979 = vadd.f32 0.0, %v978
    %v980 = vpop.f32.mrf.mxu0
    %v981 = vadd.f32 0.0, %v980
    %v982 = vpop.f32.mrf.mxu0
    %v983 = vpop.f32.mrf.mxu0
    %984 = vdwg.mxu0
    %985 = vmatprep.subr.bf16.mxu0 %v429
    %986 = vmatpush1.bf16.msra.mxu0 %v428
    %987 = vmatprep.subr.bf16.mxu0 %v425
    %988 = vmatpush1.bf16.msra.mxu0 %v424
    %989 = vmatprep.subr.bf16.mxu0 %v421
    %990 = vmatpush1.bf16.msra.mxu0 %v420
    %991 = vmatprep.subr.bf16.mxu0 %v417
    %992 = vmatpush1.bf16.msra.mxu0 %v416
    %993 = vmatprep.subr.bf16.mxu0 %v413
    %994 = vmatpush1.bf16.msra.mxu0 %v412
    %995 = vmatprep.subr.bf16.mxu0 %v409
    %996 = vmatpush1.bf16.msra.mxu0 %v408
    %997 = vmatprep.subr.bf16.mxu0 %v405
    %998 = vmatpush1.bf16.msra.mxu0 %v404
    %999 = vmatprep.subr.bf16.mxu0 %v401
    %1000 = vmatpush1.bf16.msra.mxu0 %v400
    %1001 = vmatprep.subr.bf16.mxu0 0
    %1002 = vmatpush2.bf16.msra.mxu0 0
    %1003 = vmatprep.subr.bf16.mxu0 0
    %1004 = vmatpush2.bf16.msra.mxu0 0
    %1005 = vmatprep.subr.bf16.mxu0 0
    %1006 = vmatpush2.bf16.msra.mxu0 0
    %1007 = vmatprep.subr.bf16.mxu0 0
    %1008 = vmatpush2.bf16.msra.mxu0 0
    %1009 = vmatprep.subr.bf16.mxu0 0
    %1010 = vmatpush2.bf16.msra.mxu0 0
    %1011 = vmatprep.subr.bf16.mxu0 0
    %1012 = vmatpush2.bf16.msra.mxu0 0
    %1013 = vmatprep.subr.bf16.mxu0 0
    %1014 = vmatpush2.bf16.msra.mxu0 0
    %1015 = vmatprep.subr.bf16.mxu0 0
    %1016 = vmatpush2.bf16.msra.mxu0 0
    %1017 = vmatprep.mubr.bf16.mxu0 0
    %1018 = vmatmul.mubr.bf16.gmra.mxu0 %v943
    %v1019 = vpop.f32.mrf.mxu0
    %v1020 = vadd.f32 0.0, %v1019
    %v1021 = vpop.f32.mrf.mxu0
    %v1022 = vadd.f32 0.0, %v1021
    %v1023 = vpop.f32.mrf.mxu0
    %v1024 = vpop.f32.mrf.mxu0
    %1025 = vdwg.mxu0
    %v1026 = vadd.f32 %v199, %v979
    %v1027 = vadd.f32 %v201, %v981
    %v1028 = vadd.f32 %v262, %v1020
    %v1029 = vadd.f32 %v264, %v1022
    %v1030 = vadd.f32 %v1026, %v553
    %v1031 = vadd.f32 %v1027, %v557
    %v1032 = vadd.f32 %v1028, %v561
    %v1033 = vadd.f32 %v1029, %v565
    %v1034 = vxor.u32 %v1030, 2147483648
    %v1035 = vmul.f32 %v1034, 1.442695
    %v1036 = vpow.pop %v1035
    %v1037 = vadd.f32 %v1036, 1.0
    %v1038 = vrcp.pop %v1037
    %v1039 = vmul.f32 1.0, %v1038
    %v1040 = vxor.u32 %v1031, 2147483648
    %v1041 = vmul.f32 %v1040, 1.442695
    %v1042 = vpow.pop %v1041
    %v1043 = vadd.f32 %v1042, 1.0
    %v1044 = vrcp.pop %v1043
    %v1045 = vmul.f32 1.0, %v1044
    %v1046 = vtanh.pop %v1032
    %v1047 = vxor.u32 %v1033, 2147483648
    %v1048 = vmul.f32 %v1047, 1.442695
    %v1049 = vpow.pop %v1048
    %v1050 = vadd.f32 %v1049, 1.0
    %v1051 = vrcp.pop %v1050
    %v1052 = vmul.f32 1.0, %v1051
    %v1053 = vmul.f32 %v1045, %v940
    %v1054 = vmul.f32 %v1039, %v1046
    %v1055 = vadd.f32 %v1053, %v1054
    %v1056 = vtanh.pop %v1055
    %v1057 = vmul.f32 %v1052, %v1056
    %v1058 = vpack.c.bf16 %v1057, %v1057
    %1059 = vmatprep.subr.bf16.mxu0 %v427
    %1060 = vmatpush1.bf16.msra.mxu0 %v426
    %1061 = vmatprep.subr.bf16.mxu0 %v423
    %1062 = vmatpush1.bf16.msra.mxu0 %v422
    %1063 = vmatprep.subr.bf16.mxu0 %v419
    %1064 = vmatpush1.bf16.msra.mxu0 %v418
    %1065 = vmatprep.subr.bf16.mxu0 %v415
    %1066 = vmatpush1.bf16.msra.mxu0 %v414
    %1067 = vmatprep.subr.bf16.mxu0 %v411
    %1068 = vmatpush1.bf16.msra.mxu0 %v410
    %1069 = vmatprep.subr.bf16.mxu0 %v407
    %1070 = vmatpush1.bf16.msra.mxu0 %v406
    %1071 = vmatprep.subr.bf16.mxu0 %v403
    %1072 = vmatpush1.bf16.msra.mxu0 %v402
    %1073 = vmatprep.subr.bf16.mxu0 %v399
    %1074 = vmatpush1.bf16.msra.mxu0 %v398
    %1075 = vmatprep.subr.bf16.mxu0 0
    %1076 = vmatpush2.bf16.msra.mxu0 0
    %1077 = vmatprep.subr.bf16.mxu0 0
    %1078 = vmatpush2.bf16.msra.mxu0 0
    %1079 = vmatprep.subr.bf16.mxu0 0
    %1080 = vmatpush2.bf16.msra.mxu0 0
    %1081 = vmatprep.subr.bf16.mxu0 0
    %1082 = vmatpush2.bf16.msra.mxu0 0
    %1083 = vmatprep.subr.bf16.mxu0 0
    %1084 = vmatpush2.bf16.msra.mxu0 0
    %1085 = vmatprep.subr.bf16.mxu0 0
    %1086 = vmatpush2.bf16.msra.mxu0 0
    %1087 = vmatprep.subr.bf16.mxu0 0
    %1088 = vmatpush2.bf16.msra.mxu0 0
    %1089 = vmatprep.subr.bf16.mxu0 0
    %1090 = vmatpush2.bf16.msra.mxu0 0
    %1091 = vmatprep.mubr.bf16.mxu0 0
    %1092 = vmatmul.mubr.bf16.gmra.mxu0 %v1058
    %v1093 = vpop.f32.mrf.mxu0
    %v1094 = vadd.f32 0.0, %v1093
    %v1095 = vpop.f32.mrf.mxu0
    %v1096 = vadd.f32 0.0, %v1095
    %v1097 = vpop.f32.mrf.mxu0
    %v1098 = vpop.f32.mrf.mxu0
    %1099 = vdwg.mxu0
    %1100 = vmatprep.subr.bf16.mxu0 %v429
    %1101 = vmatpush1.bf16.msra.mxu0 %v428
    %1102 = vmatprep.subr.bf16.mxu0 %v425
    %1103 = vmatpush1.bf16.msra.mxu0 %v424
    %1104 = vmatprep.subr.bf16.mxu0 %v421
    %1105 = vmatpush1.bf16.msra.mxu0 %v420
    %1106 = vmatprep.subr.bf16.mxu0 %v417
    %1107 = vmatpush1.bf16.msra.mxu0 %v416
    %1108 = vmatprep.subr.bf16.mxu0 %v413
    %1109 = vmatpush1.bf16.msra.mxu0 %v412
    %1110 = vmatprep.subr.bf16.mxu0 %v409
    %1111 = vmatpush1.bf16.msra.mxu0 %v408
    %1112 = vmatprep.subr.bf16.mxu0 %v405
    %1113 = vmatpush1.bf16.msra.mxu0 %v404
    %1114 = vmatprep.subr.bf16.mxu0 %v401
    %1115 = vmatpush1.bf16.msra.mxu0 %v400
    %1116 = vmatprep.subr.bf16.mxu0 0
    %1117 = vmatpush2.bf16.msra.mxu0 0
    %1118 = vmatprep.subr.bf16.mxu0 0
    %1119 = vmatpush2.bf16.msra.mxu0 0
    %1120 = vmatprep.subr.bf16.mxu0 0
    %1121 = vmatpush2.bf16.msra.mxu0 0
    %1122 = vmatprep.subr.bf16.mxu0 0
    %1123 = vmatpush2.bf16.msra.mxu0 0
    %1124 = vmatprep.subr.bf16.mxu0 0
    %1125 = vmatpush2.bf16.msra.mxu0 0
    %1126 = vmatprep.subr.bf16.mxu0 0
    %1127 = vmatpush2.bf16.msra.mxu0 0
    %1128 = vmatprep.subr.bf16.mxu0 0
    %1129 = vmatpush2.bf16.msra.mxu0 0
    %1130 = vmatprep.subr.bf16.mxu0 0
    %1131 = vmatpush2.bf16.msra.mxu0 0
    %1132 = vmatprep.mubr.bf16.mxu0 0
    %1133 = vmatmul.mubr.bf16.gmra.mxu0 %v1058
    %v1134 = vpop.f32.mrf.mxu0
    %v1135 = vadd.f32 0.0, %v1134
    %v1136 = vpop.f32.mrf.mxu0
    %v1137 = vadd.f32 0.0, %v1136
    %v1138 = vpop.f32.mrf.mxu0
    %v1139 = vpop.f32.mrf.mxu0
    %1140 = vdwg.mxu0
    %v1141 = vadd.f32 %v203, %v1094
    %v1142 = vadd.f32 %v205, %v1096
    %v1143 = vadd.f32 %v266, %v1135
    %v1144 = vadd.f32 %v268, %v1137
    %v1145 = vadd.f32 %v1141, %v553
    %v1146 = vadd.f32 %v1142, %v557
    %v1147 = vadd.f32 %v1143, %v561
    %v1148 = vadd.f32 %v1144, %v565
    %v1149 = vxor.u32 %v1145, 2147483648
    %v1150 = vmul.f32 %v1149, 1.442695
    %v1151 = vpow.pop %v1150
    %v1152 = vadd.f32 %v1151, 1.0
    %v1153 = vrcp.pop %v1152
    %v1154 = vmul.f32 1.0, %v1153
    %v1155 = vxor.u32 %v1146, 2147483648
    %v1156 = vmul.f32 %v1155, 1.442695
    %v1157 = vpow.pop %v1156
    %v1158 = vadd.f32 %v1157, 1.0
    %v1159 = vrcp.pop %v1158
    %v1160 = vmul.f32 1.0, %v1159
    %v1161 = vtanh.pop %v1147
    %v1162 = vxor.u32 %v1148, 2147483648
    %v1163 = vmul.f32 %v1162, 1.442695
    %v1164 = vpow.pop %v1163
    %v1165 = vadd.f32 %v1164, 1.0
    %v1166 = vrcp.pop %v1165
    %v1167 = vmul.f32 1.0, %v1166
    %v1168 = vmul.f32 %v1160, %v1055
    %v1169 = vmul.f32 %v1154, %v1161
    %v1170 = vadd.f32 %v1168, %v1169
    %v1171 = vtanh.pop %v1170
    %v1172 = vmul.f32 %v1167, %v1171
    %v1173 = vpack.c.bf16 %v1172, %v1172
    %v1174 = vld [vmem:[#allocation2] sm:$0xff]
    %v1175 = vld [vmem:[#allocation2 + $0x8] sm:$0xff]
    %v1176 = vld [vmem:[#allocation2 + $0x10] sm:$0xff]
    %v1177 = vld [vmem:[#allocation2 + $0x18] sm:$0xff]
    %v1178 = vld [vmem:[#allocation2 + $0x20] sm:$0xff]
    %v1179 = vld [vmem:[#allocation2 + $0x28] sm:$0xff]
    %v1180 = vld [vmem:[#allocation2 + $0x30] sm:$0xff]
    %v1181 = vld [vmem:[#allocation2 + $0x38] sm:$0xff]
    %v1182 = vld [vmem:[#allocation2 + $0x40] sm:$0xff]
    %v1183 = vld [vmem:[#allocation2 + $0x48] sm:$0xff]
    %v1184 = vld [vmem:[#allocation2 + $0x50] sm:$0xff]
    %v1185 = vld [vmem:[#allocation2 + $0x58] sm:$0xff]
    %v1186 = vld [vmem:[#allocation2 + $0x60] sm:$0xff]
    %v1187 = vld [vmem:[#allocation2 + $0x68] sm:$0xff]
    %v1188 = vld [vmem:[#allocation2 + $0x70] sm:$0xff]
    %v1189 = vld [vmem:[#allocation2 + $0x78] sm:$0xff]
    %v1190 = vld [vmem:[#allocation2 + $0x80] sm:$0xff]
    %v1191 = vld [vmem:[#allocation2 + $0x88] sm:$0xff]
    %v1192 = vld [vmem:[#allocation2 + $0x90] sm:$0xff]
    %v1193 = vld [vmem:[#allocation2 + $0x98] sm:$0xff]
    %v1194 = vld [vmem:[#allocation2 + $0xa0] sm:$0xff]
    %v1195 = vld [vmem:[#allocation2 + $0xa8] sm:$0xff]
    %v1196 = vld [vmem:[#allocation2 + $0xb0] sm:$0xff]
    %v1197 = vld [vmem:[#allocation2 + $0xb8] sm:$0xff]
    %v1198 = vld [vmem:[#allocation2 + $0xc0] sm:$0xff]
    %v1199 = vld [vmem:[#allocation2 + $0xc8] sm:$0xff]
    %v1200 = vld [vmem:[#allocation2 + $0xd0] sm:$0xff]
    %v1201 = vld [vmem:[#allocation2 + $0xd8] sm:$0xff]
    %v1202 = vld [vmem:[#allocation2 + $0xe0] sm:$0xff]
    %v1203 = vld [vmem:[#allocation2 + $0xe8] sm:$0xff]
    %v1204 = vld [vmem:[#allocation2 + $0xf0] sm:$0xff]
    %v1205 = vld [vmem:[#allocation2 + $0xf8] sm:$0xff]
    %v1238 = vunpack.c.l.b16 %v1174
    %v1239 = vunpack.c.h.b16 %v1174
    %v1240 = vunpack.c.l.b16 %v1175
    %v1241 = vunpack.c.h.b16 %v1175
    %v1242 = vunpack.c.l.b16 %v1176
    %v1243 = vunpack.c.h.b16 %v1176
    %v1244 = vunpack.c.l.b16 %v1177
    %v1245 = vunpack.c.h.b16 %v1177
    %v1246 = vunpack.c.l.b16 %v1178
    %v1247 = vunpack.c.h.b16 %v1178
    %v1248 = vunpack.c.l.b16 %v1179
    %v1249 = vunpack.c.h.b16 %v1179
    %v1250 = vunpack.c.l.b16 %v1180
    %v1251 = vunpack.c.h.b16 %v1180
    %v1252 = vunpack.c.l.b16 %v1181
    %v1253 = vunpack.c.h.b16 %v1181
    %v1254 = vunpack.c.l.b16 %v1182
    %v1255 = vunpack.c.h.b16 %v1182
    %v1256 = vunpack.c.l.b16 %v1183
    %v1257 = vunpack.c.h.b16 %v1183
    %v1258 = vunpack.c.l.b16 %v1184
    %v1259 = vunpack.c.h.b16 %v1184
    %v1260 = vunpack.c.l.b16 %v1185
    %v1261 = vunpack.c.h.b16 %v1185
    %v1262 = vunpack.c.l.b16 %v1186
    %v1263 = vunpack.c.h.b16 %v1186
    %v1264 = vunpack.c.l.b16 %v1187
    %v1265 = vunpack.c.h.b16 %v1187
    %v1266 = vunpack.c.l.b16 %v1188
    %v1267 = vunpack.c.h.b16 %v1188
    %v1268 = vunpack.c.l.b16 %v1189
    %v1269 = vunpack.c.h.b16 %v1189
    %v1270 = vunpack.c.l.b16 %v1190
    %v1271 = vunpack.c.h.b16 %v1190
    %v1272 = vunpack.c.l.b16 %v1191
    %v1273 = vunpack.c.h.b16 %v1191
    %v1274 = vunpack.c.l.b16 %v1192
    %v1275 = vunpack.c.h.b16 %v1192
    %v1276 = vunpack.c.l.b16 %v1193
    %v1277 = vunpack.c.h.b16 %v1193
    %v1278 = vunpack.c.l.b16 %v1194
    %v1279 = vunpack.c.h.b16 %v1194
    %v1280 = vunpack.c.l.b16 %v1195
    %v1281 = vunpack.c.h.b16 %v1195
    %v1282 = vunpack.c.l.b16 %v1196
    %v1283 = vunpack.c.h.b16 %v1196
    %v1284 = vunpack.c.l.b16 %v1197
    %v1285 = vunpack.c.h.b16 %v1197
    %v1286 = vunpack.c.l.b16 %v1198
    %v1287 = vunpack.c.h.b16 %v1198
    %v1288 = vunpack.c.l.b16 %v1199
    %v1289 = vunpack.c.h.b16 %v1199
    %v1290 = vunpack.c.l.b16 %v1200
    %v1291 = vunpack.c.h.b16 %v1200
    %v1292 = vunpack.c.l.b16 %v1201
    %v1293 = vunpack.c.h.b16 %v1201
    %v1294 = vunpack.c.l.b16 %v1202
    %v1295 = vunpack.c.h.b16 %v1202
    %v1296 = vunpack.c.l.b16 %v1203
    %v1297 = vunpack.c.h.b16 %v1203
    %v1298 = vunpack.c.l.b16 %v1204
    %v1299 = vunpack.c.h.b16 %v1204
    %v1300 = vunpack.c.l.b16 %v1205
    %v1301 = vunpack.c.h.b16 %v1205
    %v1302 = vpack.c.b16 %v1242, %v1238
    %v1303 = vpack.c.b16 %v1243, %v1239
    %v1304 = vpack.c.b16 %v1244, %v1240
    %v1305 = vpack.c.b16 %v1245, %v1241
    %v1306 = vpack.c.b16 %v1250, %v1246
    %v1307 = vpack.c.b16 %v1251, %v1247
    %v1308 = vpack.c.b16 %v1252, %v1248
    %v1309 = vpack.c.b16 %v1253, %v1249
    %v1310 = vpack.c.b16 %v1258, %v1254
    %v1311 = vpack.c.b16 %v1259, %v1255
    %v1312 = vpack.c.b16 %v1260, %v1256
    %v1313 = vpack.c.b16 %v1261, %v1257
    %v1314 = vpack.c.b16 %v1266, %v1262
    %v1315 = vpack.c.b16 %v1267, %v1263
    %v1316 = vpack.c.b16 %v1268, %v1264
    %v1317 = vpack.c.b16 %v1269, %v1265
    %v1318 = vpack.c.b16 %v1274, %v1270
    %v1319 = vpack.c.b16 %v1275, %v1271
    %v1320 = vpack.c.b16 %v1276, %v1272
    %v1321 = vpack.c.b16 %v1277, %v1273
    %v1322 = vpack.c.b16 %v1282, %v1278
    %v1323 = vpack.c.b16 %v1283, %v1279
    %v1324 = vpack.c.b16 %v1284, %v1280
    %v1325 = vpack.c.b16 %v1285, %v1281
    %v1326 = vpack.c.b16 %v1290, %v1286
    %v1327 = vpack.c.b16 %v1291, %v1287
    %v1328 = vpack.c.b16 %v1292, %v1288
    %v1329 = vpack.c.b16 %v1293, %v1289
    %v1330 = vpack.c.b16 %v1298, %v1294
    %v1331 = vpack.c.b16 %v1299, %v1295
    %v1332 = vpack.c.b16 %v1300, %v1296
    %v1333 = vpack.c.b16 %v1301, %v1297
    %1366 = vmatprep.subr.bf16.mxu0 %v1331
    %1367 = vmatpush1.bf16.msra.mxu0 %v1330
    %1368 = vmatprep.subr.bf16.mxu0 %v1327
    %1369 = vmatpush1.bf16.msra.mxu0 %v1326
    %1370 = vmatprep.subr.bf16.mxu0 %v1323
    %1371 = vmatpush1.bf16.msra.mxu0 %v1322
    %1372 = vmatprep.subr.bf16.mxu0 %v1319
    %1373 = vmatpush1.bf16.msra.mxu0 %v1318
    %1374 = vmatprep.subr.bf16.mxu0 %v1315
    %1375 = vmatpush1.bf16.msra.mxu0 %v1314
    %1376 = vmatprep.subr.bf16.mxu0 %v1311
    %1377 = vmatpush1.bf16.msra.mxu0 %v1310
    %1378 = vmatprep.subr.bf16.mxu0 %v1307
    %1379 = vmatpush1.bf16.msra.mxu0 %v1306
    %1380 = vmatprep.subr.bf16.mxu0 %v1303
    %1381 = vmatpush1.bf16.msra.mxu0 %v1302
    %1382 = vmatprep.subr.bf16.mxu0 0
    %1383 = vmatpush2.bf16.msra.mxu0 0
    %1384 = vmatprep.subr.bf16.mxu0 0
    %1385 = vmatpush2.bf16.msra.mxu0 0
    %1386 = vmatprep.subr.bf16.mxu0 0
    %1387 = vmatpush2.bf16.msra.mxu0 0
    %1388 = vmatprep.subr.bf16.mxu0 0
    %1389 = vmatpush2.bf16.msra.mxu0 0
    %1390 = vmatprep.subr.bf16.mxu0 0
    %1391 = vmatpush2.bf16.msra.mxu0 0
    %1392 = vmatprep.subr.bf16.mxu0 0
    %1393 = vmatpush2.bf16.msra.mxu0 0
    %1394 = vmatprep.subr.bf16.mxu0 0
    %1395 = vmatpush2.bf16.msra.mxu0 0
    %1396 = vmatprep.subr.bf16.mxu0 0
    %1397 = vmatpush2.bf16.msra.mxu0 0
    %1398 = vmatprep.mubr.bf16.mxu0 0
    %1399 = vmatmul.mubr.bf16.gmra.mxu0 %v1173
    %v1400 = vpop.f32.mrf.mxu0
    %v1401 = vadd.f32 0.0, %v1400
    %v1402 = vpop.f32.mrf.mxu0
    %v1403 = vadd.f32 0.0, %v1402
    %v1404 = vpop.f32.mrf.mxu0
    %v1405 = vpop.f32.mrf.mxu0
    %1406 = vdwg.mxu0
    %1407 = vmatprep.subr.bf16.mxu0 %v1333
    %1408 = vmatpush1.bf16.msra.mxu0 %v1332
    %1409 = vmatprep.subr.bf16.mxu0 %v1329
    %1410 = vmatpush1.bf16.msra.mxu0 %v1328
    %1411 = vmatprep.subr.bf16.mxu0 %v1325
    %1412 = vmatpush1.bf16.msra.mxu0 %v1324
    %1413 = vmatprep.subr.bf16.mxu0 %v1321
    %1414 = vmatpush1.bf16.msra.mxu0 %v1320
    %1415 = vmatprep.subr.bf16.mxu0 %v1317
    %1416 = vmatpush1.bf16.msra.mxu0 %v1316
    %1417 = vmatprep.subr.bf16.mxu0 %v1313
    %1418 = vmatpush1.bf16.msra.mxu0 %v1312
    %1419 = vmatprep.subr.bf16.mxu0 %v1309
    %1420 = vmatpush1.bf16.msra.mxu0 %v1308
    %1421 = vmatprep.subr.bf16.mxu0 %v1305
    %1422 = vmatpush1.bf16.msra.mxu0 %v1304
    %1423 = vmatprep.subr.bf16.mxu0 0
    %1424 = vmatpush2.bf16.msra.mxu0 0
    %1425 = vmatprep.subr.bf16.mxu0 0
    %1426 = vmatpush2.bf16.msra.mxu0 0
    %1427 = vmatprep.subr.bf16.mxu0 0
    %1428 = vmatpush2.bf16.msra.mxu0 0
    %1429 = vmatprep.subr.bf16.mxu0 0
    %1430 = vmatpush2.bf16.msra.mxu0 0
    %1431 = vmatprep.subr.bf16.mxu0 0
    %1432 = vmatpush2.bf16.msra.mxu0 0
    %1433 = vmatprep.subr.bf16.mxu0 0
    %1434 = vmatpush2.bf16.msra.mxu0 0
    %1435 = vmatprep.subr.bf16.mxu0 0
    %1436 = vmatpush2.bf16.msra.mxu0 0
    %1437 = vmatprep.subr.bf16.mxu0 0
    %1438 = vmatpush2.bf16.msra.mxu0 0
    %1439 = vmatprep.mubr.bf16.mxu0 0
    %1440 = vmatmul.mubr.bf16.gmra.mxu0 %v1173
    %v1441 = vpop.f32.mrf.mxu0
    %v1442 = vadd.f32 0.0, %v1441
    %v1443 = vpop.f32.mrf.mxu0
    %v1444 = vadd.f32 0.0, %v1443
    %v1445 = vpop.f32.mrf.mxu0
    %v1446 = vpop.f32.mrf.mxu0
    %1447 = vdwg.mxu0
    %v1448 = vld [vmem:[#allocation4] sm:$0xff]
    %v1449 = vld [vmem:[#allocation4 + $0x8] sm:$0xff]
    %v1450 = vld [vmem:[#allocation4 + $0x10] sm:$0xff]
    %v1451 = vld [vmem:[#allocation4 + $0x18] sm:$0xff]
    %v1452 = vld [vmem:[#allocation4 + $0x20] sm:$0xff]
    %v1453 = vld [vmem:[#allocation4 + $0x28] sm:$0xff]
    %v1454 = vld [vmem:[#allocation4 + $0x30] sm:$0xff]
    %v1455 = vld [vmem:[#allocation4 + $0x38] sm:$0xff]
    %v1456 = vld [vmem:[#allocation4 + $0x40] sm:$0xff]
    %v1457 = vld [vmem:[#allocation4 + $0x48] sm:$0xff]
    %v1458 = vld [vmem:[#allocation4 + $0x50] sm:$0xff]
    %v1459 = vld [vmem:[#allocation4 + $0x58] sm:$0xff]
    %v1460 = vld [vmem:[#allocation4 + $0x60] sm:$0xff]
    %v1461 = vld [vmem:[#allocation4 + $0x68] sm:$0xff]
    %v1462 = vld [vmem:[#allocation4 + $0x70] sm:$0xff]
    %v1463 = vld [vmem:[#allocation4 + $0x78] sm:$0xff]
    %v1464 = vld [vmem:[#allocation4 + $0x80] sm:$0xff]
    %v1465 = vld [vmem:[#allocation4 + $0x88] sm:$0xff]
    %v1466 = vld [vmem:[#allocation4 + $0x90] sm:$0xff]
    %v1467 = vld [vmem:[#allocation4 + $0x98] sm:$0xff]
    %v1468 = vld [vmem:[#allocation4 + $0xa0] sm:$0xff]
    %v1469 = vld [vmem:[#allocation4 + $0xa8] sm:$0xff]
    %v1470 = vld [vmem:[#allocation4 + $0xb0] sm:$0xff]
    %v1471 = vld [vmem:[#allocation4 + $0xb8] sm:$0xff]
    %v1472 = vld [vmem:[#allocation4 + $0xc0] sm:$0xff]
    %v1473 = vld [vmem:[#allocation4 + $0xc8] sm:$0xff]
    %v1474 = vld [vmem:[#allocation4 + $0xd0] sm:$0xff]
    %v1475 = vld [vmem:[#allocation4 + $0xd8] sm:$0xff]
    %v1476 = vld [vmem:[#allocation4 + $0xe0] sm:$0xff]
    %v1477 = vld [vmem:[#allocation4 + $0xe8] sm:$0xff]
    %v1478 = vld [vmem:[#allocation4 + $0xf0] sm:$0xff]
    %v1479 = vld [vmem:[#allocation4 + $0xf8] sm:$0xff]
    %v1512 = vunpack.c.l.b16 %v1448
    %v1513 = vunpack.c.h.b16 %v1448
    %v1514 = vunpack.c.l.b16 %v1449
    %v1515 = vunpack.c.h.b16 %v1449
    %v1516 = vunpack.c.l.b16 %v1450
    %v1517 = vunpack.c.h.b16 %v1450
    %v1518 = vunpack.c.l.b16 %v1451
    %v1519 = vunpack.c.h.b16 %v1451
    %v1520 = vunpack.c.l.b16 %v1452
    %v1521 = vunpack.c.h.b16 %v1452
    %v1522 = vunpack.c.l.b16 %v1453
    %v1523 = vunpack.c.h.b16 %v1453
    %v1524 = vunpack.c.l.b16 %v1454
    %v1525 = vunpack.c.h.b16 %v1454
    %v1526 = vunpack.c.l.b16 %v1455
    %v1527 = vunpack.c.h.b16 %v1455
    %v1528 = vunpack.c.l.b16 %v1456
    %v1529 = vunpack.c.h.b16 %v1456
    %v1530 = vunpack.c.l.b16 %v1457
    %v1531 = vunpack.c.h.b16 %v1457
    %v1532 = vunpack.c.l.b16 %v1458
    %v1533 = vunpack.c.h.b16 %v1458
    %v1534 = vunpack.c.l.b16 %v1459
    %v1535 = vunpack.c.h.b16 %v1459
    %v1536 = vunpack.c.l.b16 %v1460
    %v1537 = vunpack.c.h.b16 %v1460
    %v1538 = vunpack.c.l.b16 %v1461
    %v1539 = vunpack.c.h.b16 %v1461
    %v1540 = vunpack.c.l.b16 %v1462
    %v1541 = vunpack.c.h.b16 %v1462
    %v1542 = vunpack.c.l.b16 %v1463
    %v1543 = vunpack.c.h.b16 %v1463
    %v1544 = vunpack.c.l.b16 %v1464
    %v1545 = vunpack.c.h.b16 %v1464
    %v1546 = vunpack.c.l.b16 %v1465
    %v1547 = vunpack.c.h.b16 %v1465
    %v1548 = vunpack.c.l.b16 %v1466
    %v1549 = vunpack.c.h.b16 %v1466
    %v1550 = vunpack.c.l.b16 %v1467
    %v1551 = vunpack.c.h.b16 %v1467
    %v1552 = vunpack.c.l.b16 %v1468
    %v1553 = vunpack.c.h.b16 %v1468
    %v1554 = vunpack.c.l.b16 %v1469
    %v1555 = vunpack.c.h.b16 %v1469
    %v1556 = vunpack.c.l.b16 %v1470
    %v1557 = vunpack.c.h.b16 %v1470
    %v1558 = vunpack.c.l.b16 %v1471
    %v1559 = vunpack.c.h.b16 %v1471
    %v1560 = vunpack.c.l.b16 %v1472
    %v1561 = vunpack.c.h.b16 %v1472
    %v1562 = vunpack.c.l.b16 %v1473
    %v1563 = vunpack.c.h.b16 %v1473
    %v1564 = vunpack.c.l.b16 %v1474
    %v1565 = vunpack.c.h.b16 %v1474
    %v1566 = vunpack.c.l.b16 %v1475
    %v1567 = vunpack.c.h.b16 %v1475
    %v1568 = vunpack.c.l.b16 %v1476
    %v1569 = vunpack.c.h.b16 %v1476
    %v1570 = vunpack.c.l.b16 %v1477
    %v1571 = vunpack.c.h.b16 %v1477
    %v1572 = vunpack.c.l.b16 %v1478
    %v1573 = vunpack.c.h.b16 %v1478
    %v1574 = vunpack.c.l.b16 %v1479
    %v1575 = vunpack.c.h.b16 %v1479
    %v1576 = vpack.c.b16 %v1516, %v1512
    %v1577 = vpack.c.b16 %v1517, %v1513
    %v1578 = vpack.c.b16 %v1518, %v1514
    %v1579 = vpack.c.b16 %v1519, %v1515
    %v1580 = vpack.c.b16 %v1524, %v1520
    %v1581 = vpack.c.b16 %v1525, %v1521
    %v1582 = vpack.c.b16 %v1526, %v1522
    %v1583 = vpack.c.b16 %v1527, %v1523
    %v1584 = vpack.c.b16 %v1532, %v1528
    %v1585 = vpack.c.b16 %v1533, %v1529
    %v1586 = vpack.c.b16 %v1534, %v1530
    %v1587 = vpack.c.b16 %v1535, %v1531
    %v1588 = vpack.c.b16 %v1540, %v1536
    %v1589 = vpack.c.b16 %v1541, %v1537
    %v1590 = vpack.c.b16 %v1542, %v1538
    %v1591 = vpack.c.b16 %v1543, %v1539
    %v1592 = vpack.c.b16 %v1548, %v1544
    %v1593 = vpack.c.b16 %v1549, %v1545
    %v1594 = vpack.c.b16 %v1550, %v1546
    %v1595 = vpack.c.b16 %v1551, %v1547
    %v1596 = vpack.c.b16 %v1556, %v1552
    %v1597 = vpack.c.b16 %v1557, %v1553
    %v1598 = vpack.c.b16 %v1558, %v1554
    %v1599 = vpack.c.b16 %v1559, %v1555
    %v1600 = vpack.c.b16 %v1564, %v1560
    %v1601 = vpack.c.b16 %v1565, %v1561
    %v1602 = vpack.c.b16 %v1566, %v1562
    %v1603 = vpack.c.b16 %v1567, %v1563
    %v1604 = vpack.c.b16 %v1572, %v1568
    %v1605 = vpack.c.b16 %v1573, %v1569
    %v1606 = vpack.c.b16 %v1574, %v1570
    %v1607 = vpack.c.b16 %v1575, %v1571
    %1640 = vmatprep.subr.bf16.mxu0 %v1605
    %1641 = vmatpush1.bf16.msra.mxu0 %v1604
    %1642 = vmatprep.subr.bf16.mxu0 %v1601
    %1643 = vmatpush1.bf16.msra.mxu0 %v1600
    %1644 = vmatprep.subr.bf16.mxu0 %v1597
    %1645 = vmatpush1.bf16.msra.mxu0 %v1596
    %1646 = vmatprep.subr.bf16.mxu0 %v1593
    %1647 = vmatpush1.bf16.msra.mxu0 %v1592
    %1648 = vmatprep.subr.bf16.mxu0 %v1589
    %1649 = vmatpush1.bf16.msra.mxu0 %v1588
    %1650 = vmatprep.subr.bf16.mxu0 %v1585
    %1651 = vmatpush1.bf16.msra.mxu0 %v1584
    %1652 = vmatprep.subr.bf16.mxu0 %v1581
    %1653 = vmatpush1.bf16.msra.mxu0 %v1580
    %1654 = vmatprep.subr.bf16.mxu0 %v1577
    %1655 = vmatpush1.bf16.msra.mxu0 %v1576
    %1656 = vmatprep.subr.bf16.mxu0 0
    %1657 = vmatpush2.bf16.msra.mxu0 0
    %1658 = vmatprep.subr.bf16.mxu0 0
    %1659 = vmatpush2.bf16.msra.mxu0 0
    %1660 = vmatprep.subr.bf16.mxu0 0
    %1661 = vmatpush2.bf16.msra.mxu0 0
    %1662 = vmatprep.subr.bf16.mxu0 0
    %1663 = vmatpush2.bf16.msra.mxu0 0
    %1664 = vmatprep.subr.bf16.mxu0 0
    %1665 = vmatpush2.bf16.msra.mxu0 0
    %1666 = vmatprep.subr.bf16.mxu0 0
    %1667 = vmatpush2.bf16.msra.mxu0 0
    %1668 = vmatprep.subr.bf16.mxu0 0
    %1669 = vmatpush2.bf16.msra.mxu0 0
    %1670 = vmatprep.subr.bf16.mxu0 0
    %1671 = vmatpush2.bf16.msra.mxu0 0
    %1672 = vmatprep.mubr.bf16.mxu0 0
    %1673 = vmatmul.mubr.bf16.gmra.mxu0 0
    %v1674 = vpop.f32.mrf.mxu0
    %v1675 = vadd.f32 0.0, %v1674
    %v1676 = vpop.f32.mrf.mxu0
    %v1677 = vadd.f32 0.0, %v1676
    %v1678 = vpop.f32.mrf.mxu0
    %v1679 = vpop.f32.mrf.mxu0
    %1680 = vdwg.mxu0
    %1681 = vmatprep.subr.bf16.mxu0 %v1607
    %1682 = vmatpush1.bf16.msra.mxu0 %v1606
    %1683 = vmatprep.subr.bf16.mxu0 %v1603
    %1684 = vmatpush1.bf16.msra.mxu0 %v1602
    %1685 = vmatprep.subr.bf16.mxu0 %v1599
    %1686 = vmatpush1.bf16.msra.mxu0 %v1598
    %1687 = vmatprep.subr.bf16.mxu0 %v1595
    %1688 = vmatpush1.bf16.msra.mxu0 %v1594
    %1689 = vmatprep.subr.bf16.mxu0 %v1591
    %1690 = vmatpush1.bf16.msra.mxu0 %v1590
    %1691 = vmatprep.subr.bf16.mxu0 %v1587
    %1692 = vmatpush1.bf16.msra.mxu0 %v1586
    %1693 = vmatprep.subr.bf16.mxu0 %v1583
    %1694 = vmatpush1.bf16.msra.mxu0 %v1582
    %1695 = vmatprep.subr.bf16.mxu0 %v1579
    %1696 = vmatpush1.bf16.msra.mxu0 %v1578
    %1697 = vmatprep.subr.bf16.mxu0 0
    %1698 = vmatpush2.bf16.msra.mxu0 0
    %1699 = vmatprep.subr.bf16.mxu0 0
    %1700 = vmatpush2.bf16.msra.mxu0 0
    %1701 = vmatprep.subr.bf16.mxu0 0
    %1702 = vmatpush2.bf16.msra.mxu0 0
    %1703 = vmatprep.subr.bf16.mxu0 0
    %1704 = vmatpush2.bf16.msra.mxu0 0
    %1705 = vmatprep.subr.bf16.mxu0 0
    %1706 = vmatpush2.bf16.msra.mxu0 0
    %1707 = vmatprep.subr.bf16.mxu0 0
    %1708 = vmatpush2.bf16.msra.mxu0 0
    %1709 = vmatprep.subr.bf16.mxu0 0
    %1710 = vmatpush2.bf16.msra.mxu0 0
    %1711 = vmatprep.subr.bf16.mxu0 0
    %1712 = vmatpush2.bf16.msra.mxu0 0
    %1713 = vmatprep.mubr.bf16.mxu0 0
    %1714 = vmatmul.mubr.bf16.gmra.mxu0 0
    %v1715 = vpop.f32.mrf.mxu0
    %v1716 = vadd.f32 0.0, %v1715
    %v1717 = vpop.f32.mrf.mxu0
    %v1718 = vadd.f32 0.0, %v1717
    %v1719 = vpop.f32.mrf.mxu0
    %v1720 = vpop.f32.mrf.mxu0
    %1721 = vdwg.mxu0
    %v1722 = vadd.f32 %v1401, %v1675
    %v1723 = vadd.f32 %v1403, %v1677
    %v1724 = vadd.f32 %v1442, %v1716
    %v1725 = vadd.f32 %v1444, %v1718
    %v1726 = vld [vmem:[%s6] sm:$0xf]
    %v1728 = vlaneseq
    %v1729 = vshrl.u32 %v1728, 7
    %v1730 = vsub.s32 0, %v1729
    %v1731 = vrot.slane %v1726, %v1730
    %v1732 = vlaneseq
    %v1733 = vshrl.u32 %v1732, 7
    %v1734 = vsub.s32 1, %v1733
    %v1735 = vrot.slane %v1726, %v1734
    %v1736 = vlaneseq
    %v1737 = vshrl.u32 %v1736, 7
    %v1738 = vsub.s32 2, %v1737
    %v1739 = vrot.slane %v1726, %v1738
    %v1740 = vlaneseq
    %v1741 = vshrl.u32 %v1740, 7
    %v1742 = vsub.s32 3, %v1741
    %v1743 = vrot.slane %v1726, %v1742
    %v1748 = vadd.f32 %v1722, %v1731
    %v1749 = vadd.f32 %v1723, %v1735
    %v1750 = vadd.f32 %v1724, %v1739
    %v1751 = vadd.f32 %v1725, %v1743
    %v1752 = vxor.u32 %v1748, 2147483648
    %v1753 = vmul.f32 %v1752, 1.442695
    %v1754 = vpow.pop %v1753
    %v1755 = vadd.f32 %v1754, 1.0
    %v1756 = vrcp.pop %v1755
    %v1757 = vmul.f32 1.0, %v1756
    %v1758 = vxor.u32 %v1749, 2147483648
    %v1759 = vmul.f32 %v1758, 1.442695
    %v1760 = vpow.pop %v1759
    %v1761 = vadd.f32 %v1760, 1.0
    %v1762 = vrcp.pop %v1761
    %v1763 = vmul.f32 1.0, %v1762
    %v1764 = vtanh.pop %v1750
    %v1765 = vxor.u32 %v1751, 2147483648
    %v1766 = vmul.f32 %v1765, 1.442695
    %v1767 = vpow.pop %v1766
    %v1768 = vadd.f32 %v1767, 1.0
    %v1769 = vrcp.pop %v1768
    %v1770 = vmul.f32 1.0, %v1769
    %v1771 = vmul.f32 %v1763, 0.0
    %v1772 = vmul.f32 %v1757, %v1764
    %v1773 = vadd.f32 %v1771, %v1772
    %v1774 = vtanh.pop %v1773
    %v1775 = vmul.f32 %v1770, %v1774
    %1776 = vst [vmem:[%s9] sm:$0x3] %v1775
    %v1777 = vpack.c.bf16 %v1775, %v1775
    %v1778 = vld [vmem:[#allocation4] sm:$0xff]
    %v1779 = vld [vmem:[#allocation4 + $0x8] sm:$0xff]
    %v1780 = vld [vmem:[#allocation4 + $0x10] sm:$0xff]
    %v1781 = vld [vmem:[#allocation4 + $0x18] sm:$0xff]
    %v1782 = vld [vmem:[#allocation4 + $0x20] sm:$0xff]
    %v1783 = vld [vmem:[#allocation4 + $0x28] sm:$0xff]
    %v1784 = vld [vmem:[#allocation4 + $0x30] sm:$0xff]
    %v1785 = vld [vmem:[#allocation4 + $0x38] sm:$0xff]
    %v1786 = vld [vmem:[#allocation4 + $0x40] sm:$0xff]
    %v1787 = vld [vmem:[#allocation4 + $0x48] sm:$0xff]
    %v1788 = vld [vmem:[#allocation4 + $0x50] sm:$0xff]
    %v1789 = vld [vmem:[#allocation4 + $0x58] sm:$0xff]
    %v1790 = vld [vmem:[#allocation4 + $0x60] sm:$0xff]
    %v1791 = vld [vmem:[#allocation4 + $0x68] sm:$0xff]
    %v1792 = vld [vmem:[#allocation4 + $0x70] sm:$0xff]
    %v1793 = vld [vmem:[#allocation4 + $0x78] sm:$0xff]
    %v1794 = vld [vmem:[#allocation4 + $0x80] sm:$0xff]
    %v1795 = vld [vmem:[#allocation4 + $0x88] sm:$0xff]
    %v1796 = vld [vmem:[#allocation4 + $0x90] sm:$0xff]
    %v1797 = vld [vmem:[#allocation4 + $0x98] sm:$0xff]
    %v1798 = vld [vmem:[#allocation4 + $0xa0] sm:$0xff]
    %v1799 = vld [vmem:[#allocation4 + $0xa8] sm:$0xff]
    %v1800 = vld [vmem:[#allocation4 + $0xb0] sm:$0xff]
    %v1801 = vld [vmem:[#allocation4 + $0xb8] sm:$0xff]
    %v1802 = vld [vmem:[#allocation4 + $0xc0] sm:$0xff]
    %v1803 = vld [vmem:[#allocation4 + $0xc8] sm:$0xff]
    %v1804 = vld [vmem:[#allocation4 + $0xd0] sm:$0xff]
    %v1805 = vld [vmem:[#allocation4 + $0xd8] sm:$0xff]
    %v1806 = vld [vmem:[#allocation4 + $0xe0] sm:$0xff]
    %v1807 = vld [vmem:[#allocation4 + $0xe8] sm:$0xff]
    %v1808 = vld [vmem:[#allocation4 + $0xf0] sm:$0xff]
    %v1809 = vld [vmem:[#allocation4 + $0xf8] sm:$0xff]
    %v1842 = vunpack.c.l.b16 %v1778
    %v1843 = vunpack.c.h.b16 %v1778
    %v1844 = vunpack.c.l.b16 %v1779
    %v1845 = vunpack.c.h.b16 %v1779
    %v1846 = vunpack.c.l.b16 %v1780
    %v1847 = vunpack.c.h.b16 %v1780
    %v1848 = vunpack.c.l.b16 %v1781
    %v1849 = vunpack.c.h.b16 %v1781
    %v1850 = vunpack.c.l.b16 %v1782
    %v1851 = vunpack.c.h.b16 %v1782
    %v1852 = vunpack.c.l.b16 %v1783
    %v1853 = vunpack.c.h.b16 %v1783
    %v1854 = vunpack.c.l.b16 %v1784
    %v1855 = vunpack.c.h.b16 %v1784
    %v1856 = vunpack.c.l.b16 %v1785
    %v1857 = vunpack.c.h.b16 %v1785
    %v1858 = vunpack.c.l.b16 %v1786
    %v1859 = vunpack.c.h.b16 %v1786
    %v1860 = vunpack.c.l.b16 %v1787
    %v1861 = vunpack.c.h.b16 %v1787
    %v1862 = vunpack.c.l.b16 %v1788
    %v1863 = vunpack.c.h.b16 %v1788
    %v1864 = vunpack.c.l.b16 %v1789
    %v1865 = vunpack.c.h.b16 %v1789
    %v1866 = vunpack.c.l.b16 %v1790
    %v1867 = vunpack.c.h.b16 %v1790
    %v1868 = vunpack.c.l.b16 %v1791
    %v1869 = vunpack.c.h.b16 %v1791
    %v1870 = vunpack.c.l.b16 %v1792
    %v1871 = vunpack.c.h.b16 %v1792
    %v1872 = vunpack.c.l.b16 %v1793
    %v1873 = vunpack.c.h.b16 %v1793
    %v1874 = vunpack.c.l.b16 %v1794
    %v1875 = vunpack.c.h.b16 %v1794
    %v1876 = vunpack.c.l.b16 %v1795
    %v1877 = vunpack.c.h.b16 %v1795
    %v1878 = vunpack.c.l.b16 %v1796
    %v1879 = vunpack.c.h.b16 %v1796
    %v1880 = vunpack.c.l.b16 %v1797
    %v1881 = vunpack.c.h.b16 %v1797
    %v1882 = vunpack.c.l.b16 %v1798
    %v1883 = vunpack.c.h.b16 %v1798
    %v1884 = vunpack.c.l.b16 %v1799
    %v1885 = vunpack.c.h.b16 %v1799
    %v1886 = vunpack.c.l.b16 %v1800
    %v1887 = vunpack.c.h.b16 %v1800
    %v1888 = vunpack.c.l.b16 %v1801
    %v1889 = vunpack.c.h.b16 %v1801
    %v1890 = vunpack.c.l.b16 %v1802
    %v1891 = vunpack.c.h.b16 %v1802
    %v1892 = vunpack.c.l.b16 %v1803
    %v1893 = vunpack.c.h.b16 %v1803
    %v1894 = vunpack.c.l.b16 %v1804
    %v1895 = vunpack.c.h.b16 %v1804
    %v1896 = vunpack.c.l.b16 %v1805
    %v1897 = vunpack.c.h.b16 %v1805
    %v1898 = vunpack.c.l.b16 %v1806
    %v1899 = vunpack.c.h.b16 %v1806
    %v1900 = vunpack.c.l.b16 %v1807
    %v1901 = vunpack.c.h.b16 %v1807
    %v1902 = vunpack.c.l.b16 %v1808
    %v1903 = vunpack.c.h.b16 %v1808
    %v1904 = vunpack.c.l.b16 %v1809
    %v1905 = vunpack.c.h.b16 %v1809
    %v1906 = vpack.c.b16 %v1846, %v1842
    %v1907 = vpack.c.b16 %v1847, %v1843
    %v1908 = vpack.c.b16 %v1848, %v1844
    %v1909 = vpack.c.b16 %v1849, %v1845
    %v1910 = vpack.c.b16 %v1854, %v1850
    %v1911 = vpack.c.b16 %v1855, %v1851
    %v1912 = vpack.c.b16 %v1856, %v1852
    %v1913 = vpack.c.b16 %v1857, %v1853
    %v1914 = vpack.c.b16 %v1862, %v1858
    %v1915 = vpack.c.b16 %v1863, %v1859
    %v1916 = vpack.c.b16 %v1864, %v1860
    %v1917 = vpack.c.b16 %v1865, %v1861
    %v1918 = vpack.c.b16 %v1870, %v1866
    %v1919 = vpack.c.b16 %v1871, %v1867
    %v1920 = vpack.c.b16 %v1872, %v1868
    %v1921 = vpack.c.b16 %v1873, %v1869
    %v1922 = vpack.c.b16 %v1878, %v1874
    %v1923 = vpack.c.b16 %v1879, %v1875
    %v1924 = vpack.c.b16 %v1880, %v1876
    %v1925 = vpack.c.b16 %v1881, %v1877
    %v1926 = vpack.c.b16 %v1886, %v1882
    %v1927 = vpack.c.b16 %v1887, %v1883
    %v1928 = vpack.c.b16 %v1888, %v1884
    %v1929 = vpack.c.b16 %v1889, %v1885
    %v1930 = vpack.c.b16 %v1894, %v1890
    %v1931 = vpack.c.b16 %v1895, %v1891
    %v1932 = vpack.c.b16 %v1896, %v1892
    %v1933 = vpack.c.b16 %v1897, %v1893
    %v1934 = vpack.c.b16 %v1902, %v1898
    %v1935 = vpack.c.b16 %v1903, %v1899
    %v1936 = vpack.c.b16 %v1904, %v1900
    %v1937 = vpack.c.b16 %v1905, %v1901
    %1970 = vmatprep.subr.bf16.mxu0 %v1935
    %1971 = vmatpush1.bf16.msra.mxu0 %v1934
    %1972 = vmatprep.subr.bf16.mxu0 %v1931
    %1973 = vmatpush1.bf16.msra.mxu0 %v1930
    %1974 = vmatprep.subr.bf16.mxu0 %v1927
    %1975 = vmatpush1.bf16.msra.mxu0 %v1926
    %1976 = vmatprep.subr.bf16.mxu0 %v1923
    %1977 = vmatpush1.bf16.msra.mxu0 %v1922
    %1978 = vmatprep.subr.bf16.mxu0 %v1919
    %1979 = vmatpush1.bf16.msra.mxu0 %v1918
    %1980 = vmatprep.subr.bf16.mxu0 %v1915
    %1981 = vmatpush1.bf16.msra.mxu0 %v1914
    %1982 = vmatprep.subr.bf16.mxu0 %v1911
    %1983 = vmatpush1.bf16.msra.mxu0 %v1910
    %1984 = vmatprep.subr.bf16.mxu0 %v1907
    %1985 = vmatpush1.bf16.msra.mxu0 %v1906
    %1986 = vmatprep.subr.bf16.mxu0 0
    %1987 = vmatpush2.bf16.msra.mxu0 0
    %1988 = vmatprep.subr.bf16.mxu0 0
    %1989 = vmatpush2.bf16.msra.mxu0 0
    %1990 = vmatprep.subr.bf16.mxu0 0
    %1991 = vmatpush2.bf16.msra.mxu0 0
    %1992 = vmatprep.subr.bf16.mxu0 0
    %1993 = vmatpush2.bf16.msra.mxu0 0
    %1994 = vmatprep.subr.bf16.mxu0 0
    %1995 = vmatpush2.bf16.msra.mxu0 0
    %1996 = vmatprep.subr.bf16.mxu0 0
    %1997 = vmatpush2.bf16.msra.mxu0 0
    %1998 = vmatprep.subr.bf16.mxu0 0
    %1999 = vmatpush2.bf16.msra.mxu0 0
    %2000 = vmatprep.subr.bf16.mxu0 0
    %2001 = vmatpush2.bf16.msra.mxu0 0
    %2002 = vmatprep.mubr.bf16.mxu0 0
    %2003 = vmatmul.mubr.bf16.gmra.mxu0 %v1777
    %v2004 = vpop.f32.mrf.mxu0
    %v2005 = vadd.f32 0.0, %v2004
    %v2006 = vpop.f32.mrf.mxu0
    %v2007 = vadd.f32 0.0, %v2006
    %v2008 = vpop.f32.mrf.mxu0
    %v2009 = vpop.f32.mrf.mxu0
    %2010 = vdwg.mxu0
    %2011 = vmatprep.subr.bf16.mxu0 %v1937
    %2012 = vmatpush1.bf16.msra.mxu0 %v1936
    %2013 = vmatprep.subr.bf16.mxu0 %v1933
    %2014 = vmatpush1.bf16.msra.mxu0 %v1932
    %2015 = vmatprep.subr.bf16.mxu0 %v1929
    %2016 = vmatpush1.bf16.msra.mxu0 %v1928
    %2017 = vmatprep.subr.bf16.mxu0 %v1925
    %2018 = vmatpush1.bf16.msra.mxu0 %v1924
    %2019 = vmatprep.subr.bf16.mxu0 %v1921
    %2020 = vmatpush1.bf16.msra.mxu0 %v1920
    %2021 = vmatprep.subr.bf16.mxu0 %v1917
    %2022 = vmatpush1.bf16.msra.mxu0 %v1916
    %2023 = vmatprep.subr.bf16.mxu0 %v1913
    %2024 = vmatpush1.bf16.msra.mxu0 %v1912
    %2025 = vmatprep.subr.bf16.mxu0 %v1909
    %2026 = vmatpush1.bf16.msra.mxu0 %v1908
    %2027 = vmatprep.subr.bf16.mxu0 0
    %2028 = vmatpush2.bf16.msra.mxu0 0
    %2029 = vmatprep.subr.bf16.mxu0 0
    %2030 = vmatpush2.bf16.msra.mxu0 0
    %2031 = vmatprep.subr.bf16.mxu0 0
    %2032 = vmatpush2.bf16.msra.mxu0 0
    %2033 = vmatprep.subr.bf16.mxu0 0
    %2034 = vmatpush2.bf16.msra.mxu0 0
    %2035 = vmatprep.subr.bf16.mxu0 0
    %2036 = vmatpush2.bf16.msra.mxu0 0
    %2037 = vmatprep.subr.bf16.mxu0 0
    %2038 = vmatpush2.bf16.msra.mxu0 0
    %2039 = vmatprep.subr.bf16.mxu0 0
    %2040 = vmatpush2.bf16.msra.mxu0 0
    %2041 = vmatprep.subr.bf16.mxu0 0
    %2042 = vmatpush2.bf16.msra.mxu0 0
    %2043 = vmatprep.mubr.bf16.mxu0 0
    %2044 = vmatmul.mubr.bf16.gmra.mxu0 %v1777
    %v2045 = vpop.f32.mrf.mxu0
    %v2046 = vadd.f32 0.0, %v2045
    %v2047 = vpop.f32.mrf.mxu0
    %v2048 = vadd.f32 0.0, %v2047
    %v2049 = vpop.f32.mrf.mxu0
    %v2050 = vpop.f32.mrf.mxu0
    %2051 = vdwg.mxu0
    %v2056 = vrot.slane %v2005, 6
    %v2057 = vrot.slane %v2007, 6
    %v2058 = vrot.slane %v2046, 6
    %v2059 = vrot.slane %v2048, 6
    %v2064 = vadd.f32 %v1401, %v2056
    %v2065 = vadd.f32 %v1403, %v2057
    %v2066 = vadd.f32 %v1442, %v2058
    %v2067 = vadd.f32 %v1444, %v2059
    %v2068 = vld [vmem:[%s6] sm:$0xf]
    %v2070 = vlaneseq
    %v2071 = vshrl.u32 %v2070, 7
    %v2072 = vsub.s32 0, %v2071
    %v2073 = vrot.slane %v2068, %v2072
    %v2074 = vlaneseq
    %v2075 = vshrl.u32 %v2074, 7
    %v2076 = vsub.s32 1, %v2075
    %v2077 = vrot.slane %v2068, %v2076
    %v2078 = vlaneseq
    %v2079 = vshrl.u32 %v2078, 7
    %v2080 = vsub.s32 2, %v2079
    %v2081 = vrot.slane %v2068, %v2080
    %v2082 = vlaneseq
    %v2083 = vshrl.u32 %v2082, 7
    %v2084 = vsub.s32 3, %v2083
    %v2085 = vrot.slane %v2068, %v2084
    %v2090 = vadd.f32 %v2064, %v2073
    %v2091 = vadd.f32 %v2065, %v2077
    %v2092 = vadd.f32 %v2066, %v2081
    %v2093 = vadd.f32 %v2067, %v2085
    %v2094 = vxor.u32 %v2090, 2147483648
    %v2095 = vmul.f32 %v2094, 1.442695
    %v2096 = vpow.pop %v2095
    %v2097 = vadd.f32 %v2096, 1.0
    %v2098 = vrcp.pop %v2097
    %v2099 = vmul.f32 1.0, %v2098
    %v2100 = vxor.u32 %v2091, 2147483648
    %v2101 = vmul.f32 %v2100, 1.442695
    %v2102 = vpow.pop %v2101
    %v2103 = vadd.f32 %v2102, 1.0
    %v2104 = vrcp.pop %v2103
    %v2105 = vmul.f32 1.0, %v2104
    %v2106 = vtanh.pop %v2092
    %v2107 = vxor.u32 %v2093, 2147483648
    %v2108 = vmul.f32 %v2107, 1.442695
    %v2109 = vpow.pop %v2108
    %v2110 = vadd.f32 %v2109, 1.0
    %v2111 = vrcp.pop %v2110
    %v2112 = vmul.f32 1.0, %v2111
    %v2114 = vrot.slane %v1773, 6
    %v2116 = vmul.f32 %v2105, %v2114
    %v2117 = vmul.f32 %v2099, %v2106
    %v2118 = vadd.f32 %v2116, %v2117
    %v2119 = vtanh.pop %v2118
    %v2120 = vmul.f32 %v2112, %v2119
    %2121 = vst [vmem:[%s9] sm:$0xc] %v2120
    %v2122 = vpack.c.bf16 %v2120, %v2120
    %v2123 = vld [vmem:[#allocation4] sm:$0xff]
    %v2124 = vld [vmem:[#allocation4 + $0x8] sm:$0xff]
    %v2125 = vld [vmem:[#allocation4 + $0x10] sm:$0xff]
    %v2126 = vld [vmem:[#allocation4 + $0x18] sm:$0xff]
    %v2127 = vld [vmem:[#allocation4 + $0x20] sm:$0xff]
    %v2128 = vld [vmem:[#allocation4 + $0x28] sm:$0xff]
    %v2129 = vld [vmem:[#allocation4 + $0x30] sm:$0xff]
    %v2130 = vld [vmem:[#allocation4 + $0x38] sm:$0xff]
    %v2131 = vld [vmem:[#allocation4 + $0x40] sm:$0xff]
    %v2132 = vld [vmem:[#allocation4 + $0x48] sm:$0xff]
    %v2133 = vld [vmem:[#allocation4 + $0x50] sm:$0xff]
    %v2134 = vld [vmem:[#allocation4 + $0x58] sm:$0xff]
    %v2135 = vld [vmem:[#allocation4 + $0x60] sm:$0xff]
    %v2136 = vld [vmem:[#allocation4 + $0x68] sm:$0xff]
    %v2137 = vld [vmem:[#allocation4 + $0x70] sm:$0xff]
    %v2138 = vld [vmem:[#allocation4 + $0x78] sm:$0xff]
    %v2139 = vld [vmem:[#allocation4 + $0x80] sm:$0xff]
    %v2140 = vld [vmem:[#allocation4 + $0x88] sm:$0xff]
    %v2141 = vld [vmem:[#allocation4 + $0x90] sm:$0xff]
    %v2142 = vld [vmem:[#allocation4 + $0x98] sm:$0xff]
    %v2143 = vld [vmem:[#allocation4 + $0xa0] sm:$0xff]
    %v2144 = vld [vmem:[#allocation4 + $0xa8] sm:$0xff]
    %v2145 = vld [vmem:[#allocation4 + $0xb0] sm:$0xff]
    %v2146 = vld [vmem:[#allocation4 + $0xb8] sm:$0xff]
    %v2147 = vld [vmem:[#allocation4 + $0xc0] sm:$0xff]
    %v2148 = vld [vmem:[#allocation4 + $0xc8] sm:$0xff]
    %v2149 = vld [vmem:[#allocation4 + $0xd0] sm:$0xff]
    %v2150 = vld [vmem:[#allocation4 + $0xd8] sm:$0xff]
    %v2151 = vld [vmem:[#allocation4 + $0xe0] sm:$0xff]
    %v2152 = vld [vmem:[#allocation4 + $0xe8] sm:$0xff]
    %v2153 = vld [vmem:[#allocation4 + $0xf0] sm:$0xff]
    %v2154 = vld [vmem:[#allocation4 + $0xf8] sm:$0xff]
    %v2156 = vrot.slane %v2122, 1
    %v2190 = vunpack.c.l.b16 %v2123
    %v2191 = vunpack.c.h.b16 %v2123
    %v2192 = vunpack.c.l.b16 %v2124
    %v2193 = vunpack.c.h.b16 %v2124
    %v2194 = vunpack.c.l.b16 %v2125
    %v2195 = vunpack.c.h.b16 %v2125
    %v2196 = vunpack.c.l.b16 %v2126
    %v2197 = vunpack.c.h.b16 %v2126
    %v2198 = vunpack.c.l.b16 %v2127
    %v2199 = vunpack.c.h.b16 %v2127
    %v2200 = vunpack.c.l.b16 %v2128
    %v2201 = vunpack.c.h.b16 %v2128
    %v2202 = vunpack.c.l.b16 %v2129
    %v2203 = vunpack.c.h.b16 %v2129
    %v2204 = vunpack.c.l.b16 %v2130
    %v2205 = vunpack.c.h.b16 %v2130
    %v2206 = vunpack.c.l.b16 %v2131
    %v2207 = vunpack.c.h.b16 %v2131
    %v2208 = vunpack.c.l.b16 %v2132
    %v2209 = vunpack.c.h.b16 %v2132
    %v2210 = vunpack.c.l.b16 %v2133
    %v2211 = vunpack.c.h.b16 %v2133
    %v2212 = vunpack.c.l.b16 %v2134
    %v2213 = vunpack.c.h.b16 %v2134
    %v2214 = vunpack.c.l.b16 %v2135
    %v2215 = vunpack.c.h.b16 %v2135
    %v2216 = vunpack.c.l.b16 %v2136
    %v2217 = vunpack.c.h.b16 %v2136
    %v2218 = vunpack.c.l.b16 %v2137
    %v2219 = vunpack.c.h.b16 %v2137
    %v2220 = vunpack.c.l.b16 %v2138
    %v2221 = vunpack.c.h.b16 %v2138
    %v2222 = vunpack.c.l.b16 %v2139
    %v2223 = vunpack.c.h.b16 %v2139
    %v2224 = vunpack.c.l.b16 %v2140
    %v2225 = vunpack.c.h.b16 %v2140
    %v2226 = vunpack.c.l.b16 %v2141
    %v2227 = vunpack.c.h.b16 %v2141
    %v2228 = vunpack.c.l.b16 %v2142
    %v2229 = vunpack.c.h.b16 %v2142
    %v2230 = vunpack.c.l.b16 %v2143
    %v2231 = vunpack.c.h.b16 %v2143
    %v2232 = vunpack.c.l.b16 %v2144
    %v2233 = vunpack.c.h.b16 %v2144
    %v2234 = vunpack.c.l.b16 %v2145
    %v2235 = vunpack.c.h.b16 %v2145
    %v2236 = vunpack.c.l.b16 %v2146
    %v2237 = vunpack.c.h.b16 %v2146
    %v2238 = vunpack.c.l.b16 %v2147
    %v2239 = vunpack.c.h.b16 %v2147
    %v2240 = vunpack.c.l.b16 %v2148
    %v2241 = vunpack.c.h.b16 %v2148
    %v2242 = vunpack.c.l.b16 %v2149
    %v2243 = vunpack.c.h.b16 %v2149
    %v2244 = vunpack.c.l.b16 %v2150
    %v2245 = vunpack.c.h.b16 %v2150
    %v2246 = vunpack.c.l.b16 %v2151
    %v2247 = vunpack.c.h.b16 %v2151
    %v2248 = vunpack.c.l.b16 %v2152
    %v2249 = vunpack.c.h.b16 %v2152
    %v2250 = vunpack.c.l.b16 %v2153
    %v2251 = vunpack.c.h.b16 %v2153
    %v2252 = vunpack.c.l.b16 %v2154
    %v2253 = vunpack.c.h.b16 %v2154
    %v2254 = vpack.c.b16 %v2194, %v2190
    %v2255 = vpack.c.b16 %v2195, %v2191
    %v2256 = vpack.c.b16 %v2196, %v2192
    %v2257 = vpack.c.b16 %v2197, %v2193
    %v2258 = vpack.c.b16 %v2202, %v2198
    %v2259 = vpack.c.b16 %v2203, %v2199
    %v2260 = vpack.c.b16 %v2204, %v2200
    %v2261 = vpack.c.b16 %v2205, %v2201
    %v2262 = vpack.c.b16 %v2210, %v2206
    %v2263 = vpack.c.b16 %v2211, %v2207
    %v2264 = vpack.c.b16 %v2212, %v2208
    %v2265 = vpack.c.b16 %v2213, %v2209
    %v2266 = vpack.c.b16 %v2218, %v2214
    %v2267 = vpack.c.b16 %v2219, %v2215
    %v2268 = vpack.c.b16 %v2220, %v2216
    %v2269 = vpack.c.b16 %v2221, %v2217
    %v2270 = vpack.c.b16 %v2226, %v2222
    %v2271 = vpack.c.b16 %v2227, %v2223
    %v2272 = vpack.c.b16 %v2228, %v2224
    %v2273 = vpack.c.b16 %v2229, %v2225
    %v2274 = vpack.c.b16 %v2234, %v2230
    %v2275 = vpack.c.b16 %v2235, %v2231
    %v2276 = vpack.c.b16 %v2236, %v2232
    %v2277 = vpack.c.b16 %v2237, %v2233
    %v2278 = vpack.c.b16 %v2242, %v2238
    %v2279 = vpack.c.b16 %v2243, %v2239
    %v2280 = vpack.c.b16 %v2244, %v2240
    %v2281 = vpack.c.b16 %v2245, %v2241
    %v2282 = vpack.c.b16 %v2250, %v2246
    %v2283 = vpack.c.b16 %v2251, %v2247
    %v2284 = vpack.c.b16 %v2252, %v2248
    %v2285 = vpack.c.b16 %v2253, %v2249
    %2318 = vmatprep.subr.bf16.mxu0 %v2283
    %2319 = vmatpush1.bf16.msra.mxu0 %v2282
    %2320 = vmatprep.subr.bf16.mxu0 %v2279
    %2321 = vmatpush1.bf16.msra.mxu0 %v2278
    %2322 = vmatprep.subr.bf16.mxu0 %v2275
    %2323 = vmatpush1.bf16.msra.mxu0 %v2274
    %2324 = vmatprep.subr.bf16.mxu0 %v2271
    %2325 = vmatpush1.bf16.msra.mxu0 %v2270
    %2326 = vmatprep.subr.bf16.mxu0 %v2267
    %2327 = vmatpush1.bf16.msra.mxu0 %v2266
    %2328 = vmatprep.subr.bf16.mxu0 %v2263
    %2329 = vmatpush1.bf16.msra.mxu0 %v2262
    %2330 = vmatprep.subr.bf16.mxu0 %v2259
    %2331 = vmatpush1.bf16.msra.mxu0 %v2258
    %2332 = vmatprep.subr.bf16.mxu0 %v2255
    %2333 = vmatpush1.bf16.msra.mxu0 %v2254
    %2334 = vmatprep.subr.bf16.mxu0 0
    %2335 = vmatpush2.bf16.msra.mxu0 0
    %2336 = vmatprep.subr.bf16.mxu0 0
    %2337 = vmatpush2.bf16.msra.mxu0 0
    %2338 = vmatprep.subr.bf16.mxu0 0
    %2339 = vmatpush2.bf16.msra.mxu0 0
    %2340 = vmatprep.subr.bf16.mxu0 0
    %2341 = vmatpush2.bf16.msra.mxu0 0
    %2342 = vmatprep.subr.bf16.mxu0 0
    %2343 = vmatpush2.bf16.msra.mxu0 0
    %2344 = vmatprep.subr.bf16.mxu0 0
    %2345 = vmatpush2.bf16.msra.mxu0 0
    %2346 = vmatprep.subr.bf16.mxu0 0
    %2347 = vmatpush2.bf16.msra.mxu0 0
    %2348 = vmatprep.subr.bf16.mxu0 0
    %2349 = vmatpush2.bf16.msra.mxu0 0
    %2350 = vmatprep.mubr.bf16.mxu0 0
    %2351 = vmatmul.mubr.bf16.gmra.mxu0 %v2156
    %v2352 = vpop.f32.mrf.mxu0
    %v2353 = vadd.f32 0.0, %v2352
    %v2354 = vpop.f32.mrf.mxu0
    %v2355 = vadd.f32 0.0, %v2354
    %v2356 = vpop.f32.mrf.mxu0
    %v2357 = vpop.f32.mrf.mxu0
    %2358 = vdwg.mxu0
    %2359 = vmatprep.subr.bf16.mxu0 %v2285
    %2360 = vmatpush1.bf16.msra.mxu0 %v2284
    %2361 = vmatprep.subr.bf16.mxu0 %v2281
    %2362 = vmatpush1.bf16.msra.mxu0 %v2280
    %2363 = vmatprep.subr.bf16.mxu0 %v2277
    %2364 = vmatpush1.bf16.msra.mxu0 %v2276
    %2365 = vmatprep.subr.bf16.mxu0 %v2273
    %2366 = vmatpush1.bf16.msra.mxu0 %v2272
    %2367 = vmatprep.subr.bf16.mxu0 %v2269
    %2368 = vmatpush1.bf16.msra.mxu0 %v2268
    %2369 = vmatprep.subr.bf16.mxu0 %v2265
    %2370 = vmatpush1.bf16.msra.mxu0 %v2264
    %2371 = vmatprep.subr.bf16.mxu0 %v2261
    %2372 = vmatpush1.bf16.msra.mxu0 %v2260
    %2373 = vmatprep.subr.bf16.mxu0 %v2257
    %2374 = vmatpush1.bf16.msra.mxu0 %v2256
    %2375 = vmatprep.subr.bf16.mxu0 0
    %2376 = vmatpush2.bf16.msra.mxu0 0
    %2377 = vmatprep.subr.bf16.mxu0 0
    %2378 = vmatpush2.bf16.msra.mxu0 0
    %2379 = vmatprep.subr.bf16.mxu0 0
    %2380 = vmatpush2.bf16.msra.mxu0 0
    %2381 = vmatprep.subr.bf16.mxu0 0
    %2382 = vmatpush2.bf16.msra.mxu0 0
    %2383 = vmatprep.subr.bf16.mxu0 0
    %2384 = vmatpush2.bf16.msra.mxu0 0
    %2385 = vmatprep.subr.bf16.mxu0 0
    %2386 = vmatpush2.bf16.msra.mxu0 0
    %2387 = vmatprep.subr.bf16.mxu0 0
    %2388 = vmatpush2.bf16.msra.mxu0 0
    %2389 = vmatprep.subr.bf16.mxu0 0
    %2390 = vmatpush2.bf16.msra.mxu0 0
    %2391 = vmatprep.mubr.bf16.mxu0 0
    %2392 = vmatmul.mubr.bf16.gmra.mxu0 %v2156
    %v2393 = vpop.f32.mrf.mxu0
    %v2394 = vadd.f32 0.0, %v2393
    %v2395 = vpop.f32.mrf.mxu0
    %v2396 = vadd.f32 0.0, %v2395
    %v2397 = vpop.f32.mrf.mxu0
    %v2398 = vpop.f32.mrf.mxu0
    %2399 = vdwg.mxu0
    %v2404 = vrot.slane %v2353, 4
    %v2405 = vrot.slane %v2355, 4
    %v2406 = vrot.slane %v2394, 4
    %v2407 = vrot.slane %v2396, 4
    %v2412 = vadd.f32 %v1401, %v2404
    %v2413 = vadd.f32 %v1403, %v2405
    %v2414 = vadd.f32 %v1442, %v2406
    %v2415 = vadd.f32 %v1444, %v2407
    %v2416 = vld [vmem:[%s6] sm:$0xf]
    %v2418 = vlaneseq
    %v2419 = vshrl.u32 %v2418, 7
    %v2420 = vsub.s32 0, %v2419
    %v2421 = vrot.slane %v2416, %v2420
    %v2422 = vlaneseq
    %v2423 = vshrl.u32 %v2422, 7
    %v2424 = vsub.s32 1, %v2423
    %v2425 = vrot.slane %v2416, %v2424
    %v2426 = vlaneseq
    %v2427 = vshrl.u32 %v2426, 7
    %v2428 = vsub.s32 2, %v2427
    %v2429 = vrot.slane %v2416, %v2428
    %v2430 = vlaneseq
    %v2431 = vshrl.u32 %v2430, 7
    %v2432 = vsub.s32 3, %v2431
    %v2433 = vrot.slane %v2416, %v2432
    %v2438 = vadd.f32 %v2412, %v2421
    %v2439 = vadd.f32 %v2413, %v2425
    %v2440 = vadd.f32 %v2414, %v2429
    %v2441 = vadd.f32 %v2415, %v2433
    %v2442 = vxor.u32 %v2438, 2147483648
    %v2443 = vmul.f32 %v2442, 1.442695
    %v2444 = vpow.pop %v2443
    %v2445 = vadd.f32 %v2444, 1.0
    %v2446 = vrcp.pop %v2445
    %v2447 = vmul.f32 1.0, %v2446
    %v2448 = vxor.u32 %v2439, 2147483648
    %v2449 = vmul.f32 %v2448, 1.442695
    %v2450 = vpow.pop %v2449
    %v2451 = vadd.f32 %v2450, 1.0
    %v2452 = vrcp.pop %v2451
    %v2453 = vmul.f32 1.0, %v2452
    %v2454 = vtanh.pop %v2440
    %v2455 = vxor.u32 %v2441, 2147483648
    %v2456 = vmul.f32 %v2455, 1.442695
    %v2457 = vpow.pop %v2456
    %v2458 = vadd.f32 %v2457, 1.0
    %v2459 = vrcp.pop %v2458
    %v2460 = vmul.f32 1.0, %v2459
    %v2462 = vrot.slane %v2118, 6
    %v2464 = vmul.f32 %v2453, %v2462
    %v2465 = vmul.f32 %v2447, %v2454
    %v2466 = vadd.f32 %v2464, %v2465
    %v2467 = vtanh.pop %v2466
    %v2468 = vmul.f32 %v2460, %v2467
    %2469 = vst [vmem:[%s9] sm:$0x30] %v2468
    %v2470 = vpack.c.bf16 %v2468, %v2468
    %v2471 = vld [vmem:[#allocation4] sm:$0xff]
    %v2472 = vld [vmem:[#allocation4 + $0x8] sm:$0xff]
    %v2473 = vld [vmem:[#allocation4 + $0x10] sm:$0xff]
    %v2474 = vld [vmem:[#allocation4 + $0x18] sm:$0xff]
    %v2475 = vld [vmem:[#allocation4 + $0x20] sm:$0xff]
    %v2476 = vld [vmem:[#allocation4 + $0x28] sm:$0xff]
    %v2477 = vld [vmem:[#allocation4 + $0x30] sm:$0xff]
    %v2478 = vld [vmem:[#allocation4 + $0x38] sm:$0xff]
    %v2479 = vld [vmem:[#allocation4 + $0x40] sm:$0xff]
    %v2480 = vld [vmem:[#allocation4 + $0x48] sm:$0xff]
    %v2481 = vld [vmem:[#allocation4 + $0x50] sm:$0xff]
    %v2482 = vld [vmem:[#allocation4 + $0x58] sm:$0xff]
    %v2483 = vld [vmem:[#allocation4 + $0x60] sm:$0xff]
    %v2484 = vld [vmem:[#allocation4 + $0x68] sm:$0xff]
    %v2485 = vld [vmem:[#allocation4 + $0x70] sm:$0xff]
    %v2486 = vld [vmem:[#allocation4 + $0x78] sm:$0xff]
    %v2487 = vld [vmem:[#allocation4 + $0x80] sm:$0xff]
    %v2488 = vld [vmem:[#allocation4 + $0x88] sm:$0xff]
    %v2489 = vld [vmem:[#allocation4 + $0x90] sm:$0xff]
    %v2490 = vld [vmem:[#allocation4 + $0x98] sm:$0xff]
    %v2491 = vld [vmem:[#allocation4 + $0xa0] sm:$0xff]
    %v2492 = vld [vmem:[#allocation4 + $0xa8] sm:$0xff]
    %v2493 = vld [vmem:[#allocation4 + $0xb0] sm:$0xff]
    %v2494 = vld [vmem:[#allocation4 + $0xb8] sm:$0xff]
    %v2495 = vld [vmem:[#allocation4 + $0xc0] sm:$0xff]
    %v2496 = vld [vmem:[#allocation4 + $0xc8] sm:$0xff]
    %v2497 = vld [vmem:[#allocation4 + $0xd0] sm:$0xff]
    %v2498 = vld [vmem:[#allocation4 + $0xd8] sm:$0xff]
    %v2499 = vld [vmem:[#allocation4 + $0xe0] sm:$0xff]
    %v2500 = vld [vmem:[#allocation4 + $0xe8] sm:$0xff]
    %v2501 = vld [vmem:[#allocation4 + $0xf0] sm:$0xff]
    %v2502 = vld [vmem:[#allocation4 + $0xf8] sm:$0xff]
    %v2504 = vrot.slane %v2470, 2
    %v2538 = vunpack.c.l.b16 %v2471
    %v2539 = vunpack.c.h.b16 %v2471
    %v2540 = vunpack.c.l.b16 %v2472
    %v2541 = vunpack.c.h.b16 %v2472
    %v2542 = vunpack.c.l.b16 %v2473
    %v2543 = vunpack.c.h.b16 %v2473
    %v2544 = vunpack.c.l.b16 %v2474
    %v2545 = vunpack.c.h.b16 %v2474
    %v2546 = vunpack.c.l.b16 %v2475
    %v2547 = vunpack.c.h.b16 %v2475
    %v2548 = vunpack.c.l.b16 %v2476
    %v2549 = vunpack.c.h.b16 %v2476
    %v2550 = vunpack.c.l.b16 %v2477
    %v2551 = vunpack.c.h.b16 %v2477
    %v2552 = vunpack.c.l.b16 %v2478
    %v2553 = vunpack.c.h.b16 %v2478
    %v2554 = vunpack.c.l.b16 %v2479
    %v2555 = vunpack.c.h.b16 %v2479
    %v2556 = vunpack.c.l.b16 %v2480
    %v2557 = vunpack.c.h.b16 %v2480
    %v2558 = vunpack.c.l.b16 %v2481
    %v2559 = vunpack.c.h.b16 %v2481
    %v2560 = vunpack.c.l.b16 %v2482
    %v2561 = vunpack.c.h.b16 %v2482
    %v2562 = vunpack.c.l.b16 %v2483
    %v2563 = vunpack.c.h.b16 %v2483
    %v2564 = vunpack.c.l.b16 %v2484
    %v2565 = vunpack.c.h.b16 %v2484
    %v2566 = vunpack.c.l.b16 %v2485
    %v2567 = vunpack.c.h.b16 %v2485
    %v2568 = vunpack.c.l.b16 %v2486
    %v2569 = vunpack.c.h.b16 %v2486
    %v2570 = vunpack.c.l.b16 %v2487
    %v2571 = vunpack.c.h.b16 %v2487
    %v2572 = vunpack.c.l.b16 %v2488
    %v2573 = vunpack.c.h.b16 %v2488
    %v2574 = vunpack.c.l.b16 %v2489
    %v2575 = vunpack.c.h.b16 %v2489
    %v2576 = vunpack.c.l.b16 %v2490
    %v2577 = vunpack.c.h.b16 %v2490
    %v2578 = vunpack.c.l.b16 %v2491
    %v2579 = vunpack.c.h.b16 %v2491
    %v2580 = vunpack.c.l.b16 %v2492
    %v2581 = vunpack.c.h.b16 %v2492
    %v2582 = vunpack.c.l.b16 %v2493
    %v2583 = vunpack.c.h.b16 %v2493
    %v2584 = vunpack.c.l.b16 %v2494
    %v2585 = vunpack.c.h.b16 %v2494
    %v2586 = vunpack.c.l.b16 %v2495
    %v2587 = vunpack.c.h.b16 %v2495
    %v2588 = vunpack.c.l.b16 %v2496
    %v2589 = vunpack.c.h.b16 %v2496
    %v2590 = vunpack.c.l.b16 %v2497
    %v2591 = vunpack.c.h.b16 %v2497
    %v2592 = vunpack.c.l.b16 %v2498
    %v2593 = vunpack.c.h.b16 %v2498
    %v2594 = vunpack.c.l.b16 %v2499
    %v2595 = vunpack.c.h.b16 %v2499
    %v2596 = vunpack.c.l.b16 %v2500
    %v2597 = vunpack.c.h.b16 %v2500
    %v2598 = vunpack.c.l.b16 %v2501
    %v2599 = vunpack.c.h.b16 %v2501
    %v2600 = vunpack.c.l.b16 %v2502
    %v2601 = vunpack.c.h.b16 %v2502
    %v2602 = vpack.c.b16 %v2542, %v2538
    %v2603 = vpack.c.b16 %v2543, %v2539
    %v2604 = vpack.c.b16 %v2544, %v2540
    %v2605 = vpack.c.b16 %v2545, %v2541
    %v2606 = vpack.c.b16 %v2550, %v2546
    %v2607 = vpack.c.b16 %v2551, %v2547
    %v2608 = vpack.c.b16 %v2552, %v2548
    %v2609 = vpack.c.b16 %v2553, %v2549
    %v2610 = vpack.c.b16 %v2558, %v2554
    %v2611 = vpack.c.b16 %v2559, %v2555
    %v2612 = vpack.c.b16 %v2560, %v2556
    %v2613 = vpack.c.b16 %v2561, %v2557
    %v2614 = vpack.c.b16 %v2566, %v2562
    %v2615 = vpack.c.b16 %v2567, %v2563
    %v2616 = vpack.c.b16 %v2568, %v2564
    %v2617 = vpack.c.b16 %v2569, %v2565
    %v2618 = vpack.c.b16 %v2574, %v2570
    %v2619 = vpack.c.b16 %v2575, %v2571
    %v2620 = vpack.c.b16 %v2576, %v2572
    %v2621 = vpack.c.b16 %v2577, %v2573
    %v2622 = vpack.c.b16 %v2582, %v2578
    %v2623 = vpack.c.b16 %v2583, %v2579
    %v2624 = vpack.c.b16 %v2584, %v2580
    %v2625 = vpack.c.b16 %v2585, %v2581
    %v2626 = vpack.c.b16 %v2590, %v2586
    %v2627 = vpack.c.b16 %v2591, %v2587
    %v2628 = vpack.c.b16 %v2592, %v2588
    %v2629 = vpack.c.b16 %v2593, %v2589
    %v2630 = vpack.c.b16 %v2598, %v2594
    %v2631 = vpack.c.b16 %v2599, %v2595
    %v2632 = vpack.c.b16 %v2600, %v2596
    %v2633 = vpack.c.b16 %v2601, %v2597
    %2666 = vmatprep.subr.bf16.mxu0 %v2631
    %2667 = vmatpush1.bf16.msra.mxu0 %v2630
    %2668 = vmatprep.subr.bf16.mxu0 %v2627
    %2669 = vmatpush1.bf16.msra.mxu0 %v2626
    %2670 = vmatprep.subr.bf16.mxu0 %v2623
    %2671 = vmatpush1.bf16.msra.mxu0 %v2622
    %2672 = vmatprep.subr.bf16.mxu0 %v2619
    %2673 = vmatpush1.bf16.msra.mxu0 %v2618
    %2674 = vmatprep.subr.bf16.mxu0 %v2615
    %2675 = vmatpush1.bf16.msra.mxu0 %v2614
    %2676 = vmatprep.subr.bf16.mxu0 %v2611
    %2677 = vmatpush1.bf16.msra.mxu0 %v2610
    %2678 = vmatprep.subr.bf16.mxu0 %v2607
    %2679 = vmatpush1.bf16.msra.mxu0 %v2606
    %2680 = vmatprep.subr.bf16.mxu0 %v2603
    %2681 = vmatpush1.bf16.msra.mxu0 %v2602
    %2682 = vmatprep.subr.bf16.mxu0 0
    %2683 = vmatpush2.bf16.msra.mxu0 0
    %2684 = vmatprep.subr.bf16.mxu0 0
    %2685 = vmatpush2.bf16.msra.mxu0 0
    %2686 = vmatprep.subr.bf16.mxu0 0
    %2687 = vmatpush2.bf16.msra.mxu0 0
    %2688 = vmatprep.subr.bf16.mxu0 0
    %2689 = vmatpush2.bf16.msra.mxu0 0
    %2690 = vmatprep.subr.bf16.mxu0 0
    %2691 = vmatpush2.bf16.msra.mxu0 0
    %2692 = vmatprep.subr.bf16.mxu0 0
    %2693 = vmatpush2.bf16.msra.mxu0 0
    %2694 = vmatprep.subr.bf16.mxu0 0
    %2695 = vmatpush2.bf16.msra.mxu0 0
    %2696 = vmatprep.subr.bf16.mxu0 0
    %2697 = vmatpush2.bf16.msra.mxu0 0
    %2698 = vmatprep.mubr.bf16.mxu0 0
    %2699 = vmatmul.mubr.bf16.gmra.mxu0 %v2504
    %v2700 = vpop.f32.mrf.mxu0
    %v2701 = vadd.f32 0.0, %v2700
    %v2702 = vpop.f32.mrf.mxu0
    %v2703 = vadd.f32 0.0, %v2702
    %v2704 = vpop.f32.mrf.mxu0
    %v2705 = vpop.f32.mrf.mxu0
    %2706 = vdwg.mxu0
    %2707 = vmatprep.subr.bf16.mxu0 %v2633
    %2708 = vmatpush1.bf16.msra.mxu0 %v2632
    %2709 = vmatprep.subr.bf16.mxu0 %v2629
    %2710 = vmatpush1.bf16.msra.mxu0 %v2628
    %2711 = vmatprep.subr.bf16.mxu0 %v2625
    %2712 = vmatpush1.bf16.msra.mxu0 %v2624
    %2713 = vmatprep.subr.bf16.mxu0 %v2621
    %2714 = vmatpush1.bf16.msra.mxu0 %v2620
    %2715 = vmatprep.subr.bf16.mxu0 %v2617
    %2716 = vmatpush1.bf16.msra.mxu0 %v2616
    %2717 = vmatprep.subr.bf16.mxu0 %v2613
    %2718 = vmatpush1.bf16.msra.mxu0 %v2612
    %2719 = vmatprep.subr.bf16.mxu0 %v2609
    %2720 = vmatpush1.bf16.msra.mxu0 %v2608
    %2721 = vmatprep.subr.bf16.mxu0 %v2605
    %2722 = vmatpush1.bf16.msra.mxu0 %v2604
    %2723 = vmatprep.subr.bf16.mxu0 0
    %2724 = vmatpush2.bf16.msra.mxu0 0
    %2725 = vmatprep.subr.bf16.mxu0 0
    %2726 = vmatpush2.bf16.msra.mxu0 0
    %2727 = vmatprep.subr.bf16.mxu0 0
    %2728 = vmatpush2.bf16.msra.mxu0 0
    %2729 = vmatprep.subr.bf16.mxu0 0
    %2730 = vmatpush2.bf16.msra.mxu0 0
    %2731 = vmatprep.subr.bf16.mxu0 0
    %2732 = vmatpush2.bf16.msra.mxu0 0
    %2733 = vmatprep.subr.bf16.mxu0 0
    %2734 = vmatpush2.bf16.msra.mxu0 0
    %2735 = vmatprep.subr.bf16.mxu0 0
    %2736 = vmatpush2.bf16.msra.mxu0 0
    %2737 = vmatprep.subr.bf16.mxu0 0
    %2738 = vmatpush2.bf16.msra.mxu0 0
    %2739 = vmatprep.mubr.bf16.mxu0 0
    %2740 = vmatmul.mubr.bf16.gmra.mxu0 %v2504
    %v2741 = vpop.f32.mrf.mxu0
    %v2742 = vadd.f32 0.0, %v2741
    %v2743 = vpop.f32.mrf.mxu0
    %v2744 = vadd.f32 0.0, %v2743
    %v2745 = vpop.f32.mrf.mxu0
    %v2746 = vpop.f32.mrf.mxu0
    %2747 = vdwg.mxu0
    %v2752 = vrot.slane %v2701, 2
    %v2753 = vrot.slane %v2703, 2
    %v2754 = vrot.slane %v2742, 2
    %v2755 = vrot.slane %v2744, 2
    %v2760 = vadd.f32 %v1401, %v2752
    %v2761 = vadd.f32 %v1403, %v2753
    %v2762 = vadd.f32 %v1442, %v2754
    %v2763 = vadd.f32 %v1444, %v2755
    %v2764 = vld [vmem:[%s6] sm:$0xf]
    %v2766 = vlaneseq
    %v2767 = vshrl.u32 %v2766, 7
    %v2768 = vsub.s32 0, %v2767
    %v2769 = vrot.slane %v2764, %v2768
    %v2770 = vlaneseq
    %v2771 = vshrl.u32 %v2770, 7
    %v2772 = vsub.s32 1, %v2771
    %v2773 = vrot.slane %v2764, %v2772
    %v2774 = vlaneseq
    %v2775 = vshrl.u32 %v2774, 7
    %v2776 = vsub.s32 2, %v2775
    %v2777 = vrot.slane %v2764, %v2776
    %v2778 = vlaneseq
    %v2779 = vshrl.u32 %v2778, 7
    %v2780 = vsub.s32 3, %v2779
    %v2781 = vrot.slane %v2764, %v2780
    %v2786 = vadd.f32 %v2760, %v2769
    %v2787 = vadd.f32 %v2761, %v2773
    %v2788 = vadd.f32 %v2762, %v2777
    %v2789 = vadd.f32 %v2763, %v2781
    %v2790 = vxor.u32 %v2786, 2147483648
    %v2791 = vmul.f32 %v2790, 1.442695
    %v2792 = vpow.pop %v2791
    %v2793 = vadd.f32 %v2792, 1.0
    %v2794 = vrcp.pop %v2793
    %v2795 = vmul.f32 1.0, %v2794
    %v2796 = vxor.u32 %v2787, 2147483648
    %v2797 = vmul.f32 %v2796, 1.442695
    %v2798 = vpow.pop %v2797
    %v2799 = vadd.f32 %v2798, 1.0
    %v2800 = vrcp.pop %v2799
    %v2801 = vmul.f32 1.0, %v2800
    %v2802 = vtanh.pop %v2788
    %v2803 = vxor.u32 %v2789, 2147483648
    %v2804 = vmul.f32 %v2803, 1.442695
    %v2805 = vpow.pop %v2804
    %v2806 = vadd.f32 %v2805, 1.0
    %v2807 = vrcp.pop %v2806
    %v2808 = vmul.f32 1.0, %v2807
    %v2810 = vrot.slane %v2466, 6
    %v2812 = vmul.f32 %v2801, %v2810
    %v2813 = vmul.f32 %v2795, %v2802
    %v2814 = vadd.f32 %v2812, %v2813
    %v2815 = vtanh.pop %v2814
    %v2816 = vmul.f32 %v2808, %v2815
    %2817 = vst [vmem:[%s9] sm:$0xc0] %v2816
    %2818 = vst [vmem:[%s11 - $0x6] sm:$0xc0] %v2816
    %2819 = vst [vmem:[%s12 - $0x6] sm:$0xc0] %v2814
    %v2820 = vld [vmem:[%s9] sm:$0xff]
    %v2821 = vpack.c.bf16 %v2820, %v2820
    %v2822 = vld [vmem:[%s7] sm:$0xf]
    %v2823 = vld [vmem:[%s7 + $0x4] sm:$0xf]
    %v2824 = vld [vmem:[%s7 + $0x8] sm:$0xf]
    %v2825 = vld [vmem:[%s7 + $0xc] sm:$0xf]
    %v2826 = vld [vmem:[%s7 + $0x10] sm:$0xf]
    %v2827 = vld [vmem:[%s7 + $0x14] sm:$0xf]
    %v2828 = vld [vmem:[%s7 + $0x18] sm:$0xf]
    %v2829 = vld [vmem:[%s7 + $0x1c] sm:$0xf]
    %v2830 = vld [vmem:[%s7 + $0x20] sm:$0xf]
    %v2831 = vld [vmem:[%s7 + $0x24] sm:$0xf]
    %v2832 = vld [vmem:[%s7 + $0x28] sm:$0xf]
    %v2833 = vld [vmem:[%s7 + $0x2c] sm:$0xf]
    %v2834 = vld [vmem:[%s7 + $0x30] sm:$0xf]
    %v2835 = vld [vmem:[%s7 + $0x34] sm:$0xf]
    %v2836 = vld [vmem:[%s7 + $0x38] sm:$0xf]
    %v2837 = vld [vmem:[%s7 + $0x3c] sm:$0xf]
    %v2838 = vld [vmem:[%s8] sm:$0x1]
    %v2840 = vlaneseq
    %v2841 = vshrl.u32 %v2840, 7
    %v2842 = vsub.s32 0, %v2841
    %v2843 = vrot.slane %v2838, %v2842
    %v2861 = vunpack.c.l.b16 %v2822
    %v2862 = vunpack.c.l.b16 %v2823
    %v2863 = vunpack.c.l.b16 %v2824
    %v2864 = vunpack.c.l.b16 %v2825
    %v2865 = vunpack.c.l.b16 %v2826
    %v2866 = vunpack.c.l.b16 %v2827
    %v2867 = vunpack.c.l.b16 %v2828
    %v2868 = vunpack.c.l.b16 %v2829
    %v2869 = vunpack.c.l.b16 %v2830
    %v2870 = vunpack.c.l.b16 %v2831
    %v2871 = vunpack.c.l.b16 %v2832
    %v2872 = vunpack.c.l.b16 %v2833
    %v2873 = vunpack.c.l.b16 %v2834
    %v2874 = vunpack.c.l.b16 %v2835
    %v2875 = vunpack.c.l.b16 %v2836
    %v2876 = vunpack.c.l.b16 %v2837
    %v2877 = vpack.c.b16 %v2862, %v2861
    %v2878 = vpack.c.b16 %v2864, %v2863
    %v2879 = vpack.c.b16 %v2866, %v2865
    %v2880 = vpack.c.b16 %v2868, %v2867
    %v2881 = vpack.c.b16 %v2870, %v2869
    %v2882 = vpack.c.b16 %v2872, %v2871
    %v2883 = vpack.c.b16 %v2874, %v2873
    %v2884 = vpack.c.b16 %v2876, %v2875
    %2893 = vmatprep.subr.bf16.mxu0 0
    %2894 = vmatpush1.bf16.msra.mxu0 %v2884
    %2895 = vmatprep.subr.bf16.mxu0 0
    %2896 = vmatpush1.bf16.msra.mxu0 %v2883
    %2897 = vmatprep.subr.bf16.mxu0 0
    %2898 = vmatpush1.bf16.msra.mxu0 %v2882
    %2899 = vmatprep.subr.bf16.mxu0 0
    %2900 = vmatpush1.bf16.msra.mxu0 %v2881
    %2901 = vmatprep.subr.bf16.mxu0 0
    %2902 = vmatpush1.bf16.msra.mxu0 %v2880
    %2903 = vmatprep.subr.bf16.mxu0 0
    %2904 = vmatpush1.bf16.msra.mxu0 %v2879
    %2905 = vmatprep.subr.bf16.mxu0 0
    %2906 = vmatpush1.bf16.msra.mxu0 %v2878
    %2907 = vmatprep.subr.bf16.mxu0 0
    %2908 = vmatpush1.bf16.msra.mxu0 %v2877
    %2909 = vmatprep.subr.bf16.mxu0 0
    %2910 = vmatpush2.bf16.msra.mxu0 0
    %2911 = vmatprep.subr.bf16.mxu0 0
    %2912 = vmatpush2.bf16.msra.mxu0 0
    %2913 = vmatprep.subr.bf16.mxu0 0
    %2914 = vmatpush2.bf16.msra.mxu0 0
    %2915 = vmatprep.subr.bf16.mxu0 0
    %2916 = vmatpush2.bf16.msra.mxu0 0
    %2917 = vmatprep.subr.bf16.mxu0 0
    %2918 = vmatpush2.bf16.msra.mxu0 0
    %2919 = vmatprep.subr.bf16.mxu0 0
    %2920 = vmatpush2.bf16.msra.mxu0 0
    %2921 = vmatprep.subr.bf16.mxu0 0
    %2922 = vmatpush2.bf16.msra.mxu0 0
    %2923 = vmatprep.subr.bf16.mxu0 0
    %2924 = vmatpush2.bf16.msra.mxu0 0
    %2925 = vmatprep.mubr.bf16.mxu0 0
    %2926 = vmatmul.mubr.bf16.gmra.mxu0 %v2821
    %v2927 = vpop.f32.mrf.mxu0
    %v2928 = vadd.f32 %v2843, %v2927
    %v2929 = vpop.f32.mrf.mxu0
    %v2930 = vpop.f32.mrf.mxu0
    %v2931 = vpop.f32.mrf.mxu0
    %2932 = vdwg.mxu0
    %2933 = vst [vmem:[%s10] sm:$0xff] %v2928
    // Predicated region
    $region46: #{hierachical_forward.2} parent=1 // pred_check
      _
    $region47: #{hierachical_forward.2} parent=1 // pred_check_branch
      %2935 = sbr.rel (0) target = $region49
    $region48: #{hierachical_forward.2} parent=1 // pred_region
      _
    $region49: #{hierachical_forward.2} parent=1 // pred_fallthru
      _
    // Predicated region
    $region50: #{hierachical_forward.2} parent=1 // pred_check
      _
    $region51: #{hierachical_forward.2} parent=1 // pred_check_branch
      %2937 = sbr.rel (0) target = $region53
    $region52: #{hierachical_forward.2} parent=1 // pred_region
      _
    $region53: #{hierachical_forward.2} parent=1 // pred_fallthru
      _
    // Predicated region
    $region54: #{hierachical_forward.2} parent=1 // pred_check
      _
    $region55: #{hierachical_forward.2} parent=1 // pred_check_branch
      %2939 = sbr.rel (0) target = $region57
    $region56: #{hierachical_forward.2} parent=1 // pred_region
      _
    $region57: #{hierachical_forward.2} parent=1 // pred_fallthru
      _
    // Predicated region
    $region58: #{hierachical_forward.2} parent=1 // pred_check
      _
    $region59: #{hierachical_forward.2} parent=1 // pred_check_branch
      %2941 = sbr.rel (0) target = $region61
    $region60: #{hierachical_forward.2} parent=1 // pred_region
      _
    $region61: #{hierachical_forward.2} parent=1 // pred_fallthru
      _
    // Predicated region
    $region62: #{hierachical_forward.2} parent=1 // pred_check
      _
    $region63: #{hierachical_forward.2} parent=1 // pred_check_branch
      %2943 = sbr.rel (0) target = $region65
    $region64: #{hierachical_forward.2} parent=1 // pred_region
      _
    $region65: #{hierachical_forward.2} parent=1 // pred_fallthru
      _
    // Predicated region
    $region66: #{hierachical_forward.2} parent=1 // pred_check
      _
    $region67: #{hierachical_forward.2} parent=1 // pred_check_branch
      %2945 = sbr.rel (0) target = $region69
    $region68: #{hierachical_forward.2} parent=1 // pred_region
      _
    $region69: #{hierachical_forward.2} parent=1 // pred_fallthru
      _
    // Predicated region
    $region70: #{hierachical_forward.2} parent=1 // pred_check
      _
    $region71: #{hierachical_forward.2} parent=1 // pred_check_branch
      %2947 = sbr.rel (0) target = $region73
    $region72: #{hierachical_forward.2} parent=1 // pred_region
      _
    $region73: #{hierachical_forward.2} parent=1 // pred_fallthru
      _
    // Predicated region
    $region74: #{hierachical_forward.2} parent=1 // pred_check
      _
    $region75: #{hierachical_forward.2} parent=1 // pred_check_branch
      %2949 = sbr.rel (0) target = $region77
    $region76: #{hierachical_forward.2} parent=1 // pred_region
      _
    $region77: #{hierachical_forward.2} parent=1 // pred_fallthru
      _
    %2950 = vsyncpa [#allocation3], 1
    %2951 = vsyncpa [#allocation5], 1

</llo_original>
